<compile_context>
chip_gen: v7x
topology: tpu7x:2x2x1
jax: 0.10.0
libtpu: 0.0.40
codegen_flags: <defaults>
</compile_context>

<pallas_src>
import jax
import jax.numpy as jnp
from jax.experimental import pallas as pl
from jax.experimental.pallas import tpu as pltpu

# ---------------- small synthetic configuration ----------------
B = 2                  # batch size
T = 8                  # max sentence length
VOCAB = 50
EMBED_DIM = 32         # config.embed_dim
MASK_DIM = 16          # config.mask_dim
L_HIDDEN = 32          # config.l_hidden_size == kernel_num
GRU_H = L_HIDDEN // 2  # per-direction GRU hidden
LSTM_H = L_HIDDEN // 2  # dynamicLSTM hidden
MAXSPAN = 4            # build_tag_graph span upper bound (i .. min(i+4, max_len))
C1 = 1.0               # config.C1
C2 = 1.0               # config.C2

OUT_ROWS = 8           # packed output slab (lane-dense, single write-back DMA)
OUT_COLS = 128

VMEM_SPEC = pl.BlockSpec(memory_space=pltpu.MemorySpace.VMEM)
SMEM_SPEC = pl.BlockSpec(memory_space=pltpu.MemorySpace.SMEM)
ANY_SPEC = pl.BlockSpec(memory_space=pl.ANY)


# ---------------- single fused kernel ----------------
def semi_aspect_kernel(
        ids_ref, masks_ref, labels_ref, lens_ref,
        wemb_hbm, memb_ref,
        gwih0_ref, gwhh0_ref, gbih0_ref, gbhh0_ref,
        gwih1_ref, gwhh1_ref, gbih1_ref, gbhh1_ref,
        convw_ref, convb_ref,
        lwih_ref, lwhh_ref, lb_ref,
        triw_ref, trib_ref,
        labw_ref, labb_ref, trans_ref,
        out_ref,
        wvec_buf, dma_sems, gru1_scr, gru2_scr):
    bsz, tlen = masks_ref.shape
    BT = bsz * tlen
    H = L_HIDDEN
    H3 = 3 * GRU_H
    HL = LSTM_H

    # zero the packed output slab once (only untouched lanes need it; single full store)
    out_ref[...] = jnp.zeros((OUT_ROWS, OUT_COLS), jnp.float32)

    # ---- SimpleCat: GloVe row gather via DMA (ids in SMEM, embedding table stays in HBM) ----
    # TODO(synk): SimpleCat.load_vector loads pretrained GloVe; random embeddings used.
    copies = []
    for r in range(BT):
        cp = pltpu.make_async_copy(
            wemb_hbm.at[pl.ds(ids_ref[r], 1)],        # (1, EMBED_DIM) HBM row
            wvec_buf.at[pl.ds(r, 1)],                 # (1, EMBED_DIM) VMEM row
            dma_sems.at[r])
        cp.start()
        copies.append(cp)

    # mask embedding / masks computed while the gather DMAs are in flight
    lens = lens_ref[...]                                           # (B, 1) float32
    t_idx = jax.lax.broadcasted_iota(jnp.int32, (bsz, tlen), 1).astype(jnp.float32)
    wmask = (t_idx < lens).astype(jnp.float32)                     # (B, T) word mask
    m3 = masks_ref[...].astype(jnp.float32)[:, :, None]            # (B, T, 1)
    memb = memb_ref[...]                                           # (2, MASK_DIM)
    mvec = (m3 * memb[1:2, :].reshape(1, 1, MASK_DIM)
            + (1.0 - m3) * memb[0:1, :].reshape(1, 1, MASK_DIM))   # (B, T, MASK_DIM)

    for cp in copies:
        cp.wait()
    wvec = wvec_buf[...].reshape(bsz, tlen, EMBED_DIM)
    x = jnp.concatenate([wvec, mvec], axis=-1)                     # (B, T, EMBED+MASK)

    # ---- biLSTM: 2-layer bidirectional GRU, fwd/bwd fused on the row axis ----
    # rows [0:B] = forward direction, rows [B:2B] = backward direction
    isfwd = (jax.lax.broadcasted_iota(jnp.int32, (2 * bsz, 1), 0) < bsz).astype(jnp.float32)

    def gru_layer(inp_flat, wih_ref, whh_ref, bih_ref, bhh_ref, store_step):
        # hoisted input projection: ONE matmul for all timesteps AND both directions
        gi_all = (jnp.dot(inp_flat, wih_ref[...], preferred_element_type=jnp.float32)
                  + bih_ref[...]).reshape(bsz, tlen, 2 * H3)
        whh_blk = whh_ref[...]                                     # (2*GRU_H, H3), rows [fwd; bwd]
        bhh = bhh_ref[...]                                         # (2, H3), rows [fwd; bwd]
        bhh_rows = isfwd * bhh[0:1, :] + (1.0 - isfwd) * bhh[1:2, :]   # (2B, H3)
        h = jnp.zeros((2 * bsz, GRU_H), jnp.float32)
        for t in range(tlen):                                      # unrolled, static indices
            tb = tlen - 1 - t
            gi = jnp.concatenate([gi_all[:, t, 0:H3],
                                  gi_all[:, tb, H3:2 * H3]], axis=0)           # (2B, H3)
            m = jnp.concatenate([wmask[:, t:t + 1], wmask[:, tb:tb + 1]], axis=0)  # (2B, 1)
            # block-diagonal hidden projection: ONE MXU op covers both directions
            h_pad = jnp.concatenate([h * isfwd, h * (1.0 - isfwd)], axis=1)    # (2B, 2*GRU_H)
            gh = jnp.dot(h_pad, whh_blk, preferred_element_type=jnp.float32) + bhh_rows
            r = jax.nn.sigmoid(gi[:, 0:GRU_H] + gh[:, 0:GRU_H])
            z = jax.nn.sigmoid(gi[:, GRU_H:2 * GRU_H] + gh[:, GRU_H:2 * GRU_H])
            n = jnp.tanh(gi[:, 2 * GRU_H:3 * GRU_H] + r * gh[:, 2 * GRU_H:3 * GRU_H])
            h = m * ((1.0 - z) * n + z * h) + (1.0 - m) * h        # packed-seq: stop at length
            store_step(t, tb, m * h)                               # padded outputs are zero

    def store_l1(t, tb, hv):                                       # layer-1 output scratch
        gru1_scr[:, t:t + 1, 0:GRU_H] = hv[0:bsz, None, :]
        gru1_scr[:, tb:tb + 1, GRU_H:2 * GRU_H] = hv[bsz:2 * bsz, None, :]

    # layer-2 outputs go directly into the conv-padded scratch at time offset +1
    gru2_scr[...] = jnp.zeros((bsz, tlen + 2, 2 * GRU_H), jnp.float32)

    def store_l2(t, tb, hv):
        gru2_scr[:, t + 1:t + 2, 0:GRU_H] = hv[0:bsz, None, :]
        gru2_scr[:, tb + 1:tb + 2, GRU_H:2 * GRU_H] = hv[bsz:2 * bsz, None, :]

    gru_layer(x.reshape(BT, EMBED_DIM + MASK_DIM),
              gwih0_ref, gwhh0_ref, gbih0_ref, gbhh0_ref, store_l1)
    gru_layer(gru1_scr[...].reshape(BT, 2 * GRU_H),
              gwih1_ref, gwhh1_ref, gbih1_ref, gbhh1_ref, store_l2)

    # ---- Conv1d(k=3, pad=1) + ReLU: three static windows of the padded scratch, one matmul ----
    gp = gru2_scr[...]                                             # (B, T+2, H)
    conv_in = jnp.concatenate(
        [gp[:, 0:tlen, :], gp[:, 1:tlen + 1, :], gp[:, 2:tlen + 2, :]],
        axis=-1).reshape(BT, 3 * H)
    context = jnp.maximum(
        jnp.dot(conv_in, convw_ref[...], preferred_element_type=jnp.float32)
        + convb_ref[...], 0.0).reshape(bsz, tlen, H)

    # ---- build_tag_graph: span LSTM over all start positions, input projection hoisted ----
    ctx_pad = jnp.concatenate(
        [context, jnp.zeros((bsz, MAXSPAN, H), jnp.float32)], axis=1)   # (B, T+MAXSPAN, H)
    x_stack = jnp.concatenate(
        [ctx_pad[:, d:d + tlen, :].reshape(BT, H) for d in range(MAXSPAN)], axis=0)  # (4BT, H)
    gix = (jnp.dot(x_stack, lwih_ref[...], preferred_element_type=jnp.float32)
           + lb_ref[...])                                          # (4BT, 4*HL) -- off the chain
    whhL = lwhh_ref[...]

    i_pos = t_idx[:, :, None]                                      # (B, T, 1), value = start i
    valid_from = lens[:, :, None] - i_pos                          # words remaining from i
    row_mask3 = (valid_from > 0.0).astype(jnp.float32)             # span has >= 1 valid word

    h = jnp.zeros((BT, HL), jnp.float32)
    c = jnp.zeros((BT, HL), jnp.float32)
    sel = None
    sel_list, mask_list = [], []
    for d in range(MAXSPAN):
        g = gix[d * BT:(d + 1) * BT] + jnp.dot(h, whhL, preferred_element_type=jnp.float32)
        i_g = jax.nn.sigmoid(g[:, 0:HL])
        f_g = jax.nn.sigmoid(g[:, HL:2 * HL])
        g_g = jnp.tanh(g[:, 2 * HL:3 * HL])
        o_g = jax.nn.sigmoid(g[:, 3 * HL:4 * HL])
        c = f_g * c + i_g * g_g
        h = o_g * jnp.tanh(c)
        h3 = h.reshape(bsz, tlen, HL)
        # packed-length hidden (incremental): keep h from step min(d, len-i-1), clamped >= 0
        sel = h3 if d == 0 else jnp.where(valid_from >= float(d + 1), h3, sel)
        sel_list.append(sel)
        # NOTE: matches build_tag_graph -- spans overrunning the sentence are length-clamped,
        # only spans whose start is past the length (or end >= max_len) get zero scores.
        in_range = (i_pos + float(d) < float(tlen)).astype(jnp.float32)
        mask_list.append(row_mask3 * in_range)

    h_all = jnp.concatenate(sel_list, axis=1)                      # (B, MAXSPAN*T, HL)
    span_mask = jnp.concatenate(mask_list, axis=1)                 # (B, MAXSPAN*T, 1)
    emit = (jnp.dot(h_all.reshape(bsz * MAXSPAN * tlen, HL), triw_ref[...],
                    preferred_element_type=jnp.float32) + trib_ref[...])
    emit = emit.reshape(bsz, MAXSPAN * tlen, 2) * span_mask        # span (i, i+d) scores, d-major
    unary = emit[:, 0:tlen, :]                                     # d=0 block: length-1 spans

    # ---- marginals (stand-in) -> pooling -> feat2label -> log_softmax ----
    # TODO(synk): semiCRF.compute_feat_marginal source is not provided; stand-in word
    # marginals = masked softmax over the length-1 span scores (exact division, no eps).
    mx = jnp.max(unary, axis=-1, keepdims=True)
    e = jnp.exp(unary - mx)
    marg = e / jnp.sum(e, axis=-1, keepdims=True)
    p = marg[:, :, 1] * wmask                                      # select_polarities (B, T)
    gamma = jnp.sum(p, axis=1, keepdims=True)                      # > 0 (every sentence len >= 1)
    sent_v = jnp.sum(p[:, :, None] * context, axis=1) / gamma      # (B, H)
    # TODO(synk): nn.Dropout(config.dropout2) is identity here (eval mode).
    scores = (jnp.dot(sent_v, labw_ref[...], preferred_element_type=jnp.float32)
              + labb_ref[...])                                     # (B, 3)
    smax = jnp.max(scores, axis=1, keepdims=True)
    logp = scores - smax - jnp.log(jnp.sum(jnp.exp(scores - smax), axis=1, keepdims=True))

    # ---- scalar losses / penalties ----
    lab_oh = (jax.lax.broadcasted_iota(jnp.int32, (bsz, 3), 1)
              == labels_ref[...]).astype(jnp.float32)              # labels_ref: (B, 1)
    cls = -jnp.sum(jnp.sum(logp * lab_oh, axis=1, keepdims=True),
                   axis=0, keepdims=True) / float(bsz)             # NLLLoss (mean)
    tr = trans_ref[...]
    pena = (jnp.maximum(tr[1:2, 0:1] - tr[0:1, 0:1], 0.0)
            + jnp.maximum(tr[0:1, 1:2] - tr[1:2, 1:2], 0.0))       # (1, 1)
    sp_norm = jnp.sum(jnp.sum(jnp.abs(p), axis=1, keepdims=True),
                      axis=0, keepdims=True) / float(bsz)          # mean L1 of s_prob rows
    pen = C1 * pena + C2 * sp_norm

    # ---- pack every result into the single lane-dense output slab ----
    out_ref[0:1, 0:2] = jnp.concatenate([cls, pen], axis=1)        # row 0: [cls_loss, norm_pen]
    out_ref[1:1 + bsz, 0:3] = logp                                 # rows 1..B: log_softmax scores
    out_ref[1 + bsz:1 + 2 * bsz, 0:tlen] = p                       # rows ..: select_polarities
    out_ref[1 + 2 * bsz:1 + 3 * bsz, 0:MAXSPAN * tlen * 2] = (     # rows ..: span scores (d-major)
        emit.reshape(bsz, MAXSPAN * tlen * 2))


# ---------------- parameter initialization (deterministic, synthetic) ----------------
def init_params(key):
    # TODO(synk): init_ortho (orthogonal init) not replicated; synthetic normal weights.
    keys = iter(jax.random.split(key, 32))

    def nrm(shape, scale=0.1):
        return scale * jax.random.normal(next(keys), shape, dtype=jnp.float32)

    p = {}
    # SimpleCat: GloVe word embedding + binary mask embedding
    # TODO(synk): SimpleCat.load_vector loads pretrained GloVe; random embeddings used.
    p['word_embed'] = nrm((VOCAB, EMBED_DIM), 0.5)
    p['mask_embed'] = nrm((2, MASK_DIM), 0.5).at[0].set(0.0)       # reset_binary (if_reset)
    # biLSTM: 2-layer bidirectional GRU.
    #   wih: (Din, 6*GRU_H) columns [fwd r|z|n | bwd r|z|n]
    #   whh: (2*GRU_H, 3*GRU_H) rows [fwd; bwd] (block-diagonal use in-kernel)
    #   bhh: (2, 3*GRU_H) rows [fwd; bwd]
    p['gru_wih'], p['gru_whh'], p['gru_bih'], p['gru_bhh'] = [], [], [], []
    for layer in range(2):
        in_dim = (EMBED_DIM + MASK_DIM) if layer == 0 else 2 * GRU_H
        p['gru_wih'].append(nrm((in_dim, 6 * GRU_H)))
        p['gru_whh'].append(nrm((2 * GRU_H, 3 * GRU_H)))
        p['gru_bih'].append(nrm((1, 6 * GRU_H)))
        p['gru_bhh'].append(nrm((2, 3 * GRU_H)))
    # Conv1d(L_HIDDEN, L_HIDDEN, 3, padding=1): taps stacked along rows [t-1 | t | t+1]
    p['conv_w'] = nrm((3 * L_HIDDEN, L_HIDDEN))
    p['conv_b'] = nrm((1, L_HIDDEN))
    # dynamicLSTM(L_HIDDEN -> LSTM_H), gate order [i | f | g | o]; b = b_ih + b_hh folded
    p['lstm_w_ih'] = nrm((L_HIDDEN, 4 * LSTM_H))
    p['lstm_w_hh'] = nrm((LSTM_H, 4 * LSTM_H))
    p['lstm_b'] = nrm((1, 4 * LSTM_H))
    p['tri_w'] = nrm((LSTM_H, 2))          # feat2tri
    p['tri_b'] = nrm((1, 2))
    p['label_w'] = nrm((L_HIDDEN, 3))      # feat2label
    p['label_b'] = nrm((1, 3))
    p['transitions'] = nrm((2, 2), 0.5)    # semiCRF transitions (used only by the penalty)
    return p


# ---------------- forward (single fused pallas_call, single packed output) ----------------
def forward(params, sents, aspect_masks, labels, lens):
    ids = sents.reshape(B * T).astype(jnp.int32)                   # token ids -> SMEM
    lens_f = lens.astype(jnp.float32)[:, None]                     # (B, 1)
    labels_2d = labels.astype(jnp.int32)[:, None]                  # (B, 1)

    in_specs = [SMEM_SPEC,            # ids (SMEM scalars for the DMA gather)
                VMEM_SPEC, VMEM_SPEC, VMEM_SPEC,   # masks, labels, lens
                ANY_SPEC,             # word embedding table stays in HBM
                VMEM_SPEC] + [VMEM_SPEC] * 18      # mask embed + all weights

    slab = pl.pallas_call(
        semi_aspect_kernel,
        out_shape=jax.ShapeDtypeStruct((OUT_ROWS, OUT_COLS), jnp.float32),
        in_specs=in_specs,
        out_specs=VMEM_SPEC,
        scratch_shapes=[
            pltpu.VMEM((B * T, EMBED_DIM), jnp.float32),       # gathered word vectors
            pltpu.SemaphoreType.DMA((B * T,)),                 # per-row gather semaphores
            pltpu.VMEM((B, T, 2 * GRU_H), jnp.float32),        # GRU layer-1 outputs
            pltpu.VMEM((B, T + 2, 2 * GRU_H), jnp.float32),    # GRU layer-2 outputs (conv-padded)
        ],
    )(ids, aspect_masks, labels_2d, lens_f,
      params['word_embed'], params['mask_embed'],
      params['gru_wih'][0], params['gru_whh'][0], params['gru_bih'][0], params['gru_bhh'][0],
      params['gru_wih'][1], params['gru_whh'][1], params['gru_bih'][1], params['gru_bhh'][1],
      params['conv_w'], params['conv_b'],
      params['lstm_w_ih'], params['lstm_w_hh'], params['lstm_b'],
      params['tri_w'], params['tri_b'],
      params['label_w'], params['label_b'],
      params['transitions'])
    return slab[0, 0], slab[0, 1]                                  # cls_loss, norm_pen


if __name__ == "__main__":
    key = jax.random.PRNGKey(0)
    pkey, skey, mkey, lkey = jax.random.split(key, 4)
    params = init_params(pkey)

    lens = jnp.array([T, 5], dtype=jnp.int32)                      # sorted descending, max == T
    valid = (jnp.arange(T)[None, :] < lens[:, None]).astype(jnp.int32)
    sents = jax.random.randint(skey, (B, T), 0, VOCAB, dtype=jnp.int32) * valid
    aspect_masks = jax.random.randint(mkey, (B, T), 0, 2, dtype=jnp.int32) * valid
    labels = jax.random.randint(lkey, (B,), 0, 3, dtype=jnp.int32)

    cls_loss, norm_pen = jax.jit(forward)(params, sents, aspect_masks, labels, lens)
    jax.block_until_ready((cls_loss, norm_pen))
    print("KERNEL_OK")
</pallas_src>

<mosaic_0001>
module attributes {stable_mosaic.version = 11 : i64} {
  func.func @semi_aspect_kernel(%arg0: memref<16xi32, #tpu.memory_space<smem>>, %arg1: memref<2x8xi32, #tpu.memory_space<vmem>>, %arg2: memref<2x1xi32, #tpu.memory_space<vmem>>, %arg3: memref<2x1xf32, #tpu.memory_space<vmem>>, %arg4: memref<50x32xf32, #tpu.memory_space<any>>, %arg5: memref<2x16xf32, #tpu.memory_space<vmem>>, %arg6: memref<48x96xf32, #tpu.memory_space<vmem>>, %arg7: memref<32x48xf32, #tpu.memory_space<vmem>>, %arg8: memref<1x96xf32, #tpu.memory_space<vmem>>, %arg9: memref<2x48xf32, #tpu.memory_space<vmem>>, %arg10: memref<32x96xf32, #tpu.memory_space<vmem>>, %arg11: memref<32x48xf32, #tpu.memory_space<vmem>>, %arg12: memref<1x96xf32, #tpu.memory_space<vmem>>, %arg13: memref<2x48xf32, #tpu.memory_space<vmem>>, %arg14: memref<96x32xf32, #tpu.memory_space<vmem>>, %arg15: memref<1x32xf32, #tpu.memory_space<vmem>>, %arg16: memref<32x64xf32, #tpu.memory_space<vmem>>, %arg17: memref<16x64xf32, #tpu.memory_space<vmem>>, %arg18: memref<1x64xf32, #tpu.memory_space<vmem>>, %arg19: memref<16x2xf32, #tpu.memory_space<vmem>>, %arg20: memref<1x2xf32, #tpu.memory_space<vmem>>, %arg21: memref<32x3xf32, #tpu.memory_space<vmem>>, %arg22: memref<1x3xf32, #tpu.memory_space<vmem>>, %arg23: memref<2x2xf32, #tpu.memory_space<vmem>>, %arg24: memref<8x128xf32, #tpu.memory_space<vmem>>, %arg25: memref<16x32xf32, #tpu.memory_space<vmem>>, %arg26: memref<16x!tpu.dma_semaphore, #tpu.memory_space<semaphore_mem>>, %arg27: memref<2x8x32xf32, #tpu.memory_space<vmem>>, %arg28: memref<2x10x32xf32, #tpu.memory_space<vmem>>) attributes {dimension_semantics = [], scalar_prefetch = 0 : i64, scratch_operands = 4 : i64, tpu.core_type = #tpu.core_type<tc>} {
    %cst = arith.constant 0.000000e+00 : f32
    %0 = vector.broadcast %cst : f32 to vector<8x128xf32>
    %c0 = arith.constant 0 : index
    %c0_0 = arith.constant 0 : index
    %1 = vector.load %arg24[%c0, %c0_0] : memref<8x128xf32, #tpu.memory_space<vmem>>, vector<8x128xf32>
    tpu.vector_store %arg24[%c0, %c0_0], %0 {strides = array<i32>} : memref<8x128xf32, #tpu.memory_space<vmem>>, vector<8x128xf32>,
    %c0_1 = arith.constant 0 : index
    %2 = memref.load %arg0[%c0_1] : memref<16xi32, #tpu.memory_space<smem>>
    %c0_i32 = arith.constant 0 : i32
    %c0_i32_2 = arith.constant 0 : i32
    %3 = tpu.memref_slice %arg4[%2, %c0_i32_2] : memref<50x32xf32, #tpu.memory_space<any>> -> memref<1x32xf32, #tpu.memory_space<any>>
    %c0_i32_3 = arith.constant 0 : i32
    %c0_i32_4 = arith.constant 0 : i32
    %4 = tpu.memref_slice %arg25[%c0_i32_3, %c0_i32_4] : memref<16x32xf32, #tpu.memory_space<vmem>> -> memref<1x32xf32, #tpu.memory_space<vmem>>
    %5 = tpu.memref_slice %arg26[%c0_i32] : memref<16x!tpu.dma_semaphore, #tpu.memory_space<semaphore_mem>> -> memref<1x!tpu.dma_semaphore, #tpu.memory_space<semaphore_mem>>
    %6 = tpu.memref_squeeze %5 : memref<1x!tpu.dma_semaphore, #tpu.memory_space<semaphore_mem>> -> memref<!tpu.dma_semaphore, #tpu.memory_space<semaphore_mem>>
    tpu.enqueue_dma source(%3 : memref<1x32xf32, #tpu.memory_space<any>>) target(%4 : memref<1x32xf32, #tpu.memory_space<vmem>>) target_semaphore(%6 : memref<!tpu.dma_semaphore, #tpu.memory_space<semaphore_mem>>)
    %c1 = arith.constant 1 : index
    %7 = memref.load %arg0[%c1] : memref<16xi32, #tpu.memory_space<smem>>
    %c1_i32 = arith.constant 1 : i32
    %c0_i32_5 = arith.constant 0 : i32
    %8 = tpu.memref_slice %arg4[%7, %c0_i32_5] : memref<50x32xf32, #tpu.memory_space<any>> -> memref<1x32xf32, #tpu.memory_space<any>>
    %c1_i32_6 = arith.constant 1 : i32
    %c0_i32_7 = arith.constant 0 : i32
    %9 = tpu.memref_slice %arg25[%c1_i32_6, %c0_i32_7] : memref<16x32xf32, #tpu.memory_space<vmem>> -> memref<1x32xf32, #tpu.memory_space<vmem>>
    %10 = tpu.memref_slice %arg26[%c1_i32] : memref<16x!tpu.dma_semaphore, #tpu.memory_space<semaphore_mem>> -> memref<1x!tpu.dma_semaphore, #tpu.memory_space<semaphore_mem>>
    %11 = tpu.memref_squeeze %10 : memref<1x!tpu.dma_semaphore, #tpu.memory_space<semaphore_mem>> -> memref<!tpu.dma_semaphore, #tpu.memory_space<semaphore_mem>>
    tpu.enqueue_dma source(%8 : memref<1x32xf32, #tpu.memory_space<any>>) target(%9 : memref<1x32xf32, #tpu.memory_space<vmem>>) target_semaphore(%11 : memref<!tpu.dma_semaphore, #tpu.memory_space<semaphore_mem>>)
    %c2 = arith.constant 2 : index
    %12 = memref.load %arg0[%c2] : memref<16xi32, #tpu.memory_space<smem>>
    %c2_i32 = arith.constant 2 : i32
    %c0_i32_8 = arith.constant 0 : i32
    %13 = tpu.memref_slice %arg4[%12, %c0_i32_8] : memref<50x32xf32, #tpu.memory_space<any>> -> memref<1x32xf32, #tpu.memory_space<any>>
    %c2_i32_9 = arith.constant 2 : i32
    %c0_i32_10 = arith.constant 0 : i32
    %14 = tpu.memref_slice %arg25[%c2_i32_9, %c0_i32_10] : memref<16x32xf32, #tpu.memory_space<vmem>> -> memref<1x32xf32, #tpu.memory_space<vmem>>
    %15 = tpu.memref_slice %arg26[%c2_i32] : memref<16x!tpu.dma_semaphore, #tpu.memory_space<semaphore_mem>> -> memref<1x!tpu.dma_semaphore, #tpu.memory_space<semaphore_mem>>
    %16 = tpu.memref_squeeze %15 : memref<1x!tpu.dma_semaphore, #tpu.memory_space<semaphore_mem>> -> memref<!tpu.dma_semaphore, #tpu.memory_space<semaphore_mem>>
    tpu.enqueue_dma source(%13 : memref<1x32xf32, #tpu.memory_space<any>>) target(%14 : memref<1x32xf32, #tpu.memory_space<vmem>>) target_semaphore(%16 : memref<!tpu.dma_semaphore, #tpu.memory_space<semaphore_mem>>)
    %c3 = arith.constant 3 : index
    %17 = memref.load %arg0[%c3] : memref<16xi32, #tpu.memory_space<smem>>
    %c3_i32 = arith.constant 3 : i32
    %c0_i32_11 = arith.constant 0 : i32
    %18 = tpu.memref_slice %arg4[%17, %c0_i32_11] : memref<50x32xf32, #tpu.memory_space<any>> -> memref<1x32xf32, #tpu.memory_space<any>>
    %c3_i32_12 = arith.constant 3 : i32
    %c0_i32_13 = arith.constant 0 : i32
    %19 = tpu.memref_slice %arg25[%c3_i32_12, %c0_i32_13] : memref<16x32xf32, #tpu.memory_space<vmem>> -> memref<1x32xf32, #tpu.memory_space<vmem>>
    %20 = tpu.memref_slice %arg26[%c3_i32] : memref<16x!tpu.dma_semaphore, #tpu.memory_space<semaphore_mem>> -> memref<1x!tpu.dma_semaphore, #tpu.memory_space<semaphore_mem>>
    %21 = tpu.memref_squeeze %20 : memref<1x!tpu.dma_semaphore, #tpu.memory_space<semaphore_mem>> -> memref<!tpu.dma_semaphore, #tpu.memory_space<semaphore_mem>>
    tpu.enqueue_dma source(%18 : memref<1x32xf32, #tpu.memory_space<any>>) target(%19 : memref<1x32xf32, #tpu.memory_space<vmem>>) target_semaphore(%21 : memref<!tpu.dma_semaphore, #tpu.memory_space<semaphore_mem>>)
    %c4 = arith.constant 4 : index
    %22 = memref.load %arg0[%c4] : memref<16xi32, #tpu.memory_space<smem>>
    %c4_i32 = arith.constant 4 : i32
    %c0_i32_14 = arith.constant 0 : i32
    %23 = tpu.memref_slice %arg4[%22, %c0_i32_14] : memref<50x32xf32, #tpu.memory_space<any>> -> memref<1x32xf32, #tpu.memory_space<any>>
    %c4_i32_15 = arith.constant 4 : i32
    %c0_i32_16 = arith.constant 0 : i32
    %24 = tpu.memref_slice %arg25[%c4_i32_15, %c0_i32_16] : memref<16x32xf32, #tpu.memory_space<vmem>> -> memref<1x32xf32, #tpu.memory_space<vmem>>
    %25 = tpu.memref_slice %arg26[%c4_i32] : memref<16x!tpu.dma_semaphore, #tpu.memory_space<semaphore_mem>> -> memref<1x!tpu.dma_semaphore, #tpu.memory_space<semaphore_mem>>
    %26 = tpu.memref_squeeze %25 : memref<1x!tpu.dma_semaphore, #tpu.memory_space<semaphore_mem>> -> memref<!tpu.dma_semaphore, #tpu.memory_space<semaphore_mem>>
    tpu.enqueue_dma source(%23 : memref<1x32xf32, #tpu.memory_space<any>>) target(%24 : memref<1x32xf32, #tpu.memory_space<vmem>>) target_semaphore(%26 : memref<!tpu.dma_semaphore, #tpu.memory_space<semaphore_mem>>)
    %c5 = arith.constant 5 : index
    %27 = memref.load %arg0[%c5] : memref<16xi32, #tpu.memory_space<smem>>
    %c5_i32 = arith.constant 5 : i32
    %c0_i32_17 = arith.constant 0 : i32
    %28 = tpu.memref_slice %arg4[%27, %c0_i32_17] : memref<50x32xf32, #tpu.memory_space<any>> -> memref<1x32xf32, #tpu.memory_space<any>>
    %c5_i32_18 = arith.constant 5 : i32
    %c0_i32_19 = arith.constant 0 : i32
    %29 = tpu.memref_slice %arg25[%c5_i32_18, %c0_i32_19] : memref<16x32xf32, #tpu.memory_space<vmem>> -> memref<1x32xf32, #tpu.memory_space<vmem>>
    %30 = tpu.memref_slice %arg26[%c5_i32] : memref<16x!tpu.dma_semaphore, #tpu.memory_space<semaphore_mem>> -> memref<1x!tpu.dma_semaphore, #tpu.memory_space<semaphore_mem>>
    %31 = tpu.memref_squeeze %30 : memref<1x!tpu.dma_semaphore, #tpu.memory_space<semaphore_mem>> -> memref<!tpu.dma_semaphore, #tpu.memory_space<semaphore_mem>>
    tpu.enqueue_dma source(%28 : memref<1x32xf32, #tpu.memory_space<any>>) target(%29 : memref<1x32xf32, #tpu.memory_space<vmem>>) target_semaphore(%31 : memref<!tpu.dma_semaphore, #tpu.memory_space<semaphore_mem>>)
    %c6 = arith.constant 6 : index
    %32 = memref.load %arg0[%c6] : memref<16xi32, #tpu.memory_space<smem>>
    %c6_i32 = arith.constant 6 : i32
    %c0_i32_20 = arith.constant 0 : i32
    %33 = tpu.memref_slice %arg4[%32, %c0_i32_20] : memref<50x32xf32, #tpu.memory_space<any>> -> memref<1x32xf32, #tpu.memory_space<any>>
    %c6_i32_21 = arith.constant 6 : i32
    %c0_i32_22 = arith.constant 0 : i32
    %34 = tpu.memref_slice %arg25[%c6_i32_21, %c0_i32_22] : memref<16x32xf32, #tpu.memory_space<vmem>> -> memref<1x32xf32, #tpu.memory_space<vmem>>
    %35 = tpu.memref_slice %arg26[%c6_i32] : memref<16x!tpu.dma_semaphore, #tpu.memory_space<semaphore_mem>> -> memref<1x!tpu.dma_semaphore, #tpu.memory_space<semaphore_mem>>
    %36 = tpu.memref_squeeze %35 : memref<1x!tpu.dma_semaphore, #tpu.memory_space<semaphore_mem>> -> memref<!tpu.dma_semaphore, #tpu.memory_space<semaphore_mem>>
    tpu.enqueue_dma source(%33 : memref<1x32xf32, #tpu.memory_space<any>>) target(%34 : memref<1x32xf32, #tpu.memory_space<vmem>>) target_semaphore(%36 : memref<!tpu.dma_semaphore, #tpu.memory_space<semaphore_mem>>)
    %c7 = arith.constant 7 : index
    %37 = memref.load %arg0[%c7] : memref<16xi32, #tpu.memory_space<smem>>
    %c7_i32 = arith.constant 7 : i32
    %c0_i32_23 = arith.constant 0 : i32
    %38 = tpu.memref_slice %arg4[%37, %c0_i32_23] : memref<50x32xf32, #tpu.memory_space<any>> -> memref<1x32xf32, #tpu.memory_space<any>>
    %c7_i32_24 = arith.constant 7 : i32
    %c0_i32_25 = arith.constant 0 : i32
    %39 = tpu.memref_slice %arg25[%c7_i32_24, %c0_i32_25] : memref<16x32xf32, #tpu.memory_space<vmem>> -> memref<1x32xf32, #tpu.memory_space<vmem>>
    %40 = tpu.memref_slice %arg26[%c7_i32] : memref<16x!tpu.dma_semaphore, #tpu.memory_space<semaphore_mem>> -> memref<1x!tpu.dma_semaphore, #tpu.memory_space<semaphore_mem>>
    %41 = tpu.memref_squeeze %40 : memref<1x!tpu.dma_semaphore, #tpu.memory_space<semaphore_mem>> -> memref<!tpu.dma_semaphore, #tpu.memory_space<semaphore_mem>>
    tpu.enqueue_dma source(%38 : memref<1x32xf32, #tpu.memory_space<any>>) target(%39 : memref<1x32xf32, #tpu.memory_space<vmem>>) target_semaphore(%41 : memref<!tpu.dma_semaphore, #tpu.memory_space<semaphore_mem>>)
    %c8 = arith.constant 8 : index
    %42 = memref.load %arg0[%c8] : memref<16xi32, #tpu.memory_space<smem>>
    %c8_i32 = arith.constant 8 : i32
    %c0_i32_26 = arith.constant 0 : i32
    %43 = tpu.memref_slice %arg4[%42, %c0_i32_26] : memref<50x32xf32, #tpu.memory_space<any>> -> memref<1x32xf32, #tpu.memory_space<any>>
    %c8_i32_27 = arith.constant 8 : i32
    %c0_i32_28 = arith.constant 0 : i32
    %44 = tpu.memref_slice %arg25[%c8_i32_27, %c0_i32_28] : memref<16x32xf32, #tpu.memory_space<vmem>> -> memref<1x32xf32, #tpu.memory_space<vmem>>
    %45 = tpu.memref_slice %arg26[%c8_i32] : memref<16x!tpu.dma_semaphore, #tpu.memory_space<semaphore_mem>> -> memref<1x!tpu.dma_semaphore, #tpu.memory_space<semaphore_mem>>
    %46 = tpu.memref_squeeze %45 : memref<1x!tpu.dma_semaphore, #tpu.memory_space<semaphore_mem>> -> memref<!tpu.dma_semaphore, #tpu.memory_space<semaphore_mem>>
    tpu.enqueue_dma source(%43 : memref<1x32xf32, #tpu.memory_space<any>>) target(%44 : memref<1x32xf32, #tpu.memory_space<vmem>>) target_semaphore(%46 : memref<!tpu.dma_semaphore, #tpu.memory_space<semaphore_mem>>)
    %c9 = arith.constant 9 : index
    %47 = memref.load %arg0[%c9] : memref<16xi32, #tpu.memory_space<smem>>
    %c9_i32 = arith.constant 9 : i32
    %c0_i32_29 = arith.constant 0 : i32
    %48 = tpu.memref_slice %arg4[%47, %c0_i32_29] : memref<50x32xf32, #tpu.memory_space<any>> -> memref<1x32xf32, #tpu.memory_space<any>>
    %c9_i32_30 = arith.constant 9 : i32
    %c0_i32_31 = arith.constant 0 : i32
    %49 = tpu.memref_slice %arg25[%c9_i32_30, %c0_i32_31] : memref<16x32xf32, #tpu.memory_space<vmem>> -> memref<1x32xf32, #tpu.memory_space<vmem>>
    %50 = tpu.memref_slice %arg26[%c9_i32] : memref<16x!tpu.dma_semaphore, #tpu.memory_space<semaphore_mem>> -> memref<1x!tpu.dma_semaphore, #tpu.memory_space<semaphore_mem>>
    %51 = tpu.memref_squeeze %50 : memref<1x!tpu.dma_semaphore, #tpu.memory_space<semaphore_mem>> -> memref<!tpu.dma_semaphore, #tpu.memory_space<semaphore_mem>>
    tpu.enqueue_dma source(%48 : memref<1x32xf32, #tpu.memory_space<any>>) target(%49 : memref<1x32xf32, #tpu.memory_space<vmem>>) target_semaphore(%51 : memref<!tpu.dma_semaphore, #tpu.memory_space<semaphore_mem>>)
    %c10 = arith.constant 10 : index
    %52 = memref.load %arg0[%c10] : memref<16xi32, #tpu.memory_space<smem>>
    %c10_i32 = arith.constant 10 : i32
    %c0_i32_32 = arith.constant 0 : i32
    %53 = tpu.memref_slice %arg4[%52, %c0_i32_32] : memref<50x32xf32, #tpu.memory_space<any>> -> memref<1x32xf32, #tpu.memory_space<any>>
    %c10_i32_33 = arith.constant 10 : i32
    %c0_i32_34 = arith.constant 0 : i32
    %54 = tpu.memref_slice %arg25[%c10_i32_33, %c0_i32_34] : memref<16x32xf32, #tpu.memory_space<vmem>> -> memref<1x32xf32, #tpu.memory_space<vmem>>
    %55 = tpu.memref_slice %arg26[%c10_i32] : memref<16x!tpu.dma_semaphore, #tpu.memory_space<semaphore_mem>> -> memref<1x!tpu.dma_semaphore, #tpu.memory_space<semaphore_mem>>
    %56 = tpu.memref_squeeze %55 : memref<1x!tpu.dma_semaphore, #tpu.memory_space<semaphore_mem>> -> memref<!tpu.dma_semaphore, #tpu.memory_space<semaphore_mem>>
    tpu.enqueue_dma source(%53 : memref<1x32xf32, #tpu.memory_space<any>>) target(%54 : memref<1x32xf32, #tpu.memory_space<vmem>>) target_semaphore(%56 : memref<!tpu.dma_semaphore, #tpu.memory_space<semaphore_mem>>)
    %c11 = arith.constant 11 : index
    %57 = memref.load %arg0[%c11] : memref<16xi32, #tpu.memory_space<smem>>
    %c11_i32 = arith.constant 11 : i32
    %c0_i32_35 = arith.constant 0 : i32
    %58 = tpu.memref_slice %arg4[%57, %c0_i32_35] : memref<50x32xf32, #tpu.memory_space<any>> -> memref<1x32xf32, #tpu.memory_space<any>>
    %c11_i32_36 = arith.constant 11 : i32
    %c0_i32_37 = arith.constant 0 : i32
    %59 = tpu.memref_slice %arg25[%c11_i32_36, %c0_i32_37] : memref<16x32xf32, #tpu.memory_space<vmem>> -> memref<1x32xf32, #tpu.memory_space<vmem>>
    %60 = tpu.memref_slice %arg26[%c11_i32] : memref<16x!tpu.dma_semaphore, #tpu.memory_space<semaphore_mem>> -> memref<1x!tpu.dma_semaphore, #tpu.memory_space<semaphore_mem>>
    %61 = tpu.memref_squeeze %60 : memref<1x!tpu.dma_semaphore, #tpu.memory_space<semaphore_mem>> -> memref<!tpu.dma_semaphore, #tpu.memory_space<semaphore_mem>>
    tpu.enqueue_dma source(%58 : memref<1x32xf32, #tpu.memory_space<any>>) target(%59 : memref<1x32xf32, #tpu.memory_space<vmem>>) target_semaphore(%61 : memref<!tpu.dma_semaphore, #tpu.memory_space<semaphore_mem>>)
    %c12 = arith.constant 12 : index
    %62 = memref.load %arg0[%c12] : memref<16xi32, #tpu.memory_space<smem>>
    %c12_i32 = arith.constant 12 : i32
    %c0_i32_38 = arith.constant 0 : i32
    %63 = tpu.memref_slice %arg4[%62, %c0_i32_38] : memref<50x32xf32, #tpu.memory_space<any>> -> memref<1x32xf32, #tpu.memory_space<any>>
    %c12_i32_39 = arith.constant 12 : i32
    %c0_i32_40 = arith.constant 0 : i32
    %64 = tpu.memref_slice %arg25[%c12_i32_39, %c0_i32_40] : memref<16x32xf32, #tpu.memory_space<vmem>> -> memref<1x32xf32, #tpu.memory_space<vmem>>
    %65 = tpu.memref_slice %arg26[%c12_i32] : memref<16x!tpu.dma_semaphore, #tpu.memory_space<semaphore_mem>> -> memref<1x!tpu.dma_semaphore, #tpu.memory_space<semaphore_mem>>
    %66 = tpu.memref_squeeze %65 : memref<1x!tpu.dma_semaphore, #tpu.memory_space<semaphore_mem>> -> memref<!tpu.dma_semaphore, #tpu.memory_space<semaphore_mem>>
    tpu.enqueue_dma source(%63 : memref<1x32xf32, #tpu.memory_space<any>>) target(%64 : memref<1x32xf32, #tpu.memory_space<vmem>>) target_semaphore(%66 : memref<!tpu.dma_semaphore, #tpu.memory_space<semaphore_mem>>)
    %c13 = arith.constant 13 : index
    %67 = memref.load %arg0[%c13] : memref<16xi32, #tpu.memory_space<smem>>
    %c13_i32 = arith.constant 13 : i32
    %c0_i32_41 = arith.constant 0 : i32
    %68 = tpu.memref_slice %arg4[%67, %c0_i32_41] : memref<50x32xf32, #tpu.memory_space<any>> -> memref<1x32xf32, #tpu.memory_space<any>>
    %c13_i32_42 = arith.constant 13 : i32
    %c0_i32_43 = arith.constant 0 : i32
    %69 = tpu.memref_slice %arg25[%c13_i32_42, %c0_i32_43] : memref<16x32xf32, #tpu.memory_space<vmem>> -> memref<1x32xf32, #tpu.memory_space<vmem>>
    %70 = tpu.memref_slice %arg26[%c13_i32] : memref<16x!tpu.dma_semaphore, #tpu.memory_space<semaphore_mem>> -> memref<1x!tpu.dma_semaphore, #tpu.memory_space<semaphore_mem>>
    %71 = tpu.memref_squeeze %70 : memref<1x!tpu.dma_semaphore, #tpu.memory_space<semaphore_mem>> -> memref<!tpu.dma_semaphore, #tpu.memory_space<semaphore_mem>>
    tpu.enqueue_dma source(%68 : memref<1x32xf32, #tpu.memory_space<any>>) target(%69 : memref<1x32xf32, #tpu.memory_space<vmem>>) target_semaphore(%71 : memref<!tpu.dma_semaphore, #tpu.memory_space<semaphore_mem>>)
    %c14 = arith.constant 14 : index
    %72 = memref.load %arg0[%c14] : memref<16xi32, #tpu.memory_space<smem>>
    %c14_i32 = arith.constant 14 : i32
    %c0_i32_44 = arith.constant 0 : i32
    %73 = tpu.memref_slice %arg4[%72, %c0_i32_44] : memref<50x32xf32, #tpu.memory_space<any>> -> memref<1x32xf32, #tpu.memory_space<any>>
    %c14_i32_45 = arith.constant 14 : i32
    %c0_i32_46 = arith.constant 0 : i32
    %74 = tpu.memref_slice %arg25[%c14_i32_45, %c0_i32_46] : memref<16x32xf32, #tpu.memory_space<vmem>> -> memref<1x32xf32, #tpu.memory_space<vmem>>
    %75 = tpu.memref_slice %arg26[%c14_i32] : memref<16x!tpu.dma_semaphore, #tpu.memory_space<semaphore_mem>> -> memref<1x!tpu.dma_semaphore, #tpu.memory_space<semaphore_mem>>
    %76 = tpu.memref_squeeze %75 : memref<1x!tpu.dma_semaphore, #tpu.memory_space<semaphore_mem>> -> memref<!tpu.dma_semaphore, #tpu.memory_space<semaphore_mem>>
    tpu.enqueue_dma source(%73 : memref<1x32xf32, #tpu.memory_space<any>>) target(%74 : memref<1x32xf32, #tpu.memory_space<vmem>>) target_semaphore(%76 : memref<!tpu.dma_semaphore, #tpu.memory_space<semaphore_mem>>)
    %c15 = arith.constant 15 : index
    %77 = memref.load %arg0[%c15] : memref<16xi32, #tpu.memory_space<smem>>
    %c15_i32 = arith.constant 15 : i32
    %c0_i32_47 = arith.constant 0 : i32
    %78 = tpu.memref_slice %arg4[%77, %c0_i32_47] : memref<50x32xf32, #tpu.memory_space<any>> -> memref<1x32xf32, #tpu.memory_space<any>>
    %c15_i32_48 = arith.constant 15 : i32
    %c0_i32_49 = arith.constant 0 : i32
    %79 = tpu.memref_slice %arg25[%c15_i32_48, %c0_i32_49] : memref<16x32xf32, #tpu.memory_space<vmem>> -> memref<1x32xf32, #tpu.memory_space<vmem>>
    %80 = tpu.memref_slice %arg26[%c15_i32] : memref<16x!tpu.dma_semaphore, #tpu.memory_space<semaphore_mem>> -> memref<1x!tpu.dma_semaphore, #tpu.memory_space<semaphore_mem>>
    %81 = tpu.memref_squeeze %80 : memref<1x!tpu.dma_semaphore, #tpu.memory_space<semaphore_mem>> -> memref<!tpu.dma_semaphore, #tpu.memory_space<semaphore_mem>>
    tpu.enqueue_dma source(%78 : memref<1x32xf32, #tpu.memory_space<any>>) target(%79 : memref<1x32xf32, #tpu.memory_space<vmem>>) target_semaphore(%81 : memref<!tpu.dma_semaphore, #tpu.memory_space<semaphore_mem>>)
    %c0_50 = arith.constant 0 : index
    %c0_51 = arith.constant 0 : index
    %82 = vector.load %arg3[%c0_50, %c0_51] : memref<2x1xf32, #tpu.memory_space<vmem>>, vector<2x1xf32>
    %83 = tpu.iota {dimensions = array<i32: 1>} : vector<2x8xi32>
    %84 = arith.sitofp %83 : vector<2x8xi32> to vector<2x8xf32>
    %85 = vector.broadcast %82 : vector<2x1xf32> to vector<2x8xf32>
    %86 = arith.cmpf olt, %84, %85 : vector<2x8xf32>
    %87 = arith.extui %86 : vector<2x8xi1> to vector<2x8xi32>
    %88 = arith.sitofp %87 : vector<2x8xi32> to vector<2x8xf32>
    %c0_52 = arith.constant 0 : index
    %c0_53 = arith.constant 0 : index
    %89 = vector.load %arg1[%c0_52, %c0_53] : memref<2x8xi32, #tpu.memory_space<vmem>>, vector<2x8xi32>
    %90 = arith.sitofp %89 : vector<2x8xi32> to vector<2x8xf32>
    %91 = vector.shape_cast %90 : vector<2x8xf32> to vector<2x8x1xf32>
    %c0_54 = arith.constant 0 : index
    %c0_55 = arith.constant 0 : index
    %92 = vector.load %arg5[%c0_54, %c0_55] : memref<2x16xf32, #tpu.memory_space<vmem>>, vector<2x16xf32>
    %93 = vector.extract_strided_slice %92 {offsets = [1, 0], sizes = [1, 16], strides = [1, 1]} : vector<2x16xf32> to vector<1x16xf32>
    %94 = vector.shape_cast %93 : vector<1x16xf32> to vector<1x1x16xf32>
    %95 = vector.broadcast %91 : vector<2x8x1xf32> to vector<2x8x16xf32>
    %96 = vector.broadcast %94 : vector<1x1x16xf32> to vector<2x8x16xf32>
    %97 = arith.mulf %95, %96 : vector<2x8x16xf32>
    %cst_56 = arith.constant 1.000000e+00 : f32
    %98 = vector.broadcast %cst_56 : f32 to vector<2x8x1xf32>
    %99 = arith.subf %98, %91 : vector<2x8x1xf32>
    %100 = vector.extract_strided_slice %92 {offsets = [0, 0], sizes = [1, 16], strides = [1, 1]} : vector<2x16xf32> to vector<1x16xf32>
    %101 = vector.shape_cast %100 : vector<1x16xf32> to vector<1x1x16xf32>
    %102 = vector.broadcast %99 : vector<2x8x1xf32> to vector<2x8x16xf32>
    %103 = vector.broadcast %101 : vector<1x1x16xf32> to vector<2x8x16xf32>
    %104 = arith.mulf %102, %103 : vector<2x8x16xf32>
    %105 = arith.addf %97, %104 : vector<2x8x16xf32>
    %c0_i32_57 = arith.constant 0 : i32
    %c0_i32_58 = arith.constant 0 : i32
    %106 = tpu.memref_slice %arg4[%2, %c0_i32_58] : memref<50x32xf32, #tpu.memory_space<any>> -> memref<1x32xf32, #tpu.memory_space<any>>
    %c0_i32_59 = arith.constant 0 : i32
    %c0_i32_60 = arith.constant 0 : i32
    %107 = tpu.memref_slice %arg25[%c0_i32_59, %c0_i32_60] : memref<16x32xf32, #tpu.memory_space<vmem>> -> memref<1x32xf32, #tpu.memory_space<vmem>>
    %108 = tpu.memref_slice %arg26[%c0_i32_57] : memref<16x!tpu.dma_semaphore, #tpu.memory_space<semaphore_mem>> -> memref<1x!tpu.dma_semaphore, #tpu.memory_space<semaphore_mem>>
    %109 = tpu.memref_squeeze %108 : memref<1x!tpu.dma_semaphore, #tpu.memory_space<semaphore_mem>> -> memref<!tpu.dma_semaphore, #tpu.memory_space<semaphore_mem>>
    tpu.wait_dma2 semaphore(%109 : memref<!tpu.dma_semaphore, #tpu.memory_space<semaphore_mem>>) src(%106 : memref<1x32xf32, #tpu.memory_space<any>>) dst(%107 : memref<1x32xf32, #tpu.memory_space<vmem>>)
    %c1_i32_61 = arith.constant 1 : i32
    %c0_i32_62 = arith.constant 0 : i32
    %110 = tpu.memref_slice %arg4[%7, %c0_i32_62] : memref<50x32xf32, #tpu.memory_space<any>> -> memref<1x32xf32, #tpu.memory_space<any>>
    %c1_i32_63 = arith.constant 1 : i32
    %c0_i32_64 = arith.constant 0 : i32
    %111 = tpu.memref_slice %arg25[%c1_i32_63, %c0_i32_64] : memref<16x32xf32, #tpu.memory_space<vmem>> -> memref<1x32xf32, #tpu.memory_space<vmem>>
    %112 = tpu.memref_slice %arg26[%c1_i32_61] : memref<16x!tpu.dma_semaphore, #tpu.memory_space<semaphore_mem>> -> memref<1x!tpu.dma_semaphore, #tpu.memory_space<semaphore_mem>>
    %113 = tpu.memref_squeeze %112 : memref<1x!tpu.dma_semaphore, #tpu.memory_space<semaphore_mem>> -> memref<!tpu.dma_semaphore, #tpu.memory_space<semaphore_mem>>
    tpu.wait_dma2 semaphore(%113 : memref<!tpu.dma_semaphore, #tpu.memory_space<semaphore_mem>>) src(%110 : memref<1x32xf32, #tpu.memory_space<any>>) dst(%111 : memref<1x32xf32, #tpu.memory_space<vmem>>)
    %c2_i32_65 = arith.constant 2 : i32
    %c0_i32_66 = arith.constant 0 : i32
    %114 = tpu.memref_slice %arg4[%12, %c0_i32_66] : memref<50x32xf32, #tpu.memory_space<any>> -> memref<1x32xf32, #tpu.memory_space<any>>
    %c2_i32_67 = arith.constant 2 : i32
    %c0_i32_68 = arith.constant 0 : i32
    %115 = tpu.memref_slice %arg25[%c2_i32_67, %c0_i32_68] : memref<16x32xf32, #tpu.memory_space<vmem>> -> memref<1x32xf32, #tpu.memory_space<vmem>>
    %116 = tpu.memref_slice %arg26[%c2_i32_65] : memref<16x!tpu.dma_semaphore, #tpu.memory_space<semaphore_mem>> -> memref<1x!tpu.dma_semaphore, #tpu.memory_space<semaphore_mem>>
    %117 = tpu.memref_squeeze %116 : memref<1x!tpu.dma_semaphore, #tpu.memory_space<semaphore_mem>> -> memref<!tpu.dma_semaphore, #tpu.memory_space<semaphore_mem>>
    tpu.wait_dma2 semaphore(%117 : memref<!tpu.dma_semaphore, #tpu.memory_space<semaphore_mem>>) src(%114 : memref<1x32xf32, #tpu.memory_space<any>>) dst(%115 : memref<1x32xf32, #tpu.memory_space<vmem>>)
    %c3_i32_69 = arith.constant 3 : i32
    %c0_i32_70 = arith.constant 0 : i32
    %118 = tpu.memref_slice %arg4[%17, %c0_i32_70] : memref<50x32xf32, #tpu.memory_space<any>> -> memref<1x32xf32, #tpu.memory_space<any>>
    %c3_i32_71 = arith.constant 3 : i32
    %c0_i32_72 = arith.constant 0 : i32
    %119 = tpu.memref_slice %arg25[%c3_i32_71, %c0_i32_72] : memref<16x32xf32, #tpu.memory_space<vmem>> -> memref<1x32xf32, #tpu.memory_space<vmem>>
    %120 = tpu.memref_slice %arg26[%c3_i32_69] : memref<16x!tpu.dma_semaphore, #tpu.memory_space<semaphore_mem>> -> memref<1x!tpu.dma_semaphore, #tpu.memory_space<semaphore_mem>>
    %121 = tpu.memref_squeeze %120 : memref<1x!tpu.dma_semaphore, #tpu.memory_space<semaphore_mem>> -> memref<!tpu.dma_semaphore, #tpu.memory_space<semaphore_mem>>
    tpu.wait_dma2 semaphore(%121 : memref<!tpu.dma_semaphore, #tpu.memory_space<semaphore_mem>>) src(%118 : memref<1x32xf32, #tpu.memory_space<any>>) dst(%119 : memref<1x32xf32, #tpu.memory_space<vmem>>)
    %c4_i32_73 = arith.constant 4 : i32
    %c0_i32_74 = arith.constant 0 : i32
    %122 = tpu.memref_slice %arg4[%22, %c0_i32_74] : memref<50x32xf32, #tpu.memory_space<any>> -> memref<1x32xf32, #tpu.memory_space<any>>
    %c4_i32_75 = arith.constant 4 : i32
    %c0_i32_76 = arith.constant 0 : i32
    %123 = tpu.memref_slice %arg25[%c4_i32_75, %c0_i32_76] : memref<16x32xf32, #tpu.memory_space<vmem>> -> memref<1x32xf32, #tpu.memory_space<vmem>>
    %124 = tpu.memref_slice %arg26[%c4_i32_73] : memref<16x!tpu.dma_semaphore, #tpu.memory_space<semaphore_mem>> -> memref<1x!tpu.dma_semaphore, #tpu.memory_space<semaphore_mem>>
    %125 = tpu.memref_squeeze %124 : memref<1x!tpu.dma_semaphore, #tpu.memory_space<semaphore_mem>> -> memref<!tpu.dma_semaphore, #tpu.memory_space<semaphore_mem>>
    tpu.wait_dma2 semaphore(%125 : memref<!tpu.dma_semaphore, #tpu.memory_space<semaphore_mem>>) src(%122 : memref<1x32xf32, #tpu.memory_space<any>>) dst(%123 : memref<1x32xf32, #tpu.memory_space<vmem>>)
    %c5_i32_77 = arith.constant 5 : i32
    %c0_i32_78 = arith.constant 0 : i32
    %126 = tpu.memref_slice %arg4[%27, %c0_i32_78] : memref<50x32xf32, #tpu.memory_space<any>> -> memref<1x32xf32, #tpu.memory_space<any>>
    %c5_i32_79 = arith.constant 5 : i32
    %c0_i32_80 = arith.constant 0 : i32
    %127 = tpu.memref_slice %arg25[%c5_i32_79, %c0_i32_80] : memref<16x32xf32, #tpu.memory_space<vmem>> -> memref<1x32xf32, #tpu.memory_space<vmem>>
    %128 = tpu.memref_slice %arg26[%c5_i32_77] : memref<16x!tpu.dma_semaphore, #tpu.memory_space<semaphore_mem>> -> memref<1x!tpu.dma_semaphore, #tpu.memory_space<semaphore_mem>>
    %129 = tpu.memref_squeeze %128 : memref<1x!tpu.dma_semaphore, #tpu.memory_space<semaphore_mem>> -> memref<!tpu.dma_semaphore, #tpu.memory_space<semaphore_mem>>
    tpu.wait_dma2 semaphore(%129 : memref<!tpu.dma_semaphore, #tpu.memory_space<semaphore_mem>>) src(%126 : memref<1x32xf32, #tpu.memory_space<any>>) dst(%127 : memref<1x32xf32, #tpu.memory_space<vmem>>)
    %c6_i32_81 = arith.constant 6 : i32
    %c0_i32_82 = arith.constant 0 : i32
    %130 = tpu.memref_slice %arg4[%32, %c0_i32_82] : memref<50x32xf32, #tpu.memory_space<any>> -> memref<1x32xf32, #tpu.memory_space<any>>
    %c6_i32_83 = arith.constant 6 : i32
    %c0_i32_84 = arith.constant 0 : i32
    %131 = tpu.memref_slice %arg25[%c6_i32_83, %c0_i32_84] : memref<16x32xf32, #tpu.memory_space<vmem>> -> memref<1x32xf32, #tpu.memory_space<vmem>>
    %132 = tpu.memref_slice %arg26[%c6_i32_81] : memref<16x!tpu.dma_semaphore, #tpu.memory_space<semaphore_mem>> -> memref<1x!tpu.dma_semaphore, #tpu.memory_space<semaphore_mem>>
    %133 = tpu.memref_squeeze %132 : memref<1x!tpu.dma_semaphore, #tpu.memory_space<semaphore_mem>> -> memref<!tpu.dma_semaphore, #tpu.memory_space<semaphore_mem>>
    tpu.wait_dma2 semaphore(%133 : memref<!tpu.dma_semaphore, #tpu.memory_space<semaphore_mem>>) src(%130 : memref<1x32xf32, #tpu.memory_space<any>>) dst(%131 : memref<1x32xf32, #tpu.memory_space<vmem>>)
    %c7_i32_85 = arith.constant 7 : i32
    %c0_i32_86 = arith.constant 0 : i32
    %134 = tpu.memref_slice %arg4[%37, %c0_i32_86] : memref<50x32xf32, #tpu.memory_space<any>> -> memref<1x32xf32, #tpu.memory_space<any>>
    %c7_i32_87 = arith.constant 7 : i32
    %c0_i32_88 = arith.constant 0 : i32
    %135 = tpu.memref_slice %arg25[%c7_i32_87, %c0_i32_88] : memref<16x32xf32, #tpu.memory_space<vmem>> -> memref<1x32xf32, #tpu.memory_space<vmem>>
    %136 = tpu.memref_slice %arg26[%c7_i32_85] : memref<16x!tpu.dma_semaphore, #tpu.memory_space<semaphore_mem>> -> memref<1x!tpu.dma_semaphore, #tpu.memory_space<semaphore_mem>>
    %137 = tpu.memref_squeeze %136 : memref<1x!tpu.dma_semaphore, #tpu.memory_space<semaphore_mem>> -> memref<!tpu.dma_semaphore, #tpu.memory_space<semaphore_mem>>
    tpu.wait_dma2 semaphore(%137 : memref<!tpu.dma_semaphore, #tpu.memory_space<semaphore_mem>>) src(%134 : memref<1x32xf32, #tpu.memory_space<any>>) dst(%135 : memref<1x32xf32, #tpu.memory_space<vmem>>)
    %c8_i32_89 = arith.constant 8 : i32
    %c0_i32_90 = arith.constant 0 : i32
    %138 = tpu.memref_slice %arg4[%42, %c0_i32_90] : memref<50x32xf32, #tpu.memory_space<any>> -> memref<1x32xf32, #tpu.memory_space<any>>
    %c8_i32_91 = arith.constant 8 : i32
    %c0_i32_92 = arith.constant 0 : i32
    %139 = tpu.memref_slice %arg25[%c8_i32_91, %c0_i32_92] : memref<16x32xf32, #tpu.memory_space<vmem>> -> memref<1x32xf32, #tpu.memory_space<vmem>>
    %140 = tpu.memref_slice %arg26[%c8_i32_89] : memref<16x!tpu.dma_semaphore, #tpu.memory_space<semaphore_mem>> -> memref<1x!tpu.dma_semaphore, #tpu.memory_space<semaphore_mem>>
    %141 = tpu.memref_squeeze %140 : memref<1x!tpu.dma_semaphore, #tpu.memory_space<semaphore_mem>> -> memref<!tpu.dma_semaphore, #tpu.memory_space<semaphore_mem>>
    tpu.wait_dma2 semaphore(%141 : memref<!tpu.dma_semaphore, #tpu.memory_space<semaphore_mem>>) src(%138 : memref<1x32xf32, #tpu.memory_space<any>>) dst(%139 : memref<1x32xf32, #tpu.memory_space<vmem>>)
    %c9_i32_93 = arith.constant 9 : i32
    %c0_i32_94 = arith.constant 0 : i32
    %142 = tpu.memref_slice %arg4[%47, %c0_i32_94] : memref<50x32xf32, #tpu.memory_space<any>> -> memref<1x32xf32, #tpu.memory_space<any>>
    %c9_i32_95 = arith.constant 9 : i32
    %c0_i32_96 = arith.constant 0 : i32
    %143 = tpu.memref_slice %arg25[%c9_i32_95, %c0_i32_96] : memref<16x32xf32, #tpu.memory_space<vmem>> -> memref<1x32xf32, #tpu.memory_space<vmem>>
    %144 = tpu.memref_slice %arg26[%c9_i32_93] : memref<16x!tpu.dma_semaphore, #tpu.memory_space<semaphore_mem>> -> memref<1x!tpu.dma_semaphore, #tpu.memory_space<semaphore_mem>>
    %145 = tpu.memref_squeeze %144 : memref<1x!tpu.dma_semaphore, #tpu.memory_space<semaphore_mem>> -> memref<!tpu.dma_semaphore, #tpu.memory_space<semaphore_mem>>
    tpu.wait_dma2 semaphore(%145 : memref<!tpu.dma_semaphore, #tpu.memory_space<semaphore_mem>>) src(%142 : memref<1x32xf32, #tpu.memory_space<any>>) dst(%143 : memref<1x32xf32, #tpu.memory_space<vmem>>)
    %c10_i32_97 = arith.constant 10 : i32
    %c0_i32_98 = arith.constant 0 : i32
    %146 = tpu.memref_slice %arg4[%52, %c0_i32_98] : memref<50x32xf32, #tpu.memory_space<any>> -> memref<1x32xf32, #tpu.memory_space<any>>
    %c10_i32_99 = arith.constant 10 : i32
    %c0_i32_100 = arith.constant 0 : i32
    %147 = tpu.memref_slice %arg25[%c10_i32_99, %c0_i32_100] : memref<16x32xf32, #tpu.memory_space<vmem>> -> memref<1x32xf32, #tpu.memory_space<vmem>>
    %148 = tpu.memref_slice %arg26[%c10_i32_97] : memref<16x!tpu.dma_semaphore, #tpu.memory_space<semaphore_mem>> -> memref<1x!tpu.dma_semaphore, #tpu.memory_space<semaphore_mem>>
    %149 = tpu.memref_squeeze %148 : memref<1x!tpu.dma_semaphore, #tpu.memory_space<semaphore_mem>> -> memref<!tpu.dma_semaphore, #tpu.memory_space<semaphore_mem>>
    tpu.wait_dma2 semaphore(%149 : memref<!tpu.dma_semaphore, #tpu.memory_space<semaphore_mem>>) src(%146 : memref<1x32xf32, #tpu.memory_space<any>>) dst(%147 : memref<1x32xf32, #tpu.memory_space<vmem>>)
    %c11_i32_101 = arith.constant 11 : i32
    %c0_i32_102 = arith.constant 0 : i32
    %150 = tpu.memref_slice %arg4[%57, %c0_i32_102] : memref<50x32xf32, #tpu.memory_space<any>> -> memref<1x32xf32, #tpu.memory_space<any>>
    %c11_i32_103 = arith.constant 11 : i32
    %c0_i32_104 = arith.constant 0 : i32
    %151 = tpu.memref_slice %arg25[%c11_i32_103, %c0_i32_104] : memref<16x32xf32, #tpu.memory_space<vmem>> -> memref<1x32xf32, #tpu.memory_space<vmem>>
    %152 = tpu.memref_slice %arg26[%c11_i32_101] : memref<16x!tpu.dma_semaphore, #tpu.memory_space<semaphore_mem>> -> memref<1x!tpu.dma_semaphore, #tpu.memory_space<semaphore_mem>>
    %153 = tpu.memref_squeeze %152 : memref<1x!tpu.dma_semaphore, #tpu.memory_space<semaphore_mem>> -> memref<!tpu.dma_semaphore, #tpu.memory_space<semaphore_mem>>
    tpu.wait_dma2 semaphore(%153 : memref<!tpu.dma_semaphore, #tpu.memory_space<semaphore_mem>>) src(%150 : memref<1x32xf32, #tpu.memory_space<any>>) dst(%151 : memref<1x32xf32, #tpu.memory_space<vmem>>)
    %c12_i32_105 = arith.constant 12 : i32
    %c0_i32_106 = arith.constant 0 : i32
    %154 = tpu.memref_slice %arg4[%62, %c0_i32_106] : memref<50x32xf32, #tpu.memory_space<any>> -> memref<1x32xf32, #tpu.memory_space<any>>
    %c12_i32_107 = arith.constant 12 : i32
    %c0_i32_108 = arith.constant 0 : i32
    %155 = tpu.memref_slice %arg25[%c12_i32_107, %c0_i32_108] : memref<16x32xf32, #tpu.memory_space<vmem>> -> memref<1x32xf32, #tpu.memory_space<vmem>>
    %156 = tpu.memref_slice %arg26[%c12_i32_105] : memref<16x!tpu.dma_semaphore, #tpu.memory_space<semaphore_mem>> -> memref<1x!tpu.dma_semaphore, #tpu.memory_space<semaphore_mem>>
    %157 = tpu.memref_squeeze %156 : memref<1x!tpu.dma_semaphore, #tpu.memory_space<semaphore_mem>> -> memref<!tpu.dma_semaphore, #tpu.memory_space<semaphore_mem>>
    tpu.wait_dma2 semaphore(%157 : memref<!tpu.dma_semaphore, #tpu.memory_space<semaphore_mem>>) src(%154 : memref<1x32xf32, #tpu.memory_space<any>>) dst(%155 : memref<1x32xf32, #tpu.memory_space<vmem>>)
    %c13_i32_109 = arith.constant 13 : i32
    %c0_i32_110 = arith.constant 0 : i32
    %158 = tpu.memref_slice %arg4[%67, %c0_i32_110] : memref<50x32xf32, #tpu.memory_space<any>> -> memref<1x32xf32, #tpu.memory_space<any>>
    %c13_i32_111 = arith.constant 13 : i32
    %c0_i32_112 = arith.constant 0 : i32
    %159 = tpu.memref_slice %arg25[%c13_i32_111, %c0_i32_112] : memref<16x32xf32, #tpu.memory_space<vmem>> -> memref<1x32xf32, #tpu.memory_space<vmem>>
    %160 = tpu.memref_slice %arg26[%c13_i32_109] : memref<16x!tpu.dma_semaphore, #tpu.memory_space<semaphore_mem>> -> memref<1x!tpu.dma_semaphore, #tpu.memory_space<semaphore_mem>>
    %161 = tpu.memref_squeeze %160 : memref<1x!tpu.dma_semaphore, #tpu.memory_space<semaphore_mem>> -> memref<!tpu.dma_semaphore, #tpu.memory_space<semaphore_mem>>
    tpu.wait_dma2 semaphore(%161 : memref<!tpu.dma_semaphore, #tpu.memory_space<semaphore_mem>>) src(%158 : memref<1x32xf32, #tpu.memory_space<any>>) dst(%159 : memref<1x32xf32, #tpu.memory_space<vmem>>)
    %c14_i32_113 = arith.constant 14 : i32
    %c0_i32_114 = arith.constant 0 : i32
    %162 = tpu.memref_slice %arg4[%72, %c0_i32_114] : memref<50x32xf32, #tpu.memory_space<any>> -> memref<1x32xf32, #tpu.memory_space<any>>
    %c14_i32_115 = arith.constant 14 : i32
    %c0_i32_116 = arith.constant 0 : i32
    %163 = tpu.memref_slice %arg25[%c14_i32_115, %c0_i32_116] : memref<16x32xf32, #tpu.memory_space<vmem>> -> memref<1x32xf32, #tpu.memory_space<vmem>>
    %164 = tpu.memref_slice %arg26[%c14_i32_113] : memref<16x!tpu.dma_semaphore, #tpu.memory_space<semaphore_mem>> -> memref<1x!tpu.dma_semaphore, #tpu.memory_space<semaphore_mem>>
    %165 = tpu.memref_squeeze %164 : memref<1x!tpu.dma_semaphore, #tpu.memory_space<semaphore_mem>> -> memref<!tpu.dma_semaphore, #tpu.memory_space<semaphore_mem>>
    tpu.wait_dma2 semaphore(%165 : memref<!tpu.dma_semaphore, #tpu.memory_space<semaphore_mem>>) src(%162 : memref<1x32xf32, #tpu.memory_space<any>>) dst(%163 : memref<1x32xf32, #tpu.memory_space<vmem>>)
    %c15_i32_117 = arith.constant 15 : i32
    %c0_i32_118 = arith.constant 0 : i32
    %166 = tpu.memref_slice %arg4[%77, %c0_i32_118] : memref<50x32xf32, #tpu.memory_space<any>> -> memref<1x32xf32, #tpu.memory_space<any>>
    %c15_i32_119 = arith.constant 15 : i32
    %c0_i32_120 = arith.constant 0 : i32
    %167 = tpu.memref_slice %arg25[%c15_i32_119, %c0_i32_120] : memref<16x32xf32, #tpu.memory_space<vmem>> -> memref<1x32xf32, #tpu.memory_space<vmem>>
    %168 = tpu.memref_slice %arg26[%c15_i32_117] : memref<16x!tpu.dma_semaphore, #tpu.memory_space<semaphore_mem>> -> memref<1x!tpu.dma_semaphore, #tpu.memory_space<semaphore_mem>>
    %169 = tpu.memref_squeeze %168 : memref<1x!tpu.dma_semaphore, #tpu.memory_space<semaphore_mem>> -> memref<!tpu.dma_semaphore, #tpu.memory_space<semaphore_mem>>
    tpu.wait_dma2 semaphore(%169 : memref<!tpu.dma_semaphore, #tpu.memory_space<semaphore_mem>>) src(%166 : memref<1x32xf32, #tpu.memory_space<any>>) dst(%167 : memref<1x32xf32, #tpu.memory_space<vmem>>)
    %c0_121 = arith.constant 0 : index
    %c0_122 = arith.constant 0 : index
    %170 = vector.load %arg25[%c0_121, %c0_122] : memref<16x32xf32, #tpu.memory_space<vmem>>, vector<16x32xf32>
    %171 = vector.shape_cast %170 : vector<16x32xf32> to vector<2x8x32xf32>
    %172 = tpu.concatenate %171, %105 in 2 : vector<2x8x32xf32>, vector<2x8x16xf32> -> vector<2x8x48xf32>
    %173 = tpu.iota {dimensions = array<i32: 0>} : vector<4x1xi32>
    %c2_i32_123 = arith.constant 2 : i32
    %174 = vector.broadcast %c2_i32_123 : i32 to vector<4x1xi32>
    %175 = arith.cmpi slt, %173, %174 : vector<4x1xi32>
    %176 = arith.extui %175 : vector<4x1xi1> to vector<4x1xi32>
    %177 = arith.sitofp %176 : vector<4x1xi32> to vector<4x1xf32>
    %cst_124 = arith.constant 0.000000e+00 : f32
    %178 = vector.broadcast %cst_124 : f32 to vector<2x10x32xf32>
    %c0_125 = arith.constant 0 : index
    %c0_126 = arith.constant 0 : index
    %c0_127 = arith.constant 0 : index
    %179 = vector.load %arg28[%c0_125, %c0_126, %c0_127] : memref<2x10x32xf32, #tpu.memory_space<vmem>>, vector<2x10x32xf32>
    tpu.vector_store %arg28[%c0_125, %c0_126, %c0_127], %178 {strides = array<i32>} : memref<2x10x32xf32, #tpu.memory_space<vmem>>, vector<2x10x32xf32>,
    %180 = vector.shape_cast %172 : vector<2x8x48xf32> to vector<16x48xf32>
    %c0_128 = arith.constant 0 : index
    %c0_129 = arith.constant 0 : index
    %181 = vector.load %arg6[%c0_128, %c0_129] : memref<48x96xf32, #tpu.memory_space<vmem>>, vector<48x96xf32>
    %cst_130 = arith.constant dense<0.000000e+00> : vector<16x96xf32>
    %182 = tpu.matmul %180, %181, %cst_130 {dimension_numbers = #tpu.dot_dimension_numbers<[1], [0], [0], [1], [0, 0, 1, 1], [], []>} : vector<16x48xf32>, vector<48x96xf32>, vector<16x96xf32> -> vector<16x96xf32>
    %c0_131 = arith.constant 0 : index
    %c0_132 = arith.constant 0 : index
    %183 = vector.load %arg8[%c0_131, %c0_132] : memref<1x96xf32, #tpu.memory_space<vmem>>, vector<1x96xf32>
    %184 = vector.broadcast %183 : vector<1x96xf32> to vector<16x96xf32>
    %185 = arith.addf %182, %184 : vector<16x96xf32>
    %186 = vector.shape_cast %185 : vector<16x96xf32> to vector<2x8x96xf32>
    %c0_133 = arith.constant 0 : index
    %c0_134 = arith.constant 0 : index
    %187 = vector.load %arg7[%c0_133, %c0_134] : memref<32x48xf32, #tpu.memory_space<vmem>>, vector<32x48xf32>
    %c0_135 = arith.constant 0 : index
    %c0_136 = arith.constant 0 : index
    %188 = vector.load %arg9[%c0_135, %c0_136] : memref<2x48xf32, #tpu.memory_space<vmem>>, vector<2x48xf32>
    %189 = vector.extract_strided_slice %188 {offsets = [0, 0], sizes = [1, 48], strides = [1, 1]} : vector<2x48xf32> to vector<1x48xf32>
    %190 = vector.broadcast %177 : vector<4x1xf32> to vector<4x48xf32>
    %191 = vector.broadcast %189 : vector<1x48xf32> to vector<4x48xf32>
    %192 = arith.mulf %190, %191 : vector<4x48xf32>
    %cst_137 = arith.constant 1.000000e+00 : f32
    %193 = vector.broadcast %cst_137 : f32 to vector<4x1xf32>
    %194 = arith.subf %193, %177 : vector<4x1xf32>
    %195 = vector.extract_strided_slice %188 {offsets = [1, 0], sizes = [1, 48], strides = [1, 1]} : vector<2x48xf32> to vector<1x48xf32>
    %196 = vector.broadcast %194 : vector<4x1xf32> to vector<4x48xf32>
    %197 = vector.broadcast %195 : vector<1x48xf32> to vector<4x48xf32>
    %198 = arith.mulf %196, %197 : vector<4x48xf32>
    %199 = arith.addf %192, %198 : vector<4x48xf32>
    %cst_138 = arith.constant 0.000000e+00 : f32
    %200 = vector.broadcast %cst_138 : f32 to vector<4x16xf32>
    %201 = vector.extract_strided_slice %186 {offsets = [0, 0, 0], sizes = [2, 1, 48], strides = [1, 1, 1]} : vector<2x8x96xf32> to vector<2x1x48xf32>
    %202 = vector.shape_cast %201 : vector<2x1x48xf32> to vector<2x48xf32>
    %203 = vector.extract_strided_slice %186 {offsets = [0, 7, 48], sizes = [2, 1, 48], strides = [1, 1, 1]} : vector<2x8x96xf32> to vector<2x1x48xf32>
    %204 = vector.shape_cast %203 : vector<2x1x48xf32> to vector<2x48xf32>
    %205 = tpu.concatenate %202, %204 in 0 : vector<2x48xf32>, vector<2x48xf32> -> vector<4x48xf32>
    %206 = vector.extract_strided_slice %88 {offsets = [0, 0], sizes = [2, 1], strides = [1, 1]} : vector<2x8xf32> to vector<2x1xf32>
    %207 = vector.extract_strided_slice %88 {offsets = [0, 7], sizes = [2, 1], strides = [1, 1]} : vector<2x8xf32> to vector<2x1xf32>
    %208 = tpu.concatenate %206, %207 in 0 : vector<2x1xf32>, vector<2x1xf32> -> vector<4x1xf32>
    %209 = vector.broadcast %177 : vector<4x1xf32> to vector<4x16xf32>
    %210 = arith.mulf %200, %209 : vector<4x16xf32>
    %cst_139 = arith.constant 1.000000e+00 : f32
    %211 = vector.broadcast %cst_139 : f32 to vector<4x1xf32>
    %212 = arith.subf %211, %177 : vector<4x1xf32>
    %213 = vector.broadcast %212 : vector<4x1xf32> to vector<4x16xf32>
    %214 = arith.mulf %200, %213 : vector<4x16xf32>
    %215 = tpu.concatenate %210, %214 in 1 : vector<4x16xf32>, vector<4x16xf32> -> vector<4x32xf32>
    %cst_140 = arith.constant dense<0.000000e+00> : vector<4x48xf32>
    %216 = tpu.matmul %215, %187, %cst_140 {dimension_numbers = #tpu.dot_dimension_numbers<[1], [0], [0], [1], [0, 0, 1, 1], [], []>} : vector<4x32xf32>, vector<32x48xf32>, vector<4x48xf32> -> vector<4x48xf32>
    %217 = arith.addf %216, %199 : vector<4x48xf32>
    %218 = vector.extract_strided_slice %205 {offsets = [0, 0], sizes = [4, 16], strides = [1, 1]} : vector<4x48xf32> to vector<4x16xf32>
    %219 = vector.extract_strided_slice %217 {offsets = [0, 0], sizes = [4, 16], strides = [1, 1]} : vector<4x48xf32> to vector<4x16xf32>
    %220 = arith.addf %218, %219 : vector<4x16xf32>
    %221 = arith.negf %220 : vector<4x16xf32>
    %222 = math.exp %221 : vector<4x16xf32>
    %cst_141 = arith.constant 1.000000e+00 : f32
    %223 = vector.broadcast %cst_141 : f32 to vector<4x16xf32>
    %224 = arith.addf %223, %222 : vector<4x16xf32>
    %225 = arith.divf %223, %224 : vector<4x16xf32>
    %226 = vector.extract_strided_slice %205 {offsets = [0, 16], sizes = [4, 16], strides = [1, 1]} : vector<4x48xf32> to vector<4x16xf32>
    %227 = vector.extract_strided_slice %217 {offsets = [0, 16], sizes = [4, 16], strides = [1, 1]} : vector<4x48xf32> to vector<4x16xf32>
    %228 = arith.addf %226, %227 : vector<4x16xf32>
    %229 = arith.negf %228 : vector<4x16xf32>
    %230 = math.exp %229 : vector<4x16xf32>
    %cst_142 = arith.constant 1.000000e+00 : f32
    %231 = vector.broadcast %cst_142 : f32 to vector<4x16xf32>
    %232 = arith.addf %231, %230 : vector<4x16xf32>
    %233 = arith.divf %231, %232 : vector<4x16xf32>
    %234 = vector.extract_strided_slice %205 {offsets = [0, 32], sizes = [4, 16], strides = [1, 1]} : vector<4x48xf32> to vector<4x16xf32>
    %235 = vector.extract_strided_slice %217 {offsets = [0, 32], sizes = [4, 16], strides = [1, 1]} : vector<4x48xf32> to vector<4x16xf32>
    %236 = arith.mulf %225, %235 : vector<4x16xf32>
    %237 = arith.addf %234, %236 : vector<4x16xf32>
    %238 = math.tanh %237 : vector<4x16xf32>
    %cst_143 = arith.constant 1.000000e+00 : f32
    %239 = vector.broadcast %cst_143 : f32 to vector<4x16xf32>
    %240 = arith.subf %239, %233 : vector<4x16xf32>
    %241 = arith.mulf %240, %238 : vector<4x16xf32>
    %242 = arith.mulf %233, %200 : vector<4x16xf32>
    %243 = arith.addf %241, %242 : vector<4x16xf32>
    %244 = vector.broadcast %208 : vector<4x1xf32> to vector<4x16xf32>
    %245 = arith.mulf %244, %243 : vector<4x16xf32>
    %cst_144 = arith.constant 1.000000e+00 : f32
    %246 = vector.broadcast %cst_144 : f32 to vector<4x1xf32>
    %247 = arith.subf %246, %208 : vector<4x1xf32>
    %248 = vector.broadcast %247 : vector<4x1xf32> to vector<4x16xf32>
    %249 = arith.mulf %248, %200 : vector<4x16xf32>
    %250 = arith.addf %245, %249 : vector<4x16xf32>
    %251 = vector.broadcast %208 : vector<4x1xf32> to vector<4x16xf32>
    %252 = arith.mulf %251, %250 : vector<4x16xf32>
    %253 = vector.extract_strided_slice %252 {offsets = [0, 0], sizes = [2, 16], strides = [1, 1]} : vector<4x16xf32> to vector<2x16xf32>
    %254 = vector.shape_cast %253 : vector<2x16xf32> to vector<2x1x16xf32>
    %c0_145 = arith.constant 0 : index
    %c0_146 = arith.constant 0 : index
    %c0_147 = arith.constant 0 : index
    %255 = vector.load %arg27[%c0_145, %c0_146, %c0_147] : memref<2x8x32xf32, #tpu.memory_space<vmem>>, vector<2x1x16xf32>
    tpu.vector_store %arg27[%c0_145, %c0_146, %c0_147], %254 {strides = array<i32>} : memref<2x8x32xf32, #tpu.memory_space<vmem>>, vector<2x1x16xf32>,
    %256 = vector.extract_strided_slice %252 {offsets = [2, 0], sizes = [2, 16], strides = [1, 1]} : vector<4x16xf32> to vector<2x16xf32>
    %257 = vector.shape_cast %256 : vector<2x16xf32> to vector<2x1x16xf32>
    %c0_148 = arith.constant 0 : index
    %c7_149 = arith.constant 7 : index
    %c16 = arith.constant 16 : index
    %258 = vector.load %arg27[%c0_148, %c7_149, %c16] : memref<2x8x32xf32, #tpu.memory_space<vmem>>, vector<2x1x16xf32>
    tpu.vector_store %arg27[%c0_148, %c7_149, %c16], %257 {strides = array<i32>} : memref<2x8x32xf32, #tpu.memory_space<vmem>>, vector<2x1x16xf32>,
    %259 = vector.extract_strided_slice %186 {offsets = [0, 1, 0], sizes = [2, 1, 48], strides = [1, 1, 1]} : vector<2x8x96xf32> to vector<2x1x48xf32>
    %260 = vector.shape_cast %259 : vector<2x1x48xf32> to vector<2x48xf32>
    %261 = vector.extract_strided_slice %186 {offsets = [0, 6, 48], sizes = [2, 1, 48], strides = [1, 1, 1]} : vector<2x8x96xf32> to vector<2x1x48xf32>
    %262 = vector.shape_cast %261 : vector<2x1x48xf32> to vector<2x48xf32>
    %263 = tpu.concatenate %260, %262 in 0 : vector<2x48xf32>, vector<2x48xf32> -> vector<4x48xf32>
    %264 = vector.extract_strided_slice %88 {offsets = [0, 1], sizes = [2, 1], strides = [1, 1]} : vector<2x8xf32> to vector<2x1xf32>
    %265 = vector.extract_strided_slice %88 {offsets = [0, 6], sizes = [2, 1], strides = [1, 1]} : vector<2x8xf32> to vector<2x1xf32>
    %266 = tpu.concatenate %264, %265 in 0 : vector<2x1xf32>, vector<2x1xf32> -> vector<4x1xf32>
    %267 = vector.broadcast %177 : vector<4x1xf32> to vector<4x16xf32>
    %268 = arith.mulf %250, %267 : vector<4x16xf32>
    %cst_150 = arith.constant 1.000000e+00 : f32
    %269 = vector.broadcast %cst_150 : f32 to vector<4x1xf32>
    %270 = arith.subf %269, %177 : vector<4x1xf32>
    %271 = vector.broadcast %270 : vector<4x1xf32> to vector<4x16xf32>
    %272 = arith.mulf %250, %271 : vector<4x16xf32>
    %273 = tpu.concatenate %268, %272 in 1 : vector<4x16xf32>, vector<4x16xf32> -> vector<4x32xf32>
    %cst_151 = arith.constant dense<0.000000e+00> : vector<4x48xf32>
    %274 = tpu.matmul %273, %187, %cst_151 {dimension_numbers = #tpu.dot_dimension_numbers<[1], [0], [0], [1], [0, 0, 1, 1], [], []>} : vector<4x32xf32>, vector<32x48xf32>, vector<4x48xf32> -> vector<4x48xf32>
    %275 = arith.addf %274, %199 : vector<4x48xf32>
    %276 = vector.extract_strided_slice %263 {offsets = [0, 0], sizes = [4, 16], strides = [1, 1]} : vector<4x48xf32> to vector<4x16xf32>
    %277 = vector.extract_strided_slice %275 {offsets = [0, 0], sizes = [4, 16], strides = [1, 1]} : vector<4x48xf32> to vector<4x16xf32>
    %278 = arith.addf %276, %277 : vector<4x16xf32>
    %279 = arith.negf %278 : vector<4x16xf32>
    %280 = math.exp %279 : vector<4x16xf32>
    %cst_152 = arith.constant 1.000000e+00 : f32
    %281 = vector.broadcast %cst_152 : f32 to vector<4x16xf32>
    %282 = arith.addf %281, %280 : vector<4x16xf32>
    %283 = arith.divf %281, %282 : vector<4x16xf32>
    %284 = vector.extract_strided_slice %263 {offsets = [0, 16], sizes = [4, 16], strides = [1, 1]} : vector<4x48xf32> to vector<4x16xf32>
    %285 = vector.extract_strided_slice %275 {offsets = [0, 16], sizes = [4, 16], strides = [1, 1]} : vector<4x48xf32> to vector<4x16xf32>
    %286 = arith.addf %284, %285 : vector<4x16xf32>
    %287 = arith.negf %286 : vector<4x16xf32>
    %288 = math.exp %287 : vector<4x16xf32>
    %cst_153 = arith.constant 1.000000e+00 : f32
    %289 = vector.broadcast %cst_153 : f32 to vector<4x16xf32>
    %290 = arith.addf %289, %288 : vector<4x16xf32>
    %291 = arith.divf %289, %290 : vector<4x16xf32>
    %292 = vector.extract_strided_slice %263 {offsets = [0, 32], sizes = [4, 16], strides = [1, 1]} : vector<4x48xf32> to vector<4x16xf32>
    %293 = vector.extract_strided_slice %275 {offsets = [0, 32], sizes = [4, 16], strides = [1, 1]} : vector<4x48xf32> to vector<4x16xf32>
    %294 = arith.mulf %283, %293 : vector<4x16xf32>
    %295 = arith.addf %292, %294 : vector<4x16xf32>
    %296 = math.tanh %295 : vector<4x16xf32>
    %cst_154 = arith.constant 1.000000e+00 : f32
    %297 = vector.broadcast %cst_154 : f32 to vector<4x16xf32>
    %298 = arith.subf %297, %291 : vector<4x16xf32>
    %299 = arith.mulf %298, %296 : vector<4x16xf32>
    %300 = arith.mulf %291, %250 : vector<4x16xf32>
    %301 = arith.addf %299, %300 : vector<4x16xf32>
    %302 = vector.broadcast %266 : vector<4x1xf32> to vector<4x16xf32>
    %303 = arith.mulf %302, %301 : vector<4x16xf32>
    %cst_155 = arith.constant 1.000000e+00 : f32
    %304 = vector.broadcast %cst_155 : f32 to vector<4x1xf32>
    %305 = arith.subf %304, %266 : vector<4x1xf32>
    %306 = vector.broadcast %305 : vector<4x1xf32> to vector<4x16xf32>
    %307 = arith.mulf %306, %250 : vector<4x16xf32>
    %308 = arith.addf %303, %307 : vector<4x16xf32>
    %309 = vector.broadcast %266 : vector<4x1xf32> to vector<4x16xf32>
    %310 = arith.mulf %309, %308 : vector<4x16xf32>
    %311 = vector.extract_strided_slice %310 {offsets = [0, 0], sizes = [2, 16], strides = [1, 1]} : vector<4x16xf32> to vector<2x16xf32>
    %312 = vector.shape_cast %311 : vector<2x16xf32> to vector<2x1x16xf32>
    %c0_156 = arith.constant 0 : index
    %c1_157 = arith.constant 1 : index
    %c0_158 = arith.constant 0 : index
    %313 = vector.load %arg27[%c0_156, %c1_157, %c0_158] : memref<2x8x32xf32, #tpu.memory_space<vmem>>, vector<2x1x16xf32>
    tpu.vector_store %arg27[%c0_156, %c1_157, %c0_158], %312 {strides = array<i32>} : memref<2x8x32xf32, #tpu.memory_space<vmem>>, vector<2x1x16xf32>,
    %314 = vector.extract_strided_slice %310 {offsets = [2, 0], sizes = [2, 16], strides = [1, 1]} : vector<4x16xf32> to vector<2x16xf32>
    %315 = vector.shape_cast %314 : vector<2x16xf32> to vector<2x1x16xf32>
    %c0_159 = arith.constant 0 : index
    %c6_160 = arith.constant 6 : index
    %c16_161 = arith.constant 16 : index
    %316 = vector.load %arg27[%c0_159, %c6_160, %c16_161] : memref<2x8x32xf32, #tpu.memory_space<vmem>>, vector<2x1x16xf32>
    tpu.vector_store %arg27[%c0_159, %c6_160, %c16_161], %315 {strides = array<i32>} : memref<2x8x32xf32, #tpu.memory_space<vmem>>, vector<2x1x16xf32>,
    %317 = vector.extract_strided_slice %186 {offsets = [0, 2, 0], sizes = [2, 1, 48], strides = [1, 1, 1]} : vector<2x8x96xf32> to vector<2x1x48xf32>
    %318 = vector.shape_cast %317 : vector<2x1x48xf32> to vector<2x48xf32>
    %319 = vector.extract_strided_slice %186 {offsets = [0, 5, 48], sizes = [2, 1, 48], strides = [1, 1, 1]} : vector<2x8x96xf32> to vector<2x1x48xf32>
    %320 = vector.shape_cast %319 : vector<2x1x48xf32> to vector<2x48xf32>
    %321 = tpu.concatenate %318, %320 in 0 : vector<2x48xf32>, vector<2x48xf32> -> vector<4x48xf32>
    %322 = vector.extract_strided_slice %88 {offsets = [0, 2], sizes = [2, 1], strides = [1, 1]} : vector<2x8xf32> to vector<2x1xf32>
    %323 = vector.extract_strided_slice %88 {offsets = [0, 5], sizes = [2, 1], strides = [1, 1]} : vector<2x8xf32> to vector<2x1xf32>
    %324 = tpu.concatenate %322, %323 in 0 : vector<2x1xf32>, vector<2x1xf32> -> vector<4x1xf32>
    %325 = vector.broadcast %177 : vector<4x1xf32> to vector<4x16xf32>
    %326 = arith.mulf %308, %325 : vector<4x16xf32>
    %cst_162 = arith.constant 1.000000e+00 : f32
    %327 = vector.broadcast %cst_162 : f32 to vector<4x1xf32>
    %328 = arith.subf %327, %177 : vector<4x1xf32>
    %329 = vector.broadcast %328 : vector<4x1xf32> to vector<4x16xf32>
    %330 = arith.mulf %308, %329 : vector<4x16xf32>
    %331 = tpu.concatenate %326, %330 in 1 : vector<4x16xf32>, vector<4x16xf32> -> vector<4x32xf32>
    %cst_163 = arith.constant dense<0.000000e+00> : vector<4x48xf32>
    %332 = tpu.matmul %331, %187, %cst_163 {dimension_numbers = #tpu.dot_dimension_numbers<[1], [0], [0], [1], [0, 0, 1, 1], [], []>} : vector<4x32xf32>, vector<32x48xf32>, vector<4x48xf32> -> vector<4x48xf32>
    %333 = arith.addf %332, %199 : vector<4x48xf32>
    %334 = vector.extract_strided_slice %321 {offsets = [0, 0], sizes = [4, 16], strides = [1, 1]} : vector<4x48xf32> to vector<4x16xf32>
    %335 = vector.extract_strided_slice %333 {offsets = [0, 0], sizes = [4, 16], strides = [1, 1]} : vector<4x48xf32> to vector<4x16xf32>
    %336 = arith.addf %334, %335 : vector<4x16xf32>
    %337 = arith.negf %336 : vector<4x16xf32>
    %338 = math.exp %337 : vector<4x16xf32>
    %cst_164 = arith.constant 1.000000e+00 : f32
    %339 = vector.broadcast %cst_164 : f32 to vector<4x16xf32>
    %340 = arith.addf %339, %338 : vector<4x16xf32>
    %341 = arith.divf %339, %340 : vector<4x16xf32>
    %342 = vector.extract_strided_slice %321 {offsets = [0, 16], sizes = [4, 16], strides = [1, 1]} : vector<4x48xf32> to vector<4x16xf32>
    %343 = vector.extract_strided_slice %333 {offsets = [0, 16], sizes = [4, 16], strides = [1, 1]} : vector<4x48xf32> to vector<4x16xf32>
    %344 = arith.addf %342, %343 : vector<4x16xf32>
    %345 = arith.negf %344 : vector<4x16xf32>
    %346 = math.exp %345 : vector<4x16xf32>
    %cst_165 = arith.constant 1.000000e+00 : f32
    %347 = vector.broadcast %cst_165 : f32 to vector<4x16xf32>
    %348 = arith.addf %347, %346 : vector<4x16xf32>
    %349 = arith.divf %347, %348 : vector<4x16xf32>
    %350 = vector.extract_strided_slice %321 {offsets = [0, 32], sizes = [4, 16], strides = [1, 1]} : vector<4x48xf32> to vector<4x16xf32>
    %351 = vector.extract_strided_slice %333 {offsets = [0, 32], sizes = [4, 16], strides = [1, 1]} : vector<4x48xf32> to vector<4x16xf32>
    %352 = arith.mulf %341, %351 : vector<4x16xf32>
    %353 = arith.addf %350, %352 : vector<4x16xf32>
    %354 = math.tanh %353 : vector<4x16xf32>
    %cst_166 = arith.constant 1.000000e+00 : f32
    %355 = vector.broadcast %cst_166 : f32 to vector<4x16xf32>
    %356 = arith.subf %355, %349 : vector<4x16xf32>
    %357 = arith.mulf %356, %354 : vector<4x16xf32>
    %358 = arith.mulf %349, %308 : vector<4x16xf32>
    %359 = arith.addf %357, %358 : vector<4x16xf32>
    %360 = vector.broadcast %324 : vector<4x1xf32> to vector<4x16xf32>
    %361 = arith.mulf %360, %359 : vector<4x16xf32>
    %cst_167 = arith.constant 1.000000e+00 : f32
    %362 = vector.broadcast %cst_167 : f32 to vector<4x1xf32>
    %363 = arith.subf %362, %324 : vector<4x1xf32>
    %364 = vector.broadcast %363 : vector<4x1xf32> to vector<4x16xf32>
    %365 = arith.mulf %364, %308 : vector<4x16xf32>
    %366 = arith.addf %361, %365 : vector<4x16xf32>
    %367 = vector.broadcast %324 : vector<4x1xf32> to vector<4x16xf32>
    %368 = arith.mulf %367, %366 : vector<4x16xf32>
    %369 = vector.extract_strided_slice %368 {offsets = [0, 0], sizes = [2, 16], strides = [1, 1]} : vector<4x16xf32> to vector<2x16xf32>
    %370 = vector.shape_cast %369 : vector<2x16xf32> to vector<2x1x16xf32>
    %c0_168 = arith.constant 0 : index
    %c2_169 = arith.constant 2 : index
    %c0_170 = arith.constant 0 : index
    %371 = vector.load %arg27[%c0_168, %c2_169, %c0_170] : memref<2x8x32xf32, #tpu.memory_space<vmem>>, vector<2x1x16xf32>
    tpu.vector_store %arg27[%c0_168, %c2_169, %c0_170], %370 {strides = array<i32>} : memref<2x8x32xf32, #tpu.memory_space<vmem>>, vector<2x1x16xf32>,
    %372 = vector.extract_strided_slice %368 {offsets = [2, 0], sizes = [2, 16], strides = [1, 1]} : vector<4x16xf32> to vector<2x16xf32>
    %373 = vector.shape_cast %372 : vector<2x16xf32> to vector<2x1x16xf32>
    %c0_171 = arith.constant 0 : index
    %c5_172 = arith.constant 5 : index
    %c16_173 = arith.constant 16 : index
    %374 = vector.load %arg27[%c0_171, %c5_172, %c16_173] : memref<2x8x32xf32, #tpu.memory_space<vmem>>, vector<2x1x16xf32>
    tpu.vector_store %arg27[%c0_171, %c5_172, %c16_173], %373 {strides = array<i32>} : memref<2x8x32xf32, #tpu.memory_space<vmem>>, vector<2x1x16xf32>,
    %375 = vector.extract_strided_slice %186 {offsets = [0, 3, 0], sizes = [2, 1, 48], strides = [1, 1, 1]} : vector<2x8x96xf32> to vector<2x1x48xf32>
    %376 = vector.shape_cast %375 : vector<2x1x48xf32> to vector<2x48xf32>
    %377 = vector.extract_strided_slice %186 {offsets = [0, 4, 48], sizes = [2, 1, 48], strides = [1, 1, 1]} : vector<2x8x96xf32> to vector<2x1x48xf32>
    %378 = vector.shape_cast %377 : vector<2x1x48xf32> to vector<2x48xf32>
    %379 = tpu.concatenate %376, %378 in 0 : vector<2x48xf32>, vector<2x48xf32> -> vector<4x48xf32>
    %380 = vector.extract_strided_slice %88 {offsets = [0, 3], sizes = [2, 1], strides = [1, 1]} : vector<2x8xf32> to vector<2x1xf32>
    %381 = vector.extract_strided_slice %88 {offsets = [0, 4], sizes = [2, 1], strides = [1, 1]} : vector<2x8xf32> to vector<2x1xf32>
    %382 = tpu.concatenate %380, %381 in 0 : vector<2x1xf32>, vector<2x1xf32> -> vector<4x1xf32>
    %383 = vector.broadcast %177 : vector<4x1xf32> to vector<4x16xf32>
    %384 = arith.mulf %366, %383 : vector<4x16xf32>
    %cst_174 = arith.constant 1.000000e+00 : f32
    %385 = vector.broadcast %cst_174 : f32 to vector<4x1xf32>
    %386 = arith.subf %385, %177 : vector<4x1xf32>
    %387 = vector.broadcast %386 : vector<4x1xf32> to vector<4x16xf32>
    %388 = arith.mulf %366, %387 : vector<4x16xf32>
    %389 = tpu.concatenate %384, %388 in 1 : vector<4x16xf32>, vector<4x16xf32> -> vector<4x32xf32>
    %cst_175 = arith.constant dense<0.000000e+00> : vector<4x48xf32>
    %390 = tpu.matmul %389, %187, %cst_175 {dimension_numbers = #tpu.dot_dimension_numbers<[1], [0], [0], [1], [0, 0, 1, 1], [], []>} : vector<4x32xf32>, vector<32x48xf32>, vector<4x48xf32> -> vector<4x48xf32>
    %391 = arith.addf %390, %199 : vector<4x48xf32>
    %392 = vector.extract_strided_slice %379 {offsets = [0, 0], sizes = [4, 16], strides = [1, 1]} : vector<4x48xf32> to vector<4x16xf32>
    %393 = vector.extract_strided_slice %391 {offsets = [0, 0], sizes = [4, 16], strides = [1, 1]} : vector<4x48xf32> to vector<4x16xf32>
    %394 = arith.addf %392, %393 : vector<4x16xf32>
    %395 = arith.negf %394 : vector<4x16xf32>
    %396 = math.exp %395 : vector<4x16xf32>
    %cst_176 = arith.constant 1.000000e+00 : f32
    %397 = vector.broadcast %cst_176 : f32 to vector<4x16xf32>
    %398 = arith.addf %397, %396 : vector<4x16xf32>
    %399 = arith.divf %397, %398 : vector<4x16xf32>
    %400 = vector.extract_strided_slice %379 {offsets = [0, 16], sizes = [4, 16], strides = [1, 1]} : vector<4x48xf32> to vector<4x16xf32>
    %401 = vector.extract_strided_slice %391 {offsets = [0, 16], sizes = [4, 16], strides = [1, 1]} : vector<4x48xf32> to vector<4x16xf32>
    %402 = arith.addf %400, %401 : vector<4x16xf32>
    %403 = arith.negf %402 : vector<4x16xf32>
    %404 = math.exp %403 : vector<4x16xf32>
    %cst_177 = arith.constant 1.000000e+00 : f32
    %405 = vector.broadcast %cst_177 : f32 to vector<4x16xf32>
    %406 = arith.addf %405, %404 : vector<4x16xf32>
    %407 = arith.divf %405, %406 : vector<4x16xf32>
    %408 = vector.extract_strided_slice %379 {offsets = [0, 32], sizes = [4, 16], strides = [1, 1]} : vector<4x48xf32> to vector<4x16xf32>
    %409 = vector.extract_strided_slice %391 {offsets = [0, 32], sizes = [4, 16], strides = [1, 1]} : vector<4x48xf32> to vector<4x16xf32>
    %410 = arith.mulf %399, %409 : vector<4x16xf32>
    %411 = arith.addf %408, %410 : vector<4x16xf32>
    %412 = math.tanh %411 : vector<4x16xf32>
    %cst_178 = arith.constant 1.000000e+00 : f32
    %413 = vector.broadcast %cst_178 : f32 to vector<4x16xf32>
    %414 = arith.subf %413, %407 : vector<4x16xf32>
    %415 = arith.mulf %414, %412 : vector<4x16xf32>
    %416 = arith.mulf %407, %366 : vector<4x16xf32>
    %417 = arith.addf %415, %416 : vector<4x16xf32>
    %418 = vector.broadcast %382 : vector<4x1xf32> to vector<4x16xf32>
    %419 = arith.mulf %418, %417 : vector<4x16xf32>
    %cst_179 = arith.constant 1.000000e+00 : f32
    %420 = vector.broadcast %cst_179 : f32 to vector<4x1xf32>
    %421 = arith.subf %420, %382 : vector<4x1xf32>
    %422 = vector.broadcast %421 : vector<4x1xf32> to vector<4x16xf32>
    %423 = arith.mulf %422, %366 : vector<4x16xf32>
    %424 = arith.addf %419, %423 : vector<4x16xf32>
    %425 = vector.broadcast %382 : vector<4x1xf32> to vector<4x16xf32>
    %426 = arith.mulf %425, %424 : vector<4x16xf32>
    %427 = vector.extract_strided_slice %426 {offsets = [0, 0], sizes = [2, 16], strides = [1, 1]} : vector<4x16xf32> to vector<2x16xf32>
    %428 = vector.shape_cast %427 : vector<2x16xf32> to vector<2x1x16xf32>
    %c0_180 = arith.constant 0 : index
    %c3_181 = arith.constant 3 : index
    %c0_182 = arith.constant 0 : index
    %429 = vector.load %arg27[%c0_180, %c3_181, %c0_182] : memref<2x8x32xf32, #tpu.memory_space<vmem>>, vector<2x1x16xf32>
    tpu.vector_store %arg27[%c0_180, %c3_181, %c0_182], %428 {strides = array<i32>} : memref<2x8x32xf32, #tpu.memory_space<vmem>>, vector<2x1x16xf32>,
    %430 = vector.extract_strided_slice %426 {offsets = [2, 0], sizes = [2, 16], strides = [1, 1]} : vector<4x16xf32> to vector<2x16xf32>
    %431 = vector.shape_cast %430 : vector<2x16xf32> to vector<2x1x16xf32>
    %c0_183 = arith.constant 0 : index
    %c4_184 = arith.constant 4 : index
    %c16_185 = arith.constant 16 : index
    %432 = vector.load %arg27[%c0_183, %c4_184, %c16_185] : memref<2x8x32xf32, #tpu.memory_space<vmem>>, vector<2x1x16xf32>
    tpu.vector_store %arg27[%c0_183, %c4_184, %c16_185], %431 {strides = array<i32>} : memref<2x8x32xf32, #tpu.memory_space<vmem>>, vector<2x1x16xf32>,
    %433 = vector.extract_strided_slice %186 {offsets = [0, 4, 0], sizes = [2, 1, 48], strides = [1, 1, 1]} : vector<2x8x96xf32> to vector<2x1x48xf32>
    %434 = vector.shape_cast %433 : vector<2x1x48xf32> to vector<2x48xf32>
    %435 = vector.extract_strided_slice %186 {offsets = [0, 3, 48], sizes = [2, 1, 48], strides = [1, 1, 1]} : vector<2x8x96xf32> to vector<2x1x48xf32>
    %436 = vector.shape_cast %435 : vector<2x1x48xf32> to vector<2x48xf32>
    %437 = tpu.concatenate %434, %436 in 0 : vector<2x48xf32>, vector<2x48xf32> -> vector<4x48xf32>
    %438 = vector.extract_strided_slice %88 {offsets = [0, 4], sizes = [2, 1], strides = [1, 1]} : vector<2x8xf32> to vector<2x1xf32>
    %439 = vector.extract_strided_slice %88 {offsets = [0, 3], sizes = [2, 1], strides = [1, 1]} : vector<2x8xf32> to vector<2x1xf32>
    %440 = tpu.concatenate %438, %439 in 0 : vector<2x1xf32>, vector<2x1xf32> -> vector<4x1xf32>
    %441 = vector.broadcast %177 : vector<4x1xf32> to vector<4x16xf32>
    %442 = arith.mulf %424, %441 : vector<4x16xf32>
    %cst_186 = arith.constant 1.000000e+00 : f32
    %443 = vector.broadcast %cst_186 : f32 to vector<4x1xf32>
    %444 = arith.subf %443, %177 : vector<4x1xf32>
    %445 = vector.broadcast %444 : vector<4x1xf32> to vector<4x16xf32>
    %446 = arith.mulf %424, %445 : vector<4x16xf32>
    %447 = tpu.concatenate %442, %446 in 1 : vector<4x16xf32>, vector<4x16xf32> -> vector<4x32xf32>
    %cst_187 = arith.constant dense<0.000000e+00> : vector<4x48xf32>
    %448 = tpu.matmul %447, %187, %cst_187 {dimension_numbers = #tpu.dot_dimension_numbers<[1], [0], [0], [1], [0, 0, 1, 1], [], []>} : vector<4x32xf32>, vector<32x48xf32>, vector<4x48xf32> -> vector<4x48xf32>
    %449 = arith.addf %448, %199 : vector<4x48xf32>
    %450 = vector.extract_strided_slice %437 {offsets = [0, 0], sizes = [4, 16], strides = [1, 1]} : vector<4x48xf32> to vector<4x16xf32>
    %451 = vector.extract_strided_slice %449 {offsets = [0, 0], sizes = [4, 16], strides = [1, 1]} : vector<4x48xf32> to vector<4x16xf32>
    %452 = arith.addf %450, %451 : vector<4x16xf32>
    %453 = arith.negf %452 : vector<4x16xf32>
    %454 = math.exp %453 : vector<4x16xf32>
    %cst_188 = arith.constant 1.000000e+00 : f32
    %455 = vector.broadcast %cst_188 : f32 to vector<4x16xf32>
    %456 = arith.addf %455, %454 : vector<4x16xf32>
    %457 = arith.divf %455, %456 : vector<4x16xf32>
    %458 = vector.extract_strided_slice %437 {offsets = [0, 16], sizes = [4, 16], strides = [1, 1]} : vector<4x48xf32> to vector<4x16xf32>
    %459 = vector.extract_strided_slice %449 {offsets = [0, 16], sizes = [4, 16], strides = [1, 1]} : vector<4x48xf32> to vector<4x16xf32>
    %460 = arith.addf %458, %459 : vector<4x16xf32>
    %461 = arith.negf %460 : vector<4x16xf32>
    %462 = math.exp %461 : vector<4x16xf32>
    %cst_189 = arith.constant 1.000000e+00 : f32
    %463 = vector.broadcast %cst_189 : f32 to vector<4x16xf32>
    %464 = arith.addf %463, %462 : vector<4x16xf32>
    %465 = arith.divf %463, %464 : vector<4x16xf32>
    %466 = vector.extract_strided_slice %437 {offsets = [0, 32], sizes = [4, 16], strides = [1, 1]} : vector<4x48xf32> to vector<4x16xf32>
    %467 = vector.extract_strided_slice %449 {offsets = [0, 32], sizes = [4, 16], strides = [1, 1]} : vector<4x48xf32> to vector<4x16xf32>
    %468 = arith.mulf %457, %467 : vector<4x16xf32>
    %469 = arith.addf %466, %468 : vector<4x16xf32>
    %470 = math.tanh %469 : vector<4x16xf32>
    %cst_190 = arith.constant 1.000000e+00 : f32
    %471 = vector.broadcast %cst_190 : f32 to vector<4x16xf32>
    %472 = arith.subf %471, %465 : vector<4x16xf32>
    %473 = arith.mulf %472, %470 : vector<4x16xf32>
    %474 = arith.mulf %465, %424 : vector<4x16xf32>
    %475 = arith.addf %473, %474 : vector<4x16xf32>
    %476 = vector.broadcast %440 : vector<4x1xf32> to vector<4x16xf32>
    %477 = arith.mulf %476, %475 : vector<4x16xf32>
    %cst_191 = arith.constant 1.000000e+00 : f32
    %478 = vector.broadcast %cst_191 : f32 to vector<4x1xf32>
    %479 = arith.subf %478, %440 : vector<4x1xf32>
    %480 = vector.broadcast %479 : vector<4x1xf32> to vector<4x16xf32>
    %481 = arith.mulf %480, %424 : vector<4x16xf32>
    %482 = arith.addf %477, %481 : vector<4x16xf32>
    %483 = vector.broadcast %440 : vector<4x1xf32> to vector<4x16xf32>
    %484 = arith.mulf %483, %482 : vector<4x16xf32>
    %485 = vector.extract_strided_slice %484 {offsets = [0, 0], sizes = [2, 16], strides = [1, 1]} : vector<4x16xf32> to vector<2x16xf32>
    %486 = vector.shape_cast %485 : vector<2x16xf32> to vector<2x1x16xf32>
    %c0_192 = arith.constant 0 : index
    %c4_193 = arith.constant 4 : index
    %c0_194 = arith.constant 0 : index
    %487 = vector.load %arg27[%c0_192, %c4_193, %c0_194] : memref<2x8x32xf32, #tpu.memory_space<vmem>>, vector<2x1x16xf32>
    tpu.vector_store %arg27[%c0_192, %c4_193, %c0_194], %486 {strides = array<i32>} : memref<2x8x32xf32, #tpu.memory_space<vmem>>, vector<2x1x16xf32>,
    %488 = vector.extract_strided_slice %484 {offsets = [2, 0], sizes = [2, 16], strides = [1, 1]} : vector<4x16xf32> to vector<2x16xf32>
    %489 = vector.shape_cast %488 : vector<2x16xf32> to vector<2x1x16xf32>
    %c0_195 = arith.constant 0 : index
    %c3_196 = arith.constant 3 : index
    %c16_197 = arith.constant 16 : index
    %490 = vector.load %arg27[%c0_195, %c3_196, %c16_197] : memref<2x8x32xf32, #tpu.memory_space<vmem>>, vector<2x1x16xf32>
    tpu.vector_store %arg27[%c0_195, %c3_196, %c16_197], %489 {strides = array<i32>} : memref<2x8x32xf32, #tpu.memory_space<vmem>>, vector<2x1x16xf32>,
    %491 = vector.extract_strided_slice %186 {offsets = [0, 5, 0], sizes = [2, 1, 48], strides = [1, 1, 1]} : vector<2x8x96xf32> to vector<2x1x48xf32>
    %492 = vector.shape_cast %491 : vector<2x1x48xf32> to vector<2x48xf32>
    %493 = vector.extract_strided_slice %186 {offsets = [0, 2, 48], sizes = [2, 1, 48], strides = [1, 1, 1]} : vector<2x8x96xf32> to vector<2x1x48xf32>
    %494 = vector.shape_cast %493 : vector<2x1x48xf32> to vector<2x48xf32>
    %495 = tpu.concatenate %492, %494 in 0 : vector<2x48xf32>, vector<2x48xf32> -> vector<4x48xf32>
    %496 = vector.extract_strided_slice %88 {offsets = [0, 5], sizes = [2, 1], strides = [1, 1]} : vector<2x8xf32> to vector<2x1xf32>
    %497 = vector.extract_strided_slice %88 {offsets = [0, 2], sizes = [2, 1], strides = [1, 1]} : vector<2x8xf32> to vector<2x1xf32>
    %498 = tpu.concatenate %496, %497 in 0 : vector<2x1xf32>, vector<2x1xf32> -> vector<4x1xf32>
    %499 = vector.broadcast %177 : vector<4x1xf32> to vector<4x16xf32>
    %500 = arith.mulf %482, %499 : vector<4x16xf32>
    %cst_198 = arith.constant 1.000000e+00 : f32
    %501 = vector.broadcast %cst_198 : f32 to vector<4x1xf32>
    %502 = arith.subf %501, %177 : vector<4x1xf32>
    %503 = vector.broadcast %502 : vector<4x1xf32> to vector<4x16xf32>
    %504 = arith.mulf %482, %503 : vector<4x16xf32>
    %505 = tpu.concatenate %500, %504 in 1 : vector<4x16xf32>, vector<4x16xf32> -> vector<4x32xf32>
    %cst_199 = arith.constant dense<0.000000e+00> : vector<4x48xf32>
    %506 = tpu.matmul %505, %187, %cst_199 {dimension_numbers = #tpu.dot_dimension_numbers<[1], [0], [0], [1], [0, 0, 1, 1], [], []>} : vector<4x32xf32>, vector<32x48xf32>, vector<4x48xf32> -> vector<4x48xf32>
    %507 = arith.addf %506, %199 : vector<4x48xf32>
    %508 = vector.extract_strided_slice %495 {offsets = [0, 0], sizes = [4, 16], strides = [1, 1]} : vector<4x48xf32> to vector<4x16xf32>
    %509 = vector.extract_strided_slice %507 {offsets = [0, 0], sizes = [4, 16], strides = [1, 1]} : vector<4x48xf32> to vector<4x16xf32>
    %510 = arith.addf %508, %509 : vector<4x16xf32>
    %511 = arith.negf %510 : vector<4x16xf32>
    %512 = math.exp %511 : vector<4x16xf32>
    %cst_200 = arith.constant 1.000000e+00 : f32
    %513 = vector.broadcast %cst_200 : f32 to vector<4x16xf32>
    %514 = arith.addf %513, %512 : vector<4x16xf32>
    %515 = arith.divf %513, %514 : vector<4x16xf32>
    %516 = vector.extract_strided_slice %495 {offsets = [0, 16], sizes = [4, 16], strides = [1, 1]} : vector<4x48xf32> to vector<4x16xf32>
    %517 = vector.extract_strided_slice %507 {offsets = [0, 16], sizes = [4, 16], strides = [1, 1]} : vector<4x48xf32> to vector<4x16xf32>
    %518 = arith.addf %516, %517 : vector<4x16xf32>
    %519 = arith.negf %518 : vector<4x16xf32>
    %520 = math.exp %519 : vector<4x16xf32>
    %cst_201 = arith.constant 1.000000e+00 : f32
    %521 = vector.broadcast %cst_201 : f32 to vector<4x16xf32>
    %522 = arith.addf %521, %520 : vector<4x16xf32>
    %523 = arith.divf %521, %522 : vector<4x16xf32>
    %524 = vector.extract_strided_slice %495 {offsets = [0, 32], sizes = [4, 16], strides = [1, 1]} : vector<4x48xf32> to vector<4x16xf32>
    %525 = vector.extract_strided_slice %507 {offsets = [0, 32], sizes = [4, 16], strides = [1, 1]} : vector<4x48xf32> to vector<4x16xf32>
    %526 = arith.mulf %515, %525 : vector<4x16xf32>
    %527 = arith.addf %524, %526 : vector<4x16xf32>
    %528 = math.tanh %527 : vector<4x16xf32>
    %cst_202 = arith.constant 1.000000e+00 : f32
    %529 = vector.broadcast %cst_202 : f32 to vector<4x16xf32>
    %530 = arith.subf %529, %523 : vector<4x16xf32>
    %531 = arith.mulf %530, %528 : vector<4x16xf32>
    %532 = arith.mulf %523, %482 : vector<4x16xf32>
    %533 = arith.addf %531, %532 : vector<4x16xf32>
    %534 = vector.broadcast %498 : vector<4x1xf32> to vector<4x16xf32>
    %535 = arith.mulf %534, %533 : vector<4x16xf32>
    %cst_203 = arith.constant 1.000000e+00 : f32
    %536 = vector.broadcast %cst_203 : f32 to vector<4x1xf32>
    %537 = arith.subf %536, %498 : vector<4x1xf32>
    %538 = vector.broadcast %537 : vector<4x1xf32> to vector<4x16xf32>
    %539 = arith.mulf %538, %482 : vector<4x16xf32>
    %540 = arith.addf %535, %539 : vector<4x16xf32>
    %541 = vector.broadcast %498 : vector<4x1xf32> to vector<4x16xf32>
    %542 = arith.mulf %541, %540 : vector<4x16xf32>
    %543 = vector.extract_strided_slice %542 {offsets = [0, 0], sizes = [2, 16], strides = [1, 1]} : vector<4x16xf32> to vector<2x16xf32>
    %544 = vector.shape_cast %543 : vector<2x16xf32> to vector<2x1x16xf32>
    %c0_204 = arith.constant 0 : index
    %c5_205 = arith.constant 5 : index
    %c0_206 = arith.constant 0 : index
    %545 = vector.load %arg27[%c0_204, %c5_205, %c0_206] : memref<2x8x32xf32, #tpu.memory_space<vmem>>, vector<2x1x16xf32>
    tpu.vector_store %arg27[%c0_204, %c5_205, %c0_206], %544 {strides = array<i32>} : memref<2x8x32xf32, #tpu.memory_space<vmem>>, vector<2x1x16xf32>,
    %546 = vector.extract_strided_slice %542 {offsets = [2, 0], sizes = [2, 16], strides = [1, 1]} : vector<4x16xf32> to vector<2x16xf32>
    %547 = vector.shape_cast %546 : vector<2x16xf32> to vector<2x1x16xf32>
    %c0_207 = arith.constant 0 : index
    %c2_208 = arith.constant 2 : index
    %c16_209 = arith.constant 16 : index
    %548 = vector.load %arg27[%c0_207, %c2_208, %c16_209] : memref<2x8x32xf32, #tpu.memory_space<vmem>>, vector<2x1x16xf32>
    tpu.vector_store %arg27[%c0_207, %c2_208, %c16_209], %547 {strides = array<i32>} : memref<2x8x32xf32, #tpu.memory_space<vmem>>, vector<2x1x16xf32>,
    %549 = vector.extract_strided_slice %186 {offsets = [0, 6, 0], sizes = [2, 1, 48], strides = [1, 1, 1]} : vector<2x8x96xf32> to vector<2x1x48xf32>
    %550 = vector.shape_cast %549 : vector<2x1x48xf32> to vector<2x48xf32>
    %551 = vector.extract_strided_slice %186 {offsets = [0, 1, 48], sizes = [2, 1, 48], strides = [1, 1, 1]} : vector<2x8x96xf32> to vector<2x1x48xf32>
    %552 = vector.shape_cast %551 : vector<2x1x48xf32> to vector<2x48xf32>
    %553 = tpu.concatenate %550, %552 in 0 : vector<2x48xf32>, vector<2x48xf32> -> vector<4x48xf32>
    %554 = vector.extract_strided_slice %88 {offsets = [0, 6], sizes = [2, 1], strides = [1, 1]} : vector<2x8xf32> to vector<2x1xf32>
    %555 = vector.extract_strided_slice %88 {offsets = [0, 1], sizes = [2, 1], strides = [1, 1]} : vector<2x8xf32> to vector<2x1xf32>
    %556 = tpu.concatenate %554, %555 in 0 : vector<2x1xf32>, vector<2x1xf32> -> vector<4x1xf32>
    %557 = vector.broadcast %177 : vector<4x1xf32> to vector<4x16xf32>
    %558 = arith.mulf %540, %557 : vector<4x16xf32>
    %cst_210 = arith.constant 1.000000e+00 : f32
    %559 = vector.broadcast %cst_210 : f32 to vector<4x1xf32>
    %560 = arith.subf %559, %177 : vector<4x1xf32>
    %561 = vector.broadcast %560 : vector<4x1xf32> to vector<4x16xf32>
    %562 = arith.mulf %540, %561 : vector<4x16xf32>
    %563 = tpu.concatenate %558, %562 in 1 : vector<4x16xf32>, vector<4x16xf32> -> vector<4x32xf32>
    %cst_211 = arith.constant dense<0.000000e+00> : vector<4x48xf32>
    %564 = tpu.matmul %563, %187, %cst_211 {dimension_numbers = #tpu.dot_dimension_numbers<[1], [0], [0], [1], [0, 0, 1, 1], [], []>} : vector<4x32xf32>, vector<32x48xf32>, vector<4x48xf32> -> vector<4x48xf32>
    %565 = arith.addf %564, %199 : vector<4x48xf32>
    %566 = vector.extract_strided_slice %553 {offsets = [0, 0], sizes = [4, 16], strides = [1, 1]} : vector<4x48xf32> to vector<4x16xf32>
    %567 = vector.extract_strided_slice %565 {offsets = [0, 0], sizes = [4, 16], strides = [1, 1]} : vector<4x48xf32> to vector<4x16xf32>
    %568 = arith.addf %566, %567 : vector<4x16xf32>
    %569 = arith.negf %568 : vector<4x16xf32>
    %570 = math.exp %569 : vector<4x16xf32>
    %cst_212 = arith.constant 1.000000e+00 : f32
    %571 = vector.broadcast %cst_212 : f32 to vector<4x16xf32>
    %572 = arith.addf %571, %570 : vector<4x16xf32>
    %573 = arith.divf %571, %572 : vector<4x16xf32>
    %574 = vector.extract_strided_slice %553 {offsets = [0, 16], sizes = [4, 16], strides = [1, 1]} : vector<4x48xf32> to vector<4x16xf32>
    %575 = vector.extract_strided_slice %565 {offsets = [0, 16], sizes = [4, 16], strides = [1, 1]} : vector<4x48xf32> to vector<4x16xf32>
    %576 = arith.addf %574, %575 : vector<4x16xf32>
    %577 = arith.negf %576 : vector<4x16xf32>
    %578 = math.exp %577 : vector<4x16xf32>
    %cst_213 = arith.constant 1.000000e+00 : f32
    %579 = vector.broadcast %cst_213 : f32 to vector<4x16xf32>
    %580 = arith.addf %579, %578 : vector<4x16xf32>
    %581 = arith.divf %579, %580 : vector<4x16xf32>
    %582 = vector.extract_strided_slice %553 {offsets = [0, 32], sizes = [4, 16], strides = [1, 1]} : vector<4x48xf32> to vector<4x16xf32>
    %583 = vector.extract_strided_slice %565 {offsets = [0, 32], sizes = [4, 16], strides = [1, 1]} : vector<4x48xf32> to vector<4x16xf32>
    %584 = arith.mulf %573, %583 : vector<4x16xf32>
    %585 = arith.addf %582, %584 : vector<4x16xf32>
    %586 = math.tanh %585 : vector<4x16xf32>
    %cst_214 = arith.constant 1.000000e+00 : f32
    %587 = vector.broadcast %cst_214 : f32 to vector<4x16xf32>
    %588 = arith.subf %587, %581 : vector<4x16xf32>
    %589 = arith.mulf %588, %586 : vector<4x16xf32>
    %590 = arith.mulf %581, %540 : vector<4x16xf32>
    %591 = arith.addf %589, %590 : vector<4x16xf32>
    %592 = vector.broadcast %556 : vector<4x1xf32> to vector<4x16xf32>
    %593 = arith.mulf %592, %591 : vector<4x16xf32>
    %cst_215 = arith.constant 1.000000e+00 : f32
    %594 = vector.broadcast %cst_215 : f32 to vector<4x1xf32>
    %595 = arith.subf %594, %556 : vector<4x1xf32>
    %596 = vector.broadcast %595 : vector<4x1xf32> to vector<4x16xf32>
    %597 = arith.mulf %596, %540 : vector<4x16xf32>
    %598 = arith.addf %593, %597 : vector<4x16xf32>
    %599 = vector.broadcast %556 : vector<4x1xf32> to vector<4x16xf32>
    %600 = arith.mulf %599, %598 : vector<4x16xf32>
    %601 = vector.extract_strided_slice %600 {offsets = [0, 0], sizes = [2, 16], strides = [1, 1]} : vector<4x16xf32> to vector<2x16xf32>
    %602 = vector.shape_cast %601 : vector<2x16xf32> to vector<2x1x16xf32>
    %c0_216 = arith.constant 0 : index
    %c6_217 = arith.constant 6 : index
    %c0_218 = arith.constant 0 : index
    %603 = vector.load %arg27[%c0_216, %c6_217, %c0_218] : memref<2x8x32xf32, #tpu.memory_space<vmem>>, vector<2x1x16xf32>
    tpu.vector_store %arg27[%c0_216, %c6_217, %c0_218], %602 {strides = array<i32>} : memref<2x8x32xf32, #tpu.memory_space<vmem>>, vector<2x1x16xf32>,
    %604 = vector.extract_strided_slice %600 {offsets = [2, 0], sizes = [2, 16], strides = [1, 1]} : vector<4x16xf32> to vector<2x16xf32>
    %605 = vector.shape_cast %604 : vector<2x16xf32> to vector<2x1x16xf32>
    %c0_219 = arith.constant 0 : index
    %c1_220 = arith.constant 1 : index
    %c16_221 = arith.constant 16 : index
    %606 = vector.load %arg27[%c0_219, %c1_220, %c16_221] : memref<2x8x32xf32, #tpu.memory_space<vmem>>, vector<2x1x16xf32>
    tpu.vector_store %arg27[%c0_219, %c1_220, %c16_221], %605 {strides = array<i32>} : memref<2x8x32xf32, #tpu.memory_space<vmem>>, vector<2x1x16xf32>,
    %607 = vector.extract_strided_slice %186 {offsets = [0, 7, 0], sizes = [2, 1, 48], strides = [1, 1, 1]} : vector<2x8x96xf32> to vector<2x1x48xf32>
    %608 = vector.shape_cast %607 : vector<2x1x48xf32> to vector<2x48xf32>
    %609 = vector.extract_strided_slice %186 {offsets = [0, 0, 48], sizes = [2, 1, 48], strides = [1, 1, 1]} : vector<2x8x96xf32> to vector<2x1x48xf32>
    %610 = vector.shape_cast %609 : vector<2x1x48xf32> to vector<2x48xf32>
    %611 = tpu.concatenate %608, %610 in 0 : vector<2x48xf32>, vector<2x48xf32> -> vector<4x48xf32>
    %612 = vector.extract_strided_slice %88 {offsets = [0, 7], sizes = [2, 1], strides = [1, 1]} : vector<2x8xf32> to vector<2x1xf32>
    %613 = vector.extract_strided_slice %88 {offsets = [0, 0], sizes = [2, 1], strides = [1, 1]} : vector<2x8xf32> to vector<2x1xf32>
    %614 = tpu.concatenate %612, %613 in 0 : vector<2x1xf32>, vector<2x1xf32> -> vector<4x1xf32>
    %615 = vector.broadcast %177 : vector<4x1xf32> to vector<4x16xf32>
    %616 = arith.mulf %598, %615 : vector<4x16xf32>
    %cst_222 = arith.constant 1.000000e+00 : f32
    %617 = vector.broadcast %cst_222 : f32 to vector<4x1xf32>
    %618 = arith.subf %617, %177 : vector<4x1xf32>
    %619 = vector.broadcast %618 : vector<4x1xf32> to vector<4x16xf32>
    %620 = arith.mulf %598, %619 : vector<4x16xf32>
    %621 = tpu.concatenate %616, %620 in 1 : vector<4x16xf32>, vector<4x16xf32> -> vector<4x32xf32>
    %cst_223 = arith.constant dense<0.000000e+00> : vector<4x48xf32>
    %622 = tpu.matmul %621, %187, %cst_223 {dimension_numbers = #tpu.dot_dimension_numbers<[1], [0], [0], [1], [0, 0, 1, 1], [], []>} : vector<4x32xf32>, vector<32x48xf32>, vector<4x48xf32> -> vector<4x48xf32>
    %623 = arith.addf %622, %199 : vector<4x48xf32>
    %624 = vector.extract_strided_slice %611 {offsets = [0, 0], sizes = [4, 16], strides = [1, 1]} : vector<4x48xf32> to vector<4x16xf32>
    %625 = vector.extract_strided_slice %623 {offsets = [0, 0], sizes = [4, 16], strides = [1, 1]} : vector<4x48xf32> to vector<4x16xf32>
    %626 = arith.addf %624, %625 : vector<4x16xf32>
    %627 = arith.negf %626 : vector<4x16xf32>
    %628 = math.exp %627 : vector<4x16xf32>
    %cst_224 = arith.constant 1.000000e+00 : f32
    %629 = vector.broadcast %cst_224 : f32 to vector<4x16xf32>
    %630 = arith.addf %629, %628 : vector<4x16xf32>
    %631 = arith.divf %629, %630 : vector<4x16xf32>
    %632 = vector.extract_strided_slice %611 {offsets = [0, 16], sizes = [4, 16], strides = [1, 1]} : vector<4x48xf32> to vector<4x16xf32>
    %633 = vector.extract_strided_slice %623 {offsets = [0, 16], sizes = [4, 16], strides = [1, 1]} : vector<4x48xf32> to vector<4x16xf32>
    %634 = arith.addf %632, %633 : vector<4x16xf32>
    %635 = arith.negf %634 : vector<4x16xf32>
    %636 = math.exp %635 : vector<4x16xf32>
    %cst_225 = arith.constant 1.000000e+00 : f32
    %637 = vector.broadcast %cst_225 : f32 to vector<4x16xf32>
    %638 = arith.addf %637, %636 : vector<4x16xf32>
    %639 = arith.divf %637, %638 : vector<4x16xf32>
    %640 = vector.extract_strided_slice %611 {offsets = [0, 32], sizes = [4, 16], strides = [1, 1]} : vector<4x48xf32> to vector<4x16xf32>
    %641 = vector.extract_strided_slice %623 {offsets = [0, 32], sizes = [4, 16], strides = [1, 1]} : vector<4x48xf32> to vector<4x16xf32>
    %642 = arith.mulf %631, %641 : vector<4x16xf32>
    %643 = arith.addf %640, %642 : vector<4x16xf32>
    %644 = math.tanh %643 : vector<4x16xf32>
    %cst_226 = arith.constant 1.000000e+00 : f32
    %645 = vector.broadcast %cst_226 : f32 to vector<4x16xf32>
    %646 = arith.subf %645, %639 : vector<4x16xf32>
    %647 = arith.mulf %646, %644 : vector<4x16xf32>
    %648 = arith.mulf %639, %598 : vector<4x16xf32>
    %649 = arith.addf %647, %648 : vector<4x16xf32>
    %650 = vector.broadcast %614 : vector<4x1xf32> to vector<4x16xf32>
    %651 = arith.mulf %650, %649 : vector<4x16xf32>
    %cst_227 = arith.constant 1.000000e+00 : f32
    %652 = vector.broadcast %cst_227 : f32 to vector<4x1xf32>
    %653 = arith.subf %652, %614 : vector<4x1xf32>
    %654 = vector.broadcast %653 : vector<4x1xf32> to vector<4x16xf32>
    %655 = arith.mulf %654, %598 : vector<4x16xf32>
    %656 = arith.addf %651, %655 : vector<4x16xf32>
    %657 = vector.broadcast %614 : vector<4x1xf32> to vector<4x16xf32>
    %658 = arith.mulf %657, %656 : vector<4x16xf32>
    %659 = vector.extract_strided_slice %658 {offsets = [0, 0], sizes = [2, 16], strides = [1, 1]} : vector<4x16xf32> to vector<2x16xf32>
    %660 = vector.shape_cast %659 : vector<2x16xf32> to vector<2x1x16xf32>
    %c0_228 = arith.constant 0 : index
    %c7_229 = arith.constant 7 : index
    %c0_230 = arith.constant 0 : index
    %661 = vector.load %arg27[%c0_228, %c7_229, %c0_230] : memref<2x8x32xf32, #tpu.memory_space<vmem>>, vector<2x1x16xf32>
    tpu.vector_store %arg27[%c0_228, %c7_229, %c0_230], %660 {strides = array<i32>} : memref<2x8x32xf32, #tpu.memory_space<vmem>>, vector<2x1x16xf32>,
    %662 = vector.extract_strided_slice %658 {offsets = [2, 0], sizes = [2, 16], strides = [1, 1]} : vector<4x16xf32> to vector<2x16xf32>
    %663 = vector.shape_cast %662 : vector<2x16xf32> to vector<2x1x16xf32>
    %c0_231 = arith.constant 0 : index
    %c0_232 = arith.constant 0 : index
    %c16_233 = arith.constant 16 : index
    %664 = vector.load %arg27[%c0_231, %c0_232, %c16_233] : memref<2x8x32xf32, #tpu.memory_space<vmem>>, vector<2x1x16xf32>
    tpu.vector_store %arg27[%c0_231, %c0_232, %c16_233], %663 {strides = array<i32>} : memref<2x8x32xf32, #tpu.memory_space<vmem>>, vector<2x1x16xf32>,
    %c0_234 = arith.constant 0 : index
    %c0_235 = arith.constant 0 : index
    %c0_236 = arith.constant 0 : index
    %665 = vector.load %arg27[%c0_234, %c0_235, %c0_236] : memref<2x8x32xf32, #tpu.memory_space<vmem>>, vector<2x8x32xf32>
    %666 = vector.shape_cast %665 : vector<2x8x32xf32> to vector<16x32xf32>
    %c0_237 = arith.constant 0 : index
    %c0_238 = arith.constant 0 : index
    %667 = vector.load %arg10[%c0_237, %c0_238] : memref<32x96xf32, #tpu.memory_space<vmem>>, vector<32x96xf32>
    %cst_239 = arith.constant dense<0.000000e+00> : vector<16x96xf32>
    %668 = tpu.matmul %666, %667, %cst_239 {dimension_numbers = #tpu.dot_dimension_numbers<[1], [0], [0], [1], [0, 0, 1, 1], [], []>} : vector<16x32xf32>, vector<32x96xf32>, vector<16x96xf32> -> vector<16x96xf32>
    %c0_240 = arith.constant 0 : index
    %c0_241 = arith.constant 0 : index
    %669 = vector.load %arg12[%c0_240, %c0_241] : memref<1x96xf32, #tpu.memory_space<vmem>>, vector<1x96xf32>
    %670 = vector.broadcast %669 : vector<1x96xf32> to vector<16x96xf32>
    %671 = arith.addf %668, %670 : vector<16x96xf32>
    %672 = vector.shape_cast %671 : vector<16x96xf32> to vector<2x8x96xf32>
    %c0_242 = arith.constant 0 : index
    %c0_243 = arith.constant 0 : index
    %673 = vector.load %arg11[%c0_242, %c0_243] : memref<32x48xf32, #tpu.memory_space<vmem>>, vector<32x48xf32>
    %c0_244 = arith.constant 0 : index
    %c0_245 = arith.constant 0 : index
    %674 = vector.load %arg13[%c0_244, %c0_245] : memref<2x48xf32, #tpu.memory_space<vmem>>, vector<2x48xf32>
    %675 = vector.extract_strided_slice %674 {offsets = [0, 0], sizes = [1, 48], strides = [1, 1]} : vector<2x48xf32> to vector<1x48xf32>
    %676 = vector.broadcast %177 : vector<4x1xf32> to vector<4x48xf32>
    %677 = vector.broadcast %675 : vector<1x48xf32> to vector<4x48xf32>
    %678 = arith.mulf %676, %677 : vector<4x48xf32>
    %cst_246 = arith.constant 1.000000e+00 : f32
    %679 = vector.broadcast %cst_246 : f32 to vector<4x1xf32>
    %680 = arith.subf %679, %177 : vector<4x1xf32>
    %681 = vector.extract_strided_slice %674 {offsets = [1, 0], sizes = [1, 48], strides = [1, 1]} : vector<2x48xf32> to vector<1x48xf32>
    %682 = vector.broadcast %680 : vector<4x1xf32> to vector<4x48xf32>
    %683 = vector.broadcast %681 : vector<1x48xf32> to vector<4x48xf32>
    %684 = arith.mulf %682, %683 : vector<4x48xf32>
    %685 = arith.addf %678, %684 : vector<4x48xf32>
    %cst_247 = arith.constant 0.000000e+00 : f32
    %686 = vector.broadcast %cst_247 : f32 to vector<4x16xf32>
    %687 = vector.extract_strided_slice %672 {offsets = [0, 0, 0], sizes = [2, 1, 48], strides = [1, 1, 1]} : vector<2x8x96xf32> to vector<2x1x48xf32>
    %688 = vector.shape_cast %687 : vector<2x1x48xf32> to vector<2x48xf32>
    %689 = vector.extract_strided_slice %672 {offsets = [0, 7, 48], sizes = [2, 1, 48], strides = [1, 1, 1]} : vector<2x8x96xf32> to vector<2x1x48xf32>
    %690 = vector.shape_cast %689 : vector<2x1x48xf32> to vector<2x48xf32>
    %691 = tpu.concatenate %688, %690 in 0 : vector<2x48xf32>, vector<2x48xf32> -> vector<4x48xf32>
    %692 = vector.extract_strided_slice %88 {offsets = [0, 0], sizes = [2, 1], strides = [1, 1]} : vector<2x8xf32> to vector<2x1xf32>
    %693 = vector.extract_strided_slice %88 {offsets = [0, 7], sizes = [2, 1], strides = [1, 1]} : vector<2x8xf32> to vector<2x1xf32>
    %694 = tpu.concatenate %692, %693 in 0 : vector<2x1xf32>, vector<2x1xf32> -> vector<4x1xf32>
    %695 = vector.broadcast %177 : vector<4x1xf32> to vector<4x16xf32>
    %696 = arith.mulf %686, %695 : vector<4x16xf32>
    %cst_248 = arith.constant 1.000000e+00 : f32
    %697 = vector.broadcast %cst_248 : f32 to vector<4x1xf32>
    %698 = arith.subf %697, %177 : vector<4x1xf32>
    %699 = vector.broadcast %698 : vector<4x1xf32> to vector<4x16xf32>
    %700 = arith.mulf %686, %699 : vector<4x16xf32>
    %701 = tpu.concatenate %696, %700 in 1 : vector<4x16xf32>, vector<4x16xf32> -> vector<4x32xf32>
    %cst_249 = arith.constant dense<0.000000e+00> : vector<4x48xf32>
    %702 = tpu.matmul %701, %673, %cst_249 {dimension_numbers = #tpu.dot_dimension_numbers<[1], [0], [0], [1], [0, 0, 1, 1], [], []>} : vector<4x32xf32>, vector<32x48xf32>, vector<4x48xf32> -> vector<4x48xf32>
    %703 = arith.addf %702, %685 : vector<4x48xf32>
    %704 = vector.extract_strided_slice %691 {offsets = [0, 0], sizes = [4, 16], strides = [1, 1]} : vector<4x48xf32> to vector<4x16xf32>
    %705 = vector.extract_strided_slice %703 {offsets = [0, 0], sizes = [4, 16], strides = [1, 1]} : vector<4x48xf32> to vector<4x16xf32>
    %706 = arith.addf %704, %705 : vector<4x16xf32>
    %707 = arith.negf %706 : vector<4x16xf32>
    %708 = math.exp %707 : vector<4x16xf32>
    %cst_250 = arith.constant 1.000000e+00 : f32
    %709 = vector.broadcast %cst_250 : f32 to vector<4x16xf32>
    %710 = arith.addf %709, %708 : vector<4x16xf32>
    %711 = arith.divf %709, %710 : vector<4x16xf32>
    %712 = vector.extract_strided_slice %691 {offsets = [0, 16], sizes = [4, 16], strides = [1, 1]} : vector<4x48xf32> to vector<4x16xf32>
    %713 = vector.extract_strided_slice %703 {offsets = [0, 16], sizes = [4, 16], strides = [1, 1]} : vector<4x48xf32> to vector<4x16xf32>
    %714 = arith.addf %712, %713 : vector<4x16xf32>
    %715 = arith.negf %714 : vector<4x16xf32>
    %716 = math.exp %715 : vector<4x16xf32>
    %cst_251 = arith.constant 1.000000e+00 : f32
    %717 = vector.broadcast %cst_251 : f32 to vector<4x16xf32>
    %718 = arith.addf %717, %716 : vector<4x16xf32>
    %719 = arith.divf %717, %718 : vector<4x16xf32>
    %720 = vector.extract_strided_slice %691 {offsets = [0, 32], sizes = [4, 16], strides = [1, 1]} : vector<4x48xf32> to vector<4x16xf32>
    %721 = vector.extract_strided_slice %703 {offsets = [0, 32], sizes = [4, 16], strides = [1, 1]} : vector<4x48xf32> to vector<4x16xf32>
    %722 = arith.mulf %711, %721 : vector<4x16xf32>
    %723 = arith.addf %720, %722 : vector<4x16xf32>
    %724 = math.tanh %723 : vector<4x16xf32>
    %cst_252 = arith.constant 1.000000e+00 : f32
    %725 = vector.broadcast %cst_252 : f32 to vector<4x16xf32>
    %726 = arith.subf %725, %719 : vector<4x16xf32>
    %727 = arith.mulf %726, %724 : vector<4x16xf32>
    %728 = arith.mulf %719, %686 : vector<4x16xf32>
    %729 = arith.addf %727, %728 : vector<4x16xf32>
    %730 = vector.broadcast %694 : vector<4x1xf32> to vector<4x16xf32>
    %731 = arith.mulf %730, %729 : vector<4x16xf32>
    %cst_253 = arith.constant 1.000000e+00 : f32
    %732 = vector.broadcast %cst_253 : f32 to vector<4x1xf32>
    %733 = arith.subf %732, %694 : vector<4x1xf32>
    %734 = vector.broadcast %733 : vector<4x1xf32> to vector<4x16xf32>
    %735 = arith.mulf %734, %686 : vector<4x16xf32>
    %736 = arith.addf %731, %735 : vector<4x16xf32>
    %737 = vector.broadcast %694 : vector<4x1xf32> to vector<4x16xf32>
    %738 = arith.mulf %737, %736 : vector<4x16xf32>
    %739 = vector.extract_strided_slice %738 {offsets = [0, 0], sizes = [2, 16], strides = [1, 1]} : vector<4x16xf32> to vector<2x16xf32>
    %740 = vector.shape_cast %739 : vector<2x16xf32> to vector<2x1x16xf32>
    %c0_254 = arith.constant 0 : index
    %c1_255 = arith.constant 1 : index
    %c0_256 = arith.constant 0 : index
    %741 = vector.load %arg28[%c0_254, %c1_255, %c0_256] : memref<2x10x32xf32, #tpu.memory_space<vmem>>, vector<2x1x16xf32>
    tpu.vector_store %arg28[%c0_254, %c1_255, %c0_256], %740 {strides = array<i32>} : memref<2x10x32xf32, #tpu.memory_space<vmem>>, vector<2x1x16xf32>,
    %742 = vector.extract_strided_slice %738 {offsets = [2, 0], sizes = [2, 16], strides = [1, 1]} : vector<4x16xf32> to vector<2x16xf32>
    %743 = vector.shape_cast %742 : vector<2x16xf32> to vector<2x1x16xf32>
    %c0_257 = arith.constant 0 : index
    %c8_258 = arith.constant 8 : index
    %c16_259 = arith.constant 16 : index
    %744 = vector.load %arg28[%c0_257, %c8_258, %c16_259] : memref<2x10x32xf32, #tpu.memory_space<vmem>>, vector<2x1x16xf32>
    tpu.vector_store %arg28[%c0_257, %c8_258, %c16_259], %743 {strides = array<i32>} : memref<2x10x32xf32, #tpu.memory_space<vmem>>, vector<2x1x16xf32>,
    %745 = vector.extract_strided_slice %672 {offsets = [0, 1, 0], sizes = [2, 1, 48], strides = [1, 1, 1]} : vector<2x8x96xf32> to vector<2x1x48xf32>
    %746 = vector.shape_cast %745 : vector<2x1x48xf32> to vector<2x48xf32>
    %747 = vector.extract_strided_slice %672 {offsets = [0, 6, 48], sizes = [2, 1, 48], strides = [1, 1, 1]} : vector<2x8x96xf32> to vector<2x1x48xf32>
    %748 = vector.shape_cast %747 : vector<2x1x48xf32> to vector<2x48xf32>
    %749 = tpu.concatenate %746, %748 in 0 : vector<2x48xf32>, vector<2x48xf32> -> vector<4x48xf32>
    %750 = vector.extract_strided_slice %88 {offsets = [0, 1], sizes = [2, 1], strides = [1, 1]} : vector<2x8xf32> to vector<2x1xf32>
    %751 = vector.extract_strided_slice %88 {offsets = [0, 6], sizes = [2, 1], strides = [1, 1]} : vector<2x8xf32> to vector<2x1xf32>
    %752 = tpu.concatenate %750, %751 in 0 : vector<2x1xf32>, vector<2x1xf32> -> vector<4x1xf32>
    %753 = vector.broadcast %177 : vector<4x1xf32> to vector<4x16xf32>
    %754 = arith.mulf %736, %753 : vector<4x16xf32>
    %cst_260 = arith.constant 1.000000e+00 : f32
    %755 = vector.broadcast %cst_260 : f32 to vector<4x1xf32>
    %756 = arith.subf %755, %177 : vector<4x1xf32>
    %757 = vector.broadcast %756 : vector<4x1xf32> to vector<4x16xf32>
    %758 = arith.mulf %736, %757 : vector<4x16xf32>
    %759 = tpu.concatenate %754, %758 in 1 : vector<4x16xf32>, vector<4x16xf32> -> vector<4x32xf32>
    %cst_261 = arith.constant dense<0.000000e+00> : vector<4x48xf32>
    %760 = tpu.matmul %759, %673, %cst_261 {dimension_numbers = #tpu.dot_dimension_numbers<[1], [0], [0], [1], [0, 0, 1, 1], [], []>} : vector<4x32xf32>, vector<32x48xf32>, vector<4x48xf32> -> vector<4x48xf32>
    %761 = arith.addf %760, %685 : vector<4x48xf32>
    %762 = vector.extract_strided_slice %749 {offsets = [0, 0], sizes = [4, 16], strides = [1, 1]} : vector<4x48xf32> to vector<4x16xf32>
    %763 = vector.extract_strided_slice %761 {offsets = [0, 0], sizes = [4, 16], strides = [1, 1]} : vector<4x48xf32> to vector<4x16xf32>
    %764 = arith.addf %762, %763 : vector<4x16xf32>
    %765 = arith.negf %764 : vector<4x16xf32>
    %766 = math.exp %765 : vector<4x16xf32>
    %cst_262 = arith.constant 1.000000e+00 : f32
    %767 = vector.broadcast %cst_262 : f32 to vector<4x16xf32>
    %768 = arith.addf %767, %766 : vector<4x16xf32>
    %769 = arith.divf %767, %768 : vector<4x16xf32>
    %770 = vector.extract_strided_slice %749 {offsets = [0, 16], sizes = [4, 16], strides = [1, 1]} : vector<4x48xf32> to vector<4x16xf32>
    %771 = vector.extract_strided_slice %761 {offsets = [0, 16], sizes = [4, 16], strides = [1, 1]} : vector<4x48xf32> to vector<4x16xf32>
    %772 = arith.addf %770, %771 : vector<4x16xf32>
    %773 = arith.negf %772 : vector<4x16xf32>
    %774 = math.exp %773 : vector<4x16xf32>
    %cst_263 = arith.constant 1.000000e+00 : f32
    %775 = vector.broadcast %cst_263 : f32 to vector<4x16xf32>
    %776 = arith.addf %775, %774 : vector<4x16xf32>
    %777 = arith.divf %775, %776 : vector<4x16xf32>
    %778 = vector.extract_strided_slice %749 {offsets = [0, 32], sizes = [4, 16], strides = [1, 1]} : vector<4x48xf32> to vector<4x16xf32>
    %779 = vector.extract_strided_slice %761 {offsets = [0, 32], sizes = [4, 16], strides = [1, 1]} : vector<4x48xf32> to vector<4x16xf32>
    %780 = arith.mulf %769, %779 : vector<4x16xf32>
    %781 = arith.addf %778, %780 : vector<4x16xf32>
    %782 = math.tanh %781 : vector<4x16xf32>
    %cst_264 = arith.constant 1.000000e+00 : f32
    %783 = vector.broadcast %cst_264 : f32 to vector<4x16xf32>
    %784 = arith.subf %783, %777 : vector<4x16xf32>
    %785 = arith.mulf %784, %782 : vector<4x16xf32>
    %786 = arith.mulf %777, %736 : vector<4x16xf32>
    %787 = arith.addf %785, %786 : vector<4x16xf32>
    %788 = vector.broadcast %752 : vector<4x1xf32> to vector<4x16xf32>
    %789 = arith.mulf %788, %787 : vector<4x16xf32>
    %cst_265 = arith.constant 1.000000e+00 : f32
    %790 = vector.broadcast %cst_265 : f32 to vector<4x1xf32>
    %791 = arith.subf %790, %752 : vector<4x1xf32>
    %792 = vector.broadcast %791 : vector<4x1xf32> to vector<4x16xf32>
    %793 = arith.mulf %792, %736 : vector<4x16xf32>
    %794 = arith.addf %789, %793 : vector<4x16xf32>
    %795 = vector.broadcast %752 : vector<4x1xf32> to vector<4x16xf32>
    %796 = arith.mulf %795, %794 : vector<4x16xf32>
    %797 = vector.extract_strided_slice %796 {offsets = [0, 0], sizes = [2, 16], strides = [1, 1]} : vector<4x16xf32> to vector<2x16xf32>
    %798 = vector.shape_cast %797 : vector<2x16xf32> to vector<2x1x16xf32>
    %c0_266 = arith.constant 0 : index
    %c2_267 = arith.constant 2 : index
    %c0_268 = arith.constant 0 : index
    %799 = vector.load %arg28[%c0_266, %c2_267, %c0_268] : memref<2x10x32xf32, #tpu.memory_space<vmem>>, vector<2x1x16xf32>
    tpu.vector_store %arg28[%c0_266, %c2_267, %c0_268], %798 {strides = array<i32>} : memref<2x10x32xf32, #tpu.memory_space<vmem>>, vector<2x1x16xf32>,
    %800 = vector.extract_strided_slice %796 {offsets = [2, 0], sizes = [2, 16], strides = [1, 1]} : vector<4x16xf32> to vector<2x16xf32>
    %801 = vector.shape_cast %800 : vector<2x16xf32> to vector<2x1x16xf32>
    %c0_269 = arith.constant 0 : index
    %c7_270 = arith.constant 7 : index
    %c16_271 = arith.constant 16 : index
    %802 = vector.load %arg28[%c0_269, %c7_270, %c16_271] : memref<2x10x32xf32, #tpu.memory_space<vmem>>, vector<2x1x16xf32>
    tpu.vector_store %arg28[%c0_269, %c7_270, %c16_271], %801 {strides = array<i32>} : memref<2x10x32xf32, #tpu.memory_space<vmem>>, vector<2x1x16xf32>,
    %803 = vector.extract_strided_slice %672 {offsets = [0, 2, 0], sizes = [2, 1, 48], strides = [1, 1, 1]} : vector<2x8x96xf32> to vector<2x1x48xf32>
    %804 = vector.shape_cast %803 : vector<2x1x48xf32> to vector<2x48xf32>
    %805 = vector.extract_strided_slice %672 {offsets = [0, 5, 48], sizes = [2, 1, 48], strides = [1, 1, 1]} : vector<2x8x96xf32> to vector<2x1x48xf32>
    %806 = vector.shape_cast %805 : vector<2x1x48xf32> to vector<2x48xf32>
    %807 = tpu.concatenate %804, %806 in 0 : vector<2x48xf32>, vector<2x48xf32> -> vector<4x48xf32>
    %808 = vector.extract_strided_slice %88 {offsets = [0, 2], sizes = [2, 1], strides = [1, 1]} : vector<2x8xf32> to vector<2x1xf32>
    %809 = vector.extract_strided_slice %88 {offsets = [0, 5], sizes = [2, 1], strides = [1, 1]} : vector<2x8xf32> to vector<2x1xf32>
    %810 = tpu.concatenate %808, %809 in 0 : vector<2x1xf32>, vector<2x1xf32> -> vector<4x1xf32>
    %811 = vector.broadcast %177 : vector<4x1xf32> to vector<4x16xf32>
    %812 = arith.mulf %794, %811 : vector<4x16xf32>
    %cst_272 = arith.constant 1.000000e+00 : f32
    %813 = vector.broadcast %cst_272 : f32 to vector<4x1xf32>
    %814 = arith.subf %813, %177 : vector<4x1xf32>
    %815 = vector.broadcast %814 : vector<4x1xf32> to vector<4x16xf32>
    %816 = arith.mulf %794, %815 : vector<4x16xf32>
    %817 = tpu.concatenate %812, %816 in 1 : vector<4x16xf32>, vector<4x16xf32> -> vector<4x32xf32>
    %cst_273 = arith.constant dense<0.000000e+00> : vector<4x48xf32>
    %818 = tpu.matmul %817, %673, %cst_273 {dimension_numbers = #tpu.dot_dimension_numbers<[1], [0], [0], [1], [0, 0, 1, 1], [], []>} : vector<4x32xf32>, vector<32x48xf32>, vector<4x48xf32> -> vector<4x48xf32>
    %819 = arith.addf %818, %685 : vector<4x48xf32>
    %820 = vector.extract_strided_slice %807 {offsets = [0, 0], sizes = [4, 16], strides = [1, 1]} : vector<4x48xf32> to vector<4x16xf32>
    %821 = vector.extract_strided_slice %819 {offsets = [0, 0], sizes = [4, 16], strides = [1, 1]} : vector<4x48xf32> to vector<4x16xf32>
    %822 = arith.addf %820, %821 : vector<4x16xf32>
    %823 = arith.negf %822 : vector<4x16xf32>
    %824 = math.exp %823 : vector<4x16xf32>
    %cst_274 = arith.constant 1.000000e+00 : f32
    %825 = vector.broadcast %cst_274 : f32 to vector<4x16xf32>
    %826 = arith.addf %825, %824 : vector<4x16xf32>
    %827 = arith.divf %825, %826 : vector<4x16xf32>
    %828 = vector.extract_strided_slice %807 {offsets = [0, 16], sizes = [4, 16], strides = [1, 1]} : vector<4x48xf32> to vector<4x16xf32>
    %829 = vector.extract_strided_slice %819 {offsets = [0, 16], sizes = [4, 16], strides = [1, 1]} : vector<4x48xf32> to vector<4x16xf32>
    %830 = arith.addf %828, %829 : vector<4x16xf32>
    %831 = arith.negf %830 : vector<4x16xf32>
    %832 = math.exp %831 : vector<4x16xf32>
    %cst_275 = arith.constant 1.000000e+00 : f32
    %833 = vector.broadcast %cst_275 : f32 to vector<4x16xf32>
    %834 = arith.addf %833, %832 : vector<4x16xf32>
    %835 = arith.divf %833, %834 : vector<4x16xf32>
    %836 = vector.extract_strided_slice %807 {offsets = [0, 32], sizes = [4, 16], strides = [1, 1]} : vector<4x48xf32> to vector<4x16xf32>
    %837 = vector.extract_strided_slice %819 {offsets = [0, 32], sizes = [4, 16], strides = [1, 1]} : vector<4x48xf32> to vector<4x16xf32>
    %838 = arith.mulf %827, %837 : vector<4x16xf32>
    %839 = arith.addf %836, %838 : vector<4x16xf32>
    %840 = math.tanh %839 : vector<4x16xf32>
    %cst_276 = arith.constant 1.000000e+00 : f32
    %841 = vector.broadcast %cst_276 : f32 to vector<4x16xf32>
    %842 = arith.subf %841, %835 : vector<4x16xf32>
    %843 = arith.mulf %842, %840 : vector<4x16xf32>
    %844 = arith.mulf %835, %794 : vector<4x16xf32>
    %845 = arith.addf %843, %844 : vector<4x16xf32>
    %846 = vector.broadcast %810 : vector<4x1xf32> to vector<4x16xf32>
    %847 = arith.mulf %846, %845 : vector<4x16xf32>
    %cst_277 = arith.constant 1.000000e+00 : f32
    %848 = vector.broadcast %cst_277 : f32 to vector<4x1xf32>
    %849 = arith.subf %848, %810 : vector<4x1xf32>
    %850 = vector.broadcast %849 : vector<4x1xf32> to vector<4x16xf32>
    %851 = arith.mulf %850, %794 : vector<4x16xf32>
    %852 = arith.addf %847, %851 : vector<4x16xf32>
    %853 = vector.broadcast %810 : vector<4x1xf32> to vector<4x16xf32>
    %854 = arith.mulf %853, %852 : vector<4x16xf32>
    %855 = vector.extract_strided_slice %854 {offsets = [0, 0], sizes = [2, 16], strides = [1, 1]} : vector<4x16xf32> to vector<2x16xf32>
    %856 = vector.shape_cast %855 : vector<2x16xf32> to vector<2x1x16xf32>
    %c0_278 = arith.constant 0 : index
    %c3_279 = arith.constant 3 : index
    %c0_280 = arith.constant 0 : index
    %857 = vector.load %arg28[%c0_278, %c3_279, %c0_280] : memref<2x10x32xf32, #tpu.memory_space<vmem>>, vector<2x1x16xf32>
    tpu.vector_store %arg28[%c0_278, %c3_279, %c0_280], %856 {strides = array<i32>} : memref<2x10x32xf32, #tpu.memory_space<vmem>>, vector<2x1x16xf32>,
    %858 = vector.extract_strided_slice %854 {offsets = [2, 0], sizes = [2, 16], strides = [1, 1]} : vector<4x16xf32> to vector<2x16xf32>
    %859 = vector.shape_cast %858 : vector<2x16xf32> to vector<2x1x16xf32>
    %c0_281 = arith.constant 0 : index
    %c6_282 = arith.constant 6 : index
    %c16_283 = arith.constant 16 : index
    %860 = vector.load %arg28[%c0_281, %c6_282, %c16_283] : memref<2x10x32xf32, #tpu.memory_space<vmem>>, vector<2x1x16xf32>
    tpu.vector_store %arg28[%c0_281, %c6_282, %c16_283], %859 {strides = array<i32>} : memref<2x10x32xf32, #tpu.memory_space<vmem>>, vector<2x1x16xf32>,
    %861 = vector.extract_strided_slice %672 {offsets = [0, 3, 0], sizes = [2, 1, 48], strides = [1, 1, 1]} : vector<2x8x96xf32> to vector<2x1x48xf32>
    %862 = vector.shape_cast %861 : vector<2x1x48xf32> to vector<2x48xf32>
    %863 = vector.extract_strided_slice %672 {offsets = [0, 4, 48], sizes = [2, 1, 48], strides = [1, 1, 1]} : vector<2x8x96xf32> to vector<2x1x48xf32>
    %864 = vector.shape_cast %863 : vector<2x1x48xf32> to vector<2x48xf32>
    %865 = tpu.concatenate %862, %864 in 0 : vector<2x48xf32>, vector<2x48xf32> -> vector<4x48xf32>
    %866 = vector.extract_strided_slice %88 {offsets = [0, 3], sizes = [2, 1], strides = [1, 1]} : vector<2x8xf32> to vector<2x1xf32>
    %867 = vector.extract_strided_slice %88 {offsets = [0, 4], sizes = [2, 1], strides = [1, 1]} : vector<2x8xf32> to vector<2x1xf32>
    %868 = tpu.concatenate %866, %867 in 0 : vector<2x1xf32>, vector<2x1xf32> -> vector<4x1xf32>
    %869 = vector.broadcast %177 : vector<4x1xf32> to vector<4x16xf32>
    %870 = arith.mulf %852, %869 : vector<4x16xf32>
    %cst_284 = arith.constant 1.000000e+00 : f32
    %871 = vector.broadcast %cst_284 : f32 to vector<4x1xf32>
    %872 = arith.subf %871, %177 : vector<4x1xf32>
    %873 = vector.broadcast %872 : vector<4x1xf32> to vector<4x16xf32>
    %874 = arith.mulf %852, %873 : vector<4x16xf32>
    %875 = tpu.concatenate %870, %874 in 1 : vector<4x16xf32>, vector<4x16xf32> -> vector<4x32xf32>
    %cst_285 = arith.constant dense<0.000000e+00> : vector<4x48xf32>
    %876 = tpu.matmul %875, %673, %cst_285 {dimension_numbers = #tpu.dot_dimension_numbers<[1], [0], [0], [1], [0, 0, 1, 1], [], []>} : vector<4x32xf32>, vector<32x48xf32>, vector<4x48xf32> -> vector<4x48xf32>
    %877 = arith.addf %876, %685 : vector<4x48xf32>
    %878 = vector.extract_strided_slice %865 {offsets = [0, 0], sizes = [4, 16], strides = [1, 1]} : vector<4x48xf32> to vector<4x16xf32>
    %879 = vector.extract_strided_slice %877 {offsets = [0, 0], sizes = [4, 16], strides = [1, 1]} : vector<4x48xf32> to vector<4x16xf32>
    %880 = arith.addf %878, %879 : vector<4x16xf32>
    %881 = arith.negf %880 : vector<4x16xf32>
    %882 = math.exp %881 : vector<4x16xf32>
    %cst_286 = arith.constant 1.000000e+00 : f32
    %883 = vector.broadcast %cst_286 : f32 to vector<4x16xf32>
    %884 = arith.addf %883, %882 : vector<4x16xf32>
    %885 = arith.divf %883, %884 : vector<4x16xf32>
    %886 = vector.extract_strided_slice %865 {offsets = [0, 16], sizes = [4, 16], strides = [1, 1]} : vector<4x48xf32> to vector<4x16xf32>
    %887 = vector.extract_strided_slice %877 {offsets = [0, 16], sizes = [4, 16], strides = [1, 1]} : vector<4x48xf32> to vector<4x16xf32>
    %888 = arith.addf %886, %887 : vector<4x16xf32>
    %889 = arith.negf %888 : vector<4x16xf32>
    %890 = math.exp %889 : vector<4x16xf32>
    %cst_287 = arith.constant 1.000000e+00 : f32
    %891 = vector.broadcast %cst_287 : f32 to vector<4x16xf32>
    %892 = arith.addf %891, %890 : vector<4x16xf32>
    %893 = arith.divf %891, %892 : vector<4x16xf32>
    %894 = vector.extract_strided_slice %865 {offsets = [0, 32], sizes = [4, 16], strides = [1, 1]} : vector<4x48xf32> to vector<4x16xf32>
    %895 = vector.extract_strided_slice %877 {offsets = [0, 32], sizes = [4, 16], strides = [1, 1]} : vector<4x48xf32> to vector<4x16xf32>
    %896 = arith.mulf %885, %895 : vector<4x16xf32>
    %897 = arith.addf %894, %896 : vector<4x16xf32>
    %898 = math.tanh %897 : vector<4x16xf32>
    %cst_288 = arith.constant 1.000000e+00 : f32
    %899 = vector.broadcast %cst_288 : f32 to vector<4x16xf32>
    %900 = arith.subf %899, %893 : vector<4x16xf32>
    %901 = arith.mulf %900, %898 : vector<4x16xf32>
    %902 = arith.mulf %893, %852 : vector<4x16xf32>
    %903 = arith.addf %901, %902 : vector<4x16xf32>
    %904 = vector.broadcast %868 : vector<4x1xf32> to vector<4x16xf32>
    %905 = arith.mulf %904, %903 : vector<4x16xf32>
    %cst_289 = arith.constant 1.000000e+00 : f32
    %906 = vector.broadcast %cst_289 : f32 to vector<4x1xf32>
    %907 = arith.subf %906, %868 : vector<4x1xf32>
    %908 = vector.broadcast %907 : vector<4x1xf32> to vector<4x16xf32>
    %909 = arith.mulf %908, %852 : vector<4x16xf32>
    %910 = arith.addf %905, %909 : vector<4x16xf32>
    %911 = vector.broadcast %868 : vector<4x1xf32> to vector<4x16xf32>
    %912 = arith.mulf %911, %910 : vector<4x16xf32>
    %913 = vector.extract_strided_slice %912 {offsets = [0, 0], sizes = [2, 16], strides = [1, 1]} : vector<4x16xf32> to vector<2x16xf32>
    %914 = vector.shape_cast %913 : vector<2x16xf32> to vector<2x1x16xf32>
    %c0_290 = arith.constant 0 : index
    %c4_291 = arith.constant 4 : index
    %c0_292 = arith.constant 0 : index
    %915 = vector.load %arg28[%c0_290, %c4_291, %c0_292] : memref<2x10x32xf32, #tpu.memory_space<vmem>>, vector<2x1x16xf32>
    tpu.vector_store %arg28[%c0_290, %c4_291, %c0_292], %914 {strides = array<i32>} : memref<2x10x32xf32, #tpu.memory_space<vmem>>, vector<2x1x16xf32>,
    %916 = vector.extract_strided_slice %912 {offsets = [2, 0], sizes = [2, 16], strides = [1, 1]} : vector<4x16xf32> to vector<2x16xf32>
    %917 = vector.shape_cast %916 : vector<2x16xf32> to vector<2x1x16xf32>
    %c0_293 = arith.constant 0 : index
    %c5_294 = arith.constant 5 : index
    %c16_295 = arith.constant 16 : index
    %918 = vector.load %arg28[%c0_293, %c5_294, %c16_295] : memref<2x10x32xf32, #tpu.memory_space<vmem>>, vector<2x1x16xf32>
    tpu.vector_store %arg28[%c0_293, %c5_294, %c16_295], %917 {strides = array<i32>} : memref<2x10x32xf32, #tpu.memory_space<vmem>>, vector<2x1x16xf32>,
    %919 = vector.extract_strided_slice %672 {offsets = [0, 4, 0], sizes = [2, 1, 48], strides = [1, 1, 1]} : vector<2x8x96xf32> to vector<2x1x48xf32>
    %920 = vector.shape_cast %919 : vector<2x1x48xf32> to vector<2x48xf32>
    %921 = vector.extract_strided_slice %672 {offsets = [0, 3, 48], sizes = [2, 1, 48], strides = [1, 1, 1]} : vector<2x8x96xf32> to vector<2x1x48xf32>
    %922 = vector.shape_cast %921 : vector<2x1x48xf32> to vector<2x48xf32>
    %923 = tpu.concatenate %920, %922 in 0 : vector<2x48xf32>, vector<2x48xf32> -> vector<4x48xf32>
    %924 = vector.extract_strided_slice %88 {offsets = [0, 4], sizes = [2, 1], strides = [1, 1]} : vector<2x8xf32> to vector<2x1xf32>
    %925 = vector.extract_strided_slice %88 {offsets = [0, 3], sizes = [2, 1], strides = [1, 1]} : vector<2x8xf32> to vector<2x1xf32>
    %926 = tpu.concatenate %924, %925 in 0 : vector<2x1xf32>, vector<2x1xf32> -> vector<4x1xf32>
    %927 = vector.broadcast %177 : vector<4x1xf32> to vector<4x16xf32>
    %928 = arith.mulf %910, %927 : vector<4x16xf32>
    %cst_296 = arith.constant 1.000000e+00 : f32
    %929 = vector.broadcast %cst_296 : f32 to vector<4x1xf32>
    %930 = arith.subf %929, %177 : vector<4x1xf32>
    %931 = vector.broadcast %930 : vector<4x1xf32> to vector<4x16xf32>
    %932 = arith.mulf %910, %931 : vector<4x16xf32>
    %933 = tpu.concatenate %928, %932 in 1 : vector<4x16xf32>, vector<4x16xf32> -> vector<4x32xf32>
    %cst_297 = arith.constant dense<0.000000e+00> : vector<4x48xf32>
    %934 = tpu.matmul %933, %673, %cst_297 {dimension_numbers = #tpu.dot_dimension_numbers<[1], [0], [0], [1], [0, 0, 1, 1], [], []>} : vector<4x32xf32>, vector<32x48xf32>, vector<4x48xf32> -> vector<4x48xf32>
    %935 = arith.addf %934, %685 : vector<4x48xf32>
    %936 = vector.extract_strided_slice %923 {offsets = [0, 0], sizes = [4, 16], strides = [1, 1]} : vector<4x48xf32> to vector<4x16xf32>
    %937 = vector.extract_strided_slice %935 {offsets = [0, 0], sizes = [4, 16], strides = [1, 1]} : vector<4x48xf32> to vector<4x16xf32>
    %938 = arith.addf %936, %937 : vector<4x16xf32>
    %939 = arith.negf %938 : vector<4x16xf32>
    %940 = math.exp %939 : vector<4x16xf32>
    %cst_298 = arith.constant 1.000000e+00 : f32
    %941 = vector.broadcast %cst_298 : f32 to vector<4x16xf32>
    %942 = arith.addf %941, %940 : vector<4x16xf32>
    %943 = arith.divf %941, %942 : vector<4x16xf32>
    %944 = vector.extract_strided_slice %923 {offsets = [0, 16], sizes = [4, 16], strides = [1, 1]} : vector<4x48xf32> to vector<4x16xf32>
    %945 = vector.extract_strided_slice %935 {offsets = [0, 16], sizes = [4, 16], strides = [1, 1]} : vector<4x48xf32> to vector<4x16xf32>
    %946 = arith.addf %944, %945 : vector<4x16xf32>
    %947 = arith.negf %946 : vector<4x16xf32>
    %948 = math.exp %947 : vector<4x16xf32>
    %cst_299 = arith.constant 1.000000e+00 : f32
    %949 = vector.broadcast %cst_299 : f32 to vector<4x16xf32>
    %950 = arith.addf %949, %948 : vector<4x16xf32>
    %951 = arith.divf %949, %950 : vector<4x16xf32>
    %952 = vector.extract_strided_slice %923 {offsets = [0, 32], sizes = [4, 16], strides = [1, 1]} : vector<4x48xf32> to vector<4x16xf32>
    %953 = vector.extract_strided_slice %935 {offsets = [0, 32], sizes = [4, 16], strides = [1, 1]} : vector<4x48xf32> to vector<4x16xf32>
    %954 = arith.mulf %943, %953 : vector<4x16xf32>
    %955 = arith.addf %952, %954 : vector<4x16xf32>
    %956 = math.tanh %955 : vector<4x16xf32>
    %cst_300 = arith.constant 1.000000e+00 : f32
    %957 = vector.broadcast %cst_300 : f32 to vector<4x16xf32>
    %958 = arith.subf %957, %951 : vector<4x16xf32>
    %959 = arith.mulf %958, %956 : vector<4x16xf32>
    %960 = arith.mulf %951, %910 : vector<4x16xf32>
    %961 = arith.addf %959, %960 : vector<4x16xf32>
    %962 = vector.broadcast %926 : vector<4x1xf32> to vector<4x16xf32>
    %963 = arith.mulf %962, %961 : vector<4x16xf32>
    %cst_301 = arith.constant 1.000000e+00 : f32
    %964 = vector.broadcast %cst_301 : f32 to vector<4x1xf32>
    %965 = arith.subf %964, %926 : vector<4x1xf32>
    %966 = vector.broadcast %965 : vector<4x1xf32> to vector<4x16xf32>
    %967 = arith.mulf %966, %910 : vector<4x16xf32>
    %968 = arith.addf %963, %967 : vector<4x16xf32>
    %969 = vector.broadcast %926 : vector<4x1xf32> to vector<4x16xf32>
    %970 = arith.mulf %969, %968 : vector<4x16xf32>
    %971 = vector.extract_strided_slice %970 {offsets = [0, 0], sizes = [2, 16], strides = [1, 1]} : vector<4x16xf32> to vector<2x16xf32>
    %972 = vector.shape_cast %971 : vector<2x16xf32> to vector<2x1x16xf32>
    %c0_302 = arith.constant 0 : index
    %c5_303 = arith.constant 5 : index
    %c0_304 = arith.constant 0 : index
    %973 = vector.load %arg28[%c0_302, %c5_303, %c0_304] : memref<2x10x32xf32, #tpu.memory_space<vmem>>, vector<2x1x16xf32>
    tpu.vector_store %arg28[%c0_302, %c5_303, %c0_304], %972 {strides = array<i32>} : memref<2x10x32xf32, #tpu.memory_space<vmem>>, vector<2x1x16xf32>,
    %974 = vector.extract_strided_slice %970 {offsets = [2, 0], sizes = [2, 16], strides = [1, 1]} : vector<4x16xf32> to vector<2x16xf32>
    %975 = vector.shape_cast %974 : vector<2x16xf32> to vector<2x1x16xf32>
    %c0_305 = arith.constant 0 : index
    %c4_306 = arith.constant 4 : index
    %c16_307 = arith.constant 16 : index
    %976 = vector.load %arg28[%c0_305, %c4_306, %c16_307] : memref<2x10x32xf32, #tpu.memory_space<vmem>>, vector<2x1x16xf32>
    tpu.vector_store %arg28[%c0_305, %c4_306, %c16_307], %975 {strides = array<i32>} : memref<2x10x32xf32, #tpu.memory_space<vmem>>, vector<2x1x16xf32>,
    %977 = vector.extract_strided_slice %672 {offsets = [0, 5, 0], sizes = [2, 1, 48], strides = [1, 1, 1]} : vector<2x8x96xf32> to vector<2x1x48xf32>
    %978 = vector.shape_cast %977 : vector<2x1x48xf32> to vector<2x48xf32>
    %979 = vector.extract_strided_slice %672 {offsets = [0, 2, 48], sizes = [2, 1, 48], strides = [1, 1, 1]} : vector<2x8x96xf32> to vector<2x1x48xf32>
    %980 = vector.shape_cast %979 : vector<2x1x48xf32> to vector<2x48xf32>
    %981 = tpu.concatenate %978, %980 in 0 : vector<2x48xf32>, vector<2x48xf32> -> vector<4x48xf32>
    %982 = vector.extract_strided_slice %88 {offsets = [0, 5], sizes = [2, 1], strides = [1, 1]} : vector<2x8xf32> to vector<2x1xf32>
    %983 = vector.extract_strided_slice %88 {offsets = [0, 2], sizes = [2, 1], strides = [1, 1]} : vector<2x8xf32> to vector<2x1xf32>
    %984 = tpu.concatenate %982, %983 in 0 : vector<2x1xf32>, vector<2x1xf32> -> vector<4x1xf32>
    %985 = vector.broadcast %177 : vector<4x1xf32> to vector<4x16xf32>
    %986 = arith.mulf %968, %985 : vector<4x16xf32>
    %cst_308 = arith.constant 1.000000e+00 : f32
    %987 = vector.broadcast %cst_308 : f32 to vector<4x1xf32>
    %988 = arith.subf %987, %177 : vector<4x1xf32>
    %989 = vector.broadcast %988 : vector<4x1xf32> to vector<4x16xf32>
    %990 = arith.mulf %968, %989 : vector<4x16xf32>
    %991 = tpu.concatenate %986, %990 in 1 : vector<4x16xf32>, vector<4x16xf32> -> vector<4x32xf32>
    %cst_309 = arith.constant dense<0.000000e+00> : vector<4x48xf32>
    %992 = tpu.matmul %991, %673, %cst_309 {dimension_numbers = #tpu.dot_dimension_numbers<[1], [0], [0], [1], [0, 0, 1, 1], [], []>} : vector<4x32xf32>, vector<32x48xf32>, vector<4x48xf32> -> vector<4x48xf32>
    %993 = arith.addf %992, %685 : vector<4x48xf32>
    %994 = vector.extract_strided_slice %981 {offsets = [0, 0], sizes = [4, 16], strides = [1, 1]} : vector<4x48xf32> to vector<4x16xf32>
    %995 = vector.extract_strided_slice %993 {offsets = [0, 0], sizes = [4, 16], strides = [1, 1]} : vector<4x48xf32> to vector<4x16xf32>
    %996 = arith.addf %994, %995 : vector<4x16xf32>
    %997 = arith.negf %996 : vector<4x16xf32>
    %998 = math.exp %997 : vector<4x16xf32>
    %cst_310 = arith.constant 1.000000e+00 : f32
    %999 = vector.broadcast %cst_310 : f32 to vector<4x16xf32>
    %1000 = arith.addf %999, %998 : vector<4x16xf32>
    %1001 = arith.divf %999, %1000 : vector<4x16xf32>
    %1002 = vector.extract_strided_slice %981 {offsets = [0, 16], sizes = [4, 16], strides = [1, 1]} : vector<4x48xf32> to vector<4x16xf32>
    %1003 = vector.extract_strided_slice %993 {offsets = [0, 16], sizes = [4, 16], strides = [1, 1]} : vector<4x48xf32> to vector<4x16xf32>
    %1004 = arith.addf %1002, %1003 : vector<4x16xf32>
    %1005 = arith.negf %1004 : vector<4x16xf32>
    %1006 = math.exp %1005 : vector<4x16xf32>
    %cst_311 = arith.constant 1.000000e+00 : f32
    %1007 = vector.broadcast %cst_311 : f32 to vector<4x16xf32>
    %1008 = arith.addf %1007, %1006 : vector<4x16xf32>
    %1009 = arith.divf %1007, %1008 : vector<4x16xf32>
    %1010 = vector.extract_strided_slice %981 {offsets = [0, 32], sizes = [4, 16], strides = [1, 1]} : vector<4x48xf32> to vector<4x16xf32>
    %1011 = vector.extract_strided_slice %993 {offsets = [0, 32], sizes = [4, 16], strides = [1, 1]} : vector<4x48xf32> to vector<4x16xf32>
    %1012 = arith.mulf %1001, %1011 : vector<4x16xf32>
    %1013 = arith.addf %1010, %1012 : vector<4x16xf32>
    %1014 = math.tanh %1013 : vector<4x16xf32>
    %cst_312 = arith.constant 1.000000e+00 : f32
    %1015 = vector.broadcast %cst_312 : f32 to vector<4x16xf32>
    %1016 = arith.subf %1015, %1009 : vector<4x16xf32>
    %1017 = arith.mulf %1016, %1014 : vector<4x16xf32>
    %1018 = arith.mulf %1009, %968 : vector<4x16xf32>
    %1019 = arith.addf %1017, %1018 : vector<4x16xf32>
    %1020 = vector.broadcast %984 : vector<4x1xf32> to vector<4x16xf32>
    %1021 = arith.mulf %1020, %1019 : vector<4x16xf32>
    %cst_313 = arith.constant 1.000000e+00 : f32
    %1022 = vector.broadcast %cst_313 : f32 to vector<4x1xf32>
    %1023 = arith.subf %1022, %984 : vector<4x1xf32>
    %1024 = vector.broadcast %1023 : vector<4x1xf32> to vector<4x16xf32>
    %1025 = arith.mulf %1024, %968 : vector<4x16xf32>
    %1026 = arith.addf %1021, %1025 : vector<4x16xf32>
    %1027 = vector.broadcast %984 : vector<4x1xf32> to vector<4x16xf32>
    %1028 = arith.mulf %1027, %1026 : vector<4x16xf32>
    %1029 = vector.extract_strided_slice %1028 {offsets = [0, 0], sizes = [2, 16], strides = [1, 1]} : vector<4x16xf32> to vector<2x16xf32>
    %1030 = vector.shape_cast %1029 : vector<2x16xf32> to vector<2x1x16xf32>
    %c0_314 = arith.constant 0 : index
    %c6_315 = arith.constant 6 : index
    %c0_316 = arith.constant 0 : index
    %1031 = vector.load %arg28[%c0_314, %c6_315, %c0_316] : memref<2x10x32xf32, #tpu.memory_space<vmem>>, vector<2x1x16xf32>
    tpu.vector_store %arg28[%c0_314, %c6_315, %c0_316], %1030 {strides = array<i32>} : memref<2x10x32xf32, #tpu.memory_space<vmem>>, vector<2x1x16xf32>,
    %1032 = vector.extract_strided_slice %1028 {offsets = [2, 0], sizes = [2, 16], strides = [1, 1]} : vector<4x16xf32> to vector<2x16xf32>
    %1033 = vector.shape_cast %1032 : vector<2x16xf32> to vector<2x1x16xf32>
    %c0_317 = arith.constant 0 : index
    %c3_318 = arith.constant 3 : index
    %c16_319 = arith.constant 16 : index
    %1034 = vector.load %arg28[%c0_317, %c3_318, %c16_319] : memref<2x10x32xf32, #tpu.memory_space<vmem>>, vector<2x1x16xf32>
    tpu.vector_store %arg28[%c0_317, %c3_318, %c16_319], %1033 {strides = array<i32>} : memref<2x10x32xf32, #tpu.memory_space<vmem>>, vector<2x1x16xf32>,
    %1035 = vector.extract_strided_slice %672 {offsets = [0, 6, 0], sizes = [2, 1, 48], strides = [1, 1, 1]} : vector<2x8x96xf32> to vector<2x1x48xf32>
    %1036 = vector.shape_cast %1035 : vector<2x1x48xf32> to vector<2x48xf32>
    %1037 = vector.extract_strided_slice %672 {offsets = [0, 1, 48], sizes = [2, 1, 48], strides = [1, 1, 1]} : vector<2x8x96xf32> to vector<2x1x48xf32>
    %1038 = vector.shape_cast %1037 : vector<2x1x48xf32> to vector<2x48xf32>
    %1039 = tpu.concatenate %1036, %1038 in 0 : vector<2x48xf32>, vector<2x48xf32> -> vector<4x48xf32>
    %1040 = vector.extract_strided_slice %88 {offsets = [0, 6], sizes = [2, 1], strides = [1, 1]} : vector<2x8xf32> to vector<2x1xf32>
    %1041 = vector.extract_strided_slice %88 {offsets = [0, 1], sizes = [2, 1], strides = [1, 1]} : vector<2x8xf32> to vector<2x1xf32>
    %1042 = tpu.concatenate %1040, %1041 in 0 : vector<2x1xf32>, vector<2x1xf32> -> vector<4x1xf32>
    %1043 = vector.broadcast %177 : vector<4x1xf32> to vector<4x16xf32>
    %1044 = arith.mulf %1026, %1043 : vector<4x16xf32>
    %cst_320 = arith.constant 1.000000e+00 : f32
    %1045 = vector.broadcast %cst_320 : f32 to vector<4x1xf32>
    %1046 = arith.subf %1045, %177 : vector<4x1xf32>
    %1047 = vector.broadcast %1046 : vector<4x1xf32> to vector<4x16xf32>
    %1048 = arith.mulf %1026, %1047 : vector<4x16xf32>
    %1049 = tpu.concatenate %1044, %1048 in 1 : vector<4x16xf32>, vector<4x16xf32> -> vector<4x32xf32>
    %cst_321 = arith.constant dense<0.000000e+00> : vector<4x48xf32>
    %1050 = tpu.matmul %1049, %673, %cst_321 {dimension_numbers = #tpu.dot_dimension_numbers<[1], [0], [0], [1], [0, 0, 1, 1], [], []>} : vector<4x32xf32>, vector<32x48xf32>, vector<4x48xf32> -> vector<4x48xf32>
    %1051 = arith.addf %1050, %685 : vector<4x48xf32>
    %1052 = vector.extract_strided_slice %1039 {offsets = [0, 0], sizes = [4, 16], strides = [1, 1]} : vector<4x48xf32> to vector<4x16xf32>
    %1053 = vector.extract_strided_slice %1051 {offsets = [0, 0], sizes = [4, 16], strides = [1, 1]} : vector<4x48xf32> to vector<4x16xf32>
    %1054 = arith.addf %1052, %1053 : vector<4x16xf32>
    %1055 = arith.negf %1054 : vector<4x16xf32>
    %1056 = math.exp %1055 : vector<4x16xf32>
    %cst_322 = arith.constant 1.000000e+00 : f32
    %1057 = vector.broadcast %cst_322 : f32 to vector<4x16xf32>
    %1058 = arith.addf %1057, %1056 : vector<4x16xf32>
    %1059 = arith.divf %1057, %1058 : vector<4x16xf32>
    %1060 = vector.extract_strided_slice %1039 {offsets = [0, 16], sizes = [4, 16], strides = [1, 1]} : vector<4x48xf32> to vector<4x16xf32>
    %1061 = vector.extract_strided_slice %1051 {offsets = [0, 16], sizes = [4, 16], strides = [1, 1]} : vector<4x48xf32> to vector<4x16xf32>
    %1062 = arith.addf %1060, %1061 : vector<4x16xf32>
    %1063 = arith.negf %1062 : vector<4x16xf32>
    %1064 = math.exp %1063 : vector<4x16xf32>
    %cst_323 = arith.constant 1.000000e+00 : f32
    %1065 = vector.broadcast %cst_323 : f32 to vector<4x16xf32>
    %1066 = arith.addf %1065, %1064 : vector<4x16xf32>
    %1067 = arith.divf %1065, %1066 : vector<4x16xf32>
    %1068 = vector.extract_strided_slice %1039 {offsets = [0, 32], sizes = [4, 16], strides = [1, 1]} : vector<4x48xf32> to vector<4x16xf32>
    %1069 = vector.extract_strided_slice %1051 {offsets = [0, 32], sizes = [4, 16], strides = [1, 1]} : vector<4x48xf32> to vector<4x16xf32>
    %1070 = arith.mulf %1059, %1069 : vector<4x16xf32>
    %1071 = arith.addf %1068, %1070 : vector<4x16xf32>
    %1072 = math.tanh %1071 : vector<4x16xf32>
    %cst_324 = arith.constant 1.000000e+00 : f32
    %1073 = vector.broadcast %cst_324 : f32 to vector<4x16xf32>
    %1074 = arith.subf %1073, %1067 : vector<4x16xf32>
    %1075 = arith.mulf %1074, %1072 : vector<4x16xf32>
    %1076 = arith.mulf %1067, %1026 : vector<4x16xf32>
    %1077 = arith.addf %1075, %1076 : vector<4x16xf32>
    %1078 = vector.broadcast %1042 : vector<4x1xf32> to vector<4x16xf32>
    %1079 = arith.mulf %1078, %1077 : vector<4x16xf32>
    %cst_325 = arith.constant 1.000000e+00 : f32
    %1080 = vector.broadcast %cst_325 : f32 to vector<4x1xf32>
    %1081 = arith.subf %1080, %1042 : vector<4x1xf32>
    %1082 = vector.broadcast %1081 : vector<4x1xf32> to vector<4x16xf32>
    %1083 = arith.mulf %1082, %1026 : vector<4x16xf32>
    %1084 = arith.addf %1079, %1083 : vector<4x16xf32>
    %1085 = vector.broadcast %1042 : vector<4x1xf32> to vector<4x16xf32>
    %1086 = arith.mulf %1085, %1084 : vector<4x16xf32>
    %1087 = vector.extract_strided_slice %1086 {offsets = [0, 0], sizes = [2, 16], strides = [1, 1]} : vector<4x16xf32> to vector<2x16xf32>
    %1088 = vector.shape_cast %1087 : vector<2x16xf32> to vector<2x1x16xf32>
    %c0_326 = arith.constant 0 : index
    %c7_327 = arith.constant 7 : index
    %c0_328 = arith.constant 0 : index
    %1089 = vector.load %arg28[%c0_326, %c7_327, %c0_328] : memref<2x10x32xf32, #tpu.memory_space<vmem>>, vector<2x1x16xf32>
    tpu.vector_store %arg28[%c0_326, %c7_327, %c0_328], %1088 {strides = array<i32>} : memref<2x10x32xf32, #tpu.memory_space<vmem>>, vector<2x1x16xf32>,
    %1090 = vector.extract_strided_slice %1086 {offsets = [2, 0], sizes = [2, 16], strides = [1, 1]} : vector<4x16xf32> to vector<2x16xf32>
    %1091 = vector.shape_cast %1090 : vector<2x16xf32> to vector<2x1x16xf32>
    %c0_329 = arith.constant 0 : index
    %c2_330 = arith.constant 2 : index
    %c16_331 = arith.constant 16 : index
    %1092 = vector.load %arg28[%c0_329, %c2_330, %c16_331] : memref<2x10x32xf32, #tpu.memory_space<vmem>>, vector<2x1x16xf32>
    tpu.vector_store %arg28[%c0_329, %c2_330, %c16_331], %1091 {strides = array<i32>} : memref<2x10x32xf32, #tpu.memory_space<vmem>>, vector<2x1x16xf32>,
    %1093 = vector.extract_strided_slice %672 {offsets = [0, 7, 0], sizes = [2, 1, 48], strides = [1, 1, 1]} : vector<2x8x96xf32> to vector<2x1x48xf32>
    %1094 = vector.shape_cast %1093 : vector<2x1x48xf32> to vector<2x48xf32>
    %1095 = vector.extract_strided_slice %672 {offsets = [0, 0, 48], sizes = [2, 1, 48], strides = [1, 1, 1]} : vector<2x8x96xf32> to vector<2x1x48xf32>
    %1096 = vector.shape_cast %1095 : vector<2x1x48xf32> to vector<2x48xf32>
    %1097 = tpu.concatenate %1094, %1096 in 0 : vector<2x48xf32>, vector<2x48xf32> -> vector<4x48xf32>
    %1098 = vector.extract_strided_slice %88 {offsets = [0, 7], sizes = [2, 1], strides = [1, 1]} : vector<2x8xf32> to vector<2x1xf32>
    %1099 = vector.extract_strided_slice %88 {offsets = [0, 0], sizes = [2, 1], strides = [1, 1]} : vector<2x8xf32> to vector<2x1xf32>
    %1100 = tpu.concatenate %1098, %1099 in 0 : vector<2x1xf32>, vector<2x1xf32> -> vector<4x1xf32>
    %1101 = vector.broadcast %177 : vector<4x1xf32> to vector<4x16xf32>
    %1102 = arith.mulf %1084, %1101 : vector<4x16xf32>
    %cst_332 = arith.constant 1.000000e+00 : f32
    %1103 = vector.broadcast %cst_332 : f32 to vector<4x1xf32>
    %1104 = arith.subf %1103, %177 : vector<4x1xf32>
    %1105 = vector.broadcast %1104 : vector<4x1xf32> to vector<4x16xf32>
    %1106 = arith.mulf %1084, %1105 : vector<4x16xf32>
    %1107 = tpu.concatenate %1102, %1106 in 1 : vector<4x16xf32>, vector<4x16xf32> -> vector<4x32xf32>
    %cst_333 = arith.constant dense<0.000000e+00> : vector<4x48xf32>
    %1108 = tpu.matmul %1107, %673, %cst_333 {dimension_numbers = #tpu.dot_dimension_numbers<[1], [0], [0], [1], [0, 0, 1, 1], [], []>} : vector<4x32xf32>, vector<32x48xf32>, vector<4x48xf32> -> vector<4x48xf32>
    %1109 = arith.addf %1108, %685 : vector<4x48xf32>
    %1110 = vector.extract_strided_slice %1097 {offsets = [0, 0], sizes = [4, 16], strides = [1, 1]} : vector<4x48xf32> to vector<4x16xf32>
    %1111 = vector.extract_strided_slice %1109 {offsets = [0, 0], sizes = [4, 16], strides = [1, 1]} : vector<4x48xf32> to vector<4x16xf32>
    %1112 = arith.addf %1110, %1111 : vector<4x16xf32>
    %1113 = arith.negf %1112 : vector<4x16xf32>
    %1114 = math.exp %1113 : vector<4x16xf32>
    %cst_334 = arith.constant 1.000000e+00 : f32
    %1115 = vector.broadcast %cst_334 : f32 to vector<4x16xf32>
    %1116 = arith.addf %1115, %1114 : vector<4x16xf32>
    %1117 = arith.divf %1115, %1116 : vector<4x16xf32>
    %1118 = vector.extract_strided_slice %1097 {offsets = [0, 16], sizes = [4, 16], strides = [1, 1]} : vector<4x48xf32> to vector<4x16xf32>
    %1119 = vector.extract_strided_slice %1109 {offsets = [0, 16], sizes = [4, 16], strides = [1, 1]} : vector<4x48xf32> to vector<4x16xf32>
    %1120 = arith.addf %1118, %1119 : vector<4x16xf32>
    %1121 = arith.negf %1120 : vector<4x16xf32>
    %1122 = math.exp %1121 : vector<4x16xf32>
    %cst_335 = arith.constant 1.000000e+00 : f32
    %1123 = vector.broadcast %cst_335 : f32 to vector<4x16xf32>
    %1124 = arith.addf %1123, %1122 : vector<4x16xf32>
    %1125 = arith.divf %1123, %1124 : vector<4x16xf32>
    %1126 = vector.extract_strided_slice %1097 {offsets = [0, 32], sizes = [4, 16], strides = [1, 1]} : vector<4x48xf32> to vector<4x16xf32>
    %1127 = vector.extract_strided_slice %1109 {offsets = [0, 32], sizes = [4, 16], strides = [1, 1]} : vector<4x48xf32> to vector<4x16xf32>
    %1128 = arith.mulf %1117, %1127 : vector<4x16xf32>
    %1129 = arith.addf %1126, %1128 : vector<4x16xf32>
    %1130 = math.tanh %1129 : vector<4x16xf32>
    %cst_336 = arith.constant 1.000000e+00 : f32
    %1131 = vector.broadcast %cst_336 : f32 to vector<4x16xf32>
    %1132 = arith.subf %1131, %1125 : vector<4x16xf32>
    %1133 = arith.mulf %1132, %1130 : vector<4x16xf32>
    %1134 = arith.mulf %1125, %1084 : vector<4x16xf32>
    %1135 = arith.addf %1133, %1134 : vector<4x16xf32>
    %1136 = vector.broadcast %1100 : vector<4x1xf32> to vector<4x16xf32>
    %1137 = arith.mulf %1136, %1135 : vector<4x16xf32>
    %cst_337 = arith.constant 1.000000e+00 : f32
    %1138 = vector.broadcast %cst_337 : f32 to vector<4x1xf32>
    %1139 = arith.subf %1138, %1100 : vector<4x1xf32>
    %1140 = vector.broadcast %1139 : vector<4x1xf32> to vector<4x16xf32>
    %1141 = arith.mulf %1140, %1084 : vector<4x16xf32>
    %1142 = arith.addf %1137, %1141 : vector<4x16xf32>
    %1143 = vector.broadcast %1100 : vector<4x1xf32> to vector<4x16xf32>
    %1144 = arith.mulf %1143, %1142 : vector<4x16xf32>
    %1145 = vector.extract_strided_slice %1144 {offsets = [0, 0], sizes = [2, 16], strides = [1, 1]} : vector<4x16xf32> to vector<2x16xf32>
    %1146 = vector.shape_cast %1145 : vector<2x16xf32> to vector<2x1x16xf32>
    %c0_338 = arith.constant 0 : index
    %c8_339 = arith.constant 8 : index
    %c0_340 = arith.constant 0 : index
    %1147 = vector.load %arg28[%c0_338, %c8_339, %c0_340] : memref<2x10x32xf32, #tpu.memory_space<vmem>>, vector<2x1x16xf32>
    tpu.vector_store %arg28[%c0_338, %c8_339, %c0_340], %1146 {strides = array<i32>} : memref<2x10x32xf32, #tpu.memory_space<vmem>>, vector<2x1x16xf32>,
    %1148 = vector.extract_strided_slice %1144 {offsets = [2, 0], sizes = [2, 16], strides = [1, 1]} : vector<4x16xf32> to vector<2x16xf32>
    %1149 = vector.shape_cast %1148 : vector<2x16xf32> to vector<2x1x16xf32>
    %c0_341 = arith.constant 0 : index
    %c1_342 = arith.constant 1 : index
    %c16_343 = arith.constant 16 : index
    %1150 = vector.load %arg28[%c0_341, %c1_342, %c16_343] : memref<2x10x32xf32, #tpu.memory_space<vmem>>, vector<2x1x16xf32>
    tpu.vector_store %arg28[%c0_341, %c1_342, %c16_343], %1149 {strides = array<i32>} : memref<2x10x32xf32, #tpu.memory_space<vmem>>, vector<2x1x16xf32>,
    %c0_344 = arith.constant 0 : index
    %c0_345 = arith.constant 0 : index
    %c0_346 = arith.constant 0 : index
    %1151 = vector.load %arg28[%c0_344, %c0_345, %c0_346] : memref<2x10x32xf32, #tpu.memory_space<vmem>>, vector<2x10x32xf32>
    %1152 = vector.extract_strided_slice %1151 {offsets = [0, 0, 0], sizes = [2, 8, 32], strides = [1, 1, 1]} : vector<2x10x32xf32> to vector<2x8x32xf32>
    %1153 = vector.extract_strided_slice %1151 {offsets = [0, 1, 0], sizes = [2, 8, 32], strides = [1, 1, 1]} : vector<2x10x32xf32> to vector<2x8x32xf32>
    %1154 = vector.extract_strided_slice %1151 {offsets = [0, 2, 0], sizes = [2, 8, 32], strides = [1, 1, 1]} : vector<2x10x32xf32> to vector<2x8x32xf32>
    %1155 = tpu.concatenate %1152, %1153, %1154 in 2 : vector<2x8x32xf32>, vector<2x8x32xf32>, vector<2x8x32xf32> -> vector<2x8x96xf32>
    %1156 = vector.shape_cast %1155 : vector<2x8x96xf32> to vector<16x96xf32>
    %c0_347 = arith.constant 0 : index
    %c0_348 = arith.constant 0 : index
    %1157 = vector.load %arg14[%c0_347, %c0_348] : memref<96x32xf32, #tpu.memory_space<vmem>>, vector<96x32xf32>
    %cst_349 = arith.constant dense<0.000000e+00> : vector<16x32xf32>
    %1158 = tpu.matmul %1156, %1157, %cst_349 {dimension_numbers = #tpu.dot_dimension_numbers<[1], [0], [0], [1], [0, 0, 1, 1], [], []>} : vector<16x96xf32>, vector<96x32xf32>, vector<16x32xf32> -> vector<16x32xf32>
    %c0_350 = arith.constant 0 : index
    %c0_351 = arith.constant 0 : index
    %1159 = vector.load %arg15[%c0_350, %c0_351] : memref<1x32xf32, #tpu.memory_space<vmem>>, vector<1x32xf32>
    %1160 = vector.broadcast %1159 : vector<1x32xf32> to vector<16x32xf32>
    %1161 = arith.addf %1158, %1160 : vector<16x32xf32>
    %cst_352 = arith.constant 0.000000e+00 : f32
    %1162 = vector.broadcast %cst_352 : f32 to vector<16x32xf32>
    %1163 = arith.maximumf %1161, %1162 : vector<16x32xf32>
    %1164 = vector.shape_cast %1163 : vector<16x32xf32> to vector<2x8x32xf32>
    %cst_353 = arith.constant 0.000000e+00 : f32
    %1165 = vector.broadcast %cst_353 : f32 to vector<2x4x32xf32>
    %1166 = tpu.concatenate %1164, %1165 in 1 : vector<2x8x32xf32>, vector<2x4x32xf32> -> vector<2x12x32xf32>
    %1167 = vector.extract_strided_slice %1166 {offsets = [0, 0, 0], sizes = [2, 8, 32], strides = [1, 1, 1]} : vector<2x12x32xf32> to vector<2x8x32xf32>
    %1168 = vector.shape_cast %1167 : vector<2x8x32xf32> to vector<16x32xf32>
    %1169 = vector.extract_strided_slice %1166 {offsets = [0, 1, 0], sizes = [2, 8, 32], strides = [1, 1, 1]} : vector<2x12x32xf32> to vector<2x8x32xf32>
    %1170 = vector.shape_cast %1169 : vector<2x8x32xf32> to vector<16x32xf32>
    %1171 = vector.extract_strided_slice %1166 {offsets = [0, 2, 0], sizes = [2, 8, 32], strides = [1, 1, 1]} : vector<2x12x32xf32> to vector<2x8x32xf32>
    %1172 = vector.shape_cast %1171 : vector<2x8x32xf32> to vector<16x32xf32>
    %1173 = vector.extract_strided_slice %1166 {offsets = [0, 3, 0], sizes = [2, 8, 32], strides = [1, 1, 1]} : vector<2x12x32xf32> to vector<2x8x32xf32>
    %1174 = vector.shape_cast %1173 : vector<2x8x32xf32> to vector<16x32xf32>
    %1175 = tpu.concatenate %1168, %1170, %1172, %1174 in 0 : vector<16x32xf32>, vector<16x32xf32>, vector<16x32xf32>, vector<16x32xf32> -> vector<64x32xf32>
    %c0_354 = arith.constant 0 : index
    %c0_355 = arith.constant 0 : index
    %1176 = vector.load %arg16[%c0_354, %c0_355] : memref<32x64xf32, #tpu.memory_space<vmem>>, vector<32x64xf32>
    %cst_356 = arith.constant dense<0.000000e+00> : vector<64x64xf32>
    %1177 = tpu.matmul %1175, %1176, %cst_356 {dimension_numbers = #tpu.dot_dimension_numbers<[1], [0], [0], [1], [0, 0, 1, 1], [], []>} : vector<64x32xf32>, vector<32x64xf32>, vector<64x64xf32> -> vector<64x64xf32>
    %c0_357 = arith.constant 0 : index
    %c0_358 = arith.constant 0 : index
    %1178 = vector.load %arg18[%c0_357, %c0_358] : memref<1x64xf32, #tpu.memory_space<vmem>>, vector<1x64xf32>
    %1179 = vector.broadcast %1178 : vector<1x64xf32> to vector<64x64xf32>
    %1180 = arith.addf %1177, %1179 : vector<64x64xf32>
    %c0_359 = arith.constant 0 : index
    %c0_360 = arith.constant 0 : index
    %1181 = vector.load %arg17[%c0_359, %c0_360] : memref<16x64xf32, #tpu.memory_space<vmem>>, vector<16x64xf32>
    %1182 = vector.shape_cast %84 : vector<2x8xf32> to vector<2x8x1xf32>
    %1183 = vector.shape_cast %82 : vector<2x1xf32> to vector<2x1x1xf32>
    %1184 = vector.broadcast %1183 : vector<2x1x1xf32> to vector<2x8x1xf32>
    %1185 = arith.subf %1184, %1182 : vector<2x8x1xf32>
    %cst_361 = arith.constant 0.000000e+00 : f32
    %1186 = vector.broadcast %cst_361 : f32 to vector<2x8x1xf32>
    %1187 = arith.cmpf ogt, %1185, %1186 : vector<2x8x1xf32>
    %1188 = arith.extui %1187 : vector<2x8x1xi1> to vector<2x8x1xi32>
    %1189 = arith.sitofp %1188 : vector<2x8x1xi32> to vector<2x8x1xf32>
    %cst_362 = arith.constant 0.000000e+00 : f32
    %1190 = vector.broadcast %cst_362 : f32 to vector<16x16xf32>
    %cst_363 = arith.constant 0.000000e+00 : f32
    %1191 = vector.broadcast %cst_363 : f32 to vector<16x16xf32>
    %1192 = vector.extract_strided_slice %1180 {offsets = [0, 0], sizes = [16, 64], strides = [1, 1]} : vector<64x64xf32> to vector<16x64xf32>
    %cst_364 = arith.constant dense<0.000000e+00> : vector<16x64xf32>
    %1193 = tpu.matmul %1190, %1181, %cst_364 {dimension_numbers = #tpu.dot_dimension_numbers<[1], [0], [0], [1], [0, 0, 1, 1], [], []>} : vector<16x16xf32>, vector<16x64xf32>, vector<16x64xf32> -> vector<16x64xf32>
    %1194 = arith.addf %1192, %1193 : vector<16x64xf32>
    %1195 = vector.extract_strided_slice %1194 {offsets = [0, 0], sizes = [16, 16], strides = [1, 1]} : vector<16x64xf32> to vector<16x16xf32>
    %1196 = arith.negf %1195 : vector<16x16xf32>
    %1197 = math.exp %1196 : vector<16x16xf32>
    %cst_365 = arith.constant 1.000000e+00 : f32
    %1198 = vector.broadcast %cst_365 : f32 to vector<16x16xf32>
    %1199 = arith.addf %1198, %1197 : vector<16x16xf32>
    %1200 = arith.divf %1198, %1199 : vector<16x16xf32>
    %1201 = vector.extract_strided_slice %1194 {offsets = [0, 16], sizes = [16, 16], strides = [1, 1]} : vector<16x64xf32> to vector<16x16xf32>
    %1202 = arith.negf %1201 : vector<16x16xf32>
    %1203 = math.exp %1202 : vector<16x16xf32>
    %cst_366 = arith.constant 1.000000e+00 : f32
    %1204 = vector.broadcast %cst_366 : f32 to vector<16x16xf32>
    %1205 = arith.addf %1204, %1203 : vector<16x16xf32>
    %1206 = arith.divf %1204, %1205 : vector<16x16xf32>
    %1207 = vector.extract_strided_slice %1194 {offsets = [0, 32], sizes = [16, 16], strides = [1, 1]} : vector<16x64xf32> to vector<16x16xf32>
    %1208 = math.tanh %1207 : vector<16x16xf32>
    %1209 = vector.extract_strided_slice %1194 {offsets = [0, 48], sizes = [16, 16], strides = [1, 1]} : vector<16x64xf32> to vector<16x16xf32>
    %1210 = arith.negf %1209 : vector<16x16xf32>
    %1211 = math.exp %1210 : vector<16x16xf32>
    %cst_367 = arith.constant 1.000000e+00 : f32
    %1212 = vector.broadcast %cst_367 : f32 to vector<16x16xf32>
    %1213 = arith.addf %1212, %1211 : vector<16x16xf32>
    %1214 = arith.divf %1212, %1213 : vector<16x16xf32>
    %1215 = arith.mulf %1206, %1191 : vector<16x16xf32>
    %1216 = arith.mulf %1200, %1208 : vector<16x16xf32>
    %1217 = arith.addf %1215, %1216 : vector<16x16xf32>
    %1218 = math.tanh %1217 : vector<16x16xf32>
    %1219 = arith.mulf %1214, %1218 : vector<16x16xf32>
    %1220 = vector.shape_cast %1219 : vector<16x16xf32> to vector<2x8x16xf32>
    %cst_368 = arith.constant 0.000000e+00 : f32
    %1221 = vector.broadcast %cst_368 : f32 to vector<2x8x1xf32>
    %1222 = arith.addf %1182, %1221 : vector<2x8x1xf32>
    %cst_369 = arith.constant 8.000000e+00 : f32
    %1223 = vector.broadcast %cst_369 : f32 to vector<2x8x1xf32>
    %1224 = arith.cmpf olt, %1222, %1223 : vector<2x8x1xf32>
    %1225 = arith.extui %1224 : vector<2x8x1xi1> to vector<2x8x1xi32>
    %1226 = arith.sitofp %1225 : vector<2x8x1xi32> to vector<2x8x1xf32>
    %1227 = arith.mulf %1189, %1226 : vector<2x8x1xf32>
    %1228 = vector.extract_strided_slice %1180 {offsets = [16, 0], sizes = [16, 64], strides = [1, 1]} : vector<64x64xf32> to vector<16x64xf32>
    %cst_370 = arith.constant dense<0.000000e+00> : vector<16x64xf32>
    %1229 = tpu.matmul %1219, %1181, %cst_370 {dimension_numbers = #tpu.dot_dimension_numbers<[1], [0], [0], [1], [0, 0, 1, 1], [], []>} : vector<16x16xf32>, vector<16x64xf32>, vector<16x64xf32> -> vector<16x64xf32>
    %1230 = arith.addf %1228, %1229 : vector<16x64xf32>
    %1231 = vector.extract_strided_slice %1230 {offsets = [0, 0], sizes = [16, 16], strides = [1, 1]} : vector<16x64xf32> to vector<16x16xf32>
    %1232 = arith.negf %1231 : vector<16x16xf32>
    %1233 = math.exp %1232 : vector<16x16xf32>
    %cst_371 = arith.constant 1.000000e+00 : f32
    %1234 = vector.broadcast %cst_371 : f32 to vector<16x16xf32>
    %1235 = arith.addf %1234, %1233 : vector<16x16xf32>
    %1236 = arith.divf %1234, %1235 : vector<16x16xf32>
    %1237 = vector.extract_strided_slice %1230 {offsets = [0, 16], sizes = [16, 16], strides = [1, 1]} : vector<16x64xf32> to vector<16x16xf32>
    %1238 = arith.negf %1237 : vector<16x16xf32>
    %1239 = math.exp %1238 : vector<16x16xf32>
    %cst_372 = arith.constant 1.000000e+00 : f32
    %1240 = vector.broadcast %cst_372 : f32 to vector<16x16xf32>
    %1241 = arith.addf %1240, %1239 : vector<16x16xf32>
    %1242 = arith.divf %1240, %1241 : vector<16x16xf32>
    %1243 = vector.extract_strided_slice %1230 {offsets = [0, 32], sizes = [16, 16], strides = [1, 1]} : vector<16x64xf32> to vector<16x16xf32>
    %1244 = math.tanh %1243 : vector<16x16xf32>
    %1245 = vector.extract_strided_slice %1230 {offsets = [0, 48], sizes = [16, 16], strides = [1, 1]} : vector<16x64xf32> to vector<16x16xf32>
    %1246 = arith.negf %1245 : vector<16x16xf32>
    %1247 = math.exp %1246 : vector<16x16xf32>
    %cst_373 = arith.constant 1.000000e+00 : f32
    %1248 = vector.broadcast %cst_373 : f32 to vector<16x16xf32>
    %1249 = arith.addf %1248, %1247 : vector<16x16xf32>
    %1250 = arith.divf %1248, %1249 : vector<16x16xf32>
    %1251 = arith.mulf %1242, %1217 : vector<16x16xf32>
    %1252 = arith.mulf %1236, %1244 : vector<16x16xf32>
    %1253 = arith.addf %1251, %1252 : vector<16x16xf32>
    %1254 = math.tanh %1253 : vector<16x16xf32>
    %1255 = arith.mulf %1250, %1254 : vector<16x16xf32>
    %1256 = vector.shape_cast %1255 : vector<16x16xf32> to vector<2x8x16xf32>
    %cst_374 = arith.constant 2.000000e+00 : f32
    %1257 = vector.broadcast %cst_374 : f32 to vector<2x8x1xf32>
    %1258 = arith.cmpf oge, %1185, %1257 : vector<2x8x1xf32>
    %1259 = vector.shape_cast %1258 : vector<2x8x1xi1> to vector<2x8x1xi1>
    %1260 = vector.broadcast %1259 : vector<2x8x1xi1> to vector<2x8x16xi1>
    %1261 = arith.select %1260, %1256, %1220 : vector<2x8x16xi1>, vector<2x8x16xf32>
    %cst_375 = arith.constant 1.000000e+00 : f32
    %1262 = vector.broadcast %cst_375 : f32 to vector<2x8x1xf32>
    %1263 = arith.addf %1182, %1262 : vector<2x8x1xf32>
    %cst_376 = arith.constant 8.000000e+00 : f32
    %1264 = vector.broadcast %cst_376 : f32 to vector<2x8x1xf32>
    %1265 = arith.cmpf olt, %1263, %1264 : vector<2x8x1xf32>
    %1266 = arith.extui %1265 : vector<2x8x1xi1> to vector<2x8x1xi32>
    %1267 = arith.sitofp %1266 : vector<2x8x1xi32> to vector<2x8x1xf32>
    %1268 = arith.mulf %1189, %1267 : vector<2x8x1xf32>
    %1269 = vector.extract_strided_slice %1180 {offsets = [32, 0], sizes = [16, 64], strides = [1, 1]} : vector<64x64xf32> to vector<16x64xf32>
    %cst_377 = arith.constant dense<0.000000e+00> : vector<16x64xf32>
    %1270 = tpu.matmul %1255, %1181, %cst_377 {dimension_numbers = #tpu.dot_dimension_numbers<[1], [0], [0], [1], [0, 0, 1, 1], [], []>} : vector<16x16xf32>, vector<16x64xf32>, vector<16x64xf32> -> vector<16x64xf32>
    %1271 = arith.addf %1269, %1270 : vector<16x64xf32>
    %1272 = vector.extract_strided_slice %1271 {offsets = [0, 0], sizes = [16, 16], strides = [1, 1]} : vector<16x64xf32> to vector<16x16xf32>
    %1273 = arith.negf %1272 : vector<16x16xf32>
    %1274 = math.exp %1273 : vector<16x16xf32>
    %cst_378 = arith.constant 1.000000e+00 : f32
    %1275 = vector.broadcast %cst_378 : f32 to vector<16x16xf32>
    %1276 = arith.addf %1275, %1274 : vector<16x16xf32>
    %1277 = arith.divf %1275, %1276 : vector<16x16xf32>
    %1278 = vector.extract_strided_slice %1271 {offsets = [0, 16], sizes = [16, 16], strides = [1, 1]} : vector<16x64xf32> to vector<16x16xf32>
    %1279 = arith.negf %1278 : vector<16x16xf32>
    %1280 = math.exp %1279 : vector<16x16xf32>
    %cst_379 = arith.constant 1.000000e+00 : f32
    %1281 = vector.broadcast %cst_379 : f32 to vector<16x16xf32>
    %1282 = arith.addf %1281, %1280 : vector<16x16xf32>
    %1283 = arith.divf %1281, %1282 : vector<16x16xf32>
    %1284 = vector.extract_strided_slice %1271 {offsets = [0, 32], sizes = [16, 16], strides = [1, 1]} : vector<16x64xf32> to vector<16x16xf32>
    %1285 = math.tanh %1284 : vector<16x16xf32>
    %1286 = vector.extract_strided_slice %1271 {offsets = [0, 48], sizes = [16, 16], strides = [1, 1]} : vector<16x64xf32> to vector<16x16xf32>
    %1287 = arith.negf %1286 : vector<16x16xf32>
    %1288 = math.exp %1287 : vector<16x16xf32>
    %cst_380 = arith.constant 1.000000e+00 : f32
    %1289 = vector.broadcast %cst_380 : f32 to vector<16x16xf32>
    %1290 = arith.addf %1289, %1288 : vector<16x16xf32>
    %1291 = arith.divf %1289, %1290 : vector<16x16xf32>
    %1292 = arith.mulf %1283, %1253 : vector<16x16xf32>
    %1293 = arith.mulf %1277, %1285 : vector<16x16xf32>
    %1294 = arith.addf %1292, %1293 : vector<16x16xf32>
    %1295 = math.tanh %1294 : vector<16x16xf32>
    %1296 = arith.mulf %1291, %1295 : vector<16x16xf32>
    %1297 = vector.shape_cast %1296 : vector<16x16xf32> to vector<2x8x16xf32>
    %cst_381 = arith.constant 3.000000e+00 : f32
    %1298 = vector.broadcast %cst_381 : f32 to vector<2x8x1xf32>
    %1299 = arith.cmpf oge, %1185, %1298 : vector<2x8x1xf32>
    %1300 = vector.shape_cast %1299 : vector<2x8x1xi1> to vector<2x8x1xi1>
    %1301 = vector.broadcast %1300 : vector<2x8x1xi1> to vector<2x8x16xi1>
    %1302 = arith.select %1301, %1297, %1261 : vector<2x8x16xi1>, vector<2x8x16xf32>
    %cst_382 = arith.constant 2.000000e+00 : f32
    %1303 = vector.broadcast %cst_382 : f32 to vector<2x8x1xf32>
    %1304 = arith.addf %1182, %1303 : vector<2x8x1xf32>
    %cst_383 = arith.constant 8.000000e+00 : f32
    %1305 = vector.broadcast %cst_383 : f32 to vector<2x8x1xf32>
    %1306 = arith.cmpf olt, %1304, %1305 : vector<2x8x1xf32>
    %1307 = arith.extui %1306 : vector<2x8x1xi1> to vector<2x8x1xi32>
    %1308 = arith.sitofp %1307 : vector<2x8x1xi32> to vector<2x8x1xf32>
    %1309 = arith.mulf %1189, %1308 : vector<2x8x1xf32>
    %1310 = vector.extract_strided_slice %1180 {offsets = [48, 0], sizes = [16, 64], strides = [1, 1]} : vector<64x64xf32> to vector<16x64xf32>
    %cst_384 = arith.constant dense<0.000000e+00> : vector<16x64xf32>
    %1311 = tpu.matmul %1296, %1181, %cst_384 {dimension_numbers = #tpu.dot_dimension_numbers<[1], [0], [0], [1], [0, 0, 1, 1], [], []>} : vector<16x16xf32>, vector<16x64xf32>, vector<16x64xf32> -> vector<16x64xf32>
    %1312 = arith.addf %1310, %1311 : vector<16x64xf32>
    %1313 = vector.extract_strided_slice %1312 {offsets = [0, 0], sizes = [16, 16], strides = [1, 1]} : vector<16x64xf32> to vector<16x16xf32>
    %1314 = arith.negf %1313 : vector<16x16xf32>
    %1315 = math.exp %1314 : vector<16x16xf32>
    %cst_385 = arith.constant 1.000000e+00 : f32
    %1316 = vector.broadcast %cst_385 : f32 to vector<16x16xf32>
    %1317 = arith.addf %1316, %1315 : vector<16x16xf32>
    %1318 = arith.divf %1316, %1317 : vector<16x16xf32>
    %1319 = vector.extract_strided_slice %1312 {offsets = [0, 16], sizes = [16, 16], strides = [1, 1]} : vector<16x64xf32> to vector<16x16xf32>
    %1320 = arith.negf %1319 : vector<16x16xf32>
    %1321 = math.exp %1320 : vector<16x16xf32>
    %cst_386 = arith.constant 1.000000e+00 : f32
    %1322 = vector.broadcast %cst_386 : f32 to vector<16x16xf32>
    %1323 = arith.addf %1322, %1321 : vector<16x16xf32>
    %1324 = arith.divf %1322, %1323 : vector<16x16xf32>
    %1325 = vector.extract_strided_slice %1312 {offsets = [0, 32], sizes = [16, 16], strides = [1, 1]} : vector<16x64xf32> to vector<16x16xf32>
    %1326 = math.tanh %1325 : vector<16x16xf32>
    %1327 = vector.extract_strided_slice %1312 {offsets = [0, 48], sizes = [16, 16], strides = [1, 1]} : vector<16x64xf32> to vector<16x16xf32>
    %1328 = arith.negf %1327 : vector<16x16xf32>
    %1329 = math.exp %1328 : vector<16x16xf32>
    %cst_387 = arith.constant 1.000000e+00 : f32
    %1330 = vector.broadcast %cst_387 : f32 to vector<16x16xf32>
    %1331 = arith.addf %1330, %1329 : vector<16x16xf32>
    %1332 = arith.divf %1330, %1331 : vector<16x16xf32>
    %1333 = arith.mulf %1324, %1294 : vector<16x16xf32>
    %1334 = arith.mulf %1318, %1326 : vector<16x16xf32>
    %1335 = arith.addf %1333, %1334 : vector<16x16xf32>
    %1336 = math.tanh %1335 : vector<16x16xf32>
    %1337 = arith.mulf %1332, %1336 : vector<16x16xf32>
    %1338 = vector.shape_cast %1337 : vector<16x16xf32> to vector<2x8x16xf32>
    %cst_388 = arith.constant 4.000000e+00 : f32
    %1339 = vector.broadcast %cst_388 : f32 to vector<2x8x1xf32>
    %1340 = arith.cmpf oge, %1185, %1339 : vector<2x8x1xf32>
    %1341 = vector.shape_cast %1340 : vector<2x8x1xi1> to vector<2x8x1xi1>
    %1342 = vector.broadcast %1341 : vector<2x8x1xi1> to vector<2x8x16xi1>
    %1343 = arith.select %1342, %1338, %1302 : vector<2x8x16xi1>, vector<2x8x16xf32>
    %cst_389 = arith.constant 3.000000e+00 : f32
    %1344 = vector.broadcast %cst_389 : f32 to vector<2x8x1xf32>
    %1345 = arith.addf %1182, %1344 : vector<2x8x1xf32>
    %cst_390 = arith.constant 8.000000e+00 : f32
    %1346 = vector.broadcast %cst_390 : f32 to vector<2x8x1xf32>
    %1347 = arith.cmpf olt, %1345, %1346 : vector<2x8x1xf32>
    %1348 = arith.extui %1347 : vector<2x8x1xi1> to vector<2x8x1xi32>
    %1349 = arith.sitofp %1348 : vector<2x8x1xi32> to vector<2x8x1xf32>
    %1350 = arith.mulf %1189, %1349 : vector<2x8x1xf32>
    %1351 = tpu.concatenate %1220, %1261, %1302, %1343 in 1 : vector<2x8x16xf32>, vector<2x8x16xf32>, vector<2x8x16xf32>, vector<2x8x16xf32> -> vector<2x32x16xf32>
    %1352 = tpu.concatenate %1227, %1268, %1309, %1350 in 1 : vector<2x8x1xf32>, vector<2x8x1xf32>, vector<2x8x1xf32>, vector<2x8x1xf32> -> vector<2x32x1xf32>
    %1353 = vector.shape_cast %1351 : vector<2x32x16xf32> to vector<64x16xf32>
    %c0_391 = arith.constant 0 : index
    %c0_392 = arith.constant 0 : index
    %1354 = vector.load %arg19[%c0_391, %c0_392] : memref<16x2xf32, #tpu.memory_space<vmem>>, vector<16x2xf32>
    %cst_393 = arith.constant dense<0.000000e+00> : vector<64x2xf32>
    %1355 = tpu.matmul %1353, %1354, %cst_393 {dimension_numbers = #tpu.dot_dimension_numbers<[1], [0], [0], [1], [0, 0, 1, 1], [], []>} : vector<64x16xf32>, vector<16x2xf32>, vector<64x2xf32> -> vector<64x2xf32>
    %c0_394 = arith.constant 0 : index
    %c0_395 = arith.constant 0 : index
    %1356 = vector.load %arg20[%c0_394, %c0_395] : memref<1x2xf32, #tpu.memory_space<vmem>>, vector<1x2xf32>
    %1357 = vector.broadcast %1356 : vector<1x2xf32> to vector<64x2xf32>
    %1358 = arith.addf %1355, %1357 : vector<64x2xf32>
    %1359 = vector.shape_cast %1358 : vector<64x2xf32> to vector<2x32x2xf32>
    %1360 = vector.broadcast %1352 : vector<2x32x1xf32> to vector<2x32x2xf32>
    %1361 = arith.mulf %1359, %1360 : vector<2x32x2xf32>
    %1362 = vector.extract_strided_slice %1361 {offsets = [0, 0, 0], sizes = [2, 8, 2], strides = [1, 1, 1]} : vector<2x32x2xf32> to vector<2x8x2xf32>
    %cst_396 = arith.constant dense<0xFF800000> : vector<2x8xf32>
    %1363 = vector.multi_reduction <maximumf>, %1362, %cst_396 [2] : vector<2x8x2xf32> to vector<2x8xf32>
    %1364 = vector.shape_cast %1363 : vector<2x8xf32> to vector<2x8x1xf32>
    %1365 = vector.broadcast %1364 : vector<2x8x1xf32> to vector<2x8x2xf32>
    %1366 = arith.subf %1362, %1365 : vector<2x8x2xf32>
    %1367 = math.exp %1366 : vector<2x8x2xf32>
    %cst_397 = arith.constant dense<0.000000e+00> : vector<2x8xf32>
    %1368 = vector.multi_reduction <add>, %1367, %cst_397 [2] : vector<2x8x2xf32> to vector<2x8xf32>
    %1369 = vector.shape_cast %1368 : vector<2x8xf32> to vector<2x8x1xf32>
    %1370 = vector.broadcast %1369 : vector<2x8x1xf32> to vector<2x8x2xf32>
    %1371 = arith.divf %1367, %1370 : vector<2x8x2xf32>
    %1372 = vector.extract_strided_slice %1371 {offsets = [0, 0, 1], sizes = [2, 8, 1], strides = [1, 1, 1]} : vector<2x8x2xf32> to vector<2x8x1xf32>
    %1373 = vector.shape_cast %1372 : vector<2x8x1xf32> to vector<2x8xf32>
    %1374 = arith.mulf %1373, %88 : vector<2x8xf32>
    %cst_398 = arith.constant dense<0.000000e+00> : vector<2xf32>
    %1375 = vector.multi_reduction <add>, %1374, %cst_398 [1] : vector<2x8xf32> to vector<2xf32>
    %1376 = vector.shape_cast %1375 : vector<2xf32> to vector<2x1xf32>
    %1377 = vector.shape_cast %1374 : vector<2x8xf32> to vector<2x8x1xf32>
    %1378 = vector.broadcast %1377 : vector<2x8x1xf32> to vector<2x8x32xf32>
    %1379 = arith.mulf %1378, %1164 : vector<2x8x32xf32>
    %cst_399 = arith.constant dense<0.000000e+00> : vector<2x32xf32>
    %1380 = vector.multi_reduction <add>, %1379, %cst_399 [1] : vector<2x8x32xf32> to vector<2x32xf32>
    %1381 = vector.broadcast %1376 : vector<2x1xf32> to vector<2x32xf32>
    %1382 = arith.divf %1380, %1381 : vector<2x32xf32>
    %c0_400 = arith.constant 0 : index
    %c0_401 = arith.constant 0 : index
    %1383 = vector.load %arg21[%c0_400, %c0_401] : memref<32x3xf32, #tpu.memory_space<vmem>>, vector<32x3xf32>
    %cst_402 = arith.constant dense<0.000000e+00> : vector<2x3xf32>
    %1384 = tpu.matmul %1382, %1383, %cst_402 {dimension_numbers = #tpu.dot_dimension_numbers<[1], [0], [0], [1], [0, 0, 1, 1], [], []>} : vector<2x32xf32>, vector<32x3xf32>, vector<2x3xf32> -> vector<2x3xf32>
    %c0_403 = arith.constant 0 : index
    %c0_404 = arith.constant 0 : index
    %1385 = vector.load %arg22[%c0_403, %c0_404] : memref<1x3xf32, #tpu.memory_space<vmem>>, vector<1x3xf32>
    %1386 = vector.broadcast %1385 : vector<1x3xf32> to vector<2x3xf32>
    %1387 = arith.addf %1384, %1386 : vector<2x3xf32>
    %cst_405 = arith.constant dense<0xFF800000> : vector<2xf32>
    %1388 = vector.multi_reduction <maximumf>, %1387, %cst_405 [1] : vector<2x3xf32> to vector<2xf32>
    %1389 = vector.shape_cast %1388 : vector<2xf32> to vector<2x1xf32>
    %1390 = vector.broadcast %1389 : vector<2x1xf32> to vector<2x3xf32>
    %1391 = arith.subf %1387, %1390 : vector<2x3xf32>
    %1392 = vector.broadcast %1389 : vector<2x1xf32> to vector<2x3xf32>
    %1393 = arith.subf %1387, %1392 : vector<2x3xf32>
    %1394 = math.exp %1393 : vector<2x3xf32>
    %cst_406 = arith.constant dense<0.000000e+00> : vector<2xf32>
    %1395 = vector.multi_reduction <add>, %1394, %cst_406 [1] : vector<2x3xf32> to vector<2xf32>
    %1396 = vector.shape_cast %1395 : vector<2xf32> to vector<2x1xf32>
    %1397 = math.log %1396 : vector<2x1xf32>
    %1398 = vector.broadcast %1397 : vector<2x1xf32> to vector<2x3xf32>
    %1399 = arith.subf %1391, %1398 : vector<2x3xf32>
    %1400 = tpu.iota {dimensions = array<i32: 1>} : vector<2x3xi32>
    %c0_407 = arith.constant 0 : index
    %c0_408 = arith.constant 0 : index
    %1401 = vector.load %arg2[%c0_407, %c0_408] : memref<2x1xi32, #tpu.memory_space<vmem>>, vector<2x1xi32>
    %1402 = vector.broadcast %1401 : vector<2x1xi32> to vector<2x3xi32>
    %1403 = arith.cmpi eq, %1400, %1402 : vector<2x3xi32>
    %1404 = arith.extui %1403 : vector<2x3xi1> to vector<2x3xi32>
    %1405 = arith.sitofp %1404 : vector<2x3xi32> to vector<2x3xf32>
    %1406 = arith.mulf %1399, %1405 : vector<2x3xf32>
    %cst_409 = arith.constant dense<0.000000e+00> : vector<2xf32>
    %1407 = vector.multi_reduction <add>, %1406, %cst_409 [1] : vector<2x3xf32> to vector<2xf32>
    %1408 = vector.shape_cast %1407 : vector<2xf32> to vector<2x1xf32>
    %cst_410 = arith.constant dense<0.000000e+00> : vector<1xf32>
    %1409 = vector.multi_reduction <add>, %1408, %cst_410 [0] : vector<2x1xf32> to vector<1xf32>
    %1410 = vector.shape_cast %1409 : vector<1xf32> to vector<1x1xf32>
    %cst_411 = arith.constant 0.000000e+00 : f32
    %1411 = vector.broadcast %cst_411 : f32 to vector<1x1xf32>
    %1412 = arith.subf %1411, %1410 : vector<1x1xf32>
    %cst_412 = arith.constant 2.000000e+00 : f32
    %1413 = vector.broadcast %cst_412 : f32 to vector<1x1xf32>
    %1414 = arith.divf %1412, %1413 : vector<1x1xf32>
    %c0_413 = arith.constant 0 : index
    %c0_414 = arith.constant 0 : index
    %1415 = vector.load %arg23[%c0_413, %c0_414] : memref<2x2xf32, #tpu.memory_space<vmem>>, vector<2x2xf32>
    %1416 = vector.extract_strided_slice %1415 {offsets = [1, 0], sizes = [1, 1], strides = [1, 1]} : vector<2x2xf32> to vector<1x1xf32>
    %1417 = vector.extract_strided_slice %1415 {offsets = [0, 0], sizes = [1, 1], strides = [1, 1]} : vector<2x2xf32> to vector<1x1xf32>
    %1418 = arith.subf %1416, %1417 : vector<1x1xf32>
    %cst_415 = arith.constant 0.000000e+00 : f32
    %1419 = vector.broadcast %cst_415 : f32 to vector<1x1xf32>
    %1420 = arith.maximumf %1418, %1419 : vector<1x1xf32>
    %1421 = vector.extract_strided_slice %1415 {offsets = [0, 1], sizes = [1, 1], strides = [1, 1]} : vector<2x2xf32> to vector<1x1xf32>
    %1422 = vector.extract_strided_slice %1415 {offsets = [1, 1], sizes = [1, 1], strides = [1, 1]} : vector<2x2xf32> to vector<1x1xf32>
    %1423 = arith.subf %1421, %1422 : vector<1x1xf32>
    %cst_416 = arith.constant 0.000000e+00 : f32
    %1424 = vector.broadcast %cst_416 : f32 to vector<1x1xf32>
    %1425 = arith.maximumf %1423, %1424 : vector<1x1xf32>
    %1426 = arith.addf %1420, %1425 : vector<1x1xf32>
    %1427 = math.absf %1374 : vector<2x8xf32>
    %cst_417 = arith.constant dense<0.000000e+00> : vector<2xf32>
    %1428 = vector.multi_reduction <add>, %1427, %cst_417 [1] : vector<2x8xf32> to vector<2xf32>
    %1429 = vector.shape_cast %1428 : vector<2xf32> to vector<2x1xf32>
    %cst_418 = arith.constant dense<0.000000e+00> : vector<1xf32>
    %1430 = vector.multi_reduction <add>, %1429, %cst_418 [0] : vector<2x1xf32> to vector<1xf32>
    %1431 = vector.shape_cast %1430 : vector<1xf32> to vector<1x1xf32>
    %cst_419 = arith.constant 2.000000e+00 : f32
    %1432 = vector.broadcast %cst_419 : f32 to vector<1x1xf32>
    %1433 = arith.divf %1431, %1432 : vector<1x1xf32>
    %cst_420 = arith.constant 1.000000e+00 : f32
    %1434 = vector.broadcast %cst_420 : f32 to vector<1x1xf32>
    %1435 = arith.mulf %1434, %1426 : vector<1x1xf32>
    %cst_421 = arith.constant 1.000000e+00 : f32
    %1436 = vector.broadcast %cst_421 : f32 to vector<1x1xf32>
    %1437 = arith.mulf %1436, %1433 : vector<1x1xf32>
    %1438 = arith.addf %1435, %1437 : vector<1x1xf32>
    %1439 = tpu.concatenate %1414, %1438 in 1 : vector<1x1xf32>, vector<1x1xf32> -> vector<1x2xf32>
    %c0_422 = arith.constant 0 : index
    %c0_423 = arith.constant 0 : index
    %1440 = vector.load %arg24[%c0_422, %c0_423] : memref<8x128xf32, #tpu.memory_space<vmem>>, vector<1x2xf32>
    tpu.vector_store %arg24[%c0_422, %c0_423], %1439 {strides = array<i32>} : memref<8x128xf32, #tpu.memory_space<vmem>>, vector<1x2xf32>,
    %c1_424 = arith.constant 1 : index
    %c0_425 = arith.constant 0 : index
    %1441 = vector.load %arg24[%c1_424, %c0_425] : memref<8x128xf32, #tpu.memory_space<vmem>>, vector<2x3xf32>
    tpu.vector_store %arg24[%c1_424, %c0_425], %1399 {strides = array<i32>} : memref<8x128xf32, #tpu.memory_space<vmem>>, vector<2x3xf32>,
    %c3_426 = arith.constant 3 : index
    %c0_427 = arith.constant 0 : index
    %1442 = vector.load %arg24[%c3_426, %c0_427] : memref<8x128xf32, #tpu.memory_space<vmem>>, vector<2x8xf32>
    tpu.vector_store %arg24[%c3_426, %c0_427], %1374 {strides = array<i32>} : memref<8x128xf32, #tpu.memory_space<vmem>>, vector<2x8xf32>,
    %1443 = vector.shape_cast %1361 : vector<2x32x2xf32> to vector<2x64xf32>
    %c5_428 = arith.constant 5 : index
    %c0_429 = arith.constant 0 : index
    %1444 = vector.load %arg24[%c5_428, %c0_429] : memref<8x128xf32, #tpu.memory_space<vmem>>, vector<2x64xf32>
    tpu.vector_store %arg24[%c5_428, %c0_429], %1443 {strides = array<i32>} : memref<8x128xf32, #tpu.memory_space<vmem>>, vector<2x64xf32>,
    return
  }
}

</mosaic_0001>

<llo_original>
// kernel: forward.1
$region0: #{forward.1}
  #allocation0 [shape = 'u32[]', space=smem, size = 0x4, offset = 0x4, fixed_abs, tag = 'smem constant byte address 0x4 - core index']
  #allocation1 [shape = 'u32[144,128]{1,0:T(1,128)}', space=vmem, size = 0x12000, scoped, tag = 'internal scratch']
  #allocation2 [shape = 'f32[16,32]{1,0:T(8,128)}', space=vmem, size = 0x2000, scoped, tag = 'scratch operand']
  #allocation3 [shape = 's32[16]{0}', space=sflag, size = 0x40, scoped, tag = 'scratch operand']
  #allocation4 [shape = 'f32[2,8,32]{2,1,0:T(8,128)}', space=vmem, size = 0x2000, scoped, tag = 'scratch operand']
  #allocation5 [shape = 'f32[2,10,32]{2,1,0:T(8,128)}', space=vmem, size = 0x4000, scoped, tag = 'scratch operand']
  #allocation8 [shape = 's32[]', space=sflag, size = 0x4, offset = 0, fixed_abs, tag = 'sflag constant byte address 0x0 - dummy sync flag']
  #allocation9 [shape = 's32[]', space=sflag, size = 0x4, offset = 0, fixed_abs, tag = 'sflag constant byte address 0x0 - dummy sync flag']
  #allocation10 [shape = 's32[]', space=sflag, size = 0x4, offset = 0, fixed_abs, tag = 'sflag constant byte address 0x0 - dummy sync flag']
  #allocation11 [shape = 's32[]', space=sflag, size = 0x4, offset = 0, fixed_abs, tag = 'sflag constant byte address 0x0 - dummy sync flag']
  #allocation12 [shape = 's32[]', space=sflag, size = 0x4, offset = 0, fixed_abs, tag = 'sflag constant byte address 0x0 - dummy sync flag']
  #allocation13 [shape = 's32[]', space=sflag, size = 0x4, offset = 0, fixed_abs, tag = 'sflag constant byte address 0x0 - dummy sync flag']
  #allocation14 [shape = 's32[]', space=sflag, size = 0x4, offset = 0, fixed_abs, tag = 'sflag constant byte address 0x0 - dummy sync flag']
  #allocation15 [shape = 's32[]', space=sflag, size = 0x4, offset = 0, fixed_abs, tag = 'sflag constant byte address 0x0 - dummy sync flag']
  #allocation16 [shape = 's32[]', space=sflag, size = 0x4, offset = 0, fixed_abs, tag = 'sflag constant byte address 0x0 - dummy sync flag']
  #allocation17 [shape = 's32[]', space=sflag, size = 0x4, offset = 0, fixed_abs, tag = 'sflag constant byte address 0x0 - dummy sync flag']
  #allocation18 [shape = 's32[]', space=sflag, size = 0x4, offset = 0, fixed_abs, tag = 'sflag constant byte address 0x0 - dummy sync flag']
  #allocation19 [shape = 's32[]', space=sflag, size = 0x4, offset = 0, fixed_abs, tag = 'sflag constant byte address 0x0 - dummy sync flag']
  #allocation20 [shape = 's32[]', space=sflag, size = 0x4, offset = 0, fixed_abs, tag = 'sflag constant byte address 0x0 - dummy sync flag']
  #allocation21 [shape = 's32[]', space=sflag, size = 0x4, offset = 0, fixed_abs, tag = 'sflag constant byte address 0x0 - dummy sync flag']
  #allocation22 [shape = 's32[]', space=sflag, size = 0x4, offset = 0, fixed_abs, tag = 'sflag constant byte address 0x0 - dummy sync flag']
  #allocation23 [shape = 's32[]', space=sflag, size = 0x4, offset = 0, fixed_abs, tag = 'sflag constant byte address 0x0 - dummy sync flag']
  %s0 = inlined_call_operand.vmem [shape: s32[16], index: 0, kind: input, shape index: {}]
  %s1 = inlined_call_operand.vmem [shape: s32[2,8], index: 1, kind: input, shape index: {}]
  %s2 = inlined_call_operand.vmem [shape: s32[2,1], index: 2, kind: input, shape index: {}]
  %s3 = inlined_call_operand.vmem [shape: f32[2,1], index: 3, kind: input, shape index: {}]
  %s4 = inlined_call_operand.vmem [shape: f32[50,32], index: 4, kind: input, shape index: {}]
  %s5 = inlined_call_operand.vmem [shape: f32[2,16], index: 5, kind: input, shape index: {}]
  %s6 = inlined_call_operand.vmem [shape: f32[48,96], index: 6, kind: input, shape index: {}]
  %s7 = inlined_call_operand.vmem [shape: f32[32,48], index: 7, kind: input, shape index: {}]
  %s8 = inlined_call_operand.vmem [shape: f32[1,96], index: 8, kind: input, shape index: {}]
  %s9 = inlined_call_operand.vmem [shape: f32[2,48], index: 9, kind: input, shape index: {}]
  %s10 = inlined_call_operand.vmem [shape: f32[32,96], index: 10, kind: input, shape index: {}]
  %s11 = inlined_call_operand.vmem [shape: f32[32,48], index: 11, kind: input, shape index: {}]
  %s12 = inlined_call_operand.vmem [shape: f32[1,96], index: 12, kind: input, shape index: {}]
  %s13 = inlined_call_operand.vmem [shape: f32[2,48], index: 13, kind: input, shape index: {}]
  %s14 = inlined_call_operand.vmem [shape: f32[96,32], index: 14, kind: input, shape index: {}]
  %s15 = inlined_call_operand.vmem [shape: f32[1,32], index: 15, kind: input, shape index: {}]
  %s16 = inlined_call_operand.vmem [shape: f32[32,64], index: 16, kind: input, shape index: {}]
  %s17 = inlined_call_operand.vmem [shape: f32[16,64], index: 17, kind: input, shape index: {}]
  %s18 = inlined_call_operand.vmem [shape: f32[1,64], index: 18, kind: input, shape index: {}]
  %s19 = inlined_call_operand.vmem [shape: f32[16,2], index: 19, kind: input, shape index: {}]
  %s20 = inlined_call_operand.vmem [shape: f32[1,2], index: 20, kind: input, shape index: {}]
  %s21 = inlined_call_operand.vmem [shape: f32[32,3], index: 21, kind: input, shape index: {}]
  %s22 = inlined_call_operand.vmem [shape: f32[1,3], index: 22, kind: input, shape index: {}]
  %s23 = inlined_call_operand.vmem [shape: f32[2,2], index: 23, kind: input, shape index: {}]
  %s24 = inlined_call_operand.vmem [shape: f32[8,128], index: 24, kind: output, shape index: {}]
  %s25 = sld [smem:[#allocation0]]
  $region586: #{forward.1} parent=0
    _
  %s27 = ssub.s32 1, %s25
  %s28 = scalar_select 0, %s27, %s25
  $region1: #{forward.1} parent=0
    #allocation6 [shape = 'u8[512]{0}', space=smem, size = 0x200, scoped, tag = 'input window, operand 0, single buffered']
    #allocation7 [shape = 's32[1]{0}', space=sflag, size = 0x4, scoped, tag = 'scoped memory for forward.1']
    %29 = vsyncpa [#allocation7], 0
    // Predicated region
    $region2: #{forward.1} parent=1 // pred_check
      _
    $region3: #{forward.1} parent=1 // pred_check_branch
      %31 = sbr.rel (0) target = $region5
    $region4: #{forward.1} parent=1 // pred_region
      %s33 = ssub.s32 16, 16
      %34 = vsyncadd [#allocation7], %s33
      %s36 = sshll.u32 %s0, 4
      %s37 = int_to_ptr.vmem [resolvable:$true] %s36
      %39 = dma.vmem_to_smem %s37, 16, [#allocation6], [#allocation7]
    $region5: #{forward.1} parent=1 // pred_fallthru
      _
    // Predicated region
    $region6: #{forward.1} parent=1 // pred_check
      _
    $region7: #{forward.1} parent=1 // pred_check_branch
      %41 = sbr.rel (0) target = $region9
    $region8: #{forward.1} parent=1 // pred_region
      _
    $region9: #{forward.1} parent=1 // pred_fallthru
      _
    // Predicated region
    $region10: #{forward.1} parent=1 // pred_check
      _
    $region11: #{forward.1} parent=1 // pred_check_branch
      %43 = sbr.rel (0) target = $region13
    $region12: #{forward.1} parent=1 // pred_region
      _
    $region13: #{forward.1} parent=1 // pred_fallthru
      _
    // Predicated region
    $region14: #{forward.1} parent=1 // pred_check
      _
    $region15: #{forward.1} parent=1 // pred_check_branch
      %45 = sbr.rel (0) target = $region17
    $region16: #{forward.1} parent=1 // pred_region
      _
    $region17: #{forward.1} parent=1 // pred_fallthru
      _
    // Predicated region
    $region18: #{forward.1} parent=1 // pred_check
      _
    $region19: #{forward.1} parent=1 // pred_check_branch
      %47 = sbr.rel (0) target = $region21
    $region20: #{forward.1} parent=1 // pred_region
      _
    $region21: #{forward.1} parent=1 // pred_fallthru
      _
    // Predicated region
    $region22: #{forward.1} parent=1 // pred_check
      _
    $region23: #{forward.1} parent=1 // pred_check_branch
      %49 = sbr.rel (0) target = $region25
    $region24: #{forward.1} parent=1 // pred_region
      _
    $region25: #{forward.1} parent=1 // pred_fallthru
      _
    // Predicated region
    $region26: #{forward.1} parent=1 // pred_check
      _
    $region27: #{forward.1} parent=1 // pred_check_branch
      %51 = sbr.rel (0) target = $region29
    $region28: #{forward.1} parent=1 // pred_region
      _
    $region29: #{forward.1} parent=1 // pred_fallthru
      _
    // Predicated region
    $region30: #{forward.1} parent=1 // pred_check
      _
    $region31: #{forward.1} parent=1 // pred_check_branch
      %53 = sbr.rel (0) target = $region33
    $region32: #{forward.1} parent=1 // pred_region
      _
    $region33: #{forward.1} parent=1 // pred_fallthru
      _
    // Predicated region
    $region34: #{forward.1} parent=1 // pred_check
      _
    $region35: #{forward.1} parent=1 // pred_check_branch
      %55 = sbr.rel (0) target = $region37
    $region36: #{forward.1} parent=1 // pred_region
      _
    $region37: #{forward.1} parent=1 // pred_fallthru
      _
    // Predicated region
    $region38: #{forward.1} parent=1 // pred_check
      _
    $region39: #{forward.1} parent=1 // pred_check_branch
      %57 = sbr.rel (0) target = $region41
    $region40: #{forward.1} parent=1 // pred_region
      _
    $region41: #{forward.1} parent=1 // pred_fallthru
      _
    // Predicated region
    $region42: #{forward.1} parent=1 // pred_check
      _
    $region43: #{forward.1} parent=1 // pred_check_branch
      %59 = sbr.rel (0) target = $region45
    $region44: #{forward.1} parent=1 // pred_region
      _
    $region45: #{forward.1} parent=1 // pred_fallthru
      _
    // Predicated region
    $region46: #{forward.1} parent=1 // pred_check
      _
    $region47: #{forward.1} parent=1 // pred_check_branch
      %61 = sbr.rel (0) target = $region49
    $region48: #{forward.1} parent=1 // pred_region
      _
    $region49: #{forward.1} parent=1 // pred_fallthru
      _
    // Predicated region
    $region50: #{forward.1} parent=1 // pred_check
      _
    $region51: #{forward.1} parent=1 // pred_check_branch
      %63 = sbr.rel (0) target = $region53
    $region52: #{forward.1} parent=1 // pred_region
      _
    $region53: #{forward.1} parent=1 // pred_fallthru
      _
    // Predicated region
    $region54: #{forward.1} parent=1 // pred_check
      _
    $region55: #{forward.1} parent=1 // pred_check_branch
      %65 = sbr.rel (0) target = $region57
    $region56: #{forward.1} parent=1 // pred_region
      _
    $region57: #{forward.1} parent=1 // pred_fallthru
      _
    // Predicated region
    $region58: #{forward.1} parent=1 // pred_check
      _
    $region59: #{forward.1} parent=1 // pred_check_branch
      %67 = sbr.rel (0) target = $region61
    $region60: #{forward.1} parent=1 // pred_region
      _
    $region61: #{forward.1} parent=1 // pred_fallthru
      _
    // Predicated region
    $region62: #{forward.1} parent=1 // pred_check
      _
    $region63: #{forward.1} parent=1 // pred_check_branch
      %69 = sbr.rel (0) target = $region65
    $region64: #{forward.1} parent=1 // pred_region
      _
    $region65: #{forward.1} parent=1 // pred_fallthru
      _
    // Predicated region
    $region66: #{forward.1} parent=1 // pred_check
      _
    $region67: #{forward.1} parent=1 // pred_check_branch
      %71 = sbr.rel (0) target = $region69
    $region68: #{forward.1} parent=1 // pred_region
      _
    $region69: #{forward.1} parent=1 // pred_fallthru
      _
    // Predicated region
    $region70: #{forward.1} parent=1 // pred_check
      _
    $region71: #{forward.1} parent=1 // pred_check_branch
      %73 = sbr.rel (0) target = $region73
    $region72: #{forward.1} parent=1 // pred_region
      _
    $region73: #{forward.1} parent=1 // pred_fallthru
      _
    // Predicated region
    $region74: #{forward.1} parent=1 // pred_check
      _
    $region75: #{forward.1} parent=1 // pred_check_branch
      %75 = sbr.rel (0) target = $region77
    $region76: #{forward.1} parent=1 // pred_region
      _
    $region77: #{forward.1} parent=1 // pred_fallthru
      _
    // Predicated region
    $region78: #{forward.1} parent=1 // pred_check
      _
    $region79: #{forward.1} parent=1 // pred_check_branch
      %77 = sbr.rel (0) target = $region81
    $region80: #{forward.1} parent=1 // pred_region
      _
    $region81: #{forward.1} parent=1 // pred_fallthru
      _
    // Predicated region
    $region82: #{forward.1} parent=1 // pred_check
      _
    $region83: #{forward.1} parent=1 // pred_check_branch
      %79 = sbr.rel (0) target = $region85
    $region84: #{forward.1} parent=1 // pred_region
      _
    $region85: #{forward.1} parent=1 // pred_fallthru
      _
    // Predicated region
    $region86: #{forward.1} parent=1 // pred_check
      _
    $region87: #{forward.1} parent=1 // pred_check_branch
      %81 = sbr.rel (0) target = $region89
    $region88: #{forward.1} parent=1 // pred_region
      _
    $region89: #{forward.1} parent=1 // pred_fallthru
      _
    // Predicated region
    $region90: #{forward.1} parent=1 // pred_check
      _
    $region91: #{forward.1} parent=1 // pred_check_branch
      %83 = sbr.rel (0) target = $region93
    $region92: #{forward.1} parent=1 // pred_region
      _
    $region93: #{forward.1} parent=1 // pred_fallthru
      _
    // Predicated region
    $region94: #{forward.1} parent=1 // pred_check
      _
    $region95: #{forward.1} parent=1 // pred_check_branch
      %85 = sbr.rel (0) target = $region97
    $region96: #{forward.1} parent=1 // pred_region
      %86 = dma.done [#allocation7], 16
    $region97: #{forward.1} parent=1 // pred_fallthru
      _
    %87 = sfence
    %88 = vst [vmem:[%s24] sm:$0xff] 0.0
    %s89 = sld [smem:[#allocation6]]
    %s90 = scalar_lea.vmem %s4, %s89
    %p92 = scmp.lt.u32.totalorder 1, 8
    %p93 = pneg %p92
    // Predicated region
    $region98: #{forward.1} parent=1 // pred_check
      _
    $region99: #{forward.1} parent=1 // pred_check_branch
      %95 = sbr.rel (%p92) target = $region101
    $region100: #{forward.1} parent=1 // pred_region
      %s110 = sand.u32 1, 7
      %p111 = scmp.eq.s32.totalorder %s110, 0
      %p112 = pneg %p111
      // Predicated region
      $region113: #{forward.1} parent=100 // pred_check
        _
      $region114: #{forward.1} parent=100 // pred_check_branch
        %114 = sbr.rel (%p111) target = $region116
      $region115: #{forward.1} parent=100 // pred_region
        %s115 = sand.u32 1, 7
        %s116 = ssub.s32 1, %s115
        %s117 = scalar_lea.vmem %s90, %s116
        %s118 = ssub.s32 1, %s115
        %s119 = scalar_lea.vmem [#allocation2], %s118
        %s120 = sshllo.u32 0, %s115
        loop: start=0, step=1, limit=1
        $region117: #{forward.1} parent=115 // loop_pre_header
          _
        $region118: #{forward.1} parent=115 // loop_header
          %s122 = sphi 0, %s126
          %p123 = scmp.ge.s32.totalorder %s122, 1
          %s127 = sphi %s117, %s117
          %s128 = sphi %s119, %s119
        $region119: #{forward.1} parent=115 // loop_header_branch
          %125 = sbr.rel (%p123) target = $region123
        $region120: #{forward.1} parent=115 // loop_body
          %v129 = vld [vmem:[%s127] sm:%s120]
          %130 = vst [vmem:[%s128] sm:%s120] %v129
        $region121: #{forward.1} parent=115 // loop_footer
          %s126 = sadd.s32 1, %s122
        $region122: #{forward.1} parent=115 // loop_footer_branch
          %121 = sbr.rel target = $region118
        $region123: #{forward.1} parent=115 // loop_exit
          _
      $region116: #{forward.1} parent=100 // pred_fallthru
        _
    $region101: #{forward.1} parent=1 // pred_fallthru
      _
    // Predicated region
    $region102: #{forward.1} parent=1 // pred_check
      %p96 = pneg %p92
    $region103: #{forward.1} parent=1 // pred_check_branch
      %98 = sbr.rel (%p96) target = $region105
    $region104: #{forward.1} parent=1 // pred_region
      %s99 = sshllo.u32 0, 1
      loop: start=0, step=1, limit=1
      $region106: #{forward.1} parent=104 // loop_pre_header
        _
      $region107: #{forward.1} parent=104 // loop_header
        %s101 = sphi 0, %s105
        %p102 = scmp.ge.s32.totalorder %s101, 1
        %s106 = sphi %s90, %s90
        %s107 = sphi [#allocation2], [#allocation2]
      $region108: #{forward.1} parent=104 // loop_header_branch
        %104 = sbr.rel (%p102) target = $region112
      $region109: #{forward.1} parent=104 // loop_body
        %v108 = vld [vmem:[%s106] sm:%s99]
        %109 = vst [vmem:[%s107] sm:%s99] %v108
      $region110: #{forward.1} parent=104 // loop_footer
        %s105 = sadd.s32 1, %s101
      $region111: #{forward.1} parent=104 // loop_footer_branch
        %100 = sbr.rel target = $region107
      $region112: #{forward.1} parent=104 // loop_exit
        _
    $region105: #{forward.1} parent=1 // pred_fallthru
      _
    // Predicated region
    $region124: #{forward.1} parent=1 // pred_check
      _
    $region125: #{forward.1} parent=1 // pred_check_branch
      %133 = sbr.rel (0) target = $region127
    $region126: #{forward.1} parent=1 // pred_region
      %134 = vsyncadd [#allocation3], 16
    $region127: #{forward.1} parent=1 // pred_fallthru
      _
    %s135 = sld [smem:[#allocation6 + $0x1]]
    %s136 = scalar_lea.vmem %s4, %s135
    %s137 = scalar_lea.vmem [#allocation2], 1
    %s138 = scalar_lea.sflag [#allocation3], 1
    %p140 = scmp.lt.u32.totalorder 1, 8
    %p141 = pneg %p140
    // Predicated region
    $region128: #{forward.1} parent=1 // pred_check
      _
    $region129: #{forward.1} parent=1 // pred_check_branch
      %143 = sbr.rel (%p140) target = $region131
    $region130: #{forward.1} parent=1 // pred_region
      %s158 = sand.u32 1, 7
      %p159 = scmp.eq.s32.totalorder %s158, 0
      %p160 = pneg %p159
      // Predicated region
      $region143: #{forward.1} parent=130 // pred_check
        _
      $region144: #{forward.1} parent=130 // pred_check_branch
        %162 = sbr.rel (%p159) target = $region146
      $region145: #{forward.1} parent=130 // pred_region
        %s163 = sand.u32 1, 7
        %s164 = ssub.s32 1, %s163
        %s165 = scalar_lea.vmem %s136, %s164
        %s166 = ssub.s32 1, %s163
        %s167 = scalar_lea.vmem %s137, %s166 [#allocation2]
        %s168 = sshllo.u32 0, %s163
        loop: start=0, step=1, limit=1
        $region147: #{forward.1} parent=145 // loop_pre_header
          _
        $region148: #{forward.1} parent=145 // loop_header
          %s170 = sphi 0, %s174
          %p171 = scmp.ge.s32.totalorder %s170, 1
          %s175 = sphi %s165, %s165
          %s176 = sphi %s167, %s167
        $region149: #{forward.1} parent=145 // loop_header_branch
          %173 = sbr.rel (%p171) target = $region153
        $region150: #{forward.1} parent=145 // loop_body
          %v177 = vld [vmem:[%s175] sm:%s168]
          %178 = vst [vmem:[%s176] sm:%s168] %v177
        $region151: #{forward.1} parent=145 // loop_footer
          %s174 = sadd.s32 1, %s170
        $region152: #{forward.1} parent=145 // loop_footer_branch
          %169 = sbr.rel target = $region148
        $region153: #{forward.1} parent=145 // loop_exit
          _
      $region146: #{forward.1} parent=130 // pred_fallthru
        _
    $region131: #{forward.1} parent=1 // pred_fallthru
      _
    // Predicated region
    $region132: #{forward.1} parent=1 // pred_check
      %p144 = pneg %p140
    $region133: #{forward.1} parent=1 // pred_check_branch
      %146 = sbr.rel (%p144) target = $region135
    $region134: #{forward.1} parent=1 // pred_region
      %s147 = sshllo.u32 0, 1
      loop: start=0, step=1, limit=1
      $region136: #{forward.1} parent=134 // loop_pre_header
        _
      $region137: #{forward.1} parent=134 // loop_header
        %s149 = sphi 0, %s153
        %p150 = scmp.ge.s32.totalorder %s149, 1
        %s154 = sphi %s136, %s136
        %s155 = sphi %s137, %s137
      $region138: #{forward.1} parent=134 // loop_header_branch
        %152 = sbr.rel (%p150) target = $region142
      $region139: #{forward.1} parent=134 // loop_body
        %v156 = vld [vmem:[%s154] sm:%s147]
        %157 = vst [vmem:[%s155] sm:%s147] %v156
      $region140: #{forward.1} parent=134 // loop_footer
        %s153 = sadd.s32 1, %s149
      $region141: #{forward.1} parent=134 // loop_footer_branch
        %148 = sbr.rel target = $region137
      $region142: #{forward.1} parent=134 // loop_exit
        _
    $region135: #{forward.1} parent=1 // pred_fallthru
      _
    // Predicated region
    $region154: #{forward.1} parent=1 // pred_check
      _
    $region155: #{forward.1} parent=1 // pred_check_branch
      %181 = sbr.rel (0) target = $region157
    $region156: #{forward.1} parent=1 // pred_region
      %182 = vsyncadd %s138, 16
    $region157: #{forward.1} parent=1 // pred_fallthru
      _
    %s183 = sld [smem:[#allocation6 + $0x2]]
    %s184 = scalar_lea.vmem %s4, %s183
    %s185 = scalar_lea.vmem [#allocation2], 2
    %s186 = scalar_lea.sflag [#allocation3], 2
    %p188 = scmp.lt.u32.totalorder 1, 8
    %p189 = pneg %p188
    // Predicated region
    $region158: #{forward.1} parent=1 // pred_check
      _
    $region159: #{forward.1} parent=1 // pred_check_branch
      %191 = sbr.rel (%p188) target = $region161
    $region160: #{forward.1} parent=1 // pred_region
      %s206 = sand.u32 1, 7
      %p207 = scmp.eq.s32.totalorder %s206, 0
      %p208 = pneg %p207
      // Predicated region
      $region173: #{forward.1} parent=160 // pred_check
        _
      $region174: #{forward.1} parent=160 // pred_check_branch
        %210 = sbr.rel (%p207) target = $region176
      $region175: #{forward.1} parent=160 // pred_region
        %s211 = sand.u32 1, 7
        %s212 = ssub.s32 1, %s211
        %s213 = scalar_lea.vmem %s184, %s212
        %s214 = ssub.s32 1, %s211
        %s215 = scalar_lea.vmem %s185, %s214 [#allocation2]
        %s216 = sshllo.u32 0, %s211
        loop: start=0, step=1, limit=1
        $region177: #{forward.1} parent=175 // loop_pre_header
          _
        $region178: #{forward.1} parent=175 // loop_header
          %s218 = sphi 0, %s222
          %p219 = scmp.ge.s32.totalorder %s218, 1
          %s223 = sphi %s213, %s213
          %s224 = sphi %s215, %s215
        $region179: #{forward.1} parent=175 // loop_header_branch
          %221 = sbr.rel (%p219) target = $region183
        $region180: #{forward.1} parent=175 // loop_body
          %v225 = vld [vmem:[%s223] sm:%s216]
          %226 = vst [vmem:[%s224] sm:%s216] %v225
        $region181: #{forward.1} parent=175 // loop_footer
          %s222 = sadd.s32 1, %s218
        $region182: #{forward.1} parent=175 // loop_footer_branch
          %217 = sbr.rel target = $region178
        $region183: #{forward.1} parent=175 // loop_exit
          _
      $region176: #{forward.1} parent=160 // pred_fallthru
        _
    $region161: #{forward.1} parent=1 // pred_fallthru
      _
    // Predicated region
    $region162: #{forward.1} parent=1 // pred_check
      %p192 = pneg %p188
    $region163: #{forward.1} parent=1 // pred_check_branch
      %194 = sbr.rel (%p192) target = $region165
    $region164: #{forward.1} parent=1 // pred_region
      %s195 = sshllo.u32 0, 1
      loop: start=0, step=1, limit=1
      $region166: #{forward.1} parent=164 // loop_pre_header
        _
      $region167: #{forward.1} parent=164 // loop_header
        %s197 = sphi 0, %s201
        %p198 = scmp.ge.s32.totalorder %s197, 1
        %s202 = sphi %s184, %s184
        %s203 = sphi %s185, %s185
      $region168: #{forward.1} parent=164 // loop_header_branch
        %200 = sbr.rel (%p198) target = $region172
      $region169: #{forward.1} parent=164 // loop_body
        %v204 = vld [vmem:[%s202] sm:%s195]
        %205 = vst [vmem:[%s203] sm:%s195] %v204
      $region170: #{forward.1} parent=164 // loop_footer
        %s201 = sadd.s32 1, %s197
      $region171: #{forward.1} parent=164 // loop_footer_branch
        %196 = sbr.rel target = $region167
      $region172: #{forward.1} parent=164 // loop_exit
        _
    $region165: #{forward.1} parent=1 // pred_fallthru
      _
    // Predicated region
    $region184: #{forward.1} parent=1 // pred_check
      _
    $region185: #{forward.1} parent=1 // pred_check_branch
      %229 = sbr.rel (0) target = $region187
    $region186: #{forward.1} parent=1 // pred_region
      %230 = vsyncadd %s186, 16
    $region187: #{forward.1} parent=1 // pred_fallthru
      _
    %s231 = sld [smem:[#allocation6 + $0x3]]
    %s232 = scalar_lea.vmem %s4, %s231
    %s233 = scalar_lea.vmem [#allocation2], 3
    %s234 = scalar_lea.sflag [#allocation3], 3
    %p236 = scmp.lt.u32.totalorder 1, 8
    %p237 = pneg %p236
    // Predicated region
    $region188: #{forward.1} parent=1 // pred_check
      _
    $region189: #{forward.1} parent=1 // pred_check_branch
      %239 = sbr.rel (%p236) target = $region191
    $region190: #{forward.1} parent=1 // pred_region
      %s254 = sand.u32 1, 7
      %p255 = scmp.eq.s32.totalorder %s254, 0
      %p256 = pneg %p255
      // Predicated region
      $region203: #{forward.1} parent=190 // pred_check
        _
      $region204: #{forward.1} parent=190 // pred_check_branch
        %258 = sbr.rel (%p255) target = $region206
      $region205: #{forward.1} parent=190 // pred_region
        %s259 = sand.u32 1, 7
        %s260 = ssub.s32 1, %s259
        %s261 = scalar_lea.vmem %s232, %s260
        %s262 = ssub.s32 1, %s259
        %s263 = scalar_lea.vmem %s233, %s262 [#allocation2]
        %s264 = sshllo.u32 0, %s259
        loop: start=0, step=1, limit=1
        $region207: #{forward.1} parent=205 // loop_pre_header
          _
        $region208: #{forward.1} parent=205 // loop_header
          %s266 = sphi 0, %s270
          %p267 = scmp.ge.s32.totalorder %s266, 1
          %s271 = sphi %s261, %s261
          %s272 = sphi %s263, %s263
        $region209: #{forward.1} parent=205 // loop_header_branch
          %269 = sbr.rel (%p267) target = $region213
        $region210: #{forward.1} parent=205 // loop_body
          %v273 = vld [vmem:[%s271] sm:%s264]
          %274 = vst [vmem:[%s272] sm:%s264] %v273
        $region211: #{forward.1} parent=205 // loop_footer
          %s270 = sadd.s32 1, %s266
        $region212: #{forward.1} parent=205 // loop_footer_branch
          %265 = sbr.rel target = $region208
        $region213: #{forward.1} parent=205 // loop_exit
          _
      $region206: #{forward.1} parent=190 // pred_fallthru
        _
    $region191: #{forward.1} parent=1 // pred_fallthru
      _
    // Predicated region
    $region192: #{forward.1} parent=1 // pred_check
      %p240 = pneg %p236
    $region193: #{forward.1} parent=1 // pred_check_branch
      %242 = sbr.rel (%p240) target = $region195
    $region194: #{forward.1} parent=1 // pred_region
      %s243 = sshllo.u32 0, 1
      loop: start=0, step=1, limit=1
      $region196: #{forward.1} parent=194 // loop_pre_header
        _
      $region197: #{forward.1} parent=194 // loop_header
        %s245 = sphi 0, %s249
        %p246 = scmp.ge.s32.totalorder %s245, 1
        %s250 = sphi %s232, %s232
        %s251 = sphi %s233, %s233
      $region198: #{forward.1} parent=194 // loop_header_branch
        %248 = sbr.rel (%p246) target = $region202
      $region199: #{forward.1} parent=194 // loop_body
        %v252 = vld [vmem:[%s250] sm:%s243]
        %253 = vst [vmem:[%s251] sm:%s243] %v252
      $region200: #{forward.1} parent=194 // loop_footer
        %s249 = sadd.s32 1, %s245
      $region201: #{forward.1} parent=194 // loop_footer_branch
        %244 = sbr.rel target = $region197
      $region202: #{forward.1} parent=194 // loop_exit
        _
    $region195: #{forward.1} parent=1 // pred_fallthru
      _
    // Predicated region
    $region214: #{forward.1} parent=1 // pred_check
      _
    $region215: #{forward.1} parent=1 // pred_check_branch
      %277 = sbr.rel (0) target = $region217
    $region216: #{forward.1} parent=1 // pred_region
      %278 = vsyncadd %s234, 16
    $region217: #{forward.1} parent=1 // pred_fallthru
      _
    %s279 = sld [smem:[#allocation6 + $0x4]]
    %s280 = scalar_lea.vmem %s4, %s279
    %s281 = scalar_lea.vmem [#allocation2], 4
    %s282 = scalar_lea.sflag [#allocation3], 4
    %p284 = scmp.lt.u32.totalorder 1, 8
    %p285 = pneg %p284
    // Predicated region
    $region218: #{forward.1} parent=1 // pred_check
      _
    $region219: #{forward.1} parent=1 // pred_check_branch
      %287 = sbr.rel (%p284) target = $region221
    $region220: #{forward.1} parent=1 // pred_region
      %s302 = sand.u32 1, 7
      %p303 = scmp.eq.s32.totalorder %s302, 0
      %p304 = pneg %p303
      // Predicated region
      $region233: #{forward.1} parent=220 // pred_check
        _
      $region234: #{forward.1} parent=220 // pred_check_branch
        %306 = sbr.rel (%p303) target = $region236
      $region235: #{forward.1} parent=220 // pred_region
        %s307 = sand.u32 1, 7
        %s308 = ssub.s32 1, %s307
        %s309 = scalar_lea.vmem %s280, %s308
        %s310 = ssub.s32 1, %s307
        %s311 = scalar_lea.vmem %s281, %s310 [#allocation2]
        %s312 = sshllo.u32 0, %s307
        loop: start=0, step=1, limit=1
        $region237: #{forward.1} parent=235 // loop_pre_header
          _
        $region238: #{forward.1} parent=235 // loop_header
          %s314 = sphi 0, %s318
          %p315 = scmp.ge.s32.totalorder %s314, 1
          %s319 = sphi %s309, %s309
          %s320 = sphi %s311, %s311
        $region239: #{forward.1} parent=235 // loop_header_branch
          %317 = sbr.rel (%p315) target = $region243
        $region240: #{forward.1} parent=235 // loop_body
          %v321 = vld [vmem:[%s319] sm:%s312]
          %322 = vst [vmem:[%s320] sm:%s312] %v321
        $region241: #{forward.1} parent=235 // loop_footer
          %s318 = sadd.s32 1, %s314
        $region242: #{forward.1} parent=235 // loop_footer_branch
          %313 = sbr.rel target = $region238
        $region243: #{forward.1} parent=235 // loop_exit
          _
      $region236: #{forward.1} parent=220 // pred_fallthru
        _
    $region221: #{forward.1} parent=1 // pred_fallthru
      _
    // Predicated region
    $region222: #{forward.1} parent=1 // pred_check
      %p288 = pneg %p284
    $region223: #{forward.1} parent=1 // pred_check_branch
      %290 = sbr.rel (%p288) target = $region225
    $region224: #{forward.1} parent=1 // pred_region
      %s291 = sshllo.u32 0, 1
      loop: start=0, step=1, limit=1
      $region226: #{forward.1} parent=224 // loop_pre_header
        _
      $region227: #{forward.1} parent=224 // loop_header
        %s293 = sphi 0, %s297
        %p294 = scmp.ge.s32.totalorder %s293, 1
        %s298 = sphi %s280, %s280
        %s299 = sphi %s281, %s281
      $region228: #{forward.1} parent=224 // loop_header_branch
        %296 = sbr.rel (%p294) target = $region232
      $region229: #{forward.1} parent=224 // loop_body
        %v300 = vld [vmem:[%s298] sm:%s291]
        %301 = vst [vmem:[%s299] sm:%s291] %v300
      $region230: #{forward.1} parent=224 // loop_footer
        %s297 = sadd.s32 1, %s293
      $region231: #{forward.1} parent=224 // loop_footer_branch
        %292 = sbr.rel target = $region227
      $region232: #{forward.1} parent=224 // loop_exit
        _
    $region225: #{forward.1} parent=1 // pred_fallthru
      _
    // Predicated region
    $region244: #{forward.1} parent=1 // pred_check
      _
    $region245: #{forward.1} parent=1 // pred_check_branch
      %325 = sbr.rel (0) target = $region247
    $region246: #{forward.1} parent=1 // pred_region
      %326 = vsyncadd %s282, 16
    $region247: #{forward.1} parent=1 // pred_fallthru
      _
    %s327 = sld [smem:[#allocation6 + $0x5]]
    %s328 = scalar_lea.vmem %s4, %s327
    %s329 = scalar_lea.vmem [#allocation2], 5
    %s330 = scalar_lea.sflag [#allocation3], 5
    %p332 = scmp.lt.u32.totalorder 1, 8
    %p333 = pneg %p332
    // Predicated region
    $region248: #{forward.1} parent=1 // pred_check
      _
    $region249: #{forward.1} parent=1 // pred_check_branch
      %335 = sbr.rel (%p332) target = $region251
    $region250: #{forward.1} parent=1 // pred_region
      %s350 = sand.u32 1, 7
      %p351 = scmp.eq.s32.totalorder %s350, 0
      %p352 = pneg %p351
      // Predicated region
      $region263: #{forward.1} parent=250 // pred_check
        _
      $region264: #{forward.1} parent=250 // pred_check_branch
        %354 = sbr.rel (%p351) target = $region266
      $region265: #{forward.1} parent=250 // pred_region
        %s355 = sand.u32 1, 7
        %s356 = ssub.s32 1, %s355
        %s357 = scalar_lea.vmem %s328, %s356
        %s358 = ssub.s32 1, %s355
        %s359 = scalar_lea.vmem %s329, %s358 [#allocation2]
        %s360 = sshllo.u32 0, %s355
        loop: start=0, step=1, limit=1
        $region267: #{forward.1} parent=265 // loop_pre_header
          _
        $region268: #{forward.1} parent=265 // loop_header
          %s362 = sphi 0, %s366
          %p363 = scmp.ge.s32.totalorder %s362, 1
          %s367 = sphi %s357, %s357
          %s368 = sphi %s359, %s359
        $region269: #{forward.1} parent=265 // loop_header_branch
          %365 = sbr.rel (%p363) target = $region273
        $region270: #{forward.1} parent=265 // loop_body
          %v369 = vld [vmem:[%s367] sm:%s360]
          %370 = vst [vmem:[%s368] sm:%s360] %v369
        $region271: #{forward.1} parent=265 // loop_footer
          %s366 = sadd.s32 1, %s362
        $region272: #{forward.1} parent=265 // loop_footer_branch
          %361 = sbr.rel target = $region268
        $region273: #{forward.1} parent=265 // loop_exit
          _
      $region266: #{forward.1} parent=250 // pred_fallthru
        _
    $region251: #{forward.1} parent=1 // pred_fallthru
      _
    // Predicated region
    $region252: #{forward.1} parent=1 // pred_check
      %p336 = pneg %p332
    $region253: #{forward.1} parent=1 // pred_check_branch
      %338 = sbr.rel (%p336) target = $region255
    $region254: #{forward.1} parent=1 // pred_region
      %s339 = sshllo.u32 0, 1
      loop: start=0, step=1, limit=1
      $region256: #{forward.1} parent=254 // loop_pre_header
        _
      $region257: #{forward.1} parent=254 // loop_header
        %s341 = sphi 0, %s345
        %p342 = scmp.ge.s32.totalorder %s341, 1
        %s346 = sphi %s328, %s328
        %s347 = sphi %s329, %s329
      $region258: #{forward.1} parent=254 // loop_header_branch
        %344 = sbr.rel (%p342) target = $region262
      $region259: #{forward.1} parent=254 // loop_body
        %v348 = vld [vmem:[%s346] sm:%s339]
        %349 = vst [vmem:[%s347] sm:%s339] %v348
      $region260: #{forward.1} parent=254 // loop_footer
        %s345 = sadd.s32 1, %s341
      $region261: #{forward.1} parent=254 // loop_footer_branch
        %340 = sbr.rel target = $region257
      $region262: #{forward.1} parent=254 // loop_exit
        _
    $region255: #{forward.1} parent=1 // pred_fallthru
      _
    // Predicated region
    $region274: #{forward.1} parent=1 // pred_check
      _
    $region275: #{forward.1} parent=1 // pred_check_branch
      %373 = sbr.rel (0) target = $region277
    $region276: #{forward.1} parent=1 // pred_region
      %374 = vsyncadd %s330, 16
    $region277: #{forward.1} parent=1 // pred_fallthru
      _
    %s375 = sld [smem:[#allocation6 + $0x6]]
    %s376 = scalar_lea.vmem %s4, %s375
    %s377 = scalar_lea.vmem [#allocation2], 6
    %s378 = scalar_lea.sflag [#allocation3], 6
    %p380 = scmp.lt.u32.totalorder 1, 8
    %p381 = pneg %p380
    // Predicated region
    $region278: #{forward.1} parent=1 // pred_check
      _
    $region279: #{forward.1} parent=1 // pred_check_branch
      %383 = sbr.rel (%p380) target = $region281
    $region280: #{forward.1} parent=1 // pred_region
      %s398 = sand.u32 1, 7
      %p399 = scmp.eq.s32.totalorder %s398, 0
      %p400 = pneg %p399
      // Predicated region
      $region293: #{forward.1} parent=280 // pred_check
        _
      $region294: #{forward.1} parent=280 // pred_check_branch
        %402 = sbr.rel (%p399) target = $region296
      $region295: #{forward.1} parent=280 // pred_region
        %s403 = sand.u32 1, 7
        %s404 = ssub.s32 1, %s403
        %s405 = scalar_lea.vmem %s376, %s404
        %s406 = ssub.s32 1, %s403
        %s407 = scalar_lea.vmem %s377, %s406 [#allocation2]
        %s408 = sshllo.u32 0, %s403
        loop: start=0, step=1, limit=1
        $region297: #{forward.1} parent=295 // loop_pre_header
          _
        $region298: #{forward.1} parent=295 // loop_header
          %s410 = sphi 0, %s414
          %p411 = scmp.ge.s32.totalorder %s410, 1
          %s415 = sphi %s405, %s405
          %s416 = sphi %s407, %s407
        $region299: #{forward.1} parent=295 // loop_header_branch
          %413 = sbr.rel (%p411) target = $region303
        $region300: #{forward.1} parent=295 // loop_body
          %v417 = vld [vmem:[%s415] sm:%s408]
          %418 = vst [vmem:[%s416] sm:%s408] %v417
        $region301: #{forward.1} parent=295 // loop_footer
          %s414 = sadd.s32 1, %s410
        $region302: #{forward.1} parent=295 // loop_footer_branch
          %409 = sbr.rel target = $region298
        $region303: #{forward.1} parent=295 // loop_exit
          _
      $region296: #{forward.1} parent=280 // pred_fallthru
        _
    $region281: #{forward.1} parent=1 // pred_fallthru
      _
    // Predicated region
    $region282: #{forward.1} parent=1 // pred_check
      %p384 = pneg %p380
    $region283: #{forward.1} parent=1 // pred_check_branch
      %386 = sbr.rel (%p384) target = $region285
    $region284: #{forward.1} parent=1 // pred_region
      %s387 = sshllo.u32 0, 1
      loop: start=0, step=1, limit=1
      $region286: #{forward.1} parent=284 // loop_pre_header
        _
      $region287: #{forward.1} parent=284 // loop_header
        %s389 = sphi 0, %s393
        %p390 = scmp.ge.s32.totalorder %s389, 1
        %s394 = sphi %s376, %s376
        %s395 = sphi %s377, %s377
      $region288: #{forward.1} parent=284 // loop_header_branch
        %392 = sbr.rel (%p390) target = $region292
      $region289: #{forward.1} parent=284 // loop_body
        %v396 = vld [vmem:[%s394] sm:%s387]
        %397 = vst [vmem:[%s395] sm:%s387] %v396
      $region290: #{forward.1} parent=284 // loop_footer
        %s393 = sadd.s32 1, %s389
      $region291: #{forward.1} parent=284 // loop_footer_branch
        %388 = sbr.rel target = $region287
      $region292: #{forward.1} parent=284 // loop_exit
        _
    $region285: #{forward.1} parent=1 // pred_fallthru
      _
    // Predicated region
    $region304: #{forward.1} parent=1 // pred_check
      _
    $region305: #{forward.1} parent=1 // pred_check_branch
      %421 = sbr.rel (0) target = $region307
    $region306: #{forward.1} parent=1 // pred_region
      %422 = vsyncadd %s378, 16
    $region307: #{forward.1} parent=1 // pred_fallthru
      _
    %s423 = sld [smem:[#allocation6 + $0x7]]
    %s424 = scalar_lea.vmem %s4, %s423
    %s425 = scalar_lea.vmem [#allocation2], 7
    %s426 = scalar_lea.sflag [#allocation3], 7
    %p428 = scmp.lt.u32.totalorder 1, 8
    %p429 = pneg %p428
    // Predicated region
    $region308: #{forward.1} parent=1 // pred_check
      _
    $region309: #{forward.1} parent=1 // pred_check_branch
      %431 = sbr.rel (%p428) target = $region311
    $region310: #{forward.1} parent=1 // pred_region
      %s446 = sand.u32 1, 7
      %p447 = scmp.eq.s32.totalorder %s446, 0
      %p448 = pneg %p447
      // Predicated region
      $region323: #{forward.1} parent=310 // pred_check
        _
      $region324: #{forward.1} parent=310 // pred_check_branch
        %450 = sbr.rel (%p447) target = $region326
      $region325: #{forward.1} parent=310 // pred_region
        %s451 = sand.u32 1, 7
        %s452 = ssub.s32 1, %s451
        %s453 = scalar_lea.vmem %s424, %s452
        %s454 = ssub.s32 1, %s451
        %s455 = scalar_lea.vmem %s425, %s454 [#allocation2]
        %s456 = sshllo.u32 0, %s451
        loop: start=0, step=1, limit=1
        $region327: #{forward.1} parent=325 // loop_pre_header
          _
        $region328: #{forward.1} parent=325 // loop_header
          %s458 = sphi 0, %s462
          %p459 = scmp.ge.s32.totalorder %s458, 1
          %s463 = sphi %s453, %s453
          %s464 = sphi %s455, %s455
        $region329: #{forward.1} parent=325 // loop_header_branch
          %461 = sbr.rel (%p459) target = $region333
        $region330: #{forward.1} parent=325 // loop_body
          %v465 = vld [vmem:[%s463] sm:%s456]
          %466 = vst [vmem:[%s464] sm:%s456] %v465
        $region331: #{forward.1} parent=325 // loop_footer
          %s462 = sadd.s32 1, %s458
        $region332: #{forward.1} parent=325 // loop_footer_branch
          %457 = sbr.rel target = $region328
        $region333: #{forward.1} parent=325 // loop_exit
          _
      $region326: #{forward.1} parent=310 // pred_fallthru
        _
    $region311: #{forward.1} parent=1 // pred_fallthru
      _
    // Predicated region
    $region312: #{forward.1} parent=1 // pred_check
      %p432 = pneg %p428
    $region313: #{forward.1} parent=1 // pred_check_branch
      %434 = sbr.rel (%p432) target = $region315
    $region314: #{forward.1} parent=1 // pred_region
      %s435 = sshllo.u32 0, 1
      loop: start=0, step=1, limit=1
      $region316: #{forward.1} parent=314 // loop_pre_header
        _
      $region317: #{forward.1} parent=314 // loop_header
        %s437 = sphi 0, %s441
        %p438 = scmp.ge.s32.totalorder %s437, 1
        %s442 = sphi %s424, %s424
        %s443 = sphi %s425, %s425
      $region318: #{forward.1} parent=314 // loop_header_branch
        %440 = sbr.rel (%p438) target = $region322
      $region319: #{forward.1} parent=314 // loop_body
        %v444 = vld [vmem:[%s442] sm:%s435]
        %445 = vst [vmem:[%s443] sm:%s435] %v444
      $region320: #{forward.1} parent=314 // loop_footer
        %s441 = sadd.s32 1, %s437
      $region321: #{forward.1} parent=314 // loop_footer_branch
        %436 = sbr.rel target = $region317
      $region322: #{forward.1} parent=314 // loop_exit
        _
    $region315: #{forward.1} parent=1 // pred_fallthru
      _
    // Predicated region
    $region334: #{forward.1} parent=1 // pred_check
      _
    $region335: #{forward.1} parent=1 // pred_check_branch
      %469 = sbr.rel (0) target = $region337
    $region336: #{forward.1} parent=1 // pred_region
      %470 = vsyncadd %s426, 16
    $region337: #{forward.1} parent=1 // pred_fallthru
      _
    %s471 = sld [smem:[#allocation6 + $0x8]]
    %s472 = scalar_lea.vmem %s4, %s471
    %s473 = scalar_lea.vmem [#allocation2], 8
    %s474 = scalar_lea.sflag [#allocation3], 8
    %p476 = scmp.lt.u32.totalorder 1, 8
    %p477 = pneg %p476
    // Predicated region
    $region338: #{forward.1} parent=1 // pred_check
      _
    $region339: #{forward.1} parent=1 // pred_check_branch
      %479 = sbr.rel (%p476) target = $region341
    $region340: #{forward.1} parent=1 // pred_region
      %s494 = sand.u32 1, 7
      %p495 = scmp.eq.s32.totalorder %s494, 0
      %p496 = pneg %p495
      // Predicated region
      $region353: #{forward.1} parent=340 // pred_check
        _
      $region354: #{forward.1} parent=340 // pred_check_branch
        %498 = sbr.rel (%p495) target = $region356
      $region355: #{forward.1} parent=340 // pred_region
        %s499 = sand.u32 1, 7
        %s500 = ssub.s32 1, %s499
        %s501 = scalar_lea.vmem %s472, %s500
        %s502 = ssub.s32 1, %s499
        %s503 = scalar_lea.vmem %s473, %s502 [#allocation2]
        %s504 = sshllo.u32 0, %s499
        loop: start=0, step=1, limit=1
        $region357: #{forward.1} parent=355 // loop_pre_header
          _
        $region358: #{forward.1} parent=355 // loop_header
          %s506 = sphi 0, %s510
          %p507 = scmp.ge.s32.totalorder %s506, 1
          %s511 = sphi %s501, %s501
          %s512 = sphi %s503, %s503
        $region359: #{forward.1} parent=355 // loop_header_branch
          %509 = sbr.rel (%p507) target = $region363
        $region360: #{forward.1} parent=355 // loop_body
          %v513 = vld [vmem:[%s511] sm:%s504]
          %514 = vst [vmem:[%s512] sm:%s504] %v513
        $region361: #{forward.1} parent=355 // loop_footer
          %s510 = sadd.s32 1, %s506
        $region362: #{forward.1} parent=355 // loop_footer_branch
          %505 = sbr.rel target = $region358
        $region363: #{forward.1} parent=355 // loop_exit
          _
      $region356: #{forward.1} parent=340 // pred_fallthru
        _
    $region341: #{forward.1} parent=1 // pred_fallthru
      _
    // Predicated region
    $region342: #{forward.1} parent=1 // pred_check
      %p480 = pneg %p476
    $region343: #{forward.1} parent=1 // pred_check_branch
      %482 = sbr.rel (%p480) target = $region345
    $region344: #{forward.1} parent=1 // pred_region
      %s483 = sshllo.u32 0, 1
      loop: start=0, step=1, limit=1
      $region346: #{forward.1} parent=344 // loop_pre_header
        _
      $region347: #{forward.1} parent=344 // loop_header
        %s485 = sphi 0, %s489
        %p486 = scmp.ge.s32.totalorder %s485, 1
        %s490 = sphi %s472, %s472
        %s491 = sphi %s473, %s473
      $region348: #{forward.1} parent=344 // loop_header_branch
        %488 = sbr.rel (%p486) target = $region352
      $region349: #{forward.1} parent=344 // loop_body
        %v492 = vld [vmem:[%s490] sm:%s483]
        %493 = vst [vmem:[%s491] sm:%s483] %v492
      $region350: #{forward.1} parent=344 // loop_footer
        %s489 = sadd.s32 1, %s485
      $region351: #{forward.1} parent=344 // loop_footer_branch
        %484 = sbr.rel target = $region347
      $region352: #{forward.1} parent=344 // loop_exit
        _
    $region345: #{forward.1} parent=1 // pred_fallthru
      _
    // Predicated region
    $region364: #{forward.1} parent=1 // pred_check
      _
    $region365: #{forward.1} parent=1 // pred_check_branch
      %517 = sbr.rel (0) target = $region367
    $region366: #{forward.1} parent=1 // pred_region
      %518 = vsyncadd %s474, 16
    $region367: #{forward.1} parent=1 // pred_fallthru
      _
    %s519 = sld [smem:[#allocation6 + $0x9]]
    %s520 = scalar_lea.vmem %s4, %s519
    %s521 = scalar_lea.vmem [#allocation2], 9
    %s522 = scalar_lea.sflag [#allocation3], 9
    %p524 = scmp.lt.u32.totalorder 1, 8
    %p525 = pneg %p524
    // Predicated region
    $region368: #{forward.1} parent=1 // pred_check
      _
    $region369: #{forward.1} parent=1 // pred_check_branch
      %527 = sbr.rel (%p524) target = $region371
    $region370: #{forward.1} parent=1 // pred_region
      %s542 = sand.u32 1, 7
      %p543 = scmp.eq.s32.totalorder %s542, 0
      %p544 = pneg %p543
      // Predicated region
      $region383: #{forward.1} parent=370 // pred_check
        _
      $region384: #{forward.1} parent=370 // pred_check_branch
        %546 = sbr.rel (%p543) target = $region386
      $region385: #{forward.1} parent=370 // pred_region
        %s547 = sand.u32 1, 7
        %s548 = ssub.s32 1, %s547
        %s549 = scalar_lea.vmem %s520, %s548
        %s550 = ssub.s32 1, %s547
        %s551 = scalar_lea.vmem %s521, %s550 [#allocation2]
        %s552 = sshllo.u32 0, %s547
        loop: start=0, step=1, limit=1
        $region387: #{forward.1} parent=385 // loop_pre_header
          _
        $region388: #{forward.1} parent=385 // loop_header
          %s554 = sphi 0, %s558
          %p555 = scmp.ge.s32.totalorder %s554, 1
          %s559 = sphi %s549, %s549
          %s560 = sphi %s551, %s551
        $region389: #{forward.1} parent=385 // loop_header_branch
          %557 = sbr.rel (%p555) target = $region393
        $region390: #{forward.1} parent=385 // loop_body
          %v561 = vld [vmem:[%s559] sm:%s552]
          %562 = vst [vmem:[%s560] sm:%s552] %v561
        $region391: #{forward.1} parent=385 // loop_footer
          %s558 = sadd.s32 1, %s554
        $region392: #{forward.1} parent=385 // loop_footer_branch
          %553 = sbr.rel target = $region388
        $region393: #{forward.1} parent=385 // loop_exit
          _
      $region386: #{forward.1} parent=370 // pred_fallthru
        _
    $region371: #{forward.1} parent=1 // pred_fallthru
      _
    // Predicated region
    $region372: #{forward.1} parent=1 // pred_check
      %p528 = pneg %p524
    $region373: #{forward.1} parent=1 // pred_check_branch
      %530 = sbr.rel (%p528) target = $region375
    $region374: #{forward.1} parent=1 // pred_region
      %s531 = sshllo.u32 0, 1
      loop: start=0, step=1, limit=1
      $region376: #{forward.1} parent=374 // loop_pre_header
        _
      $region377: #{forward.1} parent=374 // loop_header
        %s533 = sphi 0, %s537
        %p534 = scmp.ge.s32.totalorder %s533, 1
        %s538 = sphi %s520, %s520
        %s539 = sphi %s521, %s521
      $region378: #{forward.1} parent=374 // loop_header_branch
        %536 = sbr.rel (%p534) target = $region382
      $region379: #{forward.1} parent=374 // loop_body
        %v540 = vld [vmem:[%s538] sm:%s531]
        %541 = vst [vmem:[%s539] sm:%s531] %v540
      $region380: #{forward.1} parent=374 // loop_footer
        %s537 = sadd.s32 1, %s533
      $region381: #{forward.1} parent=374 // loop_footer_branch
        %532 = sbr.rel target = $region377
      $region382: #{forward.1} parent=374 // loop_exit
        _
    $region375: #{forward.1} parent=1 // pred_fallthru
      _
    // Predicated region
    $region394: #{forward.1} parent=1 // pred_check
      _
    $region395: #{forward.1} parent=1 // pred_check_branch
      %565 = sbr.rel (0) target = $region397
    $region396: #{forward.1} parent=1 // pred_region
      %566 = vsyncadd %s522, 16
    $region397: #{forward.1} parent=1 // pred_fallthru
      _
    %s567 = sld [smem:[#allocation6 + $0xa]]
    %s568 = scalar_lea.vmem %s4, %s567
    %s569 = scalar_lea.vmem [#allocation2], 10
    %s570 = scalar_lea.sflag [#allocation3], 10
    %p572 = scmp.lt.u32.totalorder 1, 8
    %p573 = pneg %p572
    // Predicated region
    $region398: #{forward.1} parent=1 // pred_check
      _
    $region399: #{forward.1} parent=1 // pred_check_branch
      %575 = sbr.rel (%p572) target = $region401
    $region400: #{forward.1} parent=1 // pred_region
      %s590 = sand.u32 1, 7
      %p591 = scmp.eq.s32.totalorder %s590, 0
      %p592 = pneg %p591
      // Predicated region
      $region413: #{forward.1} parent=400 // pred_check
        _
      $region414: #{forward.1} parent=400 // pred_check_branch
        %594 = sbr.rel (%p591) target = $region416
      $region415: #{forward.1} parent=400 // pred_region
        %s595 = sand.u32 1, 7
        %s596 = ssub.s32 1, %s595
        %s597 = scalar_lea.vmem %s568, %s596
        %s598 = ssub.s32 1, %s595
        %s599 = scalar_lea.vmem %s569, %s598 [#allocation2]
        %s600 = sshllo.u32 0, %s595
        loop: start=0, step=1, limit=1
        $region417: #{forward.1} parent=415 // loop_pre_header
          _
        $region418: #{forward.1} parent=415 // loop_header
          %s602 = sphi 0, %s606
          %p603 = scmp.ge.s32.totalorder %s602, 1
          %s607 = sphi %s597, %s597
          %s608 = sphi %s599, %s599
        $region419: #{forward.1} parent=415 // loop_header_branch
          %605 = sbr.rel (%p603) target = $region423
        $region420: #{forward.1} parent=415 // loop_body
          %v609 = vld [vmem:[%s607] sm:%s600]
          %610 = vst [vmem:[%s608] sm:%s600] %v609
        $region421: #{forward.1} parent=415 // loop_footer
          %s606 = sadd.s32 1, %s602
        $region422: #{forward.1} parent=415 // loop_footer_branch
          %601 = sbr.rel target = $region418
        $region423: #{forward.1} parent=415 // loop_exit
          _
      $region416: #{forward.1} parent=400 // pred_fallthru
        _
    $region401: #{forward.1} parent=1 // pred_fallthru
      _
    // Predicated region
    $region402: #{forward.1} parent=1 // pred_check
      %p576 = pneg %p572
    $region403: #{forward.1} parent=1 // pred_check_branch
      %578 = sbr.rel (%p576) target = $region405
    $region404: #{forward.1} parent=1 // pred_region
      %s579 = sshllo.u32 0, 1
      loop: start=0, step=1, limit=1
      $region406: #{forward.1} parent=404 // loop_pre_header
        _
      $region407: #{forward.1} parent=404 // loop_header
        %s581 = sphi 0, %s585
        %p582 = scmp.ge.s32.totalorder %s581, 1
        %s586 = sphi %s568, %s568
        %s587 = sphi %s569, %s569
      $region408: #{forward.1} parent=404 // loop_header_branch
        %584 = sbr.rel (%p582) target = $region412
      $region409: #{forward.1} parent=404 // loop_body
        %v588 = vld [vmem:[%s586] sm:%s579]
        %589 = vst [vmem:[%s587] sm:%s579] %v588
      $region410: #{forward.1} parent=404 // loop_footer
        %s585 = sadd.s32 1, %s581
      $region411: #{forward.1} parent=404 // loop_footer_branch
        %580 = sbr.rel target = $region407
      $region412: #{forward.1} parent=404 // loop_exit
        _
    $region405: #{forward.1} parent=1 // pred_fallthru
      _
    // Predicated region
    $region424: #{forward.1} parent=1 // pred_check
      _
    $region425: #{forward.1} parent=1 // pred_check_branch
      %613 = sbr.rel (0) target = $region427
    $region426: #{forward.1} parent=1 // pred_region
      %614 = vsyncadd %s570, 16
    $region427: #{forward.1} parent=1 // pred_fallthru
      _
    %s615 = sld [smem:[#allocation6 + $0xb]]
    %s616 = scalar_lea.vmem %s4, %s615
    %s617 = scalar_lea.vmem [#allocation2], 11
    %s618 = scalar_lea.sflag [#allocation3], 11
    %p620 = scmp.lt.u32.totalorder 1, 8
    %p621 = pneg %p620
    // Predicated region
    $region428: #{forward.1} parent=1 // pred_check
      _
    $region429: #{forward.1} parent=1 // pred_check_branch
      %623 = sbr.rel (%p620) target = $region431
    $region430: #{forward.1} parent=1 // pred_region
      %s638 = sand.u32 1, 7
      %p639 = scmp.eq.s32.totalorder %s638, 0
      %p640 = pneg %p639
      // Predicated region
      $region443: #{forward.1} parent=430 // pred_check
        _
      $region444: #{forward.1} parent=430 // pred_check_branch
        %642 = sbr.rel (%p639) target = $region446
      $region445: #{forward.1} parent=430 // pred_region
        %s643 = sand.u32 1, 7
        %s644 = ssub.s32 1, %s643
        %s645 = scalar_lea.vmem %s616, %s644
        %s646 = ssub.s32 1, %s643
        %s647 = scalar_lea.vmem %s617, %s646 [#allocation2]
        %s648 = sshllo.u32 0, %s643
        loop: start=0, step=1, limit=1
        $region447: #{forward.1} parent=445 // loop_pre_header
          _
        $region448: #{forward.1} parent=445 // loop_header
          %s650 = sphi 0, %s654
          %p651 = scmp.ge.s32.totalorder %s650, 1
          %s655 = sphi %s645, %s645
          %s656 = sphi %s647, %s647
        $region449: #{forward.1} parent=445 // loop_header_branch
          %653 = sbr.rel (%p651) target = $region453
        $region450: #{forward.1} parent=445 // loop_body
          %v657 = vld [vmem:[%s655] sm:%s648]
          %658 = vst [vmem:[%s656] sm:%s648] %v657
        $region451: #{forward.1} parent=445 // loop_footer
          %s654 = sadd.s32 1, %s650
        $region452: #{forward.1} parent=445 // loop_footer_branch
          %649 = sbr.rel target = $region448
        $region453: #{forward.1} parent=445 // loop_exit
          _
      $region446: #{forward.1} parent=430 // pred_fallthru
        _
    $region431: #{forward.1} parent=1 // pred_fallthru
      _
    // Predicated region
    $region432: #{forward.1} parent=1 // pred_check
      %p624 = pneg %p620
    $region433: #{forward.1} parent=1 // pred_check_branch
      %626 = sbr.rel (%p624) target = $region435
    $region434: #{forward.1} parent=1 // pred_region
      %s627 = sshllo.u32 0, 1
      loop: start=0, step=1, limit=1
      $region436: #{forward.1} parent=434 // loop_pre_header
        _
      $region437: #{forward.1} parent=434 // loop_header
        %s629 = sphi 0, %s633
        %p630 = scmp.ge.s32.totalorder %s629, 1
        %s634 = sphi %s616, %s616
        %s635 = sphi %s617, %s617
      $region438: #{forward.1} parent=434 // loop_header_branch
        %632 = sbr.rel (%p630) target = $region442
      $region439: #{forward.1} parent=434 // loop_body
        %v636 = vld [vmem:[%s634] sm:%s627]
        %637 = vst [vmem:[%s635] sm:%s627] %v636
      $region440: #{forward.1} parent=434 // loop_footer
        %s633 = sadd.s32 1, %s629
      $region441: #{forward.1} parent=434 // loop_footer_branch
        %628 = sbr.rel target = $region437
      $region442: #{forward.1} parent=434 // loop_exit
        _
    $region435: #{forward.1} parent=1 // pred_fallthru
      _
    // Predicated region
    $region454: #{forward.1} parent=1 // pred_check
      _
    $region455: #{forward.1} parent=1 // pred_check_branch
      %661 = sbr.rel (0) target = $region457
    $region456: #{forward.1} parent=1 // pred_region
      %662 = vsyncadd %s618, 16
    $region457: #{forward.1} parent=1 // pred_fallthru
      _
    %s663 = sld [smem:[#allocation6 + $0xc]]
    %s664 = scalar_lea.vmem %s4, %s663
    %s665 = scalar_lea.vmem [#allocation2], 12
    %s666 = scalar_lea.sflag [#allocation3], 12
    %p668 = scmp.lt.u32.totalorder 1, 8
    %p669 = pneg %p668
    // Predicated region
    $region458: #{forward.1} parent=1 // pred_check
      _
    $region459: #{forward.1} parent=1 // pred_check_branch
      %671 = sbr.rel (%p668) target = $region461
    $region460: #{forward.1} parent=1 // pred_region
      %s686 = sand.u32 1, 7
      %p687 = scmp.eq.s32.totalorder %s686, 0
      %p688 = pneg %p687
      // Predicated region
      $region473: #{forward.1} parent=460 // pred_check
        _
      $region474: #{forward.1} parent=460 // pred_check_branch
        %690 = sbr.rel (%p687) target = $region476
      $region475: #{forward.1} parent=460 // pred_region
        %s691 = sand.u32 1, 7
        %s692 = ssub.s32 1, %s691
        %s693 = scalar_lea.vmem %s664, %s692
        %s694 = ssub.s32 1, %s691
        %s695 = scalar_lea.vmem %s665, %s694 [#allocation2]
        %s696 = sshllo.u32 0, %s691
        loop: start=0, step=1, limit=1
        $region477: #{forward.1} parent=475 // loop_pre_header
          _
        $region478: #{forward.1} parent=475 // loop_header
          %s698 = sphi 0, %s702
          %p699 = scmp.ge.s32.totalorder %s698, 1
          %s703 = sphi %s693, %s693
          %s704 = sphi %s695, %s695
        $region479: #{forward.1} parent=475 // loop_header_branch
          %701 = sbr.rel (%p699) target = $region483
        $region480: #{forward.1} parent=475 // loop_body
          %v705 = vld [vmem:[%s703] sm:%s696]
          %706 = vst [vmem:[%s704] sm:%s696] %v705
        $region481: #{forward.1} parent=475 // loop_footer
          %s702 = sadd.s32 1, %s698
        $region482: #{forward.1} parent=475 // loop_footer_branch
          %697 = sbr.rel target = $region478
        $region483: #{forward.1} parent=475 // loop_exit
          _
      $region476: #{forward.1} parent=460 // pred_fallthru
        _
    $region461: #{forward.1} parent=1 // pred_fallthru
      _
    // Predicated region
    $region462: #{forward.1} parent=1 // pred_check
      %p672 = pneg %p668
    $region463: #{forward.1} parent=1 // pred_check_branch
      %674 = sbr.rel (%p672) target = $region465
    $region464: #{forward.1} parent=1 // pred_region
      %s675 = sshllo.u32 0, 1
      loop: start=0, step=1, limit=1
      $region466: #{forward.1} parent=464 // loop_pre_header
        _
      $region467: #{forward.1} parent=464 // loop_header
        %s677 = sphi 0, %s681
        %p678 = scmp.ge.s32.totalorder %s677, 1
        %s682 = sphi %s664, %s664
        %s683 = sphi %s665, %s665
      $region468: #{forward.1} parent=464 // loop_header_branch
        %680 = sbr.rel (%p678) target = $region472
      $region469: #{forward.1} parent=464 // loop_body
        %v684 = vld [vmem:[%s682] sm:%s675]
        %685 = vst [vmem:[%s683] sm:%s675] %v684
      $region470: #{forward.1} parent=464 // loop_footer
        %s681 = sadd.s32 1, %s677
      $region471: #{forward.1} parent=464 // loop_footer_branch
        %676 = sbr.rel target = $region467
      $region472: #{forward.1} parent=464 // loop_exit
        _
    $region465: #{forward.1} parent=1 // pred_fallthru
      _
    // Predicated region
    $region484: #{forward.1} parent=1 // pred_check
      _
    $region485: #{forward.1} parent=1 // pred_check_branch
      %709 = sbr.rel (0) target = $region487
    $region486: #{forward.1} parent=1 // pred_region
      %710 = vsyncadd %s666, 16
    $region487: #{forward.1} parent=1 // pred_fallthru
      _
    %s711 = sld [smem:[#allocation6 + $0xd]]
    %s712 = scalar_lea.vmem %s4, %s711
    %s713 = scalar_lea.vmem [#allocation2], 13
    %s714 = scalar_lea.sflag [#allocation3], 13
    %p716 = scmp.lt.u32.totalorder 1, 8
    %p717 = pneg %p716
    // Predicated region
    $region488: #{forward.1} parent=1 // pred_check
      _
    $region489: #{forward.1} parent=1 // pred_check_branch
      %719 = sbr.rel (%p716) target = $region491
    $region490: #{forward.1} parent=1 // pred_region
      %s734 = sand.u32 1, 7
      %p735 = scmp.eq.s32.totalorder %s734, 0
      %p736 = pneg %p735
      // Predicated region
      $region503: #{forward.1} parent=490 // pred_check
        _
      $region504: #{forward.1} parent=490 // pred_check_branch
        %738 = sbr.rel (%p735) target = $region506
      $region505: #{forward.1} parent=490 // pred_region
        %s739 = sand.u32 1, 7
        %s740 = ssub.s32 1, %s739
        %s741 = scalar_lea.vmem %s712, %s740
        %s742 = ssub.s32 1, %s739
        %s743 = scalar_lea.vmem %s713, %s742 [#allocation2]
        %s744 = sshllo.u32 0, %s739
        loop: start=0, step=1, limit=1
        $region507: #{forward.1} parent=505 // loop_pre_header
          _
        $region508: #{forward.1} parent=505 // loop_header
          %s746 = sphi 0, %s750
          %p747 = scmp.ge.s32.totalorder %s746, 1
          %s751 = sphi %s741, %s741
          %s752 = sphi %s743, %s743
        $region509: #{forward.1} parent=505 // loop_header_branch
          %749 = sbr.rel (%p747) target = $region513
        $region510: #{forward.1} parent=505 // loop_body
          %v753 = vld [vmem:[%s751] sm:%s744]
          %754 = vst [vmem:[%s752] sm:%s744] %v753
        $region511: #{forward.1} parent=505 // loop_footer
          %s750 = sadd.s32 1, %s746
        $region512: #{forward.1} parent=505 // loop_footer_branch
          %745 = sbr.rel target = $region508
        $region513: #{forward.1} parent=505 // loop_exit
          _
      $region506: #{forward.1} parent=490 // pred_fallthru
        _
    $region491: #{forward.1} parent=1 // pred_fallthru
      _
    // Predicated region
    $region492: #{forward.1} parent=1 // pred_check
      %p720 = pneg %p716
    $region493: #{forward.1} parent=1 // pred_check_branch
      %722 = sbr.rel (%p720) target = $region495
    $region494: #{forward.1} parent=1 // pred_region
      %s723 = sshllo.u32 0, 1
      loop: start=0, step=1, limit=1
      $region496: #{forward.1} parent=494 // loop_pre_header
        _
      $region497: #{forward.1} parent=494 // loop_header
        %s725 = sphi 0, %s729
        %p726 = scmp.ge.s32.totalorder %s725, 1
        %s730 = sphi %s712, %s712
        %s731 = sphi %s713, %s713
      $region498: #{forward.1} parent=494 // loop_header_branch
        %728 = sbr.rel (%p726) target = $region502
      $region499: #{forward.1} parent=494 // loop_body
        %v732 = vld [vmem:[%s730] sm:%s723]
        %733 = vst [vmem:[%s731] sm:%s723] %v732
      $region500: #{forward.1} parent=494 // loop_footer
        %s729 = sadd.s32 1, %s725
      $region501: #{forward.1} parent=494 // loop_footer_branch
        %724 = sbr.rel target = $region497
      $region502: #{forward.1} parent=494 // loop_exit
        _
    $region495: #{forward.1} parent=1 // pred_fallthru
      _
    // Predicated region
    $region514: #{forward.1} parent=1 // pred_check
      _
    $region515: #{forward.1} parent=1 // pred_check_branch
      %757 = sbr.rel (0) target = $region517
    $region516: #{forward.1} parent=1 // pred_region
      %758 = vsyncadd %s714, 16
    $region517: #{forward.1} parent=1 // pred_fallthru
      _
    %s759 = sld [smem:[#allocation6 + $0xe]]
    %s760 = scalar_lea.vmem %s4, %s759
    %s761 = scalar_lea.vmem [#allocation2], 14
    %s762 = scalar_lea.sflag [#allocation3], 14
    %p764 = scmp.lt.u32.totalorder 1, 8
    %p765 = pneg %p764
    // Predicated region
    $region518: #{forward.1} parent=1 // pred_check
      _
    $region519: #{forward.1} parent=1 // pred_check_branch
      %767 = sbr.rel (%p764) target = $region521
    $region520: #{forward.1} parent=1 // pred_region
      %s782 = sand.u32 1, 7
      %p783 = scmp.eq.s32.totalorder %s782, 0
      %p784 = pneg %p783
      // Predicated region
      $region533: #{forward.1} parent=520 // pred_check
        _
      $region534: #{forward.1} parent=520 // pred_check_branch
        %786 = sbr.rel (%p783) target = $region536
      $region535: #{forward.1} parent=520 // pred_region
        %s787 = sand.u32 1, 7
        %s788 = ssub.s32 1, %s787
        %s789 = scalar_lea.vmem %s760, %s788
        %s790 = ssub.s32 1, %s787
        %s791 = scalar_lea.vmem %s761, %s790 [#allocation2]
        %s792 = sshllo.u32 0, %s787
        loop: start=0, step=1, limit=1
        $region537: #{forward.1} parent=535 // loop_pre_header
          _
        $region538: #{forward.1} parent=535 // loop_header
          %s794 = sphi 0, %s798
          %p795 = scmp.ge.s32.totalorder %s794, 1
          %s799 = sphi %s789, %s789
          %s800 = sphi %s791, %s791
        $region539: #{forward.1} parent=535 // loop_header_branch
          %797 = sbr.rel (%p795) target = $region543
        $region540: #{forward.1} parent=535 // loop_body
          %v801 = vld [vmem:[%s799] sm:%s792]
          %802 = vst [vmem:[%s800] sm:%s792] %v801
        $region541: #{forward.1} parent=535 // loop_footer
          %s798 = sadd.s32 1, %s794
        $region542: #{forward.1} parent=535 // loop_footer_branch
          %793 = sbr.rel target = $region538
        $region543: #{forward.1} parent=535 // loop_exit
          _
      $region536: #{forward.1} parent=520 // pred_fallthru
        _
    $region521: #{forward.1} parent=1 // pred_fallthru
      _
    // Predicated region
    $region522: #{forward.1} parent=1 // pred_check
      %p768 = pneg %p764
    $region523: #{forward.1} parent=1 // pred_check_branch
      %770 = sbr.rel (%p768) target = $region525
    $region524: #{forward.1} parent=1 // pred_region
      %s771 = sshllo.u32 0, 1
      loop: start=0, step=1, limit=1
      $region526: #{forward.1} parent=524 // loop_pre_header
        _
      $region527: #{forward.1} parent=524 // loop_header
        %s773 = sphi 0, %s777
        %p774 = scmp.ge.s32.totalorder %s773, 1
        %s778 = sphi %s760, %s760
        %s779 = sphi %s761, %s761
      $region528: #{forward.1} parent=524 // loop_header_branch
        %776 = sbr.rel (%p774) target = $region532
      $region529: #{forward.1} parent=524 // loop_body
        %v780 = vld [vmem:[%s778] sm:%s771]
        %781 = vst [vmem:[%s779] sm:%s771] %v780
      $region530: #{forward.1} parent=524 // loop_footer
        %s777 = sadd.s32 1, %s773
      $region531: #{forward.1} parent=524 // loop_footer_branch
        %772 = sbr.rel target = $region527
      $region532: #{forward.1} parent=524 // loop_exit
        _
    $region525: #{forward.1} parent=1 // pred_fallthru
      _
    // Predicated region
    $region544: #{forward.1} parent=1 // pred_check
      _
    $region545: #{forward.1} parent=1 // pred_check_branch
      %805 = sbr.rel (0) target = $region547
    $region546: #{forward.1} parent=1 // pred_region
      %806 = vsyncadd %s762, 16
    $region547: #{forward.1} parent=1 // pred_fallthru
      _
    %s807 = sld [smem:[#allocation6 + $0xf]]
    %s808 = scalar_lea.vmem %s4, %s807
    %s809 = scalar_lea.vmem [#allocation2], 15
    %s810 = scalar_lea.sflag [#allocation3], 15
    %p812 = scmp.lt.u32.totalorder 1, 8
    %p813 = pneg %p812
    // Predicated region
    $region548: #{forward.1} parent=1 // pred_check
      _
    $region549: #{forward.1} parent=1 // pred_check_branch
      %815 = sbr.rel (%p812) target = $region551
    $region550: #{forward.1} parent=1 // pred_region
      %s830 = sand.u32 1, 7
      %p831 = scmp.eq.s32.totalorder %s830, 0
      %p832 = pneg %p831
      // Predicated region
      $region563: #{forward.1} parent=550 // pred_check
        _
      $region564: #{forward.1} parent=550 // pred_check_branch
        %834 = sbr.rel (%p831) target = $region566
      $region565: #{forward.1} parent=550 // pred_region
        %s835 = sand.u32 1, 7
        %s836 = ssub.s32 1, %s835
        %s837 = scalar_lea.vmem %s808, %s836
        %s838 = ssub.s32 1, %s835
        %s839 = scalar_lea.vmem %s809, %s838 [#allocation2]
        %s840 = sshllo.u32 0, %s835
        loop: start=0, step=1, limit=1
        $region567: #{forward.1} parent=565 // loop_pre_header
          _
        $region568: #{forward.1} parent=565 // loop_header
          %s842 = sphi 0, %s846
          %p843 = scmp.ge.s32.totalorder %s842, 1
          %s847 = sphi %s837, %s837
          %s848 = sphi %s839, %s839
        $region569: #{forward.1} parent=565 // loop_header_branch
          %845 = sbr.rel (%p843) target = $region573
        $region570: #{forward.1} parent=565 // loop_body
          %v849 = vld [vmem:[%s847] sm:%s840]
          %850 = vst [vmem:[%s848] sm:%s840] %v849
        $region571: #{forward.1} parent=565 // loop_footer
          %s846 = sadd.s32 1, %s842
        $region572: #{forward.1} parent=565 // loop_footer_branch
          %841 = sbr.rel target = $region568
        $region573: #{forward.1} parent=565 // loop_exit
          _
      $region566: #{forward.1} parent=550 // pred_fallthru
        _
    $region551: #{forward.1} parent=1 // pred_fallthru
      _
    // Predicated region
    $region552: #{forward.1} parent=1 // pred_check
      %p816 = pneg %p812
    $region553: #{forward.1} parent=1 // pred_check_branch
      %818 = sbr.rel (%p816) target = $region555
    $region554: #{forward.1} parent=1 // pred_region
      %s819 = sshllo.u32 0, 1
      loop: start=0, step=1, limit=1
      $region556: #{forward.1} parent=554 // loop_pre_header
        _
      $region557: #{forward.1} parent=554 // loop_header
        %s821 = sphi 0, %s825
        %p822 = scmp.ge.s32.totalorder %s821, 1
        %s826 = sphi %s808, %s808
        %s827 = sphi %s809, %s809
      $region558: #{forward.1} parent=554 // loop_header_branch
        %824 = sbr.rel (%p822) target = $region562
      $region559: #{forward.1} parent=554 // loop_body
        %v828 = vld [vmem:[%s826] sm:%s819]
        %829 = vst [vmem:[%s827] sm:%s819] %v828
      $region560: #{forward.1} parent=554 // loop_footer
        %s825 = sadd.s32 1, %s821
      $region561: #{forward.1} parent=554 // loop_footer_branch
        %820 = sbr.rel target = $region557
      $region562: #{forward.1} parent=554 // loop_exit
        _
    $region555: #{forward.1} parent=1 // pred_fallthru
      _
    // Predicated region
    $region574: #{forward.1} parent=1 // pred_check
      _
    $region575: #{forward.1} parent=1 // pred_check_branch
      %853 = sbr.rel (0) target = $region577
    $region576: #{forward.1} parent=1 // pred_region
      %854 = vsyncadd %s810, 16
    $region577: #{forward.1} parent=1 // pred_fallthru
      _
    %v855 = vld [vmem:[%s3] sm:$0x3]
    %v856 = vlaneseq
    %v857 = vand.u32 %v856, 127
    %v858 = vcvt.s32.f32 %v857
    %860 = vset.pattern.permute.xlu0 0
    %861 = vperm.xlu0 %860, %v855
    %v862 = vpop.permute.xlu0 %861
    %vm864 = vcmp.lt.f32.partialorder %v858, %v862
    %v865 = vsel %vm864, 1, 0
    %v866 = vcvt.s32.f32 %v865
    %v867 = vld [vmem:[%s1] sm:$0x3]
    %v868 = vcvt.s32.f32 %v867
    %v869 = vlaneseq
    %v870 = vshrl.u32 %v869, 7
    %v871 = vsub.s32 0, %v870
    %v872 = vrot.slane %v868, %v871
    %874 = vbcast.lane.b32.xlu0 %v872, 256
    %v875 = vpop.permute.xlu0 %874
    %v876 = vlaneseq
    %v877 = vshrl.u32 %v876, 7
    %v878 = vsub.s32 1, %v877
    %v879 = vrot.slane %v868, %v878
    %881 = vbcast.lane.b32.xlu0 %v879, 256
    %v882 = vpop.permute.xlu0 %881
    %v883 = vld [vmem:[%s5] sm:$0x3]
    %v884 = vlaneseq
    %v885 = vshrl.u32 %v884, 7
    %v886 = vsub.s32 1, %v885
    %v887 = vrot.slane %v883, %v886
    %v888 = vmul.f32 %v875, %v887
    %v889 = vmul.f32 %v882, %v887
    %v890 = vsub.f32 1.0, %v875
    %v891 = vsub.f32 1.0, %v882
    %v892 = vlaneseq
    %v893 = vshrl.u32 %v892, 7
    %v894 = vsub.s32 0, %v893
    %v895 = vrot.slane %v883, %v894
    %v896 = vmul.f32 %v890, %v895
    %v897 = vmul.f32 %v891, %v895
    %v898 = vadd.f32 %v888, %v896
    %v899 = vadd.f32 %v889, %v897
    %s900 = smul.u32 1, 1
    %s901 = sshll.u32 %s900, 4
    %902 = dma.done [#allocation3], %s901
    %s903 = sshll.u32 %s900, 4
    %904 = dma.done %s138, %s903
    %s905 = sshll.u32 %s900, 4
    %906 = dma.done %s186, %s905
    %s907 = sshll.u32 %s900, 4
    %908 = dma.done %s234, %s907
    %s909 = sshll.u32 %s900, 4
    %910 = dma.done %s282, %s909
    %s911 = sshll.u32 %s900, 4
    %912 = dma.done %s330, %s911
    %s913 = sshll.u32 %s900, 4
    %914 = dma.done %s378, %s913
    %s915 = sshll.u32 %s900, 4
    %916 = dma.done %s426, %s915
    %s917 = sshll.u32 %s900, 4
    %918 = dma.done %s474, %s917
    %s919 = sshll.u32 %s900, 4
    %920 = dma.done %s522, %s919
    %s921 = sshll.u32 %s900, 4
    %922 = dma.done %s570, %s921
    %s923 = sshll.u32 %s900, 4
    %924 = dma.done %s618, %s923
    %s925 = sshll.u32 %s900, 4
    %926 = dma.done %s666, %s925
    %s927 = sshll.u32 %s900, 4
    %928 = dma.done %s714, %s927
    %s929 = sshll.u32 %s900, 4
    %930 = dma.done %s762, %s929
    %s931 = sshll.u32 %s900, 4
    %932 = dma.done %s810, %s931
    %v933 = vld [vmem:[#allocation2] sm:$0xff]
    %v934 = vld [vmem:[#allocation2 + $0x8] sm:$0xff]
    %937 = vrot.lane.b32.xlu0 %v898, 32
    %v938 = vpop.permute.xlu0 %937
    %939 = vrot.lane.b32.xlu0 %v899, 32
    %v940 = vpop.permute.xlu0 %939
    %vm943 = vcmask 261120
    %v944 = vsel %vm943, %v933, %v938
    %v945 = vsel %vm943, %v934, %v940
    %v946 = vlaneseq
    %v947 = vshrl.u32 %v946, 7
    %vm948 = vcmp.lt.s32.totalorder %v947, 2
    %v949 = vsel %vm948, 1, 0
    %v950 = vcvt.s32.f32 %v949
    %951 = vst.msk [vmem:[#allocation5] sm:$0xff] %vm943, 0.0
    %vm952 = vcmask 254976
    %953 = vst.msk [vmem:[#allocation5 + $0x8] sm:$0x3] %vm952, 0.0
    %954 = vst.msk [vmem:[#allocation5 + $0x10] sm:$0xff] %vm943, 0.0
    %955 = vst.msk [vmem:[#allocation5 + $0x18] sm:$0x3] %vm952, 0.0
    %v956 = vld [vmem:[%s6] sm:$0xff]
    %v957 = vld [vmem:[%s6 + $0x8] sm:$0xff]
    %v958 = vld [vmem:[%s6 + $0x10] sm:$0xff]
    %v959 = vld [vmem:[%s6 + $0x18] sm:$0xff]
    %v960 = vld [vmem:[%s6 + $0x20] sm:$0xff]
    %v961 = vld [vmem:[%s6 + $0x28] sm:$0xff]
    %v962 = vld [vmem:[%s8] sm:$0x1]
    %v964 = vlaneseq
    %v965 = vshrl.u32 %v964, 7
    %v966 = vsub.s32 0, %v965
    %v967 = vrot.slane %v962, %v966
    %vm969 = vcmask 392192
    %v971 = vsel %vm969, %v944, 0
    %v974 = vsel %vm969, %v945, 0
    %976 = vmatprep.subr.mxu0 0.0
    %977 = vmatpush1.msra.mxu0 %v956
    %978 = vmatprep.subr.mxu0 0.0
    %979 = vmatpush1.msra.mxu0 %v957
    %980 = vmatprep.subr.mxu0 0.0
    %981 = vmatpush1.msra.mxu0 %v958
    %982 = vmatprep.subr.mxu0 0.0
    %983 = vmatpush1.msra.mxu0 %v959
    %984 = vmatprep.subr.mxu0 0.0
    %985 = vmatpush1.msra.mxu0 %v960
    %986 = vmatprep.subr.mxu0 0.0
    %987 = vmatpush1.msra.mxu0 %v961
    %988 = vmatprep.subr.mxu0 0.0
    %989 = vmatpush1.msra.mxu0 0.0
    %990 = vmatprep.subr.mxu0 0.0
    %991 = vmatpush1.msra.mxu0 0.0
    %992 = vmatprep.subr.mxu0 0.0
    %993 = vmatpush1.msra.mxu0 0.0
    %994 = vmatprep.subr.mxu0 0.0
    %995 = vmatpush1.msra.mxu0 0.0
    %996 = vmatprep.subr.mxu0 0.0
    %997 = vmatpush1.msra.mxu0 0.0
    %998 = vmatprep.subr.mxu0 0.0
    %999 = vmatpush1.msra.mxu0 0.0
    %1000 = vmatprep.subr.mxu0 0.0
    %1001 = vmatpush1.msra.mxu0 0.0
    %1002 = vmatprep.subr.mxu0 0.0
    %1003 = vmatpush1.msra.mxu0 0.0
    %1004 = vmatprep.subr.mxu0 0.0
    %1005 = vmatpush1.msra.mxu0 0.0
    %1006 = vmatprep.subr.mxu0 0.0
    %1007 = vmatpush1.msra.mxu0 0.0
    %1008 = vmatprep.subr.mxu0 0.0
    %1009 = vmatpush1.msra.mxu0 0.0
    %1010 = vmatprep.subr.mxu0 0.0
    %1011 = vmatpush1.msra.mxu0 0.0
    %1012 = vmatprep.subr.mxu0 0.0
    %1013 = vmatpush1.msra.mxu0 0.0
    %1014 = vmatprep.subr.mxu0 0.0
    %1015 = vmatpush1.msra.mxu0 0.0
    %1016 = vmatprep.subr.mxu0 0.0
    %1017 = vmatpush1.msra.mxu0 0.0
    %1018 = vmatprep.subr.mxu0 0.0
    %1019 = vmatpush1.msra.mxu0 0.0
    %1020 = vmatprep.subr.mxu0 0.0
    %1021 = vmatpush1.msra.mxu0 0.0
    %1022 = vmatprep.subr.mxu0 0.0
    %1023 = vmatpush1.msra.mxu0 0.0
    %1024 = vmatprep.subr.mxu0 0.0
    %1025 = vmatpush1.msra.mxu0 0.0
    %1026 = vmatprep.subr.mxu0 0.0
    %1027 = vmatpush1.msra.mxu0 0.0
    %1028 = vmatprep.subr.mxu0 0.0
    %1029 = vmatpush1.msra.mxu0 0.0
    %1030 = vmatprep.subr.mxu0 0.0
    %1031 = vmatpush1.msra.mxu0 0.0
    %1032 = vmatprep.subr.mxu0 0.0
    %1033 = vmatpush1.msra.mxu0 0.0
    %1034 = vmatprep.subr.mxu0 0.0
    %1035 = vmatpush1.msra.mxu0 0.0
    %1036 = vmatprep.subr.mxu0 0.0
    %1037 = vmatpush1.msra.mxu0 0.0
    %1038 = vmatprep.subr.mxu0 0.0
    %1039 = vmatpush1.msra.mxu0 0.0
    %1040 = vmatprep.mubr.f32.mxu0 0.0
    %1041 = vmatmul.mubr.f32.gmra.mrb[0].mxu0 %v971
    %v1042 = vpop.f32.mrb[0].mxu0
    %v1043 = vadd.f32 %v967, %v1042
    %v1044 = vpop.f32.mrb[0].mxu0
    %1045 = vmatprep.mubr.f32.mxu0 0.0
    %1046 = vmatmul.mubr.f32.gmra.mrb[0].mxu0 %v974
    %v1047 = vpop.f32.mrb[0].mxu0
    %v1048 = vadd.f32 %v967, %v1047
    %v1049 = vpop.f32.mrb[0].mxu0
    %1050 = vdwg.mxu0
    %v1051 = vld [vmem:[%s7] sm:$0xff]
    %v1052 = vld [vmem:[%s7 + $0x8] sm:$0xff]
    %v1053 = vld [vmem:[%s7 + $0x10] sm:$0xff]
    %v1054 = vld [vmem:[%s7 + $0x18] sm:$0xff]
    %v1055 = vld [vmem:[%s9] sm:$0x3]
    %v1056 = vlaneseq
    %v1057 = vshrl.u32 %v1056, 7
    %v1058 = vsub.s32 0, %v1057
    %v1059 = vrot.slane %v1055, %v1058
    %v1060 = vmul.f32 %v950, %v1059
    %v1061 = vsub.f32 1.0, %v950
    %v1062 = vlaneseq
    %v1063 = vshrl.u32 %v1062, 7
    %v1064 = vsub.s32 1, %v1063
    %v1065 = vrot.slane %v1055, %v1064
    %v1066 = vmul.f32 %v1061, %v1065
    %v1067 = vadd.f32 %v1060, %v1066
    %v1070 = vrot.slane %v1048, 7
    %vm1071 = vcmask 1041409
    %v1072 = vsel %vm1071, %v1070, %v1043
    %v1074 = vrot.slane %v1043, 5
    %v1075 = vrot.slane %v1048, 4
    %vm1076 = vcmask 1043459
    %v1077 = vsel %vm1076, %v1075, %v1074
    %1078 = vrot.lane.b32.xlu0 %v1077, 80
    %v1079 = vpop.permute.xlu0 %1078
    %vm1081 = vcmask 1041408
    %v1082 = vsel %vm1081, %v1072, %v1079
    %v1084 = vrot.slane %v866, 6
    %1085 = vrot.lane.b32.xlu0 %v1084, 121
    %v1086 = vpop.permute.xlu0 %1085
    %v1088 = vsel %vm1081, %v866, %v1086
    %v1089 = vmul.f32 %v950, 0.0
    %v1090 = vmul.f32 %v1061, 0.0
    %vm1091 = vcmask 130048
    %v1092 = vsel %vm1091, %v1089, %v1090
    %v1094 = vsel %vm943, %v1092, 0
    %1096 = vmatprep.subr.mxu0 0.0
    %1097 = vmatpush1.msra.mxu0 %v1051
    %1098 = vmatprep.subr.mxu0 0.0
    %1099 = vmatpush1.msra.mxu0 %v1052
    %1100 = vmatprep.subr.mxu0 0.0
    %1101 = vmatpush1.msra.mxu0 %v1053
    %1102 = vmatprep.subr.mxu0 0.0
    %1103 = vmatpush1.msra.mxu0 %v1054
    %1104 = vmatprep.subr.mxu0 0.0
    %1105 = vmatpush1.msra.mxu0 0.0
    %1106 = vmatprep.subr.mxu0 0.0
    %1107 = vmatpush1.msra.mxu0 0.0
    %1108 = vmatprep.subr.mxu0 0.0
    %1109 = vmatpush1.msra.mxu0 0.0
    %1110 = vmatprep.subr.mxu0 0.0
    %1111 = vmatpush1.msra.mxu0 0.0
    %1112 = vmatprep.subr.mxu0 0.0
    %1113 = vmatpush1.msra.mxu0 0.0
    %1114 = vmatprep.subr.mxu0 0.0
    %1115 = vmatpush1.msra.mxu0 0.0
    %1116 = vmatprep.subr.mxu0 0.0
    %1117 = vmatpush1.msra.mxu0 0.0
    %1118 = vmatprep.subr.mxu0 0.0
    %1119 = vmatpush1.msra.mxu0 0.0
    %1120 = vmatprep.subr.mxu0 0.0
    %1121 = vmatpush1.msra.mxu0 0.0
    %1122 = vmatprep.subr.mxu0 0.0
    %1123 = vmatpush1.msra.mxu0 0.0
    %1124 = vmatprep.subr.mxu0 0.0
    %1125 = vmatpush1.msra.mxu0 0.0
    %1126 = vmatprep.subr.mxu0 0.0
    %1127 = vmatpush1.msra.mxu0 0.0
    %1128 = vmatprep.subr.mxu0 0.0
    %1129 = vmatpush1.msra.mxu0 0.0
    %1130 = vmatprep.subr.mxu0 0.0
    %1131 = vmatpush1.msra.mxu0 0.0
    %1132 = vmatprep.subr.mxu0 0.0
    %1133 = vmatpush1.msra.mxu0 0.0
    %1134 = vmatprep.subr.mxu0 0.0
    %1135 = vmatpush1.msra.mxu0 0.0
    %1136 = vmatprep.subr.mxu0 0.0
    %1137 = vmatpush1.msra.mxu0 0.0
    %1138 = vmatprep.subr.mxu0 0.0
    %1139 = vmatpush1.msra.mxu0 0.0
    %1140 = vmatprep.subr.mxu0 0.0
    %1141 = vmatpush1.msra.mxu0 0.0
    %1142 = vmatprep.subr.mxu0 0.0
    %1143 = vmatpush1.msra.mxu0 0.0
    %1144 = vmatprep.subr.mxu0 0.0
    %1145 = vmatpush1.msra.mxu0 0.0
    %1146 = vmatprep.subr.mxu0 0.0
    %1147 = vmatpush1.msra.mxu0 0.0
    %1148 = vmatprep.subr.mxu0 0.0
    %1149 = vmatpush1.msra.mxu0 0.0
    %1150 = vmatprep.subr.mxu0 0.0
    %1151 = vmatpush1.msra.mxu0 0.0
    %1152 = vmatprep.subr.mxu0 0.0
    %1153 = vmatpush1.msra.mxu0 0.0
    %1154 = vmatprep.subr.mxu0 0.0
    %1155 = vmatpush1.msra.mxu0 0.0
    %1156 = vmatprep.subr.mxu0 0.0
    %1157 = vmatpush1.msra.mxu0 0.0
    %1158 = vmatprep.subr.mxu0 0.0
    %1159 = vmatpush1.msra.mxu0 0.0
    %1160 = vmatprep.mubr.f32.mxu0 0.0
    %1161 = vmatmul.mubr.f32.gmra.mrb[0].mxu0 %v1094
    %v1162 = vpop.f32.mrb[0].mxu0
    %v1163 = vadd.f32 %v1067, %v1162
    %v1164 = vpop.f32.mrb[0].mxu0
    %1165 = vdwg.mxu0
    %v1166 = vadd.f32 %v1082, %v1163
    %v1167 = vxor.u32 %v1166, 2147483648
    %v1168 = vmul.f32 %v1167, 1.442695
    %v1169 = vpow.pop %v1168
    %v1170 = vadd.f32 %v1169, 1.0
    %v1171 = vrcp.pop %v1170
    %v1172 = vmul.f32 1.0, %v1171
    %1174 = vrot.lane.b32.xlu0 %v1163, 96
    %v1175 = vpop.permute.xlu0 %1174
    %v1177 = vmul.f32 %v1172, %v1175
    %1179 = vrot.lane.b32.xlu0 %v1177, 32
    %v1180 = vpop.permute.xlu0 %1179
    %v1182 = vadd.f32 %v1082, %v1180
    %v1183 = vtanh.pop %v1182
    %v1184 = vsub.f32 1.0, %v1172
    %1186 = vrot.lane.b32.xlu0 %v1183, 112
    %v1187 = vpop.permute.xlu0 %1186
    %v1189 = vmul.f32 %v1184, %v1187
    %v1190 = vmul.f32 %v1172, 0.0
    %v1191 = vadd.f32 %v1189, %v1190
    %1193 = vset.pattern.permute.xlu0 0
    %1194 = vperm.xlu0 %1193, %v1088
    %v1195 = vpop.permute.xlu0 %1194
    %v1197 = vmul.f32 %v1195, %v1191
    %v1198 = vsub.f32 1.0, %v1088
    %1200 = vset.pattern.permute.xlu0 0
    %1201 = vperm.xlu0 %1200, %v1198
    %v1202 = vpop.permute.xlu0 %1201
    %v1204 = vmul.f32 %v1202, 0.0
    %v1205 = vadd.f32 %v1197, %v1204
    %v1206 = vmul.f32 %v1195, %v1205
    %v1209 = vunpack.c.l.s4 1966171168
    %v1210 = vunpack.c.0.s8 %v1209
    %v1211 = vlaneseq
    %v1212 = vshrl.u32 %v1211, 7
    %v1213 = vsub.s32 %v1210, %v1212
    %v1214 = vrot.slane %v1206, %v1213
    %v1215 = vcombine.high %v1214, %v1214
    %v1217 = vunpack.c.l.s4 1966171168
    %v1218 = vunpack.c.0.s8 %v1217
    %v1219 = vlaneseq
    %v1220 = vshrl.u32 %v1219, 7
    %v1221 = vsub.s32 %v1218, %v1220
    %v1222 = vrot.slane %v1214, %v1221
    %v1224 = vunpack.c.l.s4 1966171168
    %v1225 = vunpack.c.0.s8 %v1224
    %v1226 = vlaneseq
    %v1227 = vshrl.u32 %v1226, 7
    %v1228 = vsub.s32 %v1225, %v1227
    %v1229 = vrot.slane %v1215, %v1228
    %v1230 = vlaneseq
    %v1231 = vshrl.u32 %v1230, 7
    %v1232 = vsub.s32 0, %v1231
    %v1233 = vrot.slane %v1222, %v1232
    %v1234 = vlaneseq
    %v1235 = vshrl.u32 %v1234, 7
    %v1236 = vsub.s32 0, %v1235
    %v1237 = vrot.slane %v1229, %v1236
    %1238 = vrot.lane.b32.xlu0 %v1233, 112
    %v1239 = vpop.permute.xlu0 %1238
    %1240 = vrot.lane.b32.xlu0 %v1237, 112
    %v1241 = vpop.permute.xlu0 %1240
    %vm1244 = vcmask 122880
    %1245 = vst.msk [vmem:[#allocation4] sm:$0x1] %vm1244, %v1239
    %1246 = vst.msk [vmem:[#allocation4 + $0x8] sm:$0x1] %vm1244, %v1241
    %v1247 = vcombine.high %v1222, %v1222
    %v1248 = vcombine.high %v1229, %v1229
    %vm1251 = vcmask 254080
    %1252 = vst.msk [vmem:[#allocation4 + $0x7] sm:$0x1] %vm1251, %v1247
    %1253 = vst.msk [vmem:[#allocation4 + $0xf] sm:$0x1] %vm1251, %v1248
    %v1254 = vrot.slane %v1043, 1
    %v1255 = vsel %vm1071, %v1048, %v1254
    %v1257 = vrot.slane %v1043, 4
    %v1258 = vrot.slane %v1048, 3
    %v1259 = vsel %vm1076, %v1258, %v1257
    %1260 = vrot.lane.b32.xlu0 %v1259, 80
    %v1261 = vpop.permute.xlu0 %1260
    %v1263 = vsel %vm1081, %v1255, %v1261
    %1264 = vrot.lane.b32.xlu0 %v1084, 123
    %v1265 = vpop.permute.xlu0 %1264
    %v1267 = vsel %vm1081, %v866, %v1265
    %v1268 = vmul.f32 %v1205, %v950
    %v1269 = vmul.f32 %v1205, %v1061
    %1271 = vrot.lane.b32.xlu0 %v1268, 112
    %v1272 = vpop.permute.xlu0 %1271
    %v1274 = vsel %vm1091, %v1272, %v1269
    %v1276 = vsel %vm943, %v1274, 0
    %1278 = vmatprep.subr.mxu0 0.0
    %1279 = vmatpush1.msra.mxu0 %v1051
    %1280 = vmatprep.subr.mxu0 0.0
    %1281 = vmatpush1.msra.mxu0 %v1052
    %1282 = vmatprep.subr.mxu0 0.0
    %1283 = vmatpush1.msra.mxu0 %v1053
    %1284 = vmatprep.subr.mxu0 0.0
    %1285 = vmatpush1.msra.mxu0 %v1054
    %1286 = vmatprep.subr.mxu0 0.0
    %1287 = vmatpush1.msra.mxu0 0.0
    %1288 = vmatprep.subr.mxu0 0.0
    %1289 = vmatpush1.msra.mxu0 0.0
    %1290 = vmatprep.subr.mxu0 0.0
    %1291 = vmatpush1.msra.mxu0 0.0
    %1292 = vmatprep.subr.mxu0 0.0
    %1293 = vmatpush1.msra.mxu0 0.0
    %1294 = vmatprep.subr.mxu0 0.0
    %1295 = vmatpush1.msra.mxu0 0.0
    %1296 = vmatprep.subr.mxu0 0.0
    %1297 = vmatpush1.msra.mxu0 0.0
    %1298 = vmatprep.subr.mxu0 0.0
    %1299 = vmatpush1.msra.mxu0 0.0
    %1300 = vmatprep.subr.mxu0 0.0
    %1301 = vmatpush1.msra.mxu0 0.0
    %1302 = vmatprep.subr.mxu0 0.0
    %1303 = vmatpush1.msra.mxu0 0.0
    %1304 = vmatprep.subr.mxu0 0.0
    %1305 = vmatpush1.msra.mxu0 0.0
    %1306 = vmatprep.subr.mxu0 0.0
    %1307 = vmatpush1.msra.mxu0 0.0
    %1308 = vmatprep.subr.mxu0 0.0
    %1309 = vmatpush1.msra.mxu0 0.0
    %1310 = vmatprep.subr.mxu0 0.0
    %1311 = vmatpush1.msra.mxu0 0.0
    %1312 = vmatprep.subr.mxu0 0.0
    %1313 = vmatpush1.msra.mxu0 0.0
    %1314 = vmatprep.subr.mxu0 0.0
    %1315 = vmatpush1.msra.mxu0 0.0
    %1316 = vmatprep.subr.mxu0 0.0
    %1317 = vmatpush1.msra.mxu0 0.0
    %1318 = vmatprep.subr.mxu0 0.0
    %1319 = vmatpush1.msra.mxu0 0.0
    %1320 = vmatprep.subr.mxu0 0.0
    %1321 = vmatpush1.msra.mxu0 0.0
    %1322 = vmatprep.subr.mxu0 0.0
    %1323 = vmatpush1.msra.mxu0 0.0
    %1324 = vmatprep.subr.mxu0 0.0
    %1325 = vmatpush1.msra.mxu0 0.0
    %1326 = vmatprep.subr.mxu0 0.0
    %1327 = vmatpush1.msra.mxu0 0.0
    %1328 = vmatprep.subr.mxu0 0.0
    %1329 = vmatpush1.msra.mxu0 0.0
    %1330 = vmatprep.subr.mxu0 0.0
    %1331 = vmatpush1.msra.mxu0 0.0
    %1332 = vmatprep.subr.mxu0 0.0
    %1333 = vmatpush1.msra.mxu0 0.0
    %1334 = vmatprep.subr.mxu0 0.0
    %1335 = vmatpush1.msra.mxu0 0.0
    %1336 = vmatprep.subr.mxu0 0.0
    %1337 = vmatpush1.msra.mxu0 0.0
    %1338 = vmatprep.subr.mxu0 0.0
    %1339 = vmatpush1.msra.mxu0 0.0
    %1340 = vmatprep.subr.mxu0 0.0
    %1341 = vmatpush1.msra.mxu0 0.0
    %1342 = vmatprep.mubr.f32.mxu0 0.0
    %1343 = vmatmul.mubr.f32.gmra.mrb[0].mxu0 %v1276
    %v1344 = vpop.f32.mrb[0].mxu0
    %v1345 = vadd.f32 %v1067, %v1344
    %v1346 = vpop.f32.mrb[0].mxu0
    %1347 = vdwg.mxu0
    %v1348 = vadd.f32 %v1263, %v1345
    %v1349 = vxor.u32 %v1348, 2147483648
    %v1350 = vmul.f32 %v1349, 1.442695
    %v1351 = vpow.pop %v1350
    %v1352 = vadd.f32 %v1351, 1.0
    %v1353 = vrcp.pop %v1352
    %v1354 = vmul.f32 1.0, %v1353
    %1356 = vrot.lane.b32.xlu0 %v1345, 96
    %v1357 = vpop.permute.xlu0 %1356
    %v1359 = vmul.f32 %v1354, %v1357
    %1361 = vrot.lane.b32.xlu0 %v1359, 32
    %v1362 = vpop.permute.xlu0 %1361
    %v1364 = vadd.f32 %v1263, %v1362
    %v1365 = vtanh.pop %v1364
    %v1366 = vsub.f32 1.0, %v1354
    %1368 = vrot.lane.b32.xlu0 %v1365, 112
    %v1369 = vpop.permute.xlu0 %1368
    %v1371 = vmul.f32 %v1366, %v1369
    %v1372 = vmul.f32 %v1354, %v1205
    %v1373 = vadd.f32 %v1371, %v1372
    %1375 = vset.pattern.permute.xlu0 1
    %1376 = vperm.xlu0 %1375, %v1267
    %v1377 = vpop.permute.xlu0 %1376
    %v1379 = vmul.f32 %v1377, %v1373
    %v1380 = vsub.f32 1.0, %v1267
    %1382 = vset.pattern.permute.xlu0 1
    %1383 = vperm.xlu0 %1382, %v1380
    %v1384 = vpop.permute.xlu0 %1383
    %v1386 = vmul.f32 %v1384, %v1205
    %v1387 = vadd.f32 %v1379, %v1386
    %v1388 = vmul.f32 %v1377, %v1387
    %v1391 = vunpack.c.l.s4 1966171168
    %v1392 = vunpack.c.0.s8 %v1391
    %v1393 = vlaneseq
    %v1394 = vshrl.u32 %v1393, 7
    %v1395 = vsub.s32 %v1392, %v1394
    %v1396 = vrot.slane %v1388, %v1395
    %v1397 = vcombine.high %v1396, %v1396
    %v1399 = vunpack.c.l.s4 1966171168
    %v1400 = vunpack.c.0.s8 %v1399
    %v1401 = vlaneseq
    %v1402 = vshrl.u32 %v1401, 7
    %v1403 = vsub.s32 %v1400, %v1402
    %v1404 = vrot.slane %v1396, %v1403
    %v1406 = vunpack.c.l.s4 1966171168
    %v1407 = vunpack.c.0.s8 %v1406
    %v1408 = vlaneseq
    %v1409 = vshrl.u32 %v1408, 7
    %v1410 = vsub.s32 %v1407, %v1409
    %v1411 = vrot.slane %v1397, %v1410
    %v1412 = vlaneseq
    %v1413 = vshrl.u32 %v1412, 7
    %v1414 = vsub.s32 0, %v1413
    %v1415 = vrot.slane %v1404, %v1414
    %v1416 = vlaneseq
    %v1417 = vshrl.u32 %v1416, 7
    %v1418 = vsub.s32 0, %v1417
    %v1419 = vrot.slane %v1411, %v1418
    %1420 = vrot.lane.b32.xlu0 %v1415, 112
    %v1421 = vpop.permute.xlu0 %1420
    %1422 = vrot.lane.b32.xlu0 %v1419, 112
    %v1423 = vpop.permute.xlu0 %1422
    %1426 = vst.msk [vmem:[#allocation4 + $0x1] sm:$0x1] %vm1244, %v1421
    %1427 = vst.msk [vmem:[#allocation4 + $0x9] sm:$0x1] %vm1244, %v1423
    %v1428 = vcombine.high %v1404, %v1404
    %v1429 = vcombine.high %v1411, %v1411
    %1432 = vst.msk [vmem:[#allocation4 + $0x6] sm:$0x1] %vm1251, %v1428
    %1433 = vst.msk [vmem:[#allocation4 + $0xe] sm:$0x1] %vm1251, %v1429
    %v1434 = vrot.slane %v1043, 2
    %v1435 = vrot.slane %v1048, 1
    %v1436 = vsel %vm1071, %v1435, %v1434
    %v1438 = vrot.slane %v1043, 3
    %v1439 = vrot.slane %v1048, 2
    %v1440 = vsel %vm1076, %v1439, %v1438
    %1441 = vrot.lane.b32.xlu0 %v1440, 80
    %v1442 = vpop.permute.xlu0 %1441
    %v1444 = vsel %vm1081, %v1436, %v1442
    %1445 = vrot.lane.b32.xlu0 %v1084, 125
    %v1446 = vpop.permute.xlu0 %1445
    %v1448 = vsel %vm1081, %v866, %v1446
    %v1449 = vmul.f32 %v1387, %v950
    %v1450 = vmul.f32 %v1387, %v1061
    %1452 = vrot.lane.b32.xlu0 %v1449, 112
    %v1453 = vpop.permute.xlu0 %1452
    %v1455 = vsel %vm1091, %v1453, %v1450
    %v1457 = vsel %vm943, %v1455, 0
    %1459 = vmatprep.subr.mxu0 0.0
    %1460 = vmatpush1.msra.mxu0 %v1051
    %1461 = vmatprep.subr.mxu0 0.0
    %1462 = vmatpush1.msra.mxu0 %v1052
    %1463 = vmatprep.subr.mxu0 0.0
    %1464 = vmatpush1.msra.mxu0 %v1053
    %1465 = vmatprep.subr.mxu0 0.0
    %1466 = vmatpush1.msra.mxu0 %v1054
    %1467 = vmatprep.subr.mxu0 0.0
    %1468 = vmatpush1.msra.mxu0 0.0
    %1469 = vmatprep.subr.mxu0 0.0
    %1470 = vmatpush1.msra.mxu0 0.0
    %1471 = vmatprep.subr.mxu0 0.0
    %1472 = vmatpush1.msra.mxu0 0.0
    %1473 = vmatprep.subr.mxu0 0.0
    %1474 = vmatpush1.msra.mxu0 0.0
    %1475 = vmatprep.subr.mxu0 0.0
    %1476 = vmatpush1.msra.mxu0 0.0
    %1477 = vmatprep.subr.mxu0 0.0
    %1478 = vmatpush1.msra.mxu0 0.0
    %1479 = vmatprep.subr.mxu0 0.0
    %1480 = vmatpush1.msra.mxu0 0.0
    %1481 = vmatprep.subr.mxu0 0.0
    %1482 = vmatpush1.msra.mxu0 0.0
    %1483 = vmatprep.subr.mxu0 0.0
    %1484 = vmatpush1.msra.mxu0 0.0
    %1485 = vmatprep.subr.mxu0 0.0
    %1486 = vmatpush1.msra.mxu0 0.0
    %1487 = vmatprep.subr.mxu0 0.0
    %1488 = vmatpush1.msra.mxu0 0.0
    %1489 = vmatprep.subr.mxu0 0.0
    %1490 = vmatpush1.msra.mxu0 0.0
    %1491 = vmatprep.subr.mxu0 0.0
    %1492 = vmatpush1.msra.mxu0 0.0
    %1493 = vmatprep.subr.mxu0 0.0
    %1494 = vmatpush1.msra.mxu0 0.0
    %1495 = vmatprep.subr.mxu0 0.0
    %1496 = vmatpush1.msra.mxu0 0.0
    %1497 = vmatprep.subr.mxu0 0.0
    %1498 = vmatpush1.msra.mxu0 0.0
    %1499 = vmatprep.subr.mxu0 0.0
    %1500 = vmatpush1.msra.mxu0 0.0
    %1501 = vmatprep.subr.mxu0 0.0
    %1502 = vmatpush1.msra.mxu0 0.0
    %1503 = vmatprep.subr.mxu0 0.0
    %1504 = vmatpush1.msra.mxu0 0.0
    %1505 = vmatprep.subr.mxu0 0.0
    %1506 = vmatpush1.msra.mxu0 0.0
    %1507 = vmatprep.subr.mxu0 0.0
    %1508 = vmatpush1.msra.mxu0 0.0
    %1509 = vmatprep.subr.mxu0 0.0
    %1510 = vmatpush1.msra.mxu0 0.0
    %1511 = vmatprep.subr.mxu0 0.0
    %1512 = vmatpush1.msra.mxu0 0.0
    %1513 = vmatprep.subr.mxu0 0.0
    %1514 = vmatpush1.msra.mxu0 0.0
    %1515 = vmatprep.subr.mxu0 0.0
    %1516 = vmatpush1.msra.mxu0 0.0
    %1517 = vmatprep.subr.mxu0 0.0
    %1518 = vmatpush1.msra.mxu0 0.0
    %1519 = vmatprep.subr.mxu0 0.0
    %1520 = vmatpush1.msra.mxu0 0.0
    %1521 = vmatprep.subr.mxu0 0.0
    %1522 = vmatpush1.msra.mxu0 0.0
    %1523 = vmatprep.mubr.f32.mxu0 0.0
    %1524 = vmatmul.mubr.f32.gmra.mrb[0].mxu0 %v1457
    %v1525 = vpop.f32.mrb[0].mxu0
    %v1526 = vadd.f32 %v1067, %v1525
    %v1527 = vpop.f32.mrb[0].mxu0
    %1528 = vdwg.mxu0
    %v1529 = vadd.f32 %v1444, %v1526
    %v1530 = vxor.u32 %v1529, 2147483648
    %v1531 = vmul.f32 %v1530, 1.442695
    %v1532 = vpow.pop %v1531
    %v1533 = vadd.f32 %v1532, 1.0
    %v1534 = vrcp.pop %v1533
    %v1535 = vmul.f32 1.0, %v1534
    %1537 = vrot.lane.b32.xlu0 %v1526, 96
    %v1538 = vpop.permute.xlu0 %1537
    %v1540 = vmul.f32 %v1535, %v1538
    %1542 = vrot.lane.b32.xlu0 %v1540, 32
    %v1543 = vpop.permute.xlu0 %1542
    %v1545 = vadd.f32 %v1444, %v1543
    %v1546 = vtanh.pop %v1545
    %v1547 = vsub.f32 1.0, %v1535
    %1549 = vrot.lane.b32.xlu0 %v1546, 112
    %v1550 = vpop.permute.xlu0 %1549
    %v1552 = vmul.f32 %v1547, %v1550
    %v1553 = vmul.f32 %v1535, %v1387
    %v1554 = vadd.f32 %v1552, %v1553
    %1556 = vset.pattern.permute.xlu0 2
    %1557 = vperm.xlu0 %1556, %v1448
    %v1558 = vpop.permute.xlu0 %1557
    %v1560 = vmul.f32 %v1558, %v1554
    %v1561 = vsub.f32 1.0, %v1448
    %1563 = vset.pattern.permute.xlu0 2
    %1564 = vperm.xlu0 %1563, %v1561
    %v1565 = vpop.permute.xlu0 %1564
    %v1567 = vmul.f32 %v1565, %v1387
    %v1568 = vadd.f32 %v1560, %v1567
    %v1569 = vmul.f32 %v1558, %v1568
    %v1572 = vunpack.c.l.s4 1966171168
    %v1573 = vunpack.c.0.s8 %v1572
    %v1574 = vlaneseq
    %v1575 = vshrl.u32 %v1574, 7
    %v1576 = vsub.s32 %v1573, %v1575
    %v1577 = vrot.slane %v1569, %v1576
    %v1578 = vcombine.high %v1577, %v1577
    %v1580 = vunpack.c.l.s4 1966171168
    %v1581 = vunpack.c.0.s8 %v1580
    %v1582 = vlaneseq
    %v1583 = vshrl.u32 %v1582, 7
    %v1584 = vsub.s32 %v1581, %v1583
    %v1585 = vrot.slane %v1577, %v1584
    %v1587 = vunpack.c.l.s4 1966171168
    %v1588 = vunpack.c.0.s8 %v1587
    %v1589 = vlaneseq
    %v1590 = vshrl.u32 %v1589, 7
    %v1591 = vsub.s32 %v1588, %v1590
    %v1592 = vrot.slane %v1578, %v1591
    %v1593 = vlaneseq
    %v1594 = vshrl.u32 %v1593, 7
    %v1595 = vsub.s32 0, %v1594
    %v1596 = vrot.slane %v1585, %v1595
    %v1597 = vlaneseq
    %v1598 = vshrl.u32 %v1597, 7
    %v1599 = vsub.s32 0, %v1598
    %v1600 = vrot.slane %v1592, %v1599
    %1601 = vrot.lane.b32.xlu0 %v1596, 112
    %v1602 = vpop.permute.xlu0 %1601
    %1603 = vrot.lane.b32.xlu0 %v1600, 112
    %v1604 = vpop.permute.xlu0 %1603
    %1607 = vst.msk [vmem:[#allocation4 + $0x2] sm:$0x1] %vm1244, %v1602
    %1608 = vst.msk [vmem:[#allocation4 + $0xa] sm:$0x1] %vm1244, %v1604
    %v1609 = vcombine.high %v1585, %v1585
    %v1610 = vcombine.high %v1592, %v1592
    %1613 = vst.msk [vmem:[#allocation4 + $0x5] sm:$0x1] %vm1251, %v1609
    %1614 = vst.msk [vmem:[#allocation4 + $0xd] sm:$0x1] %vm1251, %v1610
    %v1615 = vsel %vm1071, %v1439, %v1438
    %v1617 = vsel %vm1076, %v1435, %v1434
    %1618 = vrot.lane.b32.xlu0 %v1617, 80
    %v1619 = vpop.permute.xlu0 %1618
    %v1621 = vsel %vm1081, %v1615, %v1619
    %1622 = vrot.lane.b32.xlu0 %v1084, 127
    %v1623 = vpop.permute.xlu0 %1622
    %v1625 = vsel %vm1081, %v866, %v1623
    %v1626 = vmul.f32 %v1568, %v950
    %v1627 = vmul.f32 %v1568, %v1061
    %1629 = vrot.lane.b32.xlu0 %v1626, 112
    %v1630 = vpop.permute.xlu0 %1629
    %v1632 = vsel %vm1091, %v1630, %v1627
    %v1634 = vsel %vm943, %v1632, 0
    %1636 = vmatprep.subr.mxu0 0.0
    %1637 = vmatpush1.msra.mxu0 %v1051
    %1638 = vmatprep.subr.mxu0 0.0
    %1639 = vmatpush1.msra.mxu0 %v1052
    %1640 = vmatprep.subr.mxu0 0.0
    %1641 = vmatpush1.msra.mxu0 %v1053
    %1642 = vmatprep.subr.mxu0 0.0
    %1643 = vmatpush1.msra.mxu0 %v1054
    %1644 = vmatprep.subr.mxu0 0.0
    %1645 = vmatpush1.msra.mxu0 0.0
    %1646 = vmatprep.subr.mxu0 0.0
    %1647 = vmatpush1.msra.mxu0 0.0
    %1648 = vmatprep.subr.mxu0 0.0
    %1649 = vmatpush1.msra.mxu0 0.0
    %1650 = vmatprep.subr.mxu0 0.0
    %1651 = vmatpush1.msra.mxu0 0.0
    %1652 = vmatprep.subr.mxu0 0.0
    %1653 = vmatpush1.msra.mxu0 0.0
    %1654 = vmatprep.subr.mxu0 0.0
    %1655 = vmatpush1.msra.mxu0 0.0
    %1656 = vmatprep.subr.mxu0 0.0
    %1657 = vmatpush1.msra.mxu0 0.0
    %1658 = vmatprep.subr.mxu0 0.0
    %1659 = vmatpush1.msra.mxu0 0.0
    %1660 = vmatprep.subr.mxu0 0.0
    %1661 = vmatpush1.msra.mxu0 0.0
    %1662 = vmatprep.subr.mxu0 0.0
    %1663 = vmatpush1.msra.mxu0 0.0
    %1664 = vmatprep.subr.mxu0 0.0
    %1665 = vmatpush1.msra.mxu0 0.0
    %1666 = vmatprep.subr.mxu0 0.0
    %1667 = vmatpush1.msra.mxu0 0.0
    %1668 = vmatprep.subr.mxu0 0.0
    %1669 = vmatpush1.msra.mxu0 0.0
    %1670 = vmatprep.subr.mxu0 0.0
    %1671 = vmatpush1.msra.mxu0 0.0
    %1672 = vmatprep.subr.mxu0 0.0
    %1673 = vmatpush1.msra.mxu0 0.0
    %1674 = vmatprep.subr.mxu0 0.0
    %1675 = vmatpush1.msra.mxu0 0.0
    %1676 = vmatprep.subr.mxu0 0.0
    %1677 = vmatpush1.msra.mxu0 0.0
    %1678 = vmatprep.subr.mxu0 0.0
    %1679 = vmatpush1.msra.mxu0 0.0
    %1680 = vmatprep.subr.mxu0 0.0
    %1681 = vmatpush1.msra.mxu0 0.0
    %1682 = vmatprep.subr.mxu0 0.0
    %1683 = vmatpush1.msra.mxu0 0.0
    %1684 = vmatprep.subr.mxu0 0.0
    %1685 = vmatpush1.msra.mxu0 0.0
    %1686 = vmatprep.subr.mxu0 0.0
    %1687 = vmatpush1.msra.mxu0 0.0
    %1688 = vmatprep.subr.mxu0 0.0
    %1689 = vmatpush1.msra.mxu0 0.0
    %1690 = vmatprep.subr.mxu0 0.0
    %1691 = vmatpush1.msra.mxu0 0.0
    %1692 = vmatprep.subr.mxu0 0.0
    %1693 = vmatpush1.msra.mxu0 0.0
    %1694 = vmatprep.subr.mxu0 0.0
    %1695 = vmatpush1.msra.mxu0 0.0
    %1696 = vmatprep.subr.mxu0 0.0
    %1697 = vmatpush1.msra.mxu0 0.0
    %1698 = vmatprep.subr.mxu0 0.0
    %1699 = vmatpush1.msra.mxu0 0.0
    %1700 = vmatprep.mubr.f32.mxu0 0.0
    %1701 = vmatmul.mubr.f32.gmra.mrb[0].mxu0 %v1634
    %v1702 = vpop.f32.mrb[0].mxu0
    %v1703 = vadd.f32 %v1067, %v1702
    %v1704 = vpop.f32.mrb[0].mxu0
    %1705 = vdwg.mxu0
    %v1706 = vadd.f32 %v1621, %v1703
    %v1707 = vxor.u32 %v1706, 2147483648
    %v1708 = vmul.f32 %v1707, 1.442695
    %v1709 = vpow.pop %v1708
    %v1710 = vadd.f32 %v1709, 1.0
    %v1711 = vrcp.pop %v1710
    %v1712 = vmul.f32 1.0, %v1711
    %1714 = vrot.lane.b32.xlu0 %v1703, 96
    %v1715 = vpop.permute.xlu0 %1714
    %v1717 = vmul.f32 %v1712, %v1715
    %1719 = vrot.lane.b32.xlu0 %v1717, 32
    %v1720 = vpop.permute.xlu0 %1719
    %v1722 = vadd.f32 %v1621, %v1720
    %v1723 = vtanh.pop %v1722
    %v1724 = vsub.f32 1.0, %v1712
    %1726 = vrot.lane.b32.xlu0 %v1723, 112
    %v1727 = vpop.permute.xlu0 %1726
    %v1729 = vmul.f32 %v1724, %v1727
    %v1730 = vmul.f32 %v1712, %v1568
    %v1731 = vadd.f32 %v1729, %v1730
    %1733 = vset.pattern.permute.xlu0 3
    %1734 = vperm.xlu0 %1733, %v1625
    %v1735 = vpop.permute.xlu0 %1734
    %v1737 = vmul.f32 %v1735, %v1731
    %v1738 = vsub.f32 1.0, %v1625
    %1740 = vset.pattern.permute.xlu0 3
    %1741 = vperm.xlu0 %1740, %v1738
    %v1742 = vpop.permute.xlu0 %1741
    %v1744 = vmul.f32 %v1742, %v1568
    %v1745 = vadd.f32 %v1737, %v1744
    %v1746 = vmul.f32 %v1735, %v1745
    %v1749 = vunpack.c.l.s4 1966171168
    %v1750 = vunpack.c.0.s8 %v1749
    %v1751 = vlaneseq
    %v1752 = vshrl.u32 %v1751, 7
    %v1753 = vsub.s32 %v1750, %v1752
    %v1754 = vrot.slane %v1746, %v1753
    %v1755 = vcombine.high %v1754, %v1754
    %v1757 = vunpack.c.l.s4 1966171168
    %v1758 = vunpack.c.0.s8 %v1757
    %v1759 = vlaneseq
    %v1760 = vshrl.u32 %v1759, 7
    %v1761 = vsub.s32 %v1758, %v1760
    %v1762 = vrot.slane %v1754, %v1761
    %v1764 = vunpack.c.l.s4 1966171168
    %v1765 = vunpack.c.0.s8 %v1764
    %v1766 = vlaneseq
    %v1767 = vshrl.u32 %v1766, 7
    %v1768 = vsub.s32 %v1765, %v1767
    %v1769 = vrot.slane %v1755, %v1768
    %v1770 = vlaneseq
    %v1771 = vshrl.u32 %v1770, 7
    %v1772 = vsub.s32 0, %v1771
    %v1773 = vrot.slane %v1762, %v1772
    %v1774 = vlaneseq
    %v1775 = vshrl.u32 %v1774, 7
    %v1776 = vsub.s32 0, %v1775
    %v1777 = vrot.slane %v1769, %v1776
    %1778 = vrot.lane.b32.xlu0 %v1773, 112
    %v1779 = vpop.permute.xlu0 %1778
    %1780 = vrot.lane.b32.xlu0 %v1777, 112
    %v1781 = vpop.permute.xlu0 %1780
    %1784 = vst.msk [vmem:[#allocation4 + $0x3] sm:$0x1] %vm1244, %v1779
    %1785 = vst.msk [vmem:[#allocation4 + $0xb] sm:$0x1] %vm1244, %v1781
    %v1786 = vcombine.high %v1762, %v1762
    %v1787 = vcombine.high %v1769, %v1769
    %1790 = vst.msk [vmem:[#allocation4 + $0x4] sm:$0x1] %vm1251, %v1786
    %1791 = vst.msk [vmem:[#allocation4 + $0xc] sm:$0x1] %vm1251, %v1787
    %v1792 = vsel %vm1071, %v1258, %v1257
    %v1794 = vsel %vm1076, %v1048, %v1254
    %1795 = vrot.lane.b32.xlu0 %v1794, 80
    %v1796 = vpop.permute.xlu0 %1795
    %v1798 = vsel %vm1081, %v1792, %v1796
    %1799 = vrot.lane.b32.xlu0 %v1084, 1
    %v1800 = vpop.permute.xlu0 %1799
    %v1802 = vsel %vm1081, %v866, %v1800
    %v1803 = vmul.f32 %v1745, %v950
    %v1804 = vmul.f32 %v1745, %v1061
    %1806 = vrot.lane.b32.xlu0 %v1803, 112
    %v1807 = vpop.permute.xlu0 %1806
    %v1809 = vsel %vm1091, %v1807, %v1804
    %v1811 = vsel %vm943, %v1809, 0
    %1813 = vmatprep.subr.mxu0 0.0
    %1814 = vmatpush1.msra.mxu0 %v1051
    %1815 = vmatprep.subr.mxu0 0.0
    %1816 = vmatpush1.msra.mxu0 %v1052
    %1817 = vmatprep.subr.mxu0 0.0
    %1818 = vmatpush1.msra.mxu0 %v1053
    %1819 = vmatprep.subr.mxu0 0.0
    %1820 = vmatpush1.msra.mxu0 %v1054
    %1821 = vmatprep.subr.mxu0 0.0
    %1822 = vmatpush1.msra.mxu0 0.0
    %1823 = vmatprep.subr.mxu0 0.0
    %1824 = vmatpush1.msra.mxu0 0.0
    %1825 = vmatprep.subr.mxu0 0.0
    %1826 = vmatpush1.msra.mxu0 0.0
    %1827 = vmatprep.subr.mxu0 0.0
    %1828 = vmatpush1.msra.mxu0 0.0
    %1829 = vmatprep.subr.mxu0 0.0
    %1830 = vmatpush1.msra.mxu0 0.0
    %1831 = vmatprep.subr.mxu0 0.0
    %1832 = vmatpush1.msra.mxu0 0.0
    %1833 = vmatprep.subr.mxu0 0.0
    %1834 = vmatpush1.msra.mxu0 0.0
    %1835 = vmatprep.subr.mxu0 0.0
    %1836 = vmatpush1.msra.mxu0 0.0
    %1837 = vmatprep.subr.mxu0 0.0
    %1838 = vmatpush1.msra.mxu0 0.0
    %1839 = vmatprep.subr.mxu0 0.0
    %1840 = vmatpush1.msra.mxu0 0.0
    %1841 = vmatprep.subr.mxu0 0.0
    %1842 = vmatpush1.msra.mxu0 0.0
    %1843 = vmatprep.subr.mxu0 0.0
    %1844 = vmatpush1.msra.mxu0 0.0
    %1845 = vmatprep.subr.mxu0 0.0
    %1846 = vmatpush1.msra.mxu0 0.0
    %1847 = vmatprep.subr.mxu0 0.0
    %1848 = vmatpush1.msra.mxu0 0.0
    %1849 = vmatprep.subr.mxu0 0.0
    %1850 = vmatpush1.msra.mxu0 0.0
    %1851 = vmatprep.subr.mxu0 0.0
    %1852 = vmatpush1.msra.mxu0 0.0
    %1853 = vmatprep.subr.mxu0 0.0
    %1854 = vmatpush1.msra.mxu0 0.0
    %1855 = vmatprep.subr.mxu0 0.0
    %1856 = vmatpush1.msra.mxu0 0.0
    %1857 = vmatprep.subr.mxu0 0.0
    %1858 = vmatpush1.msra.mxu0 0.0
    %1859 = vmatprep.subr.mxu0 0.0
    %1860 = vmatpush1.msra.mxu0 0.0
    %1861 = vmatprep.subr.mxu0 0.0
    %1862 = vmatpush1.msra.mxu0 0.0
    %1863 = vmatprep.subr.mxu0 0.0
    %1864 = vmatpush1.msra.mxu0 0.0
    %1865 = vmatprep.subr.mxu0 0.0
    %1866 = vmatpush1.msra.mxu0 0.0
    %1867 = vmatprep.subr.mxu0 0.0
    %1868 = vmatpush1.msra.mxu0 0.0
    %1869 = vmatprep.subr.mxu0 0.0
    %1870 = vmatpush1.msra.mxu0 0.0
    %1871 = vmatprep.subr.mxu0 0.0
    %1872 = vmatpush1.msra.mxu0 0.0
    %1873 = vmatprep.subr.mxu0 0.0
    %1874 = vmatpush1.msra.mxu0 0.0
    %1875 = vmatprep.subr.mxu0 0.0
    %1876 = vmatpush1.msra.mxu0 0.0
    %1877 = vmatprep.mubr.f32.mxu0 0.0
    %1878 = vmatmul.mubr.f32.gmra.mrb[0].mxu0 %v1811
    %v1879 = vpop.f32.mrb[0].mxu0
    %v1880 = vadd.f32 %v1067, %v1879
    %v1881 = vpop.f32.mrb[0].mxu0
    %1882 = vdwg.mxu0
    %v1883 = vadd.f32 %v1798, %v1880
    %v1884 = vxor.u32 %v1883, 2147483648
    %v1885 = vmul.f32 %v1884, 1.442695
    %v1886 = vpow.pop %v1885
    %v1887 = vadd.f32 %v1886, 1.0
    %v1888 = vrcp.pop %v1887
    %v1889 = vmul.f32 1.0, %v1888
    %1891 = vrot.lane.b32.xlu0 %v1880, 96
    %v1892 = vpop.permute.xlu0 %1891
    %v1894 = vmul.f32 %v1889, %v1892
    %1896 = vrot.lane.b32.xlu0 %v1894, 32
    %v1897 = vpop.permute.xlu0 %1896
    %v1899 = vadd.f32 %v1798, %v1897
    %v1900 = vtanh.pop %v1899
    %v1901 = vsub.f32 1.0, %v1889
    %1903 = vrot.lane.b32.xlu0 %v1900, 112
    %v1904 = vpop.permute.xlu0 %1903
    %v1906 = vmul.f32 %v1901, %v1904
    %v1907 = vmul.f32 %v1889, %v1745
    %v1908 = vadd.f32 %v1906, %v1907
    %1910 = vset.pattern.permute.xlu0 4
    %1911 = vperm.xlu0 %1910, %v1802
    %v1912 = vpop.permute.xlu0 %1911
    %v1914 = vmul.f32 %v1912, %v1908
    %v1915 = vsub.f32 1.0, %v1802
    %1917 = vset.pattern.permute.xlu0 4
    %1918 = vperm.xlu0 %1917, %v1915
    %v1919 = vpop.permute.xlu0 %1918
    %v1921 = vmul.f32 %v1919, %v1745
    %v1922 = vadd.f32 %v1914, %v1921
    %v1923 = vmul.f32 %v1912, %v1922
    %v1926 = vunpack.c.l.s4 1966171168
    %v1927 = vunpack.c.0.s8 %v1926
    %v1928 = vlaneseq
    %v1929 = vshrl.u32 %v1928, 7
    %v1930 = vsub.s32 %v1927, %v1929
    %v1931 = vrot.slane %v1923, %v1930
    %v1932 = vcombine.high %v1931, %v1931
    %v1934 = vunpack.c.l.s4 1966171168
    %v1935 = vunpack.c.0.s8 %v1934
    %v1936 = vlaneseq
    %v1937 = vshrl.u32 %v1936, 7
    %v1938 = vsub.s32 %v1935, %v1937
    %v1939 = vrot.slane %v1931, %v1938
    %v1941 = vunpack.c.l.s4 1966171168
    %v1942 = vunpack.c.0.s8 %v1941
    %v1943 = vlaneseq
    %v1944 = vshrl.u32 %v1943, 7
    %v1945 = vsub.s32 %v1942, %v1944
    %v1946 = vrot.slane %v1932, %v1945
    %v1947 = vlaneseq
    %v1948 = vshrl.u32 %v1947, 7
    %v1949 = vsub.s32 0, %v1948
    %v1950 = vrot.slane %v1939, %v1949
    %v1951 = vlaneseq
    %v1952 = vshrl.u32 %v1951, 7
    %v1953 = vsub.s32 0, %v1952
    %v1954 = vrot.slane %v1946, %v1953
    %1955 = vrot.lane.b32.xlu0 %v1950, 112
    %v1956 = vpop.permute.xlu0 %1955
    %1957 = vrot.lane.b32.xlu0 %v1954, 112
    %v1958 = vpop.permute.xlu0 %1957
    %1961 = vst.msk [vmem:[#allocation4 + $0x4] sm:$0x1] %vm1244, %v1956
    %1962 = vst.msk [vmem:[#allocation4 + $0xc] sm:$0x1] %vm1244, %v1958
    %v1963 = vcombine.high %v1939, %v1939
    %v1964 = vcombine.high %v1946, %v1946
    %1967 = vst.msk [vmem:[#allocation4 + $0x3] sm:$0x1] %vm1251, %v1963
    %1968 = vst.msk [vmem:[#allocation4 + $0xb] sm:$0x1] %vm1251, %v1964
    %v1969 = vsel %vm1071, %v1075, %v1074
    %v1971 = vsel %vm1076, %v1070, %v1043
    %1972 = vrot.lane.b32.xlu0 %v1971, 80
    %v1973 = vpop.permute.xlu0 %1972
    %v1975 = vsel %vm1081, %v1969, %v1973
    %1976 = vrot.lane.b32.xlu0 %v1084, 3
    %v1977 = vpop.permute.xlu0 %1976
    %v1979 = vsel %vm1081, %v866, %v1977
    %v1980 = vmul.f32 %v1922, %v950
    %v1981 = vmul.f32 %v1922, %v1061
    %1983 = vrot.lane.b32.xlu0 %v1980, 112
    %v1984 = vpop.permute.xlu0 %1983
    %v1986 = vsel %vm1091, %v1984, %v1981
    %v1988 = vsel %vm943, %v1986, 0
    %1990 = vmatprep.subr.mxu0 0.0
    %1991 = vmatpush1.msra.mxu0 %v1051
    %1992 = vmatprep.subr.mxu0 0.0
    %1993 = vmatpush1.msra.mxu0 %v1052
    %1994 = vmatprep.subr.mxu0 0.0
    %1995 = vmatpush1.msra.mxu0 %v1053
    %1996 = vmatprep.subr.mxu0 0.0
    %1997 = vmatpush1.msra.mxu0 %v1054
    %1998 = vmatprep.subr.mxu0 0.0
    %1999 = vmatpush1.msra.mxu0 0.0
    %2000 = vmatprep.subr.mxu0 0.0
    %2001 = vmatpush1.msra.mxu0 0.0
    %2002 = vmatprep.subr.mxu0 0.0
    %2003 = vmatpush1.msra.mxu0 0.0
    %2004 = vmatprep.subr.mxu0 0.0
    %2005 = vmatpush1.msra.mxu0 0.0
    %2006 = vmatprep.subr.mxu0 0.0
    %2007 = vmatpush1.msra.mxu0 0.0
    %2008 = vmatprep.subr.mxu0 0.0
    %2009 = vmatpush1.msra.mxu0 0.0
    %2010 = vmatprep.subr.mxu0 0.0
    %2011 = vmatpush1.msra.mxu0 0.0
    %2012 = vmatprep.subr.mxu0 0.0
    %2013 = vmatpush1.msra.mxu0 0.0
    %2014 = vmatprep.subr.mxu0 0.0
    %2015 = vmatpush1.msra.mxu0 0.0
    %2016 = vmatprep.subr.mxu0 0.0
    %2017 = vmatpush1.msra.mxu0 0.0
    %2018 = vmatprep.subr.mxu0 0.0
    %2019 = vmatpush1.msra.mxu0 0.0
    %2020 = vmatprep.subr.mxu0 0.0
    %2021 = vmatpush1.msra.mxu0 0.0
    %2022 = vmatprep.subr.mxu0 0.0
    %2023 = vmatpush1.msra.mxu0 0.0
    %2024 = vmatprep.subr.mxu0 0.0
    %2025 = vmatpush1.msra.mxu0 0.0
    %2026 = vmatprep.subr.mxu0 0.0
    %2027 = vmatpush1.msra.mxu0 0.0
    %2028 = vmatprep.subr.mxu0 0.0
    %2029 = vmatpush1.msra.mxu0 0.0
    %2030 = vmatprep.subr.mxu0 0.0
    %2031 = vmatpush1.msra.mxu0 0.0
    %2032 = vmatprep.subr.mxu0 0.0
    %2033 = vmatpush1.msra.mxu0 0.0
    %2034 = vmatprep.subr.mxu0 0.0
    %2035 = vmatpush1.msra.mxu0 0.0
    %2036 = vmatprep.subr.mxu0 0.0
    %2037 = vmatpush1.msra.mxu0 0.0
    %2038 = vmatprep.subr.mxu0 0.0
    %2039 = vmatpush1.msra.mxu0 0.0
    %2040 = vmatprep.subr.mxu0 0.0
    %2041 = vmatpush1.msra.mxu0 0.0
    %2042 = vmatprep.subr.mxu0 0.0
    %2043 = vmatpush1.msra.mxu0 0.0
    %2044 = vmatprep.subr.mxu0 0.0
    %2045 = vmatpush1.msra.mxu0 0.0
    %2046 = vmatprep.subr.mxu0 0.0
    %2047 = vmatpush1.msra.mxu0 0.0
    %2048 = vmatprep.subr.mxu0 0.0
    %2049 = vmatpush1.msra.mxu0 0.0
    %2050 = vmatprep.subr.mxu0 0.0
    %2051 = vmatpush1.msra.mxu0 0.0
    %2052 = vmatprep.subr.mxu0 0.0
    %2053 = vmatpush1.msra.mxu0 0.0
    %2054 = vmatprep.mubr.f32.mxu0 0.0
    %2055 = vmatmul.mubr.f32.gmra.mrb[0].mxu0 %v1988
    %v2056 = vpop.f32.mrb[0].mxu0
    %v2057 = vadd.f32 %v1067, %v2056
    %v2058 = vpop.f32.mrb[0].mxu0
    %2059 = vdwg.mxu0
    %v2060 = vadd.f32 %v1975, %v2057
    %v2061 = vxor.u32 %v2060, 2147483648
    %v2062 = vmul.f32 %v2061, 1.442695
    %v2063 = vpow.pop %v2062
    %v2064 = vadd.f32 %v2063, 1.0
    %v2065 = vrcp.pop %v2064
    %v2066 = vmul.f32 1.0, %v2065
    %2068 = vrot.lane.b32.xlu0 %v2057, 96
    %v2069 = vpop.permute.xlu0 %2068
    %v2071 = vmul.f32 %v2066, %v2069
    %2073 = vrot.lane.b32.xlu0 %v2071, 32
    %v2074 = vpop.permute.xlu0 %2073
    %v2076 = vadd.f32 %v1975, %v2074
    %v2077 = vtanh.pop %v2076
    %v2078 = vsub.f32 1.0, %v2066
    %2080 = vrot.lane.b32.xlu0 %v2077, 112
    %v2081 = vpop.permute.xlu0 %2080
    %v2083 = vmul.f32 %v2078, %v2081
    %v2084 = vmul.f32 %v2066, %v1922
    %v2085 = vadd.f32 %v2083, %v2084
    %2087 = vset.pattern.permute.xlu0 5
    %2088 = vperm.xlu0 %2087, %v1979
    %v2089 = vpop.permute.xlu0 %2088
    %v2091 = vmul.f32 %v2089, %v2085
    %v2092 = vsub.f32 1.0, %v1979
    %2094 = vset.pattern.permute.xlu0 5
    %2095 = vperm.xlu0 %2094, %v2092
    %v2096 = vpop.permute.xlu0 %2095
    %v2098 = vmul.f32 %v2096, %v1922
    %v2099 = vadd.f32 %v2091, %v2098
    %v2100 = vmul.f32 %v2089, %v2099
    %v2103 = vunpack.c.l.s4 1966171168
    %v2104 = vunpack.c.0.s8 %v2103
    %v2105 = vlaneseq
    %v2106 = vshrl.u32 %v2105, 7
    %v2107 = vsub.s32 %v2104, %v2106
    %v2108 = vrot.slane %v2100, %v2107
    %v2109 = vcombine.high %v2108, %v2108
    %v2111 = vunpack.c.l.s4 1966171168
    %v2112 = vunpack.c.0.s8 %v2111
    %v2113 = vlaneseq
    %v2114 = vshrl.u32 %v2113, 7
    %v2115 = vsub.s32 %v2112, %v2114
    %v2116 = vrot.slane %v2108, %v2115
    %v2118 = vunpack.c.l.s4 1966171168
    %v2119 = vunpack.c.0.s8 %v2118
    %v2120 = vlaneseq
    %v2121 = vshrl.u32 %v2120, 7
    %v2122 = vsub.s32 %v2119, %v2121
    %v2123 = vrot.slane %v2109, %v2122
    %v2124 = vlaneseq
    %v2125 = vshrl.u32 %v2124, 7
    %v2126 = vsub.s32 0, %v2125
    %v2127 = vrot.slane %v2116, %v2126
    %v2128 = vlaneseq
    %v2129 = vshrl.u32 %v2128, 7
    %v2130 = vsub.s32 0, %v2129
    %v2131 = vrot.slane %v2123, %v2130
    %2132 = vrot.lane.b32.xlu0 %v2127, 112
    %v2133 = vpop.permute.xlu0 %2132
    %2134 = vrot.lane.b32.xlu0 %v2131, 112
    %v2135 = vpop.permute.xlu0 %2134
    %2138 = vst.msk [vmem:[#allocation4 + $0x5] sm:$0x1] %vm1244, %v2133
    %2139 = vst.msk [vmem:[#allocation4 + $0xd] sm:$0x1] %vm1244, %v2135
    %v2140 = vcombine.high %v2116, %v2116
    %v2141 = vcombine.high %v2123, %v2123
    %2144 = vst.msk [vmem:[#allocation4 + $0x2] sm:$0x1] %vm1251, %v2140
    %2145 = vst.msk [vmem:[#allocation4 + $0xa] sm:$0x1] %vm1251, %v2141
    %v2146 = vrot.slane %v1043, 6
    %v2147 = vrot.slane %v1048, 5
    %v2148 = vsel %vm1071, %v2147, %v2146
    %v2150 = vrot.slane %v1043, 7
    %v2151 = vrot.slane %v1048, 6
    %v2152 = vsel %vm1076, %v2151, %v2150
    %2153 = vrot.lane.b32.xlu0 %v2152, 80
    %v2154 = vpop.permute.xlu0 %2153
    %v2156 = vsel %vm1081, %v2148, %v2154
    %2157 = vrot.lane.b32.xlu0 %v1084, 5
    %v2158 = vpop.permute.xlu0 %2157
    %v2160 = vsel %vm1081, %v866, %v2158
    %v2161 = vmul.f32 %v2099, %v950
    %v2162 = vmul.f32 %v2099, %v1061
    %2164 = vrot.lane.b32.xlu0 %v2161, 112
    %v2165 = vpop.permute.xlu0 %2164
    %v2167 = vsel %vm1091, %v2165, %v2162
    %v2169 = vsel %vm943, %v2167, 0
    %2171 = vmatprep.subr.mxu0 0.0
    %2172 = vmatpush1.msra.mxu0 %v1051
    %2173 = vmatprep.subr.mxu0 0.0
    %2174 = vmatpush1.msra.mxu0 %v1052
    %2175 = vmatprep.subr.mxu0 0.0
    %2176 = vmatpush1.msra.mxu0 %v1053
    %2177 = vmatprep.subr.mxu0 0.0
    %2178 = vmatpush1.msra.mxu0 %v1054
    %2179 = vmatprep.subr.mxu0 0.0
    %2180 = vmatpush1.msra.mxu0 0.0
    %2181 = vmatprep.subr.mxu0 0.0
    %2182 = vmatpush1.msra.mxu0 0.0
    %2183 = vmatprep.subr.mxu0 0.0
    %2184 = vmatpush1.msra.mxu0 0.0
    %2185 = vmatprep.subr.mxu0 0.0
    %2186 = vmatpush1.msra.mxu0 0.0
    %2187 = vmatprep.subr.mxu0 0.0
    %2188 = vmatpush1.msra.mxu0 0.0
    %2189 = vmatprep.subr.mxu0 0.0
    %2190 = vmatpush1.msra.mxu0 0.0
    %2191 = vmatprep.subr.mxu0 0.0
    %2192 = vmatpush1.msra.mxu0 0.0
    %2193 = vmatprep.subr.mxu0 0.0
    %2194 = vmatpush1.msra.mxu0 0.0
    %2195 = vmatprep.subr.mxu0 0.0
    %2196 = vmatpush1.msra.mxu0 0.0
    %2197 = vmatprep.subr.mxu0 0.0
    %2198 = vmatpush1.msra.mxu0 0.0
    %2199 = vmatprep.subr.mxu0 0.0
    %2200 = vmatpush1.msra.mxu0 0.0
    %2201 = vmatprep.subr.mxu0 0.0
    %2202 = vmatpush1.msra.mxu0 0.0
    %2203 = vmatprep.subr.mxu0 0.0
    %2204 = vmatpush1.msra.mxu0 0.0
    %2205 = vmatprep.subr.mxu0 0.0
    %2206 = vmatpush1.msra.mxu0 0.0
    %2207 = vmatprep.subr.mxu0 0.0
    %2208 = vmatpush1.msra.mxu0 0.0
    %2209 = vmatprep.subr.mxu0 0.0
    %2210 = vmatpush1.msra.mxu0 0.0
    %2211 = vmatprep.subr.mxu0 0.0
    %2212 = vmatpush1.msra.mxu0 0.0
    %2213 = vmatprep.subr.mxu0 0.0
    %2214 = vmatpush1.msra.mxu0 0.0
    %2215 = vmatprep.subr.mxu0 0.0
    %2216 = vmatpush1.msra.mxu0 0.0
    %2217 = vmatprep.subr.mxu0 0.0
    %2218 = vmatpush1.msra.mxu0 0.0
    %2219 = vmatprep.subr.mxu0 0.0
    %2220 = vmatpush1.msra.mxu0 0.0
    %2221 = vmatprep.subr.mxu0 0.0
    %2222 = vmatpush1.msra.mxu0 0.0
    %2223 = vmatprep.subr.mxu0 0.0
    %2224 = vmatpush1.msra.mxu0 0.0
    %2225 = vmatprep.subr.mxu0 0.0
    %2226 = vmatpush1.msra.mxu0 0.0
    %2227 = vmatprep.subr.mxu0 0.0
    %2228 = vmatpush1.msra.mxu0 0.0
    %2229 = vmatprep.subr.mxu0 0.0
    %2230 = vmatpush1.msra.mxu0 0.0
    %2231 = vmatprep.subr.mxu0 0.0
    %2232 = vmatpush1.msra.mxu0 0.0
    %2233 = vmatprep.subr.mxu0 0.0
    %2234 = vmatpush1.msra.mxu0 0.0
    %2235 = vmatprep.mubr.f32.mxu0 0.0
    %2236 = vmatmul.mubr.f32.gmra.mrb[0].mxu0 %v2169
    %v2237 = vpop.f32.mrb[0].mxu0
    %v2238 = vadd.f32 %v1067, %v2237
    %v2239 = vpop.f32.mrb[0].mxu0
    %2240 = vdwg.mxu0
    %v2241 = vadd.f32 %v2156, %v2238
    %v2242 = vxor.u32 %v2241, 2147483648
    %v2243 = vmul.f32 %v2242, 1.442695
    %v2244 = vpow.pop %v2243
    %v2245 = vadd.f32 %v2244, 1.0
    %v2246 = vrcp.pop %v2245
    %v2247 = vmul.f32 1.0, %v2246
    %2249 = vrot.lane.b32.xlu0 %v2238, 96
    %v2250 = vpop.permute.xlu0 %2249
    %v2252 = vmul.f32 %v2247, %v2250
    %2254 = vrot.lane.b32.xlu0 %v2252, 32
    %v2255 = vpop.permute.xlu0 %2254
    %v2257 = vadd.f32 %v2156, %v2255
    %v2258 = vtanh.pop %v2257
    %v2259 = vsub.f32 1.0, %v2247
    %2261 = vrot.lane.b32.xlu0 %v2258, 112
    %v2262 = vpop.permute.xlu0 %2261
    %v2264 = vmul.f32 %v2259, %v2262
    %v2265 = vmul.f32 %v2247, %v2099
    %v2266 = vadd.f32 %v2264, %v2265
    %2268 = vset.pattern.permute.xlu0 6
    %2269 = vperm.xlu0 %2268, %v2160
    %v2270 = vpop.permute.xlu0 %2269
    %v2272 = vmul.f32 %v2270, %v2266
    %v2273 = vsub.f32 1.0, %v2160
    %2275 = vset.pattern.permute.xlu0 6
    %2276 = vperm.xlu0 %2275, %v2273
    %v2277 = vpop.permute.xlu0 %2276
    %v2279 = vmul.f32 %v2277, %v2099
    %v2280 = vadd.f32 %v2272, %v2279
    %v2281 = vmul.f32 %v2270, %v2280
    %v2284 = vunpack.c.l.s4 1966171168
    %v2285 = vunpack.c.0.s8 %v2284
    %v2286 = vlaneseq
    %v2287 = vshrl.u32 %v2286, 7
    %v2288 = vsub.s32 %v2285, %v2287
    %v2289 = vrot.slane %v2281, %v2288
    %v2290 = vcombine.high %v2289, %v2289
    %v2292 = vunpack.c.l.s4 1966171168
    %v2293 = vunpack.c.0.s8 %v2292
    %v2294 = vlaneseq
    %v2295 = vshrl.u32 %v2294, 7
    %v2296 = vsub.s32 %v2293, %v2295
    %v2297 = vrot.slane %v2289, %v2296
    %v2299 = vunpack.c.l.s4 1966171168
    %v2300 = vunpack.c.0.s8 %v2299
    %v2301 = vlaneseq
    %v2302 = vshrl.u32 %v2301, 7
    %v2303 = vsub.s32 %v2300, %v2302
    %v2304 = vrot.slane %v2290, %v2303
    %v2305 = vlaneseq
    %v2306 = vshrl.u32 %v2305, 7
    %v2307 = vsub.s32 0, %v2306
    %v2308 = vrot.slane %v2297, %v2307
    %v2309 = vlaneseq
    %v2310 = vshrl.u32 %v2309, 7
    %v2311 = vsub.s32 0, %v2310
    %v2312 = vrot.slane %v2304, %v2311
    %2313 = vrot.lane.b32.xlu0 %v2308, 112
    %v2314 = vpop.permute.xlu0 %2313
    %2315 = vrot.lane.b32.xlu0 %v2312, 112
    %v2316 = vpop.permute.xlu0 %2315
    %2319 = vst.msk [vmem:[#allocation4 + $0x6] sm:$0x1] %vm1244, %v2314
    %2320 = vst.msk [vmem:[#allocation4 + $0xe] sm:$0x1] %vm1244, %v2316
    %v2321 = vcombine.high %v2297, %v2297
    %v2322 = vcombine.high %v2304, %v2304
    %2325 = vst.msk [vmem:[#allocation4 + $0x1] sm:$0x1] %vm1251, %v2321
    %2326 = vst.msk [vmem:[#allocation4 + $0x9] sm:$0x1] %vm1251, %v2322
    %v2327 = vsel %vm1071, %v2151, %v2150
    %v2329 = vsel %vm1076, %v2147, %v2146
    %2330 = vrot.lane.b32.xlu0 %v2329, 80
    %v2331 = vpop.permute.xlu0 %2330
    %v2333 = vsel %vm1081, %v2327, %v2331
    %2334 = vrot.lane.b32.xlu0 %v1084, 7
    %v2335 = vpop.permute.xlu0 %2334
    %v2337 = vsel %vm1081, %v866, %v2335
    %v2338 = vmul.f32 %v2280, %v950
    %v2339 = vmul.f32 %v2280, %v1061
    %2341 = vrot.lane.b32.xlu0 %v2338, 112
    %v2342 = vpop.permute.xlu0 %2341
    %v2344 = vsel %vm1091, %v2342, %v2339
    %v2346 = vsel %vm943, %v2344, 0
    %2348 = vmatprep.subr.mxu0 0.0
    %2349 = vmatpush1.msra.mxu0 %v1051
    %2350 = vmatprep.subr.mxu0 0.0
    %2351 = vmatpush1.msra.mxu0 %v1052
    %2352 = vmatprep.subr.mxu0 0.0
    %2353 = vmatpush1.msra.mxu0 %v1053
    %2354 = vmatprep.subr.mxu0 0.0
    %2355 = vmatpush1.msra.mxu0 %v1054
    %2356 = vmatprep.subr.mxu0 0.0
    %2357 = vmatpush1.msra.mxu0 0.0
    %2358 = vmatprep.subr.mxu0 0.0
    %2359 = vmatpush1.msra.mxu0 0.0
    %2360 = vmatprep.subr.mxu0 0.0
    %2361 = vmatpush1.msra.mxu0 0.0
    %2362 = vmatprep.subr.mxu0 0.0
    %2363 = vmatpush1.msra.mxu0 0.0
    %2364 = vmatprep.subr.mxu0 0.0
    %2365 = vmatpush1.msra.mxu0 0.0
    %2366 = vmatprep.subr.mxu0 0.0
    %2367 = vmatpush1.msra.mxu0 0.0
    %2368 = vmatprep.subr.mxu0 0.0
    %2369 = vmatpush1.msra.mxu0 0.0
    %2370 = vmatprep.subr.mxu0 0.0
    %2371 = vmatpush1.msra.mxu0 0.0
    %2372 = vmatprep.subr.mxu0 0.0
    %2373 = vmatpush1.msra.mxu0 0.0
    %2374 = vmatprep.subr.mxu0 0.0
    %2375 = vmatpush1.msra.mxu0 0.0
    %2376 = vmatprep.subr.mxu0 0.0
    %2377 = vmatpush1.msra.mxu0 0.0
    %2378 = vmatprep.subr.mxu0 0.0
    %2379 = vmatpush1.msra.mxu0 0.0
    %2380 = vmatprep.subr.mxu0 0.0
    %2381 = vmatpush1.msra.mxu0 0.0
    %2382 = vmatprep.subr.mxu0 0.0
    %2383 = vmatpush1.msra.mxu0 0.0
    %2384 = vmatprep.subr.mxu0 0.0
    %2385 = vmatpush1.msra.mxu0 0.0
    %2386 = vmatprep.subr.mxu0 0.0
    %2387 = vmatpush1.msra.mxu0 0.0
    %2388 = vmatprep.subr.mxu0 0.0
    %2389 = vmatpush1.msra.mxu0 0.0
    %2390 = vmatprep.subr.mxu0 0.0
    %2391 = vmatpush1.msra.mxu0 0.0
    %2392 = vmatprep.subr.mxu0 0.0
    %2393 = vmatpush1.msra.mxu0 0.0
    %2394 = vmatprep.subr.mxu0 0.0
    %2395 = vmatpush1.msra.mxu0 0.0
    %2396 = vmatprep.subr.mxu0 0.0
    %2397 = vmatpush1.msra.mxu0 0.0
    %2398 = vmatprep.subr.mxu0 0.0
    %2399 = vmatpush1.msra.mxu0 0.0
    %2400 = vmatprep.subr.mxu0 0.0
    %2401 = vmatpush1.msra.mxu0 0.0
    %2402 = vmatprep.subr.mxu0 0.0
    %2403 = vmatpush1.msra.mxu0 0.0
    %2404 = vmatprep.subr.mxu0 0.0
    %2405 = vmatpush1.msra.mxu0 0.0
    %2406 = vmatprep.subr.mxu0 0.0
    %2407 = vmatpush1.msra.mxu0 0.0
    %2408 = vmatprep.subr.mxu0 0.0
    %2409 = vmatpush1.msra.mxu0 0.0
    %2410 = vmatprep.subr.mxu0 0.0
    %2411 = vmatpush1.msra.mxu0 0.0
    %2412 = vmatprep.mubr.f32.mxu0 0.0
    %2413 = vmatmul.mubr.f32.gmra.mrb[0].mxu0 %v2346
    %v2414 = vpop.f32.mrb[0].mxu0
    %v2415 = vadd.f32 %v1067, %v2414
    %v2416 = vpop.f32.mrb[0].mxu0
    %2417 = vdwg.mxu0
    %v2418 = vadd.f32 %v2333, %v2415
    %v2419 = vxor.u32 %v2418, 2147483648
    %v2420 = vmul.f32 %v2419, 1.442695
    %v2421 = vpow.pop %v2420
    %v2422 = vadd.f32 %v2421, 1.0
    %v2423 = vrcp.pop %v2422
    %v2424 = vmul.f32 1.0, %v2423
    %2426 = vrot.lane.b32.xlu0 %v2415, 96
    %v2427 = vpop.permute.xlu0 %2426
    %v2429 = vmul.f32 %v2424, %v2427
    %2431 = vrot.lane.b32.xlu0 %v2429, 32
    %v2432 = vpop.permute.xlu0 %2431
    %v2434 = vadd.f32 %v2333, %v2432
    %v2435 = vtanh.pop %v2434
    %v2436 = vsub.f32 1.0, %v2424
    %2438 = vrot.lane.b32.xlu0 %v2435, 112
    %v2439 = vpop.permute.xlu0 %2438
    %v2441 = vmul.f32 %v2436, %v2439
    %v2442 = vmul.f32 %v2424, %v2280
    %v2443 = vadd.f32 %v2441, %v2442
    %2445 = vset.pattern.permute.xlu0 7
    %2446 = vperm.xlu0 %2445, %v2337
    %v2447 = vpop.permute.xlu0 %2446
    %v2449 = vmul.f32 %v2447, %v2443
    %v2450 = vsub.f32 1.0, %v2337
    %2452 = vset.pattern.permute.xlu0 7
    %2453 = vperm.xlu0 %2452, %v2450
    %v2454 = vpop.permute.xlu0 %2453
    %v2456 = vmul.f32 %v2454, %v2280
    %v2457 = vadd.f32 %v2449, %v2456
    %v2458 = vmul.f32 %v2447, %v2457
    %v2461 = vunpack.c.l.s4 1966171168
    %v2462 = vunpack.c.0.s8 %v2461
    %v2463 = vlaneseq
    %v2464 = vshrl.u32 %v2463, 7
    %v2465 = vsub.s32 %v2462, %v2464
    %v2466 = vrot.slane %v2458, %v2465
    %v2467 = vcombine.high %v2466, %v2466
    %v2469 = vunpack.c.l.s4 1966171168
    %v2470 = vunpack.c.0.s8 %v2469
    %v2471 = vlaneseq
    %v2472 = vshrl.u32 %v2471, 7
    %v2473 = vsub.s32 %v2470, %v2472
    %v2474 = vrot.slane %v2466, %v2473
    %v2476 = vunpack.c.l.s4 1966171168
    %v2477 = vunpack.c.0.s8 %v2476
    %v2478 = vlaneseq
    %v2479 = vshrl.u32 %v2478, 7
    %v2480 = vsub.s32 %v2477, %v2479
    %v2481 = vrot.slane %v2467, %v2480
    %v2482 = vlaneseq
    %v2483 = vshrl.u32 %v2482, 7
    %v2484 = vsub.s32 0, %v2483
    %v2485 = vrot.slane %v2474, %v2484
    %v2486 = vlaneseq
    %v2487 = vshrl.u32 %v2486, 7
    %v2488 = vsub.s32 0, %v2487
    %v2489 = vrot.slane %v2481, %v2488
    %2490 = vrot.lane.b32.xlu0 %v2485, 112
    %v2491 = vpop.permute.xlu0 %2490
    %2492 = vrot.lane.b32.xlu0 %v2489, 112
    %v2493 = vpop.permute.xlu0 %2492
    %2496 = vst.msk [vmem:[#allocation4 + $0x7] sm:$0x1] %vm1244, %v2491
    %2497 = vst.msk [vmem:[#allocation4 + $0xf] sm:$0x1] %vm1244, %v2493
    %v2498 = vcombine.high %v2474, %v2474
    %v2499 = vcombine.high %v2481, %v2481
    %2502 = vst.msk [vmem:[#allocation4] sm:$0x1] %vm1251, %v2498
    %2503 = vst.msk [vmem:[#allocation4 + $0x8] sm:$0x1] %vm1251, %v2499
    %v2504 = vld [vmem:[#allocation4] sm:$0xff]
    %v2505 = vld [vmem:[#allocation4 + $0x8] sm:$0xff]
    %v2506 = vld [vmem:[%s10] sm:$0xff]
    %v2507 = vld [vmem:[%s10 + $0x8] sm:$0xff]
    %v2508 = vld [vmem:[%s10 + $0x10] sm:$0xff]
    %v2509 = vld [vmem:[%s10 + $0x18] sm:$0xff]
    %v2510 = vld [vmem:[%s12] sm:$0x1]
    %v2512 = vlaneseq
    %v2513 = vshrl.u32 %v2512, 7
    %v2514 = vsub.s32 0, %v2513
    %v2515 = vrot.slane %v2510, %v2514
    %v2518 = vsel %vm943, %v2504, 0
    %v2521 = vsel %vm943, %v2505, 0
    %2523 = vmatprep.subr.mxu0 0.0
    %2524 = vmatpush1.msra.mxu0 %v2506
    %2525 = vmatprep.subr.mxu0 0.0
    %2526 = vmatpush1.msra.mxu0 %v2507
    %2527 = vmatprep.subr.mxu0 0.0
    %2528 = vmatpush1.msra.mxu0 %v2508
    %2529 = vmatprep.subr.mxu0 0.0
    %2530 = vmatpush1.msra.mxu0 %v2509
    %2531 = vmatprep.subr.mxu0 0.0
    %2532 = vmatpush1.msra.mxu0 0.0
    %2533 = vmatprep.subr.mxu0 0.0
    %2534 = vmatpush1.msra.mxu0 0.0
    %2535 = vmatprep.subr.mxu0 0.0
    %2536 = vmatpush1.msra.mxu0 0.0
    %2537 = vmatprep.subr.mxu0 0.0
    %2538 = vmatpush1.msra.mxu0 0.0
    %2539 = vmatprep.subr.mxu0 0.0
    %2540 = vmatpush1.msra.mxu0 0.0
    %2541 = vmatprep.subr.mxu0 0.0
    %2542 = vmatpush1.msra.mxu0 0.0
    %2543 = vmatprep.subr.mxu0 0.0
    %2544 = vmatpush1.msra.mxu0 0.0
    %2545 = vmatprep.subr.mxu0 0.0
    %2546 = vmatpush1.msra.mxu0 0.0
    %2547 = vmatprep.subr.mxu0 0.0
    %2548 = vmatpush1.msra.mxu0 0.0
    %2549 = vmatprep.subr.mxu0 0.0
    %2550 = vmatpush1.msra.mxu0 0.0
    %2551 = vmatprep.subr.mxu0 0.0
    %2552 = vmatpush1.msra.mxu0 0.0
    %2553 = vmatprep.subr.mxu0 0.0
    %2554 = vmatpush1.msra.mxu0 0.0
    %2555 = vmatprep.subr.mxu0 0.0
    %2556 = vmatpush1.msra.mxu0 0.0
    %2557 = vmatprep.subr.mxu0 0.0
    %2558 = vmatpush1.msra.mxu0 0.0
    %2559 = vmatprep.subr.mxu0 0.0
    %2560 = vmatpush1.msra.mxu0 0.0
    %2561 = vmatprep.subr.mxu0 0.0
    %2562 = vmatpush1.msra.mxu0 0.0
    %2563 = vmatprep.subr.mxu0 0.0
    %2564 = vmatpush1.msra.mxu0 0.0
    %2565 = vmatprep.subr.mxu0 0.0
    %2566 = vmatpush1.msra.mxu0 0.0
    %2567 = vmatprep.subr.mxu0 0.0
    %2568 = vmatpush1.msra.mxu0 0.0
    %2569 = vmatprep.subr.mxu0 0.0
    %2570 = vmatpush1.msra.mxu0 0.0
    %2571 = vmatprep.subr.mxu0 0.0
    %2572 = vmatpush1.msra.mxu0 0.0
    %2573 = vmatprep.subr.mxu0 0.0
    %2574 = vmatpush1.msra.mxu0 0.0
    %2575 = vmatprep.subr.mxu0 0.0
    %2576 = vmatpush1.msra.mxu0 0.0
    %2577 = vmatprep.subr.mxu0 0.0
    %2578 = vmatpush1.msra.mxu0 0.0
    %2579 = vmatprep.subr.mxu0 0.0
    %2580 = vmatpush1.msra.mxu0 0.0
    %2581 = vmatprep.subr.mxu0 0.0
    %2582 = vmatpush1.msra.mxu0 0.0
    %2583 = vmatprep.subr.mxu0 0.0
    %2584 = vmatpush1.msra.mxu0 0.0
    %2585 = vmatprep.subr.mxu0 0.0
    %2586 = vmatpush1.msra.mxu0 0.0
    %2587 = vmatprep.mubr.f32.mxu0 0.0
    %2588 = vmatmul.mubr.f32.gmra.mrb[0].mxu0 %v2518
    %v2589 = vpop.f32.mrb[0].mxu0
    %v2590 = vadd.f32 %v2515, %v2589
    %v2591 = vpop.f32.mrb[0].mxu0
    %2592 = vmatprep.mubr.f32.mxu0 0.0
    %2593 = vmatmul.mubr.f32.gmra.mrb[0].mxu0 %v2521
    %v2594 = vpop.f32.mrb[0].mxu0
    %v2595 = vadd.f32 %v2515, %v2594
    %v2596 = vpop.f32.mrb[0].mxu0
    %2597 = vdwg.mxu0
    %v2598 = vld [vmem:[%s11] sm:$0xff]
    %v2599 = vld [vmem:[%s11 + $0x8] sm:$0xff]
    %v2600 = vld [vmem:[%s11 + $0x10] sm:$0xff]
    %v2601 = vld [vmem:[%s11 + $0x18] sm:$0xff]
    %v2602 = vld [vmem:[%s13] sm:$0x3]
    %v2603 = vlaneseq
    %v2604 = vshrl.u32 %v2603, 7
    %v2605 = vsub.s32 0, %v2604
    %v2606 = vrot.slane %v2602, %v2605
    %v2607 = vmul.f32 %v950, %v2606
    %v2608 = vlaneseq
    %v2609 = vshrl.u32 %v2608, 7
    %v2610 = vsub.s32 1, %v2609
    %v2611 = vrot.slane %v2602, %v2610
    %v2612 = vmul.f32 %v1061, %v2611
    %v2613 = vadd.f32 %v2607, %v2612
    %v2616 = vrot.slane %v2595, 7
    %v2617 = vsel %vm1071, %v2616, %v2590
    %v2619 = vrot.slane %v2590, 5
    %v2620 = vrot.slane %v2595, 4
    %v2621 = vsel %vm1076, %v2620, %v2619
    %2622 = vrot.lane.b32.xlu0 %v2621, 80
    %v2623 = vpop.permute.xlu0 %2622
    %v2625 = vsel %vm1081, %v2617, %v2623
    %2626 = vmatprep.subr.mxu0 0.0
    %2627 = vmatpush1.msra.mxu0 %v2598
    %2628 = vmatprep.subr.mxu0 0.0
    %2629 = vmatpush1.msra.mxu0 %v2599
    %2630 = vmatprep.subr.mxu0 0.0
    %2631 = vmatpush1.msra.mxu0 %v2600
    %2632 = vmatprep.subr.mxu0 0.0
    %2633 = vmatpush1.msra.mxu0 %v2601
    %2634 = vmatprep.subr.mxu0 0.0
    %2635 = vmatpush1.msra.mxu0 0.0
    %2636 = vmatprep.subr.mxu0 0.0
    %2637 = vmatpush1.msra.mxu0 0.0
    %2638 = vmatprep.subr.mxu0 0.0
    %2639 = vmatpush1.msra.mxu0 0.0
    %2640 = vmatprep.subr.mxu0 0.0
    %2641 = vmatpush1.msra.mxu0 0.0
    %2642 = vmatprep.subr.mxu0 0.0
    %2643 = vmatpush1.msra.mxu0 0.0
    %2644 = vmatprep.subr.mxu0 0.0
    %2645 = vmatpush1.msra.mxu0 0.0
    %2646 = vmatprep.subr.mxu0 0.0
    %2647 = vmatpush1.msra.mxu0 0.0
    %2648 = vmatprep.subr.mxu0 0.0
    %2649 = vmatpush1.msra.mxu0 0.0
    %2650 = vmatprep.subr.mxu0 0.0
    %2651 = vmatpush1.msra.mxu0 0.0
    %2652 = vmatprep.subr.mxu0 0.0
    %2653 = vmatpush1.msra.mxu0 0.0
    %2654 = vmatprep.subr.mxu0 0.0
    %2655 = vmatpush1.msra.mxu0 0.0
    %2656 = vmatprep.subr.mxu0 0.0
    %2657 = vmatpush1.msra.mxu0 0.0
    %2658 = vmatprep.subr.mxu0 0.0
    %2659 = vmatpush1.msra.mxu0 0.0
    %2660 = vmatprep.subr.mxu0 0.0
    %2661 = vmatpush1.msra.mxu0 0.0
    %2662 = vmatprep.subr.mxu0 0.0
    %2663 = vmatpush1.msra.mxu0 0.0
    %2664 = vmatprep.subr.mxu0 0.0
    %2665 = vmatpush1.msra.mxu0 0.0
    %2666 = vmatprep.subr.mxu0 0.0
    %2667 = vmatpush1.msra.mxu0 0.0
    %2668 = vmatprep.subr.mxu0 0.0
    %2669 = vmatpush1.msra.mxu0 0.0
    %2670 = vmatprep.subr.mxu0 0.0
    %2671 = vmatpush1.msra.mxu0 0.0
    %2672 = vmatprep.subr.mxu0 0.0
    %2673 = vmatpush1.msra.mxu0 0.0
    %2674 = vmatprep.subr.mxu0 0.0
    %2675 = vmatpush1.msra.mxu0 0.0
    %2676 = vmatprep.subr.mxu0 0.0
    %2677 = vmatpush1.msra.mxu0 0.0
    %2678 = vmatprep.subr.mxu0 0.0
    %2679 = vmatpush1.msra.mxu0 0.0
    %2680 = vmatprep.subr.mxu0 0.0
    %2681 = vmatpush1.msra.mxu0 0.0
    %2682 = vmatprep.subr.mxu0 0.0
    %2683 = vmatpush1.msra.mxu0 0.0
    %2684 = vmatprep.subr.mxu0 0.0
    %2685 = vmatpush1.msra.mxu0 0.0
    %2686 = vmatprep.subr.mxu0 0.0
    %2687 = vmatpush1.msra.mxu0 0.0
    %2688 = vmatprep.subr.mxu0 0.0
    %2689 = vmatpush1.msra.mxu0 0.0
    %2690 = vmatprep.mubr.f32.mxu0 0.0
    %2691 = vmatmul.mubr.f32.gmra.mrb[0].mxu0 %v1094
    %v2692 = vpop.f32.mrb[0].mxu0
    %v2693 = vadd.f32 %v2613, %v2692
    %v2694 = vpop.f32.mrb[0].mxu0
    %2695 = vdwg.mxu0
    %v2696 = vadd.f32 %v2625, %v2693
    %v2697 = vxor.u32 %v2696, 2147483648
    %v2698 = vmul.f32 %v2697, 1.442695
    %v2699 = vpow.pop %v2698
    %v2700 = vadd.f32 %v2699, 1.0
    %v2701 = vrcp.pop %v2700
    %v2702 = vmul.f32 1.0, %v2701
    %2704 = vrot.lane.b32.xlu0 %v2693, 96
    %v2705 = vpop.permute.xlu0 %2704
    %v2707 = vmul.f32 %v2702, %v2705
    %2709 = vrot.lane.b32.xlu0 %v2707, 32
    %v2710 = vpop.permute.xlu0 %2709
    %v2712 = vadd.f32 %v2625, %v2710
    %v2713 = vtanh.pop %v2712
    %v2714 = vsub.f32 1.0, %v2702
    %2716 = vrot.lane.b32.xlu0 %v2713, 112
    %v2717 = vpop.permute.xlu0 %2716
    %v2719 = vmul.f32 %v2714, %v2717
    %v2720 = vmul.f32 %v2702, 0.0
    %v2721 = vadd.f32 %v2719, %v2720
    %v2722 = vmul.f32 %v1195, %v2721
    %v2723 = vadd.f32 %v2722, %v1204
    %v2724 = vmul.f32 %v1195, %v2723
    %v2727 = vunpack.c.l.s4 1966171168
    %v2728 = vunpack.c.0.s8 %v2727
    %v2729 = vlaneseq
    %v2730 = vshrl.u32 %v2729, 7
    %v2731 = vsub.s32 %v2728, %v2730
    %v2732 = vrot.slane %v2724, %v2731
    %v2733 = vcombine.high %v2732, %v2732
    %v2735 = vunpack.c.l.s4 1966171168
    %v2736 = vunpack.c.0.s8 %v2735
    %v2737 = vlaneseq
    %v2738 = vshrl.u32 %v2737, 7
    %v2739 = vsub.s32 %v2736, %v2738
    %v2740 = vrot.slane %v2732, %v2739
    %v2742 = vunpack.c.l.s4 1966171168
    %v2743 = vunpack.c.0.s8 %v2742
    %v2744 = vlaneseq
    %v2745 = vshrl.u32 %v2744, 7
    %v2746 = vsub.s32 %v2743, %v2745
    %v2747 = vrot.slane %v2733, %v2746
    %v2748 = vlaneseq
    %v2749 = vshrl.u32 %v2748, 7
    %v2750 = vsub.s32 0, %v2749
    %v2751 = vrot.slane %v2740, %v2750
    %v2752 = vlaneseq
    %v2753 = vshrl.u32 %v2752, 7
    %v2754 = vsub.s32 0, %v2753
    %v2755 = vrot.slane %v2747, %v2754
    %2756 = vrot.lane.b32.xlu0 %v2751, 112
    %v2757 = vpop.permute.xlu0 %2756
    %2758 = vrot.lane.b32.xlu0 %v2755, 112
    %v2759 = vpop.permute.xlu0 %2758
    %2762 = vst.msk [vmem:[#allocation5 + $0x1] sm:$0x1] %vm1244, %v2757
    %2763 = vst.msk [vmem:[#allocation5 + $0x11] sm:$0x1] %vm1244, %v2759
    %v2764 = vcombine.high %v2740, %v2740
    %v2765 = vcombine.high %v2747, %v2747
    %2768 = vst.msk [vmem:[#allocation5 + $0x8] sm:$0x1] %vm1251, %v2764
    %2769 = vst.msk [vmem:[#allocation5 + $0x18] sm:$0x1] %vm1251, %v2765
    %v2770 = vrot.slane %v2590, 1
    %v2771 = vsel %vm1071, %v2595, %v2770
    %v2773 = vrot.slane %v2590, 4
    %v2774 = vrot.slane %v2595, 3
    %v2775 = vsel %vm1076, %v2774, %v2773
    %2776 = vrot.lane.b32.xlu0 %v2775, 80
    %v2777 = vpop.permute.xlu0 %2776
    %v2779 = vsel %vm1081, %v2771, %v2777
    %v2780 = vmul.f32 %v2723, %v950
    %v2781 = vmul.f32 %v2723, %v1061
    %2783 = vrot.lane.b32.xlu0 %v2780, 112
    %v2784 = vpop.permute.xlu0 %2783
    %v2786 = vsel %vm1091, %v2784, %v2781
    %v2788 = vsel %vm943, %v2786, 0
    %2790 = vmatprep.subr.mxu0 0.0
    %2791 = vmatpush1.msra.mxu0 %v2598
    %2792 = vmatprep.subr.mxu0 0.0
    %2793 = vmatpush1.msra.mxu0 %v2599
    %2794 = vmatprep.subr.mxu0 0.0
    %2795 = vmatpush1.msra.mxu0 %v2600
    %2796 = vmatprep.subr.mxu0 0.0
    %2797 = vmatpush1.msra.mxu0 %v2601
    %2798 = vmatprep.subr.mxu0 0.0
    %2799 = vmatpush1.msra.mxu0 0.0
    %2800 = vmatprep.subr.mxu0 0.0
    %2801 = vmatpush1.msra.mxu0 0.0
    %2802 = vmatprep.subr.mxu0 0.0
    %2803 = vmatpush1.msra.mxu0 0.0
    %2804 = vmatprep.subr.mxu0 0.0
    %2805 = vmatpush1.msra.mxu0 0.0
    %2806 = vmatprep.subr.mxu0 0.0
    %2807 = vmatpush1.msra.mxu0 0.0
    %2808 = vmatprep.subr.mxu0 0.0
    %2809 = vmatpush1.msra.mxu0 0.0
    %2810 = vmatprep.subr.mxu0 0.0
    %2811 = vmatpush1.msra.mxu0 0.0
    %2812 = vmatprep.subr.mxu0 0.0
    %2813 = vmatpush1.msra.mxu0 0.0
    %2814 = vmatprep.subr.mxu0 0.0
    %2815 = vmatpush1.msra.mxu0 0.0
    %2816 = vmatprep.subr.mxu0 0.0
    %2817 = vmatpush1.msra.mxu0 0.0
    %2818 = vmatprep.subr.mxu0 0.0
    %2819 = vmatpush1.msra.mxu0 0.0
    %2820 = vmatprep.subr.mxu0 0.0
    %2821 = vmatpush1.msra.mxu0 0.0
    %2822 = vmatprep.subr.mxu0 0.0
    %2823 = vmatpush1.msra.mxu0 0.0
    %2824 = vmatprep.subr.mxu0 0.0
    %2825 = vmatpush1.msra.mxu0 0.0
    %2826 = vmatprep.subr.mxu0 0.0
    %2827 = vmatpush1.msra.mxu0 0.0
    %2828 = vmatprep.subr.mxu0 0.0
    %2829 = vmatpush1.msra.mxu0 0.0
    %2830 = vmatprep.subr.mxu0 0.0
    %2831 = vmatpush1.msra.mxu0 0.0
    %2832 = vmatprep.subr.mxu0 0.0
    %2833 = vmatpush1.msra.mxu0 0.0
    %2834 = vmatprep.subr.mxu0 0.0
    %2835 = vmatpush1.msra.mxu0 0.0
    %2836 = vmatprep.subr.mxu0 0.0
    %2837 = vmatpush1.msra.mxu0 0.0
    %2838 = vmatprep.subr.mxu0 0.0
    %2839 = vmatpush1.msra.mxu0 0.0
    %2840 = vmatprep.subr.mxu0 0.0
    %2841 = vmatpush1.msra.mxu0 0.0
    %2842 = vmatprep.subr.mxu0 0.0
    %2843 = vmatpush1.msra.mxu0 0.0
    %2844 = vmatprep.subr.mxu0 0.0
    %2845 = vmatpush1.msra.mxu0 0.0
    %2846 = vmatprep.subr.mxu0 0.0
    %2847 = vmatpush1.msra.mxu0 0.0
    %2848 = vmatprep.subr.mxu0 0.0
    %2849 = vmatpush1.msra.mxu0 0.0
    %2850 = vmatprep.subr.mxu0 0.0
    %2851 = vmatpush1.msra.mxu0 0.0
    %2852 = vmatprep.subr.mxu0 0.0
    %2853 = vmatpush1.msra.mxu0 0.0
    %2854 = vmatprep.mubr.f32.mxu0 0.0
    %2855 = vmatmul.mubr.f32.gmra.mrb[0].mxu0 %v2788
    %v2856 = vpop.f32.mrb[0].mxu0
    %v2857 = vadd.f32 %v2613, %v2856
    %v2858 = vpop.f32.mrb[0].mxu0
    %2859 = vdwg.mxu0
    %v2860 = vadd.f32 %v2779, %v2857
    %v2861 = vxor.u32 %v2860, 2147483648
    %v2862 = vmul.f32 %v2861, 1.442695
    %v2863 = vpow.pop %v2862
    %v2864 = vadd.f32 %v2863, 1.0
    %v2865 = vrcp.pop %v2864
    %v2866 = vmul.f32 1.0, %v2865
    %2868 = vrot.lane.b32.xlu0 %v2857, 96
    %v2869 = vpop.permute.xlu0 %2868
    %v2871 = vmul.f32 %v2866, %v2869
    %2873 = vrot.lane.b32.xlu0 %v2871, 32
    %v2874 = vpop.permute.xlu0 %2873
    %v2876 = vadd.f32 %v2779, %v2874
    %v2877 = vtanh.pop %v2876
    %v2878 = vsub.f32 1.0, %v2866
    %2880 = vrot.lane.b32.xlu0 %v2877, 112
    %v2881 = vpop.permute.xlu0 %2880
    %v2883 = vmul.f32 %v2878, %v2881
    %v2884 = vmul.f32 %v2866, %v2723
    %v2885 = vadd.f32 %v2883, %v2884
    %v2886 = vmul.f32 %v1377, %v2885
    %v2887 = vmul.f32 %v1384, %v2723
    %v2888 = vadd.f32 %v2886, %v2887
    %v2889 = vmul.f32 %v1377, %v2888
    %v2892 = vunpack.c.l.s4 1966171168
    %v2893 = vunpack.c.0.s8 %v2892
    %v2894 = vlaneseq
    %v2895 = vshrl.u32 %v2894, 7
    %v2896 = vsub.s32 %v2893, %v2895
    %v2897 = vrot.slane %v2889, %v2896
    %v2898 = vcombine.high %v2897, %v2897
    %v2900 = vunpack.c.l.s4 1966171168
    %v2901 = vunpack.c.0.s8 %v2900
    %v2902 = vlaneseq
    %v2903 = vshrl.u32 %v2902, 7
    %v2904 = vsub.s32 %v2901, %v2903
    %v2905 = vrot.slane %v2897, %v2904
    %v2907 = vunpack.c.l.s4 1966171168
    %v2908 = vunpack.c.0.s8 %v2907
    %v2909 = vlaneseq
    %v2910 = vshrl.u32 %v2909, 7
    %v2911 = vsub.s32 %v2908, %v2910
    %v2912 = vrot.slane %v2898, %v2911
    %v2913 = vlaneseq
    %v2914 = vshrl.u32 %v2913, 7
    %v2915 = vsub.s32 0, %v2914
    %v2916 = vrot.slane %v2905, %v2915
    %v2917 = vlaneseq
    %v2918 = vshrl.u32 %v2917, 7
    %v2919 = vsub.s32 0, %v2918
    %v2920 = vrot.slane %v2912, %v2919
    %2921 = vrot.lane.b32.xlu0 %v2916, 112
    %v2922 = vpop.permute.xlu0 %2921
    %2923 = vrot.lane.b32.xlu0 %v2920, 112
    %v2924 = vpop.permute.xlu0 %2923
    %2927 = vst.msk [vmem:[#allocation5 + $0x2] sm:$0x1] %vm1244, %v2922
    %2928 = vst.msk [vmem:[#allocation5 + $0x12] sm:$0x1] %vm1244, %v2924
    %v2929 = vcombine.high %v2905, %v2905
    %v2930 = vcombine.high %v2912, %v2912
    %2933 = vst.msk [vmem:[#allocation5 + $0x7] sm:$0x1] %vm1251, %v2929
    %2934 = vst.msk [vmem:[#allocation5 + $0x17] sm:$0x1] %vm1251, %v2930
    %v2935 = vrot.slane %v2590, 2
    %v2936 = vrot.slane %v2595, 1
    %v2937 = vsel %vm1071, %v2936, %v2935
    %v2939 = vrot.slane %v2590, 3
    %v2940 = vrot.slane %v2595, 2
    %v2941 = vsel %vm1076, %v2940, %v2939
    %2942 = vrot.lane.b32.xlu0 %v2941, 80
    %v2943 = vpop.permute.xlu0 %2942
    %v2945 = vsel %vm1081, %v2937, %v2943
    %v2946 = vmul.f32 %v2888, %v950
    %v2947 = vmul.f32 %v2888, %v1061
    %2949 = vrot.lane.b32.xlu0 %v2946, 112
    %v2950 = vpop.permute.xlu0 %2949
    %v2952 = vsel %vm1091, %v2950, %v2947
    %v2954 = vsel %vm943, %v2952, 0
    %2956 = vmatprep.subr.mxu0 0.0
    %2957 = vmatpush1.msra.mxu0 %v2598
    %2958 = vmatprep.subr.mxu0 0.0
    %2959 = vmatpush1.msra.mxu0 %v2599
    %2960 = vmatprep.subr.mxu0 0.0
    %2961 = vmatpush1.msra.mxu0 %v2600
    %2962 = vmatprep.subr.mxu0 0.0
    %2963 = vmatpush1.msra.mxu0 %v2601
    %2964 = vmatprep.subr.mxu0 0.0
    %2965 = vmatpush1.msra.mxu0 0.0
    %2966 = vmatprep.subr.mxu0 0.0
    %2967 = vmatpush1.msra.mxu0 0.0
    %2968 = vmatprep.subr.mxu0 0.0
    %2969 = vmatpush1.msra.mxu0 0.0
    %2970 = vmatprep.subr.mxu0 0.0
    %2971 = vmatpush1.msra.mxu0 0.0
    %2972 = vmatprep.subr.mxu0 0.0
    %2973 = vmatpush1.msra.mxu0 0.0
    %2974 = vmatprep.subr.mxu0 0.0
    %2975 = vmatpush1.msra.mxu0 0.0
    %2976 = vmatprep.subr.mxu0 0.0
    %2977 = vmatpush1.msra.mxu0 0.0
    %2978 = vmatprep.subr.mxu0 0.0
    %2979 = vmatpush1.msra.mxu0 0.0
    %2980 = vmatprep.subr.mxu0 0.0
    %2981 = vmatpush1.msra.mxu0 0.0
    %2982 = vmatprep.subr.mxu0 0.0
    %2983 = vmatpush1.msra.mxu0 0.0
    %2984 = vmatprep.subr.mxu0 0.0
    %2985 = vmatpush1.msra.mxu0 0.0
    %2986 = vmatprep.subr.mxu0 0.0
    %2987 = vmatpush1.msra.mxu0 0.0
    %2988 = vmatprep.subr.mxu0 0.0
    %2989 = vmatpush1.msra.mxu0 0.0
    %2990 = vmatprep.subr.mxu0 0.0
    %2991 = vmatpush1.msra.mxu0 0.0
    %2992 = vmatprep.subr.mxu0 0.0
    %2993 = vmatpush1.msra.mxu0 0.0
    %2994 = vmatprep.subr.mxu0 0.0
    %2995 = vmatpush1.msra.mxu0 0.0
    %2996 = vmatprep.subr.mxu0 0.0
    %2997 = vmatpush1.msra.mxu0 0.0
    %2998 = vmatprep.subr.mxu0 0.0
    %2999 = vmatpush1.msra.mxu0 0.0
    %3000 = vmatprep.subr.mxu0 0.0
    %3001 = vmatpush1.msra.mxu0 0.0
    %3002 = vmatprep.subr.mxu0 0.0
    %3003 = vmatpush1.msra.mxu0 0.0
    %3004 = vmatprep.subr.mxu0 0.0
    %3005 = vmatpush1.msra.mxu0 0.0
    %3006 = vmatprep.subr.mxu0 0.0
    %3007 = vmatpush1.msra.mxu0 0.0
    %3008 = vmatprep.subr.mxu0 0.0
    %3009 = vmatpush1.msra.mxu0 0.0
    %3010 = vmatprep.subr.mxu0 0.0
    %3011 = vmatpush1.msra.mxu0 0.0
    %3012 = vmatprep.subr.mxu0 0.0
    %3013 = vmatpush1.msra.mxu0 0.0
    %3014 = vmatprep.subr.mxu0 0.0
    %3015 = vmatpush1.msra.mxu0 0.0
    %3016 = vmatprep.subr.mxu0 0.0
    %3017 = vmatpush1.msra.mxu0 0.0
    %3018 = vmatprep.subr.mxu0 0.0
    %3019 = vmatpush1.msra.mxu0 0.0
    %3020 = vmatprep.mubr.f32.mxu0 0.0
    %3021 = vmatmul.mubr.f32.gmra.mrb[0].mxu0 %v2954
    %v3022 = vpop.f32.mrb[0].mxu0
    %v3023 = vadd.f32 %v2613, %v3022
    %v3024 = vpop.f32.mrb[0].mxu0
    %3025 = vdwg.mxu0
    %v3026 = vadd.f32 %v2945, %v3023
    %v3027 = vxor.u32 %v3026, 2147483648
    %v3028 = vmul.f32 %v3027, 1.442695
    %v3029 = vpow.pop %v3028
    %v3030 = vadd.f32 %v3029, 1.0
    %v3031 = vrcp.pop %v3030
    %v3032 = vmul.f32 1.0, %v3031
    %3034 = vrot.lane.b32.xlu0 %v3023, 96
    %v3035 = vpop.permute.xlu0 %3034
    %v3037 = vmul.f32 %v3032, %v3035
    %3039 = vrot.lane.b32.xlu0 %v3037, 32
    %v3040 = vpop.permute.xlu0 %3039
    %v3042 = vadd.f32 %v2945, %v3040
    %v3043 = vtanh.pop %v3042
    %v3044 = vsub.f32 1.0, %v3032
    %3046 = vrot.lane.b32.xlu0 %v3043, 112
    %v3047 = vpop.permute.xlu0 %3046
    %v3049 = vmul.f32 %v3044, %v3047
    %v3050 = vmul.f32 %v3032, %v2888
    %v3051 = vadd.f32 %v3049, %v3050
    %v3052 = vmul.f32 %v1558, %v3051
    %v3053 = vmul.f32 %v1565, %v2888
    %v3054 = vadd.f32 %v3052, %v3053
    %v3055 = vmul.f32 %v1558, %v3054
    %v3058 = vunpack.c.l.s4 1966171168
    %v3059 = vunpack.c.0.s8 %v3058
    %v3060 = vlaneseq
    %v3061 = vshrl.u32 %v3060, 7
    %v3062 = vsub.s32 %v3059, %v3061
    %v3063 = vrot.slane %v3055, %v3062
    %v3064 = vcombine.high %v3063, %v3063
    %v3066 = vunpack.c.l.s4 1966171168
    %v3067 = vunpack.c.0.s8 %v3066
    %v3068 = vlaneseq
    %v3069 = vshrl.u32 %v3068, 7
    %v3070 = vsub.s32 %v3067, %v3069
    %v3071 = vrot.slane %v3063, %v3070
    %v3073 = vunpack.c.l.s4 1966171168
    %v3074 = vunpack.c.0.s8 %v3073
    %v3075 = vlaneseq
    %v3076 = vshrl.u32 %v3075, 7
    %v3077 = vsub.s32 %v3074, %v3076
    %v3078 = vrot.slane %v3064, %v3077
    %v3079 = vlaneseq
    %v3080 = vshrl.u32 %v3079, 7
    %v3081 = vsub.s32 0, %v3080
    %v3082 = vrot.slane %v3071, %v3081
    %v3083 = vlaneseq
    %v3084 = vshrl.u32 %v3083, 7
    %v3085 = vsub.s32 0, %v3084
    %v3086 = vrot.slane %v3078, %v3085
    %3087 = vrot.lane.b32.xlu0 %v3082, 112
    %v3088 = vpop.permute.xlu0 %3087
    %3089 = vrot.lane.b32.xlu0 %v3086, 112
    %v3090 = vpop.permute.xlu0 %3089
    %3093 = vst.msk [vmem:[#allocation5 + $0x3] sm:$0x1] %vm1244, %v3088
    %3094 = vst.msk [vmem:[#allocation5 + $0x13] sm:$0x1] %vm1244, %v3090
    %v3095 = vcombine.high %v3071, %v3071
    %v3096 = vcombine.high %v3078, %v3078
    %3099 = vst.msk [vmem:[#allocation5 + $0x6] sm:$0x1] %vm1251, %v3095
    %3100 = vst.msk [vmem:[#allocation5 + $0x16] sm:$0x1] %vm1251, %v3096
    %v3101 = vsel %vm1071, %v2940, %v2939
    %v3103 = vsel %vm1076, %v2936, %v2935
    %3104 = vrot.lane.b32.xlu0 %v3103, 80
    %v3105 = vpop.permute.xlu0 %3104
    %v3107 = vsel %vm1081, %v3101, %v3105
    %v3108 = vmul.f32 %v3054, %v950
    %v3109 = vmul.f32 %v3054, %v1061
    %3111 = vrot.lane.b32.xlu0 %v3108, 112
    %v3112 = vpop.permute.xlu0 %3111
    %v3114 = vsel %vm1091, %v3112, %v3109
    %v3116 = vsel %vm943, %v3114, 0
    %3118 = vmatprep.subr.mxu0 0.0
    %3119 = vmatpush1.msra.mxu0 %v2598
    %3120 = vmatprep.subr.mxu0 0.0
    %3121 = vmatpush1.msra.mxu0 %v2599
    %3122 = vmatprep.subr.mxu0 0.0
    %3123 = vmatpush1.msra.mxu0 %v2600
    %3124 = vmatprep.subr.mxu0 0.0
    %3125 = vmatpush1.msra.mxu0 %v2601
    %3126 = vmatprep.subr.mxu0 0.0
    %3127 = vmatpush1.msra.mxu0 0.0
    %3128 = vmatprep.subr.mxu0 0.0
    %3129 = vmatpush1.msra.mxu0 0.0
    %3130 = vmatprep.subr.mxu0 0.0
    %3131 = vmatpush1.msra.mxu0 0.0
    %3132 = vmatprep.subr.mxu0 0.0
    %3133 = vmatpush1.msra.mxu0 0.0
    %3134 = vmatprep.subr.mxu0 0.0
    %3135 = vmatpush1.msra.mxu0 0.0
    %3136 = vmatprep.subr.mxu0 0.0
    %3137 = vmatpush1.msra.mxu0 0.0
    %3138 = vmatprep.subr.mxu0 0.0
    %3139 = vmatpush1.msra.mxu0 0.0
    %3140 = vmatprep.subr.mxu0 0.0
    %3141 = vmatpush1.msra.mxu0 0.0
    %3142 = vmatprep.subr.mxu0 0.0
    %3143 = vmatpush1.msra.mxu0 0.0
    %3144 = vmatprep.subr.mxu0 0.0
    %3145 = vmatpush1.msra.mxu0 0.0
    %3146 = vmatprep.subr.mxu0 0.0
    %3147 = vmatpush1.msra.mxu0 0.0
    %3148 = vmatprep.subr.mxu0 0.0
    %3149 = vmatpush1.msra.mxu0 0.0
    %3150 = vmatprep.subr.mxu0 0.0
    %3151 = vmatpush1.msra.mxu0 0.0
    %3152 = vmatprep.subr.mxu0 0.0
    %3153 = vmatpush1.msra.mxu0 0.0
    %3154 = vmatprep.subr.mxu0 0.0
    %3155 = vmatpush1.msra.mxu0 0.0
    %3156 = vmatprep.subr.mxu0 0.0
    %3157 = vmatpush1.msra.mxu0 0.0
    %3158 = vmatprep.subr.mxu0 0.0
    %3159 = vmatpush1.msra.mxu0 0.0
    %3160 = vmatprep.subr.mxu0 0.0
    %3161 = vmatpush1.msra.mxu0 0.0
    %3162 = vmatprep.subr.mxu0 0.0
    %3163 = vmatpush1.msra.mxu0 0.0
    %3164 = vmatprep.subr.mxu0 0.0
    %3165 = vmatpush1.msra.mxu0 0.0
    %3166 = vmatprep.subr.mxu0 0.0
    %3167 = vmatpush1.msra.mxu0 0.0
    %3168 = vmatprep.subr.mxu0 0.0
    %3169 = vmatpush1.msra.mxu0 0.0
    %3170 = vmatprep.subr.mxu0 0.0
    %3171 = vmatpush1.msra.mxu0 0.0
    %3172 = vmatprep.subr.mxu0 0.0
    %3173 = vmatpush1.msra.mxu0 0.0
    %3174 = vmatprep.subr.mxu0 0.0
    %3175 = vmatpush1.msra.mxu0 0.0
    %3176 = vmatprep.subr.mxu0 0.0
    %3177 = vmatpush1.msra.mxu0 0.0
    %3178 = vmatprep.subr.mxu0 0.0
    %3179 = vmatpush1.msra.mxu0 0.0
    %3180 = vmatprep.subr.mxu0 0.0
    %3181 = vmatpush1.msra.mxu0 0.0
    %3182 = vmatprep.mubr.f32.mxu0 0.0
    %3183 = vmatmul.mubr.f32.gmra.mrb[0].mxu0 %v3116
    %v3184 = vpop.f32.mrb[0].mxu0
    %v3185 = vadd.f32 %v2613, %v3184
    %v3186 = vpop.f32.mrb[0].mxu0
    %3187 = vdwg.mxu0
    %v3188 = vadd.f32 %v3107, %v3185
    %v3189 = vxor.u32 %v3188, 2147483648
    %v3190 = vmul.f32 %v3189, 1.442695
    %v3191 = vpow.pop %v3190
    %v3192 = vadd.f32 %v3191, 1.0
    %v3193 = vrcp.pop %v3192
    %v3194 = vmul.f32 1.0, %v3193
    %3196 = vrot.lane.b32.xlu0 %v3185, 96
    %v3197 = vpop.permute.xlu0 %3196
    %v3199 = vmul.f32 %v3194, %v3197
    %3201 = vrot.lane.b32.xlu0 %v3199, 32
    %v3202 = vpop.permute.xlu0 %3201
    %v3204 = vadd.f32 %v3107, %v3202
    %v3205 = vtanh.pop %v3204
    %v3206 = vsub.f32 1.0, %v3194
    %3208 = vrot.lane.b32.xlu0 %v3205, 112
    %v3209 = vpop.permute.xlu0 %3208
    %v3211 = vmul.f32 %v3206, %v3209
    %v3212 = vmul.f32 %v3194, %v3054
    %v3213 = vadd.f32 %v3211, %v3212
    %v3214 = vmul.f32 %v1735, %v3213
    %v3215 = vmul.f32 %v1742, %v3054
    %v3216 = vadd.f32 %v3214, %v3215
    %v3217 = vmul.f32 %v1735, %v3216
    %v3220 = vunpack.c.l.s4 1966171168
    %v3221 = vunpack.c.0.s8 %v3220
    %v3222 = vlaneseq
    %v3223 = vshrl.u32 %v3222, 7
    %v3224 = vsub.s32 %v3221, %v3223
    %v3225 = vrot.slane %v3217, %v3224
    %v3226 = vcombine.high %v3225, %v3225
    %v3228 = vunpack.c.l.s4 1966171168
    %v3229 = vunpack.c.0.s8 %v3228
    %v3230 = vlaneseq
    %v3231 = vshrl.u32 %v3230, 7
    %v3232 = vsub.s32 %v3229, %v3231
    %v3233 = vrot.slane %v3225, %v3232
    %v3235 = vunpack.c.l.s4 1966171168
    %v3236 = vunpack.c.0.s8 %v3235
    %v3237 = vlaneseq
    %v3238 = vshrl.u32 %v3237, 7
    %v3239 = vsub.s32 %v3236, %v3238
    %v3240 = vrot.slane %v3226, %v3239
    %v3241 = vlaneseq
    %v3242 = vshrl.u32 %v3241, 7
    %v3243 = vsub.s32 0, %v3242
    %v3244 = vrot.slane %v3233, %v3243
    %v3245 = vlaneseq
    %v3246 = vshrl.u32 %v3245, 7
    %v3247 = vsub.s32 0, %v3246
    %v3248 = vrot.slane %v3240, %v3247
    %3249 = vrot.lane.b32.xlu0 %v3244, 112
    %v3250 = vpop.permute.xlu0 %3249
    %3251 = vrot.lane.b32.xlu0 %v3248, 112
    %v3252 = vpop.permute.xlu0 %3251
    %3255 = vst.msk [vmem:[#allocation5 + $0x4] sm:$0x1] %vm1244, %v3250
    %3256 = vst.msk [vmem:[#allocation5 + $0x14] sm:$0x1] %vm1244, %v3252
    %v3257 = vcombine.high %v3233, %v3233
    %v3258 = vcombine.high %v3240, %v3240
    %3261 = vst.msk [vmem:[#allocation5 + $0x5] sm:$0x1] %vm1251, %v3257
    %3262 = vst.msk [vmem:[#allocation5 + $0x15] sm:$0x1] %vm1251, %v3258
    %v3263 = vsel %vm1071, %v2774, %v2773
    %v3265 = vsel %vm1076, %v2595, %v2770
    %3266 = vrot.lane.b32.xlu0 %v3265, 80
    %v3267 = vpop.permute.xlu0 %3266
    %v3269 = vsel %vm1081, %v3263, %v3267
    %v3270 = vmul.f32 %v3216, %v950
    %v3271 = vmul.f32 %v3216, %v1061
    %3273 = vrot.lane.b32.xlu0 %v3270, 112
    %v3274 = vpop.permute.xlu0 %3273
    %v3276 = vsel %vm1091, %v3274, %v3271
    %v3278 = vsel %vm943, %v3276, 0
    %3280 = vmatprep.subr.mxu0 0.0
    %3281 = vmatpush1.msra.mxu0 %v2598
    %3282 = vmatprep.subr.mxu0 0.0
    %3283 = vmatpush1.msra.mxu0 %v2599
    %3284 = vmatprep.subr.mxu0 0.0
    %3285 = vmatpush1.msra.mxu0 %v2600
    %3286 = vmatprep.subr.mxu0 0.0
    %3287 = vmatpush1.msra.mxu0 %v2601
    %3288 = vmatprep.subr.mxu0 0.0
    %3289 = vmatpush1.msra.mxu0 0.0
    %3290 = vmatprep.subr.mxu0 0.0
    %3291 = vmatpush1.msra.mxu0 0.0
    %3292 = vmatprep.subr.mxu0 0.0
    %3293 = vmatpush1.msra.mxu0 0.0
    %3294 = vmatprep.subr.mxu0 0.0
    %3295 = vmatpush1.msra.mxu0 0.0
    %3296 = vmatprep.subr.mxu0 0.0
    %3297 = vmatpush1.msra.mxu0 0.0
    %3298 = vmatprep.subr.mxu0 0.0
    %3299 = vmatpush1.msra.mxu0 0.0
    %3300 = vmatprep.subr.mxu0 0.0
    %3301 = vmatpush1.msra.mxu0 0.0
    %3302 = vmatprep.subr.mxu0 0.0
    %3303 = vmatpush1.msra.mxu0 0.0
    %3304 = vmatprep.subr.mxu0 0.0
    %3305 = vmatpush1.msra.mxu0 0.0
    %3306 = vmatprep.subr.mxu0 0.0
    %3307 = vmatpush1.msra.mxu0 0.0
    %3308 = vmatprep.subr.mxu0 0.0
    %3309 = vmatpush1.msra.mxu0 0.0
    %3310 = vmatprep.subr.mxu0 0.0
    %3311 = vmatpush1.msra.mxu0 0.0
    %3312 = vmatprep.subr.mxu0 0.0
    %3313 = vmatpush1.msra.mxu0 0.0
    %3314 = vmatprep.subr.mxu0 0.0
    %3315 = vmatpush1.msra.mxu0 0.0
    %3316 = vmatprep.subr.mxu0 0.0
    %3317 = vmatpush1.msra.mxu0 0.0
    %3318 = vmatprep.subr.mxu0 0.0
    %3319 = vmatpush1.msra.mxu0 0.0
    %3320 = vmatprep.subr.mxu0 0.0
    %3321 = vmatpush1.msra.mxu0 0.0
    %3322 = vmatprep.subr.mxu0 0.0
    %3323 = vmatpush1.msra.mxu0 0.0
    %3324 = vmatprep.subr.mxu0 0.0
    %3325 = vmatpush1.msra.mxu0 0.0
    %3326 = vmatprep.subr.mxu0 0.0
    %3327 = vmatpush1.msra.mxu0 0.0
    %3328 = vmatprep.subr.mxu0 0.0
    %3329 = vmatpush1.msra.mxu0 0.0
    %3330 = vmatprep.subr.mxu0 0.0
    %3331 = vmatpush1.msra.mxu0 0.0
    %3332 = vmatprep.subr.mxu0 0.0
    %3333 = vmatpush1.msra.mxu0 0.0
    %3334 = vmatprep.subr.mxu0 0.0
    %3335 = vmatpush1.msra.mxu0 0.0
    %3336 = vmatprep.subr.mxu0 0.0
    %3337 = vmatpush1.msra.mxu0 0.0
    %3338 = vmatprep.subr.mxu0 0.0
    %3339 = vmatpush1.msra.mxu0 0.0
    %3340 = vmatprep.subr.mxu0 0.0
    %3341 = vmatpush1.msra.mxu0 0.0
    %3342 = vmatprep.subr.mxu0 0.0
    %3343 = vmatpush1.msra.mxu0 0.0
    %3344 = vmatprep.mubr.f32.mxu0 0.0
    %3345 = vmatmul.mubr.f32.gmra.mrb[0].mxu0 %v3278
    %v3346 = vpop.f32.mrb[0].mxu0
    %v3347 = vadd.f32 %v2613, %v3346
    %v3348 = vpop.f32.mrb[0].mxu0
    %3349 = vdwg.mxu0
    %v3350 = vadd.f32 %v3269, %v3347
    %v3351 = vxor.u32 %v3350, 2147483648
    %v3352 = vmul.f32 %v3351, 1.442695
    %v3353 = vpow.pop %v3352
    %v3354 = vadd.f32 %v3353, 1.0
    %v3355 = vrcp.pop %v3354
    %v3356 = vmul.f32 1.0, %v3355
    %3358 = vrot.lane.b32.xlu0 %v3347, 96
    %v3359 = vpop.permute.xlu0 %3358
    %v3361 = vmul.f32 %v3356, %v3359
    %3363 = vrot.lane.b32.xlu0 %v3361, 32
    %v3364 = vpop.permute.xlu0 %3363
    %v3366 = vadd.f32 %v3269, %v3364
    %v3367 = vtanh.pop %v3366
    %v3368 = vsub.f32 1.0, %v3356
    %3370 = vrot.lane.b32.xlu0 %v3367, 112
    %v3371 = vpop.permute.xlu0 %3370
    %v3373 = vmul.f32 %v3368, %v3371
    %v3374 = vmul.f32 %v3356, %v3216
    %v3375 = vadd.f32 %v3373, %v3374
    %v3376 = vmul.f32 %v1912, %v3375
    %v3377 = vmul.f32 %v1919, %v3216
    %v3378 = vadd.f32 %v3376, %v3377
    %v3379 = vmul.f32 %v1912, %v3378
    %v3382 = vunpack.c.l.s4 1966171168
    %v3383 = vunpack.c.0.s8 %v3382
    %v3384 = vlaneseq
    %v3385 = vshrl.u32 %v3384, 7
    %v3386 = vsub.s32 %v3383, %v3385
    %v3387 = vrot.slane %v3379, %v3386
    %v3388 = vcombine.high %v3387, %v3387
    %v3390 = vunpack.c.l.s4 1966171168
    %v3391 = vunpack.c.0.s8 %v3390
    %v3392 = vlaneseq
    %v3393 = vshrl.u32 %v3392, 7
    %v3394 = vsub.s32 %v3391, %v3393
    %v3395 = vrot.slane %v3387, %v3394
    %v3397 = vunpack.c.l.s4 1966171168
    %v3398 = vunpack.c.0.s8 %v3397
    %v3399 = vlaneseq
    %v3400 = vshrl.u32 %v3399, 7
    %v3401 = vsub.s32 %v3398, %v3400
    %v3402 = vrot.slane %v3388, %v3401
    %v3403 = vlaneseq
    %v3404 = vshrl.u32 %v3403, 7
    %v3405 = vsub.s32 0, %v3404
    %v3406 = vrot.slane %v3395, %v3405
    %v3407 = vlaneseq
    %v3408 = vshrl.u32 %v3407, 7
    %v3409 = vsub.s32 0, %v3408
    %v3410 = vrot.slane %v3402, %v3409
    %3411 = vrot.lane.b32.xlu0 %v3406, 112
    %v3412 = vpop.permute.xlu0 %3411
    %3413 = vrot.lane.b32.xlu0 %v3410, 112
    %v3414 = vpop.permute.xlu0 %3413
    %3417 = vst.msk [vmem:[#allocation5 + $0x5] sm:$0x1] %vm1244, %v3412
    %3418 = vst.msk [vmem:[#allocation5 + $0x15] sm:$0x1] %vm1244, %v3414
    %v3419 = vcombine.high %v3395, %v3395
    %v3420 = vcombine.high %v3402, %v3402
    %3423 = vst.msk [vmem:[#allocation5 + $0x4] sm:$0x1] %vm1251, %v3419
    %3424 = vst.msk [vmem:[#allocation5 + $0x14] sm:$0x1] %vm1251, %v3420
    %v3425 = vsel %vm1071, %v2620, %v2619
    %v3427 = vsel %vm1076, %v2616, %v2590
    %3428 = vrot.lane.b32.xlu0 %v3427, 80
    %v3429 = vpop.permute.xlu0 %3428
    %v3431 = vsel %vm1081, %v3425, %v3429
    %v3432 = vmul.f32 %v3378, %v950
    %v3433 = vmul.f32 %v3378, %v1061
    %3435 = vrot.lane.b32.xlu0 %v3432, 112
    %v3436 = vpop.permute.xlu0 %3435
    %v3438 = vsel %vm1091, %v3436, %v3433
    %v3440 = vsel %vm943, %v3438, 0
    %3442 = vmatprep.subr.mxu0 0.0
    %3443 = vmatpush1.msra.mxu0 %v2598
    %3444 = vmatprep.subr.mxu0 0.0
    %3445 = vmatpush1.msra.mxu0 %v2599
    %3446 = vmatprep.subr.mxu0 0.0
    %3447 = vmatpush1.msra.mxu0 %v2600
    %3448 = vmatprep.subr.mxu0 0.0
    %3449 = vmatpush1.msra.mxu0 %v2601
    %3450 = vmatprep.subr.mxu0 0.0
    %3451 = vmatpush1.msra.mxu0 0.0
    %3452 = vmatprep.subr.mxu0 0.0
    %3453 = vmatpush1.msra.mxu0 0.0
    %3454 = vmatprep.subr.mxu0 0.0
    %3455 = vmatpush1.msra.mxu0 0.0
    %3456 = vmatprep.subr.mxu0 0.0
    %3457 = vmatpush1.msra.mxu0 0.0
    %3458 = vmatprep.subr.mxu0 0.0
    %3459 = vmatpush1.msra.mxu0 0.0
    %3460 = vmatprep.subr.mxu0 0.0
    %3461 = vmatpush1.msra.mxu0 0.0
    %3462 = vmatprep.subr.mxu0 0.0
    %3463 = vmatpush1.msra.mxu0 0.0
    %3464 = vmatprep.subr.mxu0 0.0
    %3465 = vmatpush1.msra.mxu0 0.0
    %3466 = vmatprep.subr.mxu0 0.0
    %3467 = vmatpush1.msra.mxu0 0.0
    %3468 = vmatprep.subr.mxu0 0.0
    %3469 = vmatpush1.msra.mxu0 0.0
    %3470 = vmatprep.subr.mxu0 0.0
    %3471 = vmatpush1.msra.mxu0 0.0
    %3472 = vmatprep.subr.mxu0 0.0
    %3473 = vmatpush1.msra.mxu0 0.0
    %3474 = vmatprep.subr.mxu0 0.0
    %3475 = vmatpush1.msra.mxu0 0.0
    %3476 = vmatprep.subr.mxu0 0.0
    %3477 = vmatpush1.msra.mxu0 0.0
    %3478 = vmatprep.subr.mxu0 0.0
    %3479 = vmatpush1.msra.mxu0 0.0
    %3480 = vmatprep.subr.mxu0 0.0
    %3481 = vmatpush1.msra.mxu0 0.0
    %3482 = vmatprep.subr.mxu0 0.0
    %3483 = vmatpush1.msra.mxu0 0.0
    %3484 = vmatprep.subr.mxu0 0.0
    %3485 = vmatpush1.msra.mxu0 0.0
    %3486 = vmatprep.subr.mxu0 0.0
    %3487 = vmatpush1.msra.mxu0 0.0
    %3488 = vmatprep.subr.mxu0 0.0
    %3489 = vmatpush1.msra.mxu0 0.0
    %3490 = vmatprep.subr.mxu0 0.0
    %3491 = vmatpush1.msra.mxu0 0.0
    %3492 = vmatprep.subr.mxu0 0.0
    %3493 = vmatpush1.msra.mxu0 0.0
    %3494 = vmatprep.subr.mxu0 0.0
    %3495 = vmatpush1.msra.mxu0 0.0
    %3496 = vmatprep.subr.mxu0 0.0
    %3497 = vmatpush1.msra.mxu0 0.0
    %3498 = vmatprep.subr.mxu0 0.0
    %3499 = vmatpush1.msra.mxu0 0.0
    %3500 = vmatprep.subr.mxu0 0.0
    %3501 = vmatpush1.msra.mxu0 0.0
    %3502 = vmatprep.subr.mxu0 0.0
    %3503 = vmatpush1.msra.mxu0 0.0
    %3504 = vmatprep.subr.mxu0 0.0
    %3505 = vmatpush1.msra.mxu0 0.0
    %3506 = vmatprep.mubr.f32.mxu0 0.0
    %3507 = vmatmul.mubr.f32.gmra.mrb[0].mxu0 %v3440
    %v3508 = vpop.f32.mrb[0].mxu0
    %v3509 = vadd.f32 %v2613, %v3508
    %v3510 = vpop.f32.mrb[0].mxu0
    %3511 = vdwg.mxu0
    %v3512 = vadd.f32 %v3431, %v3509
    %v3513 = vxor.u32 %v3512, 2147483648
    %v3514 = vmul.f32 %v3513, 1.442695
    %v3515 = vpow.pop %v3514
    %v3516 = vadd.f32 %v3515, 1.0
    %v3517 = vrcp.pop %v3516
    %v3518 = vmul.f32 1.0, %v3517
    %3520 = vrot.lane.b32.xlu0 %v3509, 96
    %v3521 = vpop.permute.xlu0 %3520
    %v3523 = vmul.f32 %v3518, %v3521
    %3525 = vrot.lane.b32.xlu0 %v3523, 32
    %v3526 = vpop.permute.xlu0 %3525
    %v3528 = vadd.f32 %v3431, %v3526
    %v3529 = vtanh.pop %v3528
    %v3530 = vsub.f32 1.0, %v3518
    %3532 = vrot.lane.b32.xlu0 %v3529, 112
    %v3533 = vpop.permute.xlu0 %3532
    %v3535 = vmul.f32 %v3530, %v3533
    %v3536 = vmul.f32 %v3518, %v3378
    %v3537 = vadd.f32 %v3535, %v3536
    %v3538 = vmul.f32 %v2089, %v3537
    %v3539 = vmul.f32 %v2096, %v3378
    %v3540 = vadd.f32 %v3538, %v3539
    %v3541 = vmul.f32 %v2089, %v3540
    %v3544 = vunpack.c.l.s4 1966171168
    %v3545 = vunpack.c.0.s8 %v3544
    %v3546 = vlaneseq
    %v3547 = vshrl.u32 %v3546, 7
    %v3548 = vsub.s32 %v3545, %v3547
    %v3549 = vrot.slane %v3541, %v3548
    %v3550 = vcombine.high %v3549, %v3549
    %v3552 = vunpack.c.l.s4 1966171168
    %v3553 = vunpack.c.0.s8 %v3552
    %v3554 = vlaneseq
    %v3555 = vshrl.u32 %v3554, 7
    %v3556 = vsub.s32 %v3553, %v3555
    %v3557 = vrot.slane %v3549, %v3556
    %v3559 = vunpack.c.l.s4 1966171168
    %v3560 = vunpack.c.0.s8 %v3559
    %v3561 = vlaneseq
    %v3562 = vshrl.u32 %v3561, 7
    %v3563 = vsub.s32 %v3560, %v3562
    %v3564 = vrot.slane %v3550, %v3563
    %v3565 = vlaneseq
    %v3566 = vshrl.u32 %v3565, 7
    %v3567 = vsub.s32 0, %v3566
    %v3568 = vrot.slane %v3557, %v3567
    %v3569 = vlaneseq
    %v3570 = vshrl.u32 %v3569, 7
    %v3571 = vsub.s32 0, %v3570
    %v3572 = vrot.slane %v3564, %v3571
    %3573 = vrot.lane.b32.xlu0 %v3568, 112
    %v3574 = vpop.permute.xlu0 %3573
    %3575 = vrot.lane.b32.xlu0 %v3572, 112
    %v3576 = vpop.permute.xlu0 %3575
    %3579 = vst.msk [vmem:[#allocation5 + $0x6] sm:$0x1] %vm1244, %v3574
    %3580 = vst.msk [vmem:[#allocation5 + $0x16] sm:$0x1] %vm1244, %v3576
    %v3581 = vcombine.high %v3557, %v3557
    %v3582 = vcombine.high %v3564, %v3564
    %3585 = vst.msk [vmem:[#allocation5 + $0x3] sm:$0x1] %vm1251, %v3581
    %3586 = vst.msk [vmem:[#allocation5 + $0x13] sm:$0x1] %vm1251, %v3582
    %v3587 = vrot.slane %v2590, 6
    %v3588 = vrot.slane %v2595, 5
    %v3589 = vsel %vm1071, %v3588, %v3587
    %v3591 = vrot.slane %v2590, 7
    %v3592 = vrot.slane %v2595, 6
    %v3593 = vsel %vm1076, %v3592, %v3591
    %3594 = vrot.lane.b32.xlu0 %v3593, 80
    %v3595 = vpop.permute.xlu0 %3594
    %v3597 = vsel %vm1081, %v3589, %v3595
    %v3598 = vmul.f32 %v3540, %v950
    %v3599 = vmul.f32 %v3540, %v1061
    %3601 = vrot.lane.b32.xlu0 %v3598, 112
    %v3602 = vpop.permute.xlu0 %3601
    %v3604 = vsel %vm1091, %v3602, %v3599
    %v3606 = vsel %vm943, %v3604, 0
    %3608 = vmatprep.subr.mxu0 0.0
    %3609 = vmatpush1.msra.mxu0 %v2598
    %3610 = vmatprep.subr.mxu0 0.0
    %3611 = vmatpush1.msra.mxu0 %v2599
    %3612 = vmatprep.subr.mxu0 0.0
    %3613 = vmatpush1.msra.mxu0 %v2600
    %3614 = vmatprep.subr.mxu0 0.0
    %3615 = vmatpush1.msra.mxu0 %v2601
    %3616 = vmatprep.subr.mxu0 0.0
    %3617 = vmatpush1.msra.mxu0 0.0
    %3618 = vmatprep.subr.mxu0 0.0
    %3619 = vmatpush1.msra.mxu0 0.0
    %3620 = vmatprep.subr.mxu0 0.0
    %3621 = vmatpush1.msra.mxu0 0.0
    %3622 = vmatprep.subr.mxu0 0.0
    %3623 = vmatpush1.msra.mxu0 0.0
    %3624 = vmatprep.subr.mxu0 0.0
    %3625 = vmatpush1.msra.mxu0 0.0
    %3626 = vmatprep.subr.mxu0 0.0
    %3627 = vmatpush1.msra.mxu0 0.0
    %3628 = vmatprep.subr.mxu0 0.0
    %3629 = vmatpush1.msra.mxu0 0.0
    %3630 = vmatprep.subr.mxu0 0.0
    %3631 = vmatpush1.msra.mxu0 0.0
    %3632 = vmatprep.subr.mxu0 0.0
    %3633 = vmatpush1.msra.mxu0 0.0
    %3634 = vmatprep.subr.mxu0 0.0
    %3635 = vmatpush1.msra.mxu0 0.0
    %3636 = vmatprep.subr.mxu0 0.0
    %3637 = vmatpush1.msra.mxu0 0.0
    %3638 = vmatprep.subr.mxu0 0.0
    %3639 = vmatpush1.msra.mxu0 0.0
    %3640 = vmatprep.subr.mxu0 0.0
    %3641 = vmatpush1.msra.mxu0 0.0
    %3642 = vmatprep.subr.mxu0 0.0
    %3643 = vmatpush1.msra.mxu0 0.0
    %3644 = vmatprep.subr.mxu0 0.0
    %3645 = vmatpush1.msra.mxu0 0.0
    %3646 = vmatprep.subr.mxu0 0.0
    %3647 = vmatpush1.msra.mxu0 0.0
    %3648 = vmatprep.subr.mxu0 0.0
    %3649 = vmatpush1.msra.mxu0 0.0
    %3650 = vmatprep.subr.mxu0 0.0
    %3651 = vmatpush1.msra.mxu0 0.0
    %3652 = vmatprep.subr.mxu0 0.0
    %3653 = vmatpush1.msra.mxu0 0.0
    %3654 = vmatprep.subr.mxu0 0.0
    %3655 = vmatpush1.msra.mxu0 0.0
    %3656 = vmatprep.subr.mxu0 0.0
    %3657 = vmatpush1.msra.mxu0 0.0
    %3658 = vmatprep.subr.mxu0 0.0
    %3659 = vmatpush1.msra.mxu0 0.0
    %3660 = vmatprep.subr.mxu0 0.0
    %3661 = vmatpush1.msra.mxu0 0.0
    %3662 = vmatprep.subr.mxu0 0.0
    %3663 = vmatpush1.msra.mxu0 0.0
    %3664 = vmatprep.subr.mxu0 0.0
    %3665 = vmatpush1.msra.mxu0 0.0
    %3666 = vmatprep.subr.mxu0 0.0
    %3667 = vmatpush1.msra.mxu0 0.0
    %3668 = vmatprep.subr.mxu0 0.0
    %3669 = vmatpush1.msra.mxu0 0.0
    %3670 = vmatprep.subr.mxu0 0.0
    %3671 = vmatpush1.msra.mxu0 0.0
    %3672 = vmatprep.mubr.f32.mxu0 0.0
    %3673 = vmatmul.mubr.f32.gmra.mrb[0].mxu0 %v3606
    %v3674 = vpop.f32.mrb[0].mxu0
    %v3675 = vadd.f32 %v2613, %v3674
    %v3676 = vpop.f32.mrb[0].mxu0
    %3677 = vdwg.mxu0
    %v3678 = vadd.f32 %v3597, %v3675
    %v3679 = vxor.u32 %v3678, 2147483648
    %v3680 = vmul.f32 %v3679, 1.442695
    %v3681 = vpow.pop %v3680
    %v3682 = vadd.f32 %v3681, 1.0
    %v3683 = vrcp.pop %v3682
    %v3684 = vmul.f32 1.0, %v3683
    %3686 = vrot.lane.b32.xlu0 %v3675, 96
    %v3687 = vpop.permute.xlu0 %3686
    %v3689 = vmul.f32 %v3684, %v3687
    %3691 = vrot.lane.b32.xlu0 %v3689, 32
    %v3692 = vpop.permute.xlu0 %3691
    %v3694 = vadd.f32 %v3597, %v3692
    %v3695 = vtanh.pop %v3694
    %v3696 = vsub.f32 1.0, %v3684
    %3698 = vrot.lane.b32.xlu0 %v3695, 112
    %v3699 = vpop.permute.xlu0 %3698
    %v3701 = vmul.f32 %v3696, %v3699
    %v3702 = vmul.f32 %v3684, %v3540
    %v3703 = vadd.f32 %v3701, %v3702
    %v3704 = vmul.f32 %v2270, %v3703
    %v3705 = vmul.f32 %v2277, %v3540
    %v3706 = vadd.f32 %v3704, %v3705
    %v3707 = vmul.f32 %v2270, %v3706
    %v3710 = vunpack.c.l.s4 1966171168
    %v3711 = vunpack.c.0.s8 %v3710
    %v3712 = vlaneseq
    %v3713 = vshrl.u32 %v3712, 7
    %v3714 = vsub.s32 %v3711, %v3713
    %v3715 = vrot.slane %v3707, %v3714
    %v3716 = vcombine.high %v3715, %v3715
    %v3718 = vunpack.c.l.s4 1966171168
    %v3719 = vunpack.c.0.s8 %v3718
    %v3720 = vlaneseq
    %v3721 = vshrl.u32 %v3720, 7
    %v3722 = vsub.s32 %v3719, %v3721
    %v3723 = vrot.slane %v3715, %v3722
    %v3725 = vunpack.c.l.s4 1966171168
    %v3726 = vunpack.c.0.s8 %v3725
    %v3727 = vlaneseq
    %v3728 = vshrl.u32 %v3727, 7
    %v3729 = vsub.s32 %v3726, %v3728
    %v3730 = vrot.slane %v3716, %v3729
    %v3731 = vlaneseq
    %v3732 = vshrl.u32 %v3731, 7
    %v3733 = vsub.s32 0, %v3732
    %v3734 = vrot.slane %v3723, %v3733
    %v3735 = vlaneseq
    %v3736 = vshrl.u32 %v3735, 7
    %v3737 = vsub.s32 0, %v3736
    %v3738 = vrot.slane %v3730, %v3737
    %3739 = vrot.lane.b32.xlu0 %v3734, 112
    %v3740 = vpop.permute.xlu0 %3739
    %3741 = vrot.lane.b32.xlu0 %v3738, 112
    %v3742 = vpop.permute.xlu0 %3741
    %3745 = vst.msk [vmem:[#allocation5 + $0x7] sm:$0x1] %vm1244, %v3740
    %3746 = vst.msk [vmem:[#allocation5 + $0x17] sm:$0x1] %vm1244, %v3742
    %v3747 = vcombine.high %v3723, %v3723
    %v3748 = vcombine.high %v3730, %v3730
    %3751 = vst.msk [vmem:[#allocation5 + $0x2] sm:$0x1] %vm1251, %v3747
    %3752 = vst.msk [vmem:[#allocation5 + $0x12] sm:$0x1] %vm1251, %v3748
    %v3753 = vsel %vm1071, %v3592, %v3591
    %v3755 = vsel %vm1076, %v3588, %v3587
    %3756 = vrot.lane.b32.xlu0 %v3755, 80
    %v3757 = vpop.permute.xlu0 %3756
    %v3759 = vsel %vm1081, %v3753, %v3757
    %v3760 = vmul.f32 %v3706, %v950
    %v3761 = vmul.f32 %v3706, %v1061
    %3763 = vrot.lane.b32.xlu0 %v3760, 112
    %v3764 = vpop.permute.xlu0 %3763
    %v3766 = vsel %vm1091, %v3764, %v3761
    %v3768 = vsel %vm943, %v3766, 0
    %3770 = vmatprep.subr.mxu0 0.0
    %3771 = vmatpush1.msra.mxu0 %v2598
    %3772 = vmatprep.subr.mxu0 0.0
    %3773 = vmatpush1.msra.mxu0 %v2599
    %3774 = vmatprep.subr.mxu0 0.0
    %3775 = vmatpush1.msra.mxu0 %v2600
    %3776 = vmatprep.subr.mxu0 0.0
    %3777 = vmatpush1.msra.mxu0 %v2601
    %3778 = vmatprep.subr.mxu0 0.0
    %3779 = vmatpush1.msra.mxu0 0.0
    %3780 = vmatprep.subr.mxu0 0.0
    %3781 = vmatpush1.msra.mxu0 0.0
    %3782 = vmatprep.subr.mxu0 0.0
    %3783 = vmatpush1.msra.mxu0 0.0
    %3784 = vmatprep.subr.mxu0 0.0
    %3785 = vmatpush1.msra.mxu0 0.0
    %3786 = vmatprep.subr.mxu0 0.0
    %3787 = vmatpush1.msra.mxu0 0.0
    %3788 = vmatprep.subr.mxu0 0.0
    %3789 = vmatpush1.msra.mxu0 0.0
    %3790 = vmatprep.subr.mxu0 0.0
    %3791 = vmatpush1.msra.mxu0 0.0
    %3792 = vmatprep.subr.mxu0 0.0
    %3793 = vmatpush1.msra.mxu0 0.0
    %3794 = vmatprep.subr.mxu0 0.0
    %3795 = vmatpush1.msra.mxu0 0.0
    %3796 = vmatprep.subr.mxu0 0.0
    %3797 = vmatpush1.msra.mxu0 0.0
    %3798 = vmatprep.subr.mxu0 0.0
    %3799 = vmatpush1.msra.mxu0 0.0
    %3800 = vmatprep.subr.mxu0 0.0
    %3801 = vmatpush1.msra.mxu0 0.0
    %3802 = vmatprep.subr.mxu0 0.0
    %3803 = vmatpush1.msra.mxu0 0.0
    %3804 = vmatprep.subr.mxu0 0.0
    %3805 = vmatpush1.msra.mxu0 0.0
    %3806 = vmatprep.subr.mxu0 0.0
    %3807 = vmatpush1.msra.mxu0 0.0
    %3808 = vmatprep.subr.mxu0 0.0
    %3809 = vmatpush1.msra.mxu0 0.0
    %3810 = vmatprep.subr.mxu0 0.0
    %3811 = vmatpush1.msra.mxu0 0.0
    %3812 = vmatprep.subr.mxu0 0.0
    %3813 = vmatpush1.msra.mxu0 0.0
    %3814 = vmatprep.subr.mxu0 0.0
    %3815 = vmatpush1.msra.mxu0 0.0
    %3816 = vmatprep.subr.mxu0 0.0
    %3817 = vmatpush1.msra.mxu0 0.0
    %3818 = vmatprep.subr.mxu0 0.0
    %3819 = vmatpush1.msra.mxu0 0.0
    %3820 = vmatprep.subr.mxu0 0.0
    %3821 = vmatpush1.msra.mxu0 0.0
    %3822 = vmatprep.subr.mxu0 0.0
    %3823 = vmatpush1.msra.mxu0 0.0
    %3824 = vmatprep.subr.mxu0 0.0
    %3825 = vmatpush1.msra.mxu0 0.0
    %3826 = vmatprep.subr.mxu0 0.0
    %3827 = vmatpush1.msra.mxu0 0.0
    %3828 = vmatprep.subr.mxu0 0.0
    %3829 = vmatpush1.msra.mxu0 0.0
    %3830 = vmatprep.subr.mxu0 0.0
    %3831 = vmatpush1.msra.mxu0 0.0
    %3832 = vmatprep.subr.mxu0 0.0
    %3833 = vmatpush1.msra.mxu0 0.0
    %3834 = vmatprep.mubr.f32.mxu0 0.0
    %3835 = vmatmul.mubr.f32.gmra.mrb[0].mxu0 %v3768
    %v3836 = vpop.f32.mrb[0].mxu0
    %v3837 = vadd.f32 %v2613, %v3836
    %v3838 = vpop.f32.mrb[0].mxu0
    %3839 = vdwg.mxu0
    %v3840 = vadd.f32 %v3759, %v3837
    %v3841 = vxor.u32 %v3840, 2147483648
    %v3842 = vmul.f32 %v3841, 1.442695
    %v3843 = vpow.pop %v3842
    %v3844 = vadd.f32 %v3843, 1.0
    %v3845 = vrcp.pop %v3844
    %v3846 = vmul.f32 1.0, %v3845
    %3848 = vrot.lane.b32.xlu0 %v3837, 96
    %v3849 = vpop.permute.xlu0 %3848
    %v3851 = vmul.f32 %v3846, %v3849
    %3853 = vrot.lane.b32.xlu0 %v3851, 32
    %v3854 = vpop.permute.xlu0 %3853
    %v3856 = vadd.f32 %v3759, %v3854
    %v3857 = vtanh.pop %v3856
    %v3858 = vsub.f32 1.0, %v3846
    %3860 = vrot.lane.b32.xlu0 %v3857, 112
    %v3861 = vpop.permute.xlu0 %3860
    %v3863 = vmul.f32 %v3858, %v3861
    %v3864 = vmul.f32 %v3846, %v3706
    %v3865 = vadd.f32 %v3863, %v3864
    %v3866 = vmul.f32 %v2447, %v3865
    %v3867 = vmul.f32 %v2454, %v3706
    %v3868 = vadd.f32 %v3866, %v3867
    %v3869 = vmul.f32 %v2447, %v3868
    %v3872 = vunpack.c.l.s4 1966171168
    %v3873 = vunpack.c.0.s8 %v3872
    %v3874 = vlaneseq
    %v3875 = vshrl.u32 %v3874, 7
    %v3876 = vsub.s32 %v3873, %v3875
    %v3877 = vrot.slane %v3869, %v3876
    %v3878 = vcombine.high %v3877, %v3877
    %v3880 = vunpack.c.l.s4 1966171168
    %v3881 = vunpack.c.0.s8 %v3880
    %v3882 = vlaneseq
    %v3883 = vshrl.u32 %v3882, 7
    %v3884 = vsub.s32 %v3881, %v3883
    %v3885 = vrot.slane %v3877, %v3884
    %v3887 = vunpack.c.l.s4 1966171168
    %v3888 = vunpack.c.0.s8 %v3887
    %v3889 = vlaneseq
    %v3890 = vshrl.u32 %v3889, 7
    %v3891 = vsub.s32 %v3888, %v3890
    %v3892 = vrot.slane %v3878, %v3891
    %v3893 = vlaneseq
    %v3894 = vshrl.u32 %v3893, 7
    %v3895 = vsub.s32 0, %v3894
    %v3896 = vrot.slane %v3885, %v3895
    %v3897 = vlaneseq
    %v3898 = vshrl.u32 %v3897, 7
    %v3899 = vsub.s32 0, %v3898
    %v3900 = vrot.slane %v3892, %v3899
    %3901 = vrot.lane.b32.xlu0 %v3896, 112
    %v3902 = vpop.permute.xlu0 %3901
    %3903 = vrot.lane.b32.xlu0 %v3900, 112
    %v3904 = vpop.permute.xlu0 %3903
    %3907 = vst.msk [vmem:[#allocation5 + $0x8] sm:$0x1] %vm1244, %v3902
    %3908 = vst.msk [vmem:[#allocation5 + $0x18] sm:$0x1] %vm1244, %v3904
    %v3909 = vcombine.high %v3885, %v3885
    %v3910 = vcombine.high %v3892, %v3892
    %3913 = vst.msk [vmem:[#allocation5 + $0x1] sm:$0x1] %vm1251, %v3909
    %3914 = vst.msk [vmem:[#allocation5 + $0x11] sm:$0x1] %vm1251, %v3910
    %v3915 = vld [vmem:[#allocation5] sm:$0xff]
    %v3916 = vld [vmem:[#allocation5 + $0x8] sm:$0x3]
    %v3917 = vld [vmem:[#allocation5 + $0x10] sm:$0xff]
    %v3918 = vld [vmem:[#allocation5 + $0x18] sm:$0x3]
    %vm3923 = vcmask 1046528
    %v3924 = vrot.slane %v3915, 1
    %v3925 = vrot.slane %v3916, 1
    %v3926 = vsel %vm3923, %v3924, %v3925
    %v3927 = vrot.slane %v3917, 1
    %v3928 = vrot.slane %v3918, 1
    %v3929 = vsel %vm3923, %v3927, %v3928
    %3930 = vrot.lane.b32.xlu0 %v3926, 32
    %v3931 = vpop.permute.xlu0 %3930
    %3932 = vrot.lane.b32.xlu0 %v3929, 32
    %v3933 = vpop.permute.xlu0 %3932
    %vm3936 = vcmask 1045504
    %v3937 = vrot.slane %v3915, 2
    %v3938 = vrot.slane %v3916, 2
    %v3939 = vsel %vm3936, %v3937, %v3938
    %v3940 = vrot.slane %v3917, 2
    %v3941 = vrot.slane %v3918, 2
    %v3942 = vsel %vm3936, %v3940, %v3941
    %3943 = vrot.lane.b32.xlu0 %v3939, 64
    %v3944 = vpop.permute.xlu0 %3943
    %3945 = vrot.lane.b32.xlu0 %v3942, 64
    %v3946 = vpop.permute.xlu0 %3945
    %v3949 = vsel %vm943, %v3915, %v3931
    %v3950 = vsel %vm943, %v3917, %v3933
    %vm3951 = vcmask 523264
    %v3952 = vsel %vm3951, %v3949, %v3944
    %v3953 = vsel %vm3951, %v3950, %v3946
    %v3954 = vld [vmem:[%s14] sm:$0xff]
    %v3955 = vld [vmem:[%s14 + $0x8] sm:$0xff]
    %v3956 = vld [vmem:[%s14 + $0x10] sm:$0xff]
    %v3957 = vld [vmem:[%s14 + $0x18] sm:$0xff]
    %v3958 = vld [vmem:[%s14 + $0x20] sm:$0xff]
    %v3959 = vld [vmem:[%s14 + $0x28] sm:$0xff]
    %v3960 = vld [vmem:[%s14 + $0x30] sm:$0xff]
    %v3961 = vld [vmem:[%s14 + $0x38] sm:$0xff]
    %v3962 = vld [vmem:[%s14 + $0x40] sm:$0xff]
    %v3963 = vld [vmem:[%s14 + $0x48] sm:$0xff]
    %v3964 = vld [vmem:[%s14 + $0x50] sm:$0xff]
    %v3965 = vld [vmem:[%s14 + $0x58] sm:$0xff]
    %v3966 = vld [vmem:[%s15] sm:$0x1]
    %v3968 = vlaneseq
    %v3969 = vshrl.u32 %v3968, 7
    %v3970 = vsub.s32 0, %v3969
    %v3971 = vrot.slane %v3966, %v3970
    %vm3973 = vcmask 785408
    %v3975 = vsel %vm3973, %v3952, 0
    %v3978 = vsel %vm3973, %v3953, 0
    %3980 = vmatprep.subr.mxu0 0.0
    %3981 = vmatpush1.msra.mxu0 %v3954
    %3982 = vmatprep.subr.mxu0 0.0
    %3983 = vmatpush1.msra.mxu0 %v3955
    %3984 = vmatprep.subr.mxu0 0.0
    %3985 = vmatpush1.msra.mxu0 %v3956
    %3986 = vmatprep.subr.mxu0 0.0
    %3987 = vmatpush1.msra.mxu0 %v3957
    %3988 = vmatprep.subr.mxu0 0.0
    %3989 = vmatpush1.msra.mxu0 %v3958
    %3990 = vmatprep.subr.mxu0 0.0
    %3991 = vmatpush1.msra.mxu0 %v3959
    %3992 = vmatprep.subr.mxu0 0.0
    %3993 = vmatpush1.msra.mxu0 %v3960
    %3994 = vmatprep.subr.mxu0 0.0
    %3995 = vmatpush1.msra.mxu0 %v3961
    %3996 = vmatprep.subr.mxu0 0.0
    %3997 = vmatpush1.msra.mxu0 %v3962
    %3998 = vmatprep.subr.mxu0 0.0
    %3999 = vmatpush1.msra.mxu0 %v3963
    %4000 = vmatprep.subr.mxu0 0.0
    %4001 = vmatpush1.msra.mxu0 %v3964
    %4002 = vmatprep.subr.mxu0 0.0
    %4003 = vmatpush1.msra.mxu0 %v3965
    %4004 = vmatprep.subr.mxu0 0.0
    %4005 = vmatpush1.msra.mxu0 0.0
    %4006 = vmatprep.subr.mxu0 0.0
    %4007 = vmatpush1.msra.mxu0 0.0
    %4008 = vmatprep.subr.mxu0 0.0
    %4009 = vmatpush1.msra.mxu0 0.0
    %4010 = vmatprep.subr.mxu0 0.0
    %4011 = vmatpush1.msra.mxu0 0.0
    %4012 = vmatprep.subr.mxu0 0.0
    %4013 = vmatpush1.msra.mxu0 0.0
    %4014 = vmatprep.subr.mxu0 0.0
    %4015 = vmatpush1.msra.mxu0 0.0
    %4016 = vmatprep.subr.mxu0 0.0
    %4017 = vmatpush1.msra.mxu0 0.0
    %4018 = vmatprep.subr.mxu0 0.0
    %4019 = vmatpush1.msra.mxu0 0.0
    %4020 = vmatprep.subr.mxu0 0.0
    %4021 = vmatpush1.msra.mxu0 0.0
    %4022 = vmatprep.subr.mxu0 0.0
    %4023 = vmatpush1.msra.mxu0 0.0
    %4024 = vmatprep.subr.mxu0 0.0
    %4025 = vmatpush1.msra.mxu0 0.0
    %4026 = vmatprep.subr.mxu0 0.0
    %4027 = vmatpush1.msra.mxu0 0.0
    %4028 = vmatprep.subr.mxu0 0.0
    %4029 = vmatpush1.msra.mxu0 0.0
    %4030 = vmatprep.subr.mxu0 0.0
    %4031 = vmatpush1.msra.mxu0 0.0
    %4032 = vmatprep.subr.mxu0 0.0
    %4033 = vmatpush1.msra.mxu0 0.0
    %4034 = vmatprep.subr.mxu0 0.0
    %4035 = vmatpush1.msra.mxu0 0.0
    %4036 = vmatprep.subr.mxu0 0.0
    %4037 = vmatpush1.msra.mxu0 0.0
    %4038 = vmatprep.subr.mxu0 0.0
    %4039 = vmatpush1.msra.mxu0 0.0
    %4040 = vmatprep.subr.mxu0 0.0
    %4041 = vmatpush1.msra.mxu0 0.0
    %4042 = vmatprep.subr.mxu0 0.0
    %4043 = vmatpush1.msra.mxu0 0.0
    %4044 = vmatprep.mubr.f32.mxu0 0.0
    %4045 = vmatmul.mubr.f32.gmra.mrb[0].mxu0 %v3975
    %v4046 = vpop.f32.mrb[0].mxu0
    %v4047 = vadd.f32 %v3971, %v4046
    %v4048 = vpop.f32.mrb[0].mxu0
    %4049 = vmatprep.mubr.f32.mxu0 0.0
    %4050 = vmatmul.mubr.f32.gmra.mrb[0].mxu0 %v3978
    %v4051 = vpop.f32.mrb[0].mxu0
    %v4052 = vadd.f32 %v3971, %v4051
    %v4053 = vpop.f32.mrb[0].mxu0
    %4054 = vdwg.mxu0
    %v4055 = vmax.f32 %v4047, 0.0
    %v4056 = vmax.f32 %v4052, 0.0
    %v4060 = vrot.slane %v4055, 1
    %v4061 = vrot.slane 0.0, 1
    %v4062 = vsel %vm3923, %v4060, %v4061
    %v4063 = vrot.slane %v4056, 1
    %v4064 = vsel %vm3923, %v4063, %v4061
    %v4065 = vrot.slane %v4055, 2
    %v4066 = vrot.slane 0.0, 2
    %v4067 = vsel %vm3936, %v4065, %v4066
    %v4068 = vrot.slane %v4056, 2
    %v4069 = vsel %vm3936, %v4068, %v4066
    %vm4070 = vcmask 1044480
    %v4071 = vrot.slane %v4055, 3
    %v4072 = vrot.slane 0.0, 3
    %v4073 = vsel %vm4070, %v4071, %v4072
    %v4074 = vrot.slane %v4056, 3
    %v4075 = vsel %vm4070, %v4074, %v4072
    %v4076 = vld [vmem:[%s16] sm:$0xff]
    %v4077 = vld [vmem:[%s16 + $0x8] sm:$0xff]
    %v4078 = vld [vmem:[%s16 + $0x10] sm:$0xff]
    %v4079 = vld [vmem:[%s16 + $0x18] sm:$0xff]
    %v4080 = vld [vmem:[%s18] sm:$0x1]
    %v4082 = vlaneseq
    %v4083 = vshrl.u32 %v4082, 7
    %v4084 = vsub.s32 0, %v4083
    %v4085 = vrot.slane %v4080, %v4084
    %v4087 = vsel %vm943, %v4055, 0
    %v4089 = vsel %vm943, %v4056, 0
    %v4091 = vsel %vm943, %v4062, 0
    %v4093 = vsel %vm943, %v4064, 0
    %v4095 = vsel %vm943, %v4067, 0
    %v4097 = vsel %vm943, %v4069, 0
    %v4099 = vsel %vm943, %v4073, 0
    %v4101 = vsel %vm943, %v4075, 0
    %4103 = vmatprep.subr.mxu0 0.0
    %4104 = vmatpush1.msra.mxu0 %v4076
    %4105 = vmatprep.subr.mxu0 0.0
    %4106 = vmatpush1.msra.mxu0 %v4077
    %4107 = vmatprep.subr.mxu0 0.0
    %4108 = vmatpush1.msra.mxu0 %v4078
    %4109 = vmatprep.subr.mxu0 0.0
    %4110 = vmatpush1.msra.mxu0 %v4079
    %4111 = vmatprep.subr.mxu0 0.0
    %4112 = vmatpush1.msra.mxu0 0.0
    %4113 = vmatprep.subr.mxu0 0.0
    %4114 = vmatpush1.msra.mxu0 0.0
    %4115 = vmatprep.subr.mxu0 0.0
    %4116 = vmatpush1.msra.mxu0 0.0
    %4117 = vmatprep.subr.mxu0 0.0
    %4118 = vmatpush1.msra.mxu0 0.0
    %4119 = vmatprep.subr.mxu0 0.0
    %4120 = vmatpush1.msra.mxu0 0.0
    %4121 = vmatprep.subr.mxu0 0.0
    %4122 = vmatpush1.msra.mxu0 0.0
    %4123 = vmatprep.subr.mxu0 0.0
    %4124 = vmatpush1.msra.mxu0 0.0
    %4125 = vmatprep.subr.mxu0 0.0
    %4126 = vmatpush1.msra.mxu0 0.0
    %4127 = vmatprep.subr.mxu0 0.0
    %4128 = vmatpush1.msra.mxu0 0.0
    %4129 = vmatprep.subr.mxu0 0.0
    %4130 = vmatpush1.msra.mxu0 0.0
    %4131 = vmatprep.subr.mxu0 0.0
    %4132 = vmatpush1.msra.mxu0 0.0
    %4133 = vmatprep.subr.mxu0 0.0
    %4134 = vmatpush1.msra.mxu0 0.0
    %4135 = vmatprep.subr.mxu0 0.0
    %4136 = vmatpush1.msra.mxu0 0.0
    %4137 = vmatprep.subr.mxu0 0.0
    %4138 = vmatpush1.msra.mxu0 0.0
    %4139 = vmatprep.subr.mxu0 0.0
    %4140 = vmatpush1.msra.mxu0 0.0
    %4141 = vmatprep.subr.mxu0 0.0
    %4142 = vmatpush1.msra.mxu0 0.0
    %4143 = vmatprep.subr.mxu0 0.0
    %4144 = vmatpush1.msra.mxu0 0.0
    %4145 = vmatprep.subr.mxu0 0.0
    %4146 = vmatpush1.msra.mxu0 0.0
    %4147 = vmatprep.subr.mxu0 0.0
    %4148 = vmatpush1.msra.mxu0 0.0
    %4149 = vmatprep.subr.mxu0 0.0
    %4150 = vmatpush1.msra.mxu0 0.0
    %4151 = vmatprep.subr.mxu0 0.0
    %4152 = vmatpush1.msra.mxu0 0.0
    %4153 = vmatprep.subr.mxu0 0.0
    %4154 = vmatpush1.msra.mxu0 0.0
    %4155 = vmatprep.subr.mxu0 0.0
    %4156 = vmatpush1.msra.mxu0 0.0
    %4157 = vmatprep.subr.mxu0 0.0
    %4158 = vmatpush1.msra.mxu0 0.0
    %4159 = vmatprep.subr.mxu0 0.0
    %4160 = vmatpush1.msra.mxu0 0.0
    %4161 = vmatprep.subr.mxu0 0.0
    %4162 = vmatpush1.msra.mxu0 0.0
    %4163 = vmatprep.subr.mxu0 0.0
    %4164 = vmatpush1.msra.mxu0 0.0
    %4165 = vmatprep.subr.mxu0 0.0
    %4166 = vmatpush1.msra.mxu0 0.0
    %4167 = vmatprep.mubr.f32.mxu0 0.0
    %4168 = vmatmul.mubr.f32.gmra.mrb[0].mxu0 %v4087
    %v4169 = vpop.f32.mrb[0].mxu0
    %v4170 = vadd.f32 %v4085, %v4169
    %v4171 = vpop.f32.mrb[0].mxu0
    %4172 = vmatprep.mubr.f32.mxu0 0.0
    %4173 = vmatmul.mubr.f32.gmra.mrb[0].mxu0 %v4089
    %v4174 = vpop.f32.mrb[0].mxu0
    %v4175 = vadd.f32 %v4085, %v4174
    %v4176 = vpop.f32.mrb[0].mxu0
    %4177 = vmatprep.mubr.f32.mxu0 0.0
    %4178 = vmatmul.mubr.f32.gmra.mrb[0].mxu0 %v4091
    %v4179 = vpop.f32.mrb[0].mxu0
    %v4180 = vadd.f32 %v4085, %v4179
    %v4181 = vpop.f32.mrb[0].mxu0
    %4182 = vmatprep.mubr.f32.mxu0 0.0
    %4183 = vmatmul.mubr.f32.gmra.mrb[0].mxu0 %v4093
    %v4184 = vpop.f32.mrb[0].mxu0
    %v4185 = vadd.f32 %v4085, %v4184
    %v4186 = vpop.f32.mrb[0].mxu0
    %4187 = vmatprep.mubr.f32.mxu0 0.0
    %4188 = vmatmul.mubr.f32.gmra.mrb[0].mxu0 %v4095
    %v4189 = vpop.f32.mrb[0].mxu0
    %v4190 = vadd.f32 %v4085, %v4189
    %v4191 = vpop.f32.mrb[0].mxu0
    %4192 = vmatprep.mubr.f32.mxu0 0.0
    %4193 = vmatmul.mubr.f32.gmra.mrb[0].mxu0 %v4097
    %v4194 = vpop.f32.mrb[0].mxu0
    %v4195 = vadd.f32 %v4085, %v4194
    %v4196 = vpop.f32.mrb[0].mxu0
    %4197 = vmatprep.mubr.f32.mxu0 0.0
    %4198 = vmatmul.mubr.f32.gmra.mrb[0].mxu0 %v4099
    %v4199 = vpop.f32.mrb[0].mxu0
    %v4200 = vadd.f32 %v4085, %v4199
    %v4201 = vpop.f32.mrb[0].mxu0
    %4202 = vmatprep.mubr.f32.mxu0 0.0
    %4203 = vmatmul.mubr.f32.gmra.mrb[0].mxu0 %v4101
    %v4204 = vpop.f32.mrb[0].mxu0
    %v4205 = vadd.f32 %v4085, %v4204
    %v4206 = vpop.f32.mrb[0].mxu0
    %4207 = vdwg.mxu0
    %v4208 = vld [vmem:[%s17] sm:$0xff]
    %v4209 = vld [vmem:[%s17 + $0x8] sm:$0xff]
    %4211 = vbcast.lane.b32.xlu0 %v858, 256
    %v4212 = vpop.permute.xlu0 %4211
    %v4214 = vunpack.c.l.s4 1966171168
    %v4215 = vunpack.c.0.s8 %v4214
    %v4216 = vlaneseq
    %v4217 = vshrl.u32 %v4216, 7
    %v4218 = vsub.s32 %v4215, %v4217
    %v4219 = vrot.slane %v855, %v4218
    %v4220 = vcombine.high %v4219, %v4219
    %v4222 = vunpack.c.l.s4 1966171168
    %v4223 = vunpack.c.0.s8 %v4222
    %v4224 = vlaneseq
    %v4225 = vshrl.u32 %v4224, 7
    %v4226 = vsub.s32 %v4223, %v4225
    %v4227 = vrot.slane %v4219, %v4226
    %v4229 = vunpack.c.l.s4 1966171168
    %v4230 = vunpack.c.0.s8 %v4229
    %v4231 = vlaneseq
    %v4232 = vshrl.u32 %v4231, 7
    %v4233 = vsub.s32 %v4230, %v4232
    %v4234 = vrot.slane %v4220, %v4233
    %v4235 = vlaneseq
    %v4236 = vshrl.u32 %v4235, 7
    %v4237 = vsub.s32 0, %v4236
    %v4238 = vrot.slane %v4227, %v4237
    %v4239 = vlaneseq
    %v4240 = vshrl.u32 %v4239, 7
    %v4241 = vsub.s32 0, %v4240
    %v4242 = vrot.slane %v4234, %v4241
    %v4245 = vsub.f32 %v4238, %v4212
    %v4246 = vsub.f32 %v4242, %v4212
    %vm4247 = vcmp.gt.f32.partialorder %v4245, 0.0
    %vm4248 = vcmp.gt.f32.partialorder %v4246, 0.0
    %v4249 = vsel %vm4247, 1, 0
    %v4250 = vsel %vm4248, 1, 0
    %v4251 = vcvt.s32.f32 %v4249
    %v4252 = vcvt.s32.f32 %v4250
    %v4253 = vsel %vm1091, 0.0, 0
    %4255 = vmatprep.subr.mxu0 0.0
    %4256 = vmatpush1.msra.mxu0 %v4208
    %4257 = vmatprep.subr.mxu0 0.0
    %4258 = vmatpush1.msra.mxu0 %v4209
    %4259 = vmatprep.subr.mxu0 0.0
    %4260 = vmatpush1.msra.mxu0 0.0
    %4261 = vmatprep.subr.mxu0 0.0
    %4262 = vmatpush1.msra.mxu0 0.0
    %4263 = vmatprep.subr.mxu0 0.0
    %4264 = vmatpush1.msra.mxu0 0.0
    %4265 = vmatprep.subr.mxu0 0.0
    %4266 = vmatpush1.msra.mxu0 0.0
    %4267 = vmatprep.subr.mxu0 0.0
    %4268 = vmatpush1.msra.mxu0 0.0
    %4269 = vmatprep.subr.mxu0 0.0
    %4270 = vmatpush1.msra.mxu0 0.0
    %4271 = vmatprep.subr.mxu0 0.0
    %4272 = vmatpush1.msra.mxu0 0.0
    %4273 = vmatprep.subr.mxu0 0.0
    %4274 = vmatpush1.msra.mxu0 0.0
    %4275 = vmatprep.subr.mxu0 0.0
    %4276 = vmatpush1.msra.mxu0 0.0
    %4277 = vmatprep.subr.mxu0 0.0
    %4278 = vmatpush1.msra.mxu0 0.0
    %4279 = vmatprep.subr.mxu0 0.0
    %4280 = vmatpush1.msra.mxu0 0.0
    %4281 = vmatprep.subr.mxu0 0.0
    %4282 = vmatpush1.msra.mxu0 0.0
    %4283 = vmatprep.subr.mxu0 0.0
    %4284 = vmatpush1.msra.mxu0 0.0
    %4285 = vmatprep.subr.mxu0 0.0
    %4286 = vmatpush1.msra.mxu0 0.0
    %4287 = vmatprep.subr.mxu0 0.0
    %4288 = vmatpush1.msra.mxu0 0.0
    %4289 = vmatprep.subr.mxu0 0.0
    %4290 = vmatpush1.msra.mxu0 0.0
    %4291 = vmatprep.subr.mxu0 0.0
    %4292 = vmatpush1.msra.mxu0 0.0
    %4293 = vmatprep.subr.mxu0 0.0
    %4294 = vmatpush1.msra.mxu0 0.0
    %4295 = vmatprep.subr.mxu0 0.0
    %4296 = vmatpush1.msra.mxu0 0.0
    %4297 = vmatprep.subr.mxu0 0.0
    %4298 = vmatpush1.msra.mxu0 0.0
    %4299 = vmatprep.subr.mxu0 0.0
    %4300 = vmatpush1.msra.mxu0 0.0
    %4301 = vmatprep.subr.mxu0 0.0
    %4302 = vmatpush1.msra.mxu0 0.0
    %4303 = vmatprep.subr.mxu0 0.0
    %4304 = vmatpush1.msra.mxu0 0.0
    %4305 = vmatprep.subr.mxu0 0.0
    %4306 = vmatpush1.msra.mxu0 0.0
    %4307 = vmatprep.subr.mxu0 0.0
    %4308 = vmatpush1.msra.mxu0 0.0
    %4309 = vmatprep.subr.mxu0 0.0
    %4310 = vmatpush1.msra.mxu0 0.0
    %4311 = vmatprep.subr.mxu0 0.0
    %4312 = vmatpush1.msra.mxu0 0.0
    %4313 = vmatprep.subr.mxu0 0.0
    %4314 = vmatpush1.msra.mxu0 0.0
    %4315 = vmatprep.subr.mxu0 0.0
    %4316 = vmatpush1.msra.mxu0 0.0
    %4317 = vmatprep.subr.mxu0 0.0
    %4318 = vmatpush1.msra.mxu0 0.0
    %4319 = vmatprep.mubr.f32.mxu0 0.0
    %4320 = vmatmul.mubr.f32.gmra.mrb[0].mxu0 %v4253
    %v4321 = vpop.f32.mrb[0].mxu0
    %v4322 = vadd.f32 0.0, %v4321
    %v4323 = vpop.f32.mrb[0].mxu0
    %4324 = vmatprep.mubr.f32.mxu0 0.0
    %4325 = vmatmul.mubr.f32.gmra.mrb[0].mxu0 %v4253
    %v4326 = vpop.f32.mrb[0].mxu0
    %v4327 = vadd.f32 0.0, %v4326
    %v4328 = vpop.f32.mrb[0].mxu0
    %4329 = vdwg.mxu0
    %v4330 = vadd.f32 %v4170, %v4322
    %v4331 = vadd.f32 %v4175, %v4327
    %v4332 = vxor.u32 %v4330, 2147483648
    %v4333 = vxor.u32 %v4331, 2147483648
    %v4334 = vmul.f32 %v4332, 1.442695
    %v4335 = vpow.pop %v4334
    %v4336 = vmul.f32 %v4333, 1.442695
    %v4337 = vpow.pop %v4336
    %v4338 = vadd.f32 %v4335, 1.0
    %v4339 = vadd.f32 %v4337, 1.0
    %v4340 = vrcp.pop %v4338
    %v4341 = vmul.f32 1.0, %v4340
    %v4342 = vrcp.pop %v4339
    %v4343 = vmul.f32 1.0, %v4342
    %v4344 = vtanh.pop %v4330
    %v4345 = vtanh.pop %v4331
    %v4346 = vmul.f32 %v4341, 0.0
    %v4347 = vmul.f32 %v4343, 0.0
    %4350 = vrot.lane.b32.xlu0 %v4344, 96
    %v4351 = vpop.permute.xlu0 %4350
    %4352 = vrot.lane.b32.xlu0 %v4345, 96
    %v4353 = vpop.permute.xlu0 %4352
    %v4356 = vmul.f32 %v4341, %v4351
    %v4357 = vmul.f32 %v4343, %v4353
    %4360 = vrot.lane.b32.xlu0 %v4356, 16
    %v4361 = vpop.permute.xlu0 %4360
    %4362 = vrot.lane.b32.xlu0 %v4357, 16
    %v4363 = vpop.permute.xlu0 %4362
    %v4366 = vadd.f32 %v4346, %v4361
    %v4367 = vadd.f32 %v4347, %v4363
    %v4368 = vtanh.pop %v4366
    %v4369 = vtanh.pop %v4367
    %4372 = vrot.lane.b32.xlu0 %v4368, 32
    %v4373 = vpop.permute.xlu0 %4372
    %4374 = vrot.lane.b32.xlu0 %v4369, 32
    %v4375 = vpop.permute.xlu0 %4374
    %v4378 = vmul.f32 %v4341, %v4373
    %v4379 = vmul.f32 %v4343, %v4375
    %v4380 = vadd.f32 %v4212, 0.0
    %vm4381 = vcmp.lt.f32.partialorder %v4380, 8.0
    %v4382 = vsel %vm4381, 1, 0
    %v4383 = vcvt.s32.f32 %v4382
    %v4384 = vmul.f32 %v4251, %v4383
    %v4385 = vmul.f32 %v4252, %v4383
    %4388 = vrot.lane.b32.xlu0 %v4378, 80
    %v4389 = vpop.permute.xlu0 %4388
    %4390 = vrot.lane.b32.xlu0 %v4379, 80
    %v4391 = vpop.permute.xlu0 %4390
    %v4392 = vsel %vm1091, %v4389, 0
    %v4394 = vsel %vm1091, %v4391, 0
    %4396 = vmatprep.subr.mxu0 0.0
    %4397 = vmatpush1.msra.mxu0 %v4208
    %4398 = vmatprep.subr.mxu0 0.0
    %4399 = vmatpush1.msra.mxu0 %v4209
    %4400 = vmatprep.subr.mxu0 0.0
    %4401 = vmatpush1.msra.mxu0 0.0
    %4402 = vmatprep.subr.mxu0 0.0
    %4403 = vmatpush1.msra.mxu0 0.0
    %4404 = vmatprep.subr.mxu0 0.0
    %4405 = vmatpush1.msra.mxu0 0.0
    %4406 = vmatprep.subr.mxu0 0.0
    %4407 = vmatpush1.msra.mxu0 0.0
    %4408 = vmatprep.subr.mxu0 0.0
    %4409 = vmatpush1.msra.mxu0 0.0
    %4410 = vmatprep.subr.mxu0 0.0
    %4411 = vmatpush1.msra.mxu0 0.0
    %4412 = vmatprep.subr.mxu0 0.0
    %4413 = vmatpush1.msra.mxu0 0.0
    %4414 = vmatprep.subr.mxu0 0.0
    %4415 = vmatpush1.msra.mxu0 0.0
    %4416 = vmatprep.subr.mxu0 0.0
    %4417 = vmatpush1.msra.mxu0 0.0
    %4418 = vmatprep.subr.mxu0 0.0
    %4419 = vmatpush1.msra.mxu0 0.0
    %4420 = vmatprep.subr.mxu0 0.0
    %4421 = vmatpush1.msra.mxu0 0.0
    %4422 = vmatprep.subr.mxu0 0.0
    %4423 = vmatpush1.msra.mxu0 0.0
    %4424 = vmatprep.subr.mxu0 0.0
    %4425 = vmatpush1.msra.mxu0 0.0
    %4426 = vmatprep.subr.mxu0 0.0
    %4427 = vmatpush1.msra.mxu0 0.0
    %4428 = vmatprep.subr.mxu0 0.0
    %4429 = vmatpush1.msra.mxu0 0.0
    %4430 = vmatprep.subr.mxu0 0.0
    %4431 = vmatpush1.msra.mxu0 0.0
    %4432 = vmatprep.subr.mxu0 0.0
    %4433 = vmatpush1.msra.mxu0 0.0
    %4434 = vmatprep.subr.mxu0 0.0
    %4435 = vmatpush1.msra.mxu0 0.0
    %4436 = vmatprep.subr.mxu0 0.0
    %4437 = vmatpush1.msra.mxu0 0.0
    %4438 = vmatprep.subr.mxu0 0.0
    %4439 = vmatpush1.msra.mxu0 0.0
    %4440 = vmatprep.subr.mxu0 0.0
    %4441 = vmatpush1.msra.mxu0 0.0
    %4442 = vmatprep.subr.mxu0 0.0
    %4443 = vmatpush1.msra.mxu0 0.0
    %4444 = vmatprep.subr.mxu0 0.0
    %4445 = vmatpush1.msra.mxu0 0.0
    %4446 = vmatprep.subr.mxu0 0.0
    %4447 = vmatpush1.msra.mxu0 0.0
    %4448 = vmatprep.subr.mxu0 0.0
    %4449 = vmatpush1.msra.mxu0 0.0
    %4450 = vmatprep.subr.mxu0 0.0
    %4451 = vmatpush1.msra.mxu0 0.0
    %4452 = vmatprep.subr.mxu0 0.0
    %4453 = vmatpush1.msra.mxu0 0.0
    %4454 = vmatprep.subr.mxu0 0.0
    %4455 = vmatpush1.msra.mxu0 0.0
    %4456 = vmatprep.subr.mxu0 0.0
    %4457 = vmatpush1.msra.mxu0 0.0
    %4458 = vmatprep.subr.mxu0 0.0
    %4459 = vmatpush1.msra.mxu0 0.0
    %4460 = vmatprep.mubr.f32.mxu0 0.0
    %4461 = vmatmul.mubr.f32.gmra.mrb[0].mxu0 %v4392
    %v4462 = vpop.f32.mrb[0].mxu0
    %v4463 = vadd.f32 0.0, %v4462
    %v4464 = vpop.f32.mrb[0].mxu0
    %4465 = vmatprep.mubr.f32.mxu0 0.0
    %4466 = vmatmul.mubr.f32.gmra.mrb[0].mxu0 %v4394
    %v4467 = vpop.f32.mrb[0].mxu0
    %v4468 = vadd.f32 0.0, %v4467
    %v4469 = vpop.f32.mrb[0].mxu0
    %4470 = vdwg.mxu0
    %v4471 = vadd.f32 %v4180, %v4463
    %v4472 = vadd.f32 %v4185, %v4468
    %v4473 = vxor.u32 %v4471, 2147483648
    %v4474 = vxor.u32 %v4472, 2147483648
    %v4475 = vmul.f32 %v4473, 1.442695
    %v4476 = vpow.pop %v4475
    %v4477 = vmul.f32 %v4474, 1.442695
    %v4478 = vpow.pop %v4477
    %v4479 = vadd.f32 %v4476, 1.0
    %v4480 = vadd.f32 %v4478, 1.0
    %v4481 = vrcp.pop %v4479
    %v4482 = vmul.f32 1.0, %v4481
    %v4483 = vrcp.pop %v4480
    %v4484 = vmul.f32 1.0, %v4483
    %v4485 = vtanh.pop %v4471
    %v4486 = vtanh.pop %v4472
    %v4487 = vmul.f32 %v4482, %v4366
    %v4488 = vmul.f32 %v4484, %v4367
    %4491 = vrot.lane.b32.xlu0 %v4485, 96
    %v4492 = vpop.permute.xlu0 %4491
    %4493 = vrot.lane.b32.xlu0 %v4486, 96
    %v4494 = vpop.permute.xlu0 %4493
    %v4497 = vmul.f32 %v4482, %v4492
    %v4498 = vmul.f32 %v4484, %v4494
    %4501 = vrot.lane.b32.xlu0 %v4497, 16
    %v4502 = vpop.permute.xlu0 %4501
    %4503 = vrot.lane.b32.xlu0 %v4498, 16
    %v4504 = vpop.permute.xlu0 %4503
    %v4507 = vadd.f32 %v4487, %v4502
    %v4508 = vadd.f32 %v4488, %v4504
    %v4509 = vtanh.pop %v4507
    %v4510 = vtanh.pop %v4508
    %4513 = vrot.lane.b32.xlu0 %v4509, 32
    %v4514 = vpop.permute.xlu0 %4513
    %4515 = vrot.lane.b32.xlu0 %v4510, 32
    %v4516 = vpop.permute.xlu0 %4515
    %v4519 = vmul.f32 %v4482, %v4514
    %v4520 = vmul.f32 %v4484, %v4516
    %vm4521 = vcmp.ge.f32.partialorder %v4245, 2.0
    %vm4522 = vcmp.ge.f32.partialorder %v4246, 2.0
    %v4523 = vsel %vm4521, 1, 0
    %v4524 = vsel %vm4522, 1, 0
    %4525 = vset.pattern.permute.xlu0 0
    %4526 = vperm.xlu0 %4525, %v4523
    %v4527 = vpop.permute.xlu0 %4526
    %4528 = vset.pattern.permute.xlu0 0
    %4529 = vperm.xlu0 %4528, %v4524
    %v4530 = vpop.permute.xlu0 %4529
    %vm4531 = vcmp.eq.s32.totalorder %v4527, 1
    %vm4532 = vcmp.eq.s32.totalorder %v4530, 1
    %v4533 = vsel %vm4531, %v4519, %v4378
    %v4534 = vsel %vm4532, %v4520, %v4379
    %v4535 = vadd.f32 %v4212, 1.0
    %vm4536 = vcmp.lt.f32.partialorder %v4535, 8.0
    %v4537 = vsel %vm4536, 1, 0
    %v4538 = vcvt.s32.f32 %v4537
    %v4539 = vmul.f32 %v4251, %v4538
    %v4540 = vmul.f32 %v4252, %v4538
    %4543 = vrot.lane.b32.xlu0 %v4519, 80
    %v4544 = vpop.permute.xlu0 %4543
    %4545 = vrot.lane.b32.xlu0 %v4520, 80
    %v4546 = vpop.permute.xlu0 %4545
    %v4547 = vsel %vm1091, %v4544, 0
    %v4549 = vsel %vm1091, %v4546, 0
    %4551 = vmatprep.subr.mxu0 0.0
    %4552 = vmatpush1.msra.mxu0 %v4208
    %4553 = vmatprep.subr.mxu0 0.0
    %4554 = vmatpush1.msra.mxu0 %v4209
    %4555 = vmatprep.subr.mxu0 0.0
    %4556 = vmatpush1.msra.mxu0 0.0
    %4557 = vmatprep.subr.mxu0 0.0
    %4558 = vmatpush1.msra.mxu0 0.0
    %4559 = vmatprep.subr.mxu0 0.0
    %4560 = vmatpush1.msra.mxu0 0.0
    %4561 = vmatprep.subr.mxu0 0.0
    %4562 = vmatpush1.msra.mxu0 0.0
    %4563 = vmatprep.subr.mxu0 0.0
    %4564 = vmatpush1.msra.mxu0 0.0
    %4565 = vmatprep.subr.mxu0 0.0
    %4566 = vmatpush1.msra.mxu0 0.0
    %4567 = vmatprep.subr.mxu0 0.0
    %4568 = vmatpush1.msra.mxu0 0.0
    %4569 = vmatprep.subr.mxu0 0.0
    %4570 = vmatpush1.msra.mxu0 0.0
    %4571 = vmatprep.subr.mxu0 0.0
    %4572 = vmatpush1.msra.mxu0 0.0
    %4573 = vmatprep.subr.mxu0 0.0
    %4574 = vmatpush1.msra.mxu0 0.0
    %4575 = vmatprep.subr.mxu0 0.0
    %4576 = vmatpush1.msra.mxu0 0.0
    %4577 = vmatprep.subr.mxu0 0.0
    %4578 = vmatpush1.msra.mxu0 0.0
    %4579 = vmatprep.subr.mxu0 0.0
    %4580 = vmatpush1.msra.mxu0 0.0
    %4581 = vmatprep.subr.mxu0 0.0
    %4582 = vmatpush1.msra.mxu0 0.0
    %4583 = vmatprep.subr.mxu0 0.0
    %4584 = vmatpush1.msra.mxu0 0.0
    %4585 = vmatprep.subr.mxu0 0.0
    %4586 = vmatpush1.msra.mxu0 0.0
    %4587 = vmatprep.subr.mxu0 0.0
    %4588 = vmatpush1.msra.mxu0 0.0
    %4589 = vmatprep.subr.mxu0 0.0
    %4590 = vmatpush1.msra.mxu0 0.0
    %4591 = vmatprep.subr.mxu0 0.0
    %4592 = vmatpush1.msra.mxu0 0.0
    %4593 = vmatprep.subr.mxu0 0.0
    %4594 = vmatpush1.msra.mxu0 0.0
    %4595 = vmatprep.subr.mxu0 0.0
    %4596 = vmatpush1.msra.mxu0 0.0
    %4597 = vmatprep.subr.mxu0 0.0
    %4598 = vmatpush1.msra.mxu0 0.0
    %4599 = vmatprep.subr.mxu0 0.0
    %4600 = vmatpush1.msra.mxu0 0.0
    %4601 = vmatprep.subr.mxu0 0.0
    %4602 = vmatpush1.msra.mxu0 0.0
    %4603 = vmatprep.subr.mxu0 0.0
    %4604 = vmatpush1.msra.mxu0 0.0
    %4605 = vmatprep.subr.mxu0 0.0
    %4606 = vmatpush1.msra.mxu0 0.0
    %4607 = vmatprep.subr.mxu0 0.0
    %4608 = vmatpush1.msra.mxu0 0.0
    %4609 = vmatprep.subr.mxu0 0.0
    %4610 = vmatpush1.msra.mxu0 0.0
    %4611 = vmatprep.subr.mxu0 0.0
    %4612 = vmatpush1.msra.mxu0 0.0
    %4613 = vmatprep.subr.mxu0 0.0
    %4614 = vmatpush1.msra.mxu0 0.0
    %4615 = vmatprep.mubr.f32.mxu0 0.0
    %4616 = vmatmul.mubr.f32.gmra.mrb[0].mxu0 %v4547
    %v4617 = vpop.f32.mrb[0].mxu0
    %v4618 = vadd.f32 0.0, %v4617
    %v4619 = vpop.f32.mrb[0].mxu0
    %4620 = vmatprep.mubr.f32.mxu0 0.0
    %4621 = vmatmul.mubr.f32.gmra.mrb[0].mxu0 %v4549
    %v4622 = vpop.f32.mrb[0].mxu0
    %v4623 = vadd.f32 0.0, %v4622
    %v4624 = vpop.f32.mrb[0].mxu0
    %4625 = vdwg.mxu0
    %v4626 = vadd.f32 %v4190, %v4618
    %v4627 = vadd.f32 %v4195, %v4623
    %v4628 = vxor.u32 %v4626, 2147483648
    %v4629 = vxor.u32 %v4627, 2147483648
    %v4630 = vmul.f32 %v4628, 1.442695
    %v4631 = vpow.pop %v4630
    %v4632 = vmul.f32 %v4629, 1.442695
    %v4633 = vpow.pop %v4632
    %v4634 = vadd.f32 %v4631, 1.0
    %v4635 = vadd.f32 %v4633, 1.0
    %v4636 = vrcp.pop %v4634
    %v4637 = vmul.f32 1.0, %v4636
    %v4638 = vrcp.pop %v4635
    %v4639 = vmul.f32 1.0, %v4638
    %v4640 = vtanh.pop %v4626
    %v4641 = vtanh.pop %v4627
    %v4642 = vmul.f32 %v4637, %v4507
    %v4643 = vmul.f32 %v4639, %v4508
    %4646 = vrot.lane.b32.xlu0 %v4640, 96
    %v4647 = vpop.permute.xlu0 %4646
    %4648 = vrot.lane.b32.xlu0 %v4641, 96
    %v4649 = vpop.permute.xlu0 %4648
    %v4652 = vmul.f32 %v4637, %v4647
    %v4653 = vmul.f32 %v4639, %v4649
    %4656 = vrot.lane.b32.xlu0 %v4652, 16
    %v4657 = vpop.permute.xlu0 %4656
    %4658 = vrot.lane.b32.xlu0 %v4653, 16
    %v4659 = vpop.permute.xlu0 %4658
    %v4662 = vadd.f32 %v4642, %v4657
    %v4663 = vadd.f32 %v4643, %v4659
    %v4664 = vtanh.pop %v4662
    %v4665 = vtanh.pop %v4663
    %4668 = vrot.lane.b32.xlu0 %v4664, 32
    %v4669 = vpop.permute.xlu0 %4668
    %4670 = vrot.lane.b32.xlu0 %v4665, 32
    %v4671 = vpop.permute.xlu0 %4670
    %v4674 = vmul.f32 %v4637, %v4669
    %v4675 = vmul.f32 %v4639, %v4671
    %vm4676 = vcmp.ge.f32.partialorder %v4245, 3.0
    %vm4677 = vcmp.ge.f32.partialorder %v4246, 3.0
    %v4678 = vsel %vm4676, 1, 0
    %v4679 = vsel %vm4677, 1, 0
    %4680 = vset.pattern.permute.xlu0 0
    %4681 = vperm.xlu0 %4680, %v4678
    %v4682 = vpop.permute.xlu0 %4681
    %4683 = vset.pattern.permute.xlu0 0
    %4684 = vperm.xlu0 %4683, %v4679
    %v4685 = vpop.permute.xlu0 %4684
    %vm4686 = vcmp.eq.s32.totalorder %v4682, 1
    %vm4687 = vcmp.eq.s32.totalorder %v4685, 1
    %v4688 = vsel %vm4686, %v4674, %v4533
    %v4689 = vsel %vm4687, %v4675, %v4534
    %v4690 = vadd.f32 %v4212, 2.0
    %vm4691 = vcmp.lt.f32.partialorder %v4690, 8.0
    %v4692 = vsel %vm4691, 1, 0
    %v4693 = vcvt.s32.f32 %v4692
    %v4694 = vmul.f32 %v4251, %v4693
    %v4695 = vmul.f32 %v4252, %v4693
    %4698 = vrot.lane.b32.xlu0 %v4674, 80
    %v4699 = vpop.permute.xlu0 %4698
    %4700 = vrot.lane.b32.xlu0 %v4675, 80
    %v4701 = vpop.permute.xlu0 %4700
    %v4702 = vsel %vm1091, %v4699, 0
    %v4704 = vsel %vm1091, %v4701, 0
    %4706 = vmatprep.subr.mxu0 0.0
    %4707 = vmatpush1.msra.mxu0 %v4208
    %4708 = vmatprep.subr.mxu0 0.0
    %4709 = vmatpush1.msra.mxu0 %v4209
    %4710 = vmatprep.subr.mxu0 0.0
    %4711 = vmatpush1.msra.mxu0 0.0
    %4712 = vmatprep.subr.mxu0 0.0
    %4713 = vmatpush1.msra.mxu0 0.0
    %4714 = vmatprep.subr.mxu0 0.0
    %4715 = vmatpush1.msra.mxu0 0.0
    %4716 = vmatprep.subr.mxu0 0.0
    %4717 = vmatpush1.msra.mxu0 0.0
    %4718 = vmatprep.subr.mxu0 0.0
    %4719 = vmatpush1.msra.mxu0 0.0
    %4720 = vmatprep.subr.mxu0 0.0
    %4721 = vmatpush1.msra.mxu0 0.0
    %4722 = vmatprep.subr.mxu0 0.0
    %4723 = vmatpush1.msra.mxu0 0.0
    %4724 = vmatprep.subr.mxu0 0.0
    %4725 = vmatpush1.msra.mxu0 0.0
    %4726 = vmatprep.subr.mxu0 0.0
    %4727 = vmatpush1.msra.mxu0 0.0
    %4728 = vmatprep.subr.mxu0 0.0
    %4729 = vmatpush1.msra.mxu0 0.0
    %4730 = vmatprep.subr.mxu0 0.0
    %4731 = vmatpush1.msra.mxu0 0.0
    %4732 = vmatprep.subr.mxu0 0.0
    %4733 = vmatpush1.msra.mxu0 0.0
    %4734 = vmatprep.subr.mxu0 0.0
    %4735 = vmatpush1.msra.mxu0 0.0
    %4736 = vmatprep.subr.mxu0 0.0
    %4737 = vmatpush1.msra.mxu0 0.0
    %4738 = vmatprep.subr.mxu0 0.0
    %4739 = vmatpush1.msra.mxu0 0.0
    %4740 = vmatprep.subr.mxu0 0.0
    %4741 = vmatpush1.msra.mxu0 0.0
    %4742 = vmatprep.subr.mxu0 0.0
    %4743 = vmatpush1.msra.mxu0 0.0
    %4744 = vmatprep.subr.mxu0 0.0
    %4745 = vmatpush1.msra.mxu0 0.0
    %4746 = vmatprep.subr.mxu0 0.0
    %4747 = vmatpush1.msra.mxu0 0.0
    %4748 = vmatprep.subr.mxu0 0.0
    %4749 = vmatpush1.msra.mxu0 0.0
    %4750 = vmatprep.subr.mxu0 0.0
    %4751 = vmatpush1.msra.mxu0 0.0
    %4752 = vmatprep.subr.mxu0 0.0
    %4753 = vmatpush1.msra.mxu0 0.0
    %4754 = vmatprep.subr.mxu0 0.0
    %4755 = vmatpush1.msra.mxu0 0.0
    %4756 = vmatprep.subr.mxu0 0.0
    %4757 = vmatpush1.msra.mxu0 0.0
    %4758 = vmatprep.subr.mxu0 0.0
    %4759 = vmatpush1.msra.mxu0 0.0
    %4760 = vmatprep.subr.mxu0 0.0
    %4761 = vmatpush1.msra.mxu0 0.0
    %4762 = vmatprep.subr.mxu0 0.0
    %4763 = vmatpush1.msra.mxu0 0.0
    %4764 = vmatprep.subr.mxu0 0.0
    %4765 = vmatpush1.msra.mxu0 0.0
    %4766 = vmatprep.subr.mxu0 0.0
    %4767 = vmatpush1.msra.mxu0 0.0
    %4768 = vmatprep.subr.mxu0 0.0
    %4769 = vmatpush1.msra.mxu0 0.0
    %4770 = vmatprep.mubr.f32.mxu0 0.0
    %4771 = vmatmul.mubr.f32.gmra.mrb[0].mxu0 %v4702
    %v4772 = vpop.f32.mrb[0].mxu0
    %v4773 = vadd.f32 0.0, %v4772
    %v4774 = vpop.f32.mrb[0].mxu0
    %4775 = vmatprep.mubr.f32.mxu0 0.0
    %4776 = vmatmul.mubr.f32.gmra.mrb[0].mxu0 %v4704
    %v4777 = vpop.f32.mrb[0].mxu0
    %v4778 = vadd.f32 0.0, %v4777
    %v4779 = vpop.f32.mrb[0].mxu0
    %4780 = vdwg.mxu0
    %v4781 = vadd.f32 %v4200, %v4773
    %v4782 = vadd.f32 %v4205, %v4778
    %v4783 = vxor.u32 %v4781, 2147483648
    %v4784 = vxor.u32 %v4782, 2147483648
    %v4785 = vmul.f32 %v4783, 1.442695
    %v4786 = vpow.pop %v4785
    %v4787 = vmul.f32 %v4784, 1.442695
    %v4788 = vpow.pop %v4787
    %v4789 = vadd.f32 %v4786, 1.0
    %v4790 = vadd.f32 %v4788, 1.0
    %v4791 = vrcp.pop %v4789
    %v4792 = vmul.f32 1.0, %v4791
    %v4793 = vrcp.pop %v4790
    %v4794 = vmul.f32 1.0, %v4793
    %v4795 = vtanh.pop %v4781
    %v4796 = vtanh.pop %v4782
    %v4797 = vmul.f32 %v4792, %v4662
    %v4798 = vmul.f32 %v4794, %v4663
    %4801 = vrot.lane.b32.xlu0 %v4795, 96
    %v4802 = vpop.permute.xlu0 %4801
    %4803 = vrot.lane.b32.xlu0 %v4796, 96
    %v4804 = vpop.permute.xlu0 %4803
    %v4807 = vmul.f32 %v4792, %v4802
    %v4808 = vmul.f32 %v4794, %v4804
    %4811 = vrot.lane.b32.xlu0 %v4807, 16
    %v4812 = vpop.permute.xlu0 %4811
    %4813 = vrot.lane.b32.xlu0 %v4808, 16
    %v4814 = vpop.permute.xlu0 %4813
    %v4817 = vadd.f32 %v4797, %v4812
    %v4818 = vadd.f32 %v4798, %v4814
    %v4819 = vtanh.pop %v4817
    %v4820 = vtanh.pop %v4818
    %4823 = vrot.lane.b32.xlu0 %v4819, 32
    %v4824 = vpop.permute.xlu0 %4823
    %4825 = vrot.lane.b32.xlu0 %v4820, 32
    %v4826 = vpop.permute.xlu0 %4825
    %v4829 = vmul.f32 %v4792, %v4824
    %v4830 = vmul.f32 %v4794, %v4826
    %vm4831 = vcmp.ge.f32.partialorder %v4245, 4.0
    %vm4832 = vcmp.ge.f32.partialorder %v4246, 4.0
    %v4833 = vsel %vm4831, 1, 0
    %v4834 = vsel %vm4832, 1, 0
    %4835 = vset.pattern.permute.xlu0 0
    %4836 = vperm.xlu0 %4835, %v4833
    %v4837 = vpop.permute.xlu0 %4836
    %4838 = vset.pattern.permute.xlu0 0
    %4839 = vperm.xlu0 %4838, %v4834
    %v4840 = vpop.permute.xlu0 %4839
    %vm4841 = vcmp.eq.s32.totalorder %v4837, 1
    %vm4842 = vcmp.eq.s32.totalorder %v4840, 1
    %v4843 = vsel %vm4841, %v4829, %v4688
    %v4844 = vsel %vm4842, %v4830, %v4689
    %v4845 = vadd.f32 %v4212, 3.0
    %vm4846 = vcmp.lt.f32.partialorder %v4845, 8.0
    %v4847 = vsel %vm4846, 1, 0
    %v4848 = vcvt.s32.f32 %v4847
    %v4849 = vmul.f32 %v4251, %v4848
    %v4850 = vmul.f32 %v4252, %v4848
    %v4851 = vld [vmem:[%s19] sm:$0xff]
    %v4852 = vld [vmem:[%s19 + $0x8] sm:$0xff]
    %v4853 = vld [vmem:[%s20] sm:$0x1]
    %v4855 = vlaneseq
    %v4856 = vshrl.u32 %v4855, 7
    %v4857 = vsub.s32 0, %v4856
    %v4858 = vrot.slane %v4853, %v4857
    %4866 = vrot.lane.b32.xlu0 %v4533, 80
    %v4867 = vpop.permute.xlu0 %4866
    %4868 = vrot.lane.b32.xlu0 %v4688, 80
    %v4869 = vpop.permute.xlu0 %4868
    %4870 = vrot.lane.b32.xlu0 %v4843, 80
    %v4871 = vpop.permute.xlu0 %4870
    %4872 = vrot.lane.b32.xlu0 %v4534, 80
    %v4873 = vpop.permute.xlu0 %4872
    %4874 = vrot.lane.b32.xlu0 %v4689, 80
    %v4875 = vpop.permute.xlu0 %4874
    %4876 = vrot.lane.b32.xlu0 %v4844, 80
    %v4877 = vpop.permute.xlu0 %4876
    %v4878 = vsel %vm1091, %v4867, 0
    %v4880 = vsel %vm1091, %v4869, 0
    %v4882 = vsel %vm1091, %v4871, 0
    %v4884 = vsel %vm1091, %v4873, 0
    %v4886 = vsel %vm1091, %v4875, 0
    %v4888 = vsel %vm1091, %v4877, 0
    %4890 = vmatprep.subr.mxu0 0.0
    %4891 = vmatpush1.msra.mxu0 %v4851
    %4892 = vmatprep.subr.mxu0 0.0
    %4893 = vmatpush1.msra.mxu0 %v4852
    %4894 = vmatprep.subr.mxu0 0.0
    %4895 = vmatpush1.msra.mxu0 0.0
    %4896 = vmatprep.subr.mxu0 0.0
    %4897 = vmatpush1.msra.mxu0 0.0
    %4898 = vmatprep.subr.mxu0 0.0
    %4899 = vmatpush1.msra.mxu0 0.0
    %4900 = vmatprep.subr.mxu0 0.0
    %4901 = vmatpush1.msra.mxu0 0.0
    %4902 = vmatprep.subr.mxu0 0.0
    %4903 = vmatpush1.msra.mxu0 0.0
    %4904 = vmatprep.subr.mxu0 0.0
    %4905 = vmatpush1.msra.mxu0 0.0
    %4906 = vmatprep.subr.mxu0 0.0
    %4907 = vmatpush1.msra.mxu0 0.0
    %4908 = vmatprep.subr.mxu0 0.0
    %4909 = vmatpush1.msra.mxu0 0.0
    %4910 = vmatprep.subr.mxu0 0.0
    %4911 = vmatpush1.msra.mxu0 0.0
    %4912 = vmatprep.subr.mxu0 0.0
    %4913 = vmatpush1.msra.mxu0 0.0
    %4914 = vmatprep.subr.mxu0 0.0
    %4915 = vmatpush1.msra.mxu0 0.0
    %4916 = vmatprep.subr.mxu0 0.0
    %4917 = vmatpush1.msra.mxu0 0.0
    %4918 = vmatprep.subr.mxu0 0.0
    %4919 = vmatpush1.msra.mxu0 0.0
    %4920 = vmatprep.subr.mxu0 0.0
    %4921 = vmatpush1.msra.mxu0 0.0
    %4922 = vmatprep.subr.mxu0 0.0
    %4923 = vmatpush1.msra.mxu0 0.0
    %4924 = vmatprep.subr.mxu0 0.0
    %4925 = vmatpush1.msra.mxu0 0.0
    %4926 = vmatprep.subr.mxu0 0.0
    %4927 = vmatpush1.msra.mxu0 0.0
    %4928 = vmatprep.subr.mxu0 0.0
    %4929 = vmatpush1.msra.mxu0 0.0
    %4930 = vmatprep.subr.mxu0 0.0
    %4931 = vmatpush1.msra.mxu0 0.0
    %4932 = vmatprep.subr.mxu0 0.0
    %4933 = vmatpush1.msra.mxu0 0.0
    %4934 = vmatprep.subr.mxu0 0.0
    %4935 = vmatpush1.msra.mxu0 0.0
    %4936 = vmatprep.subr.mxu0 0.0
    %4937 = vmatpush1.msra.mxu0 0.0
    %4938 = vmatprep.subr.mxu0 0.0
    %4939 = vmatpush1.msra.mxu0 0.0
    %4940 = vmatprep.subr.mxu0 0.0
    %4941 = vmatpush1.msra.mxu0 0.0
    %4942 = vmatprep.subr.mxu0 0.0
    %4943 = vmatpush1.msra.mxu0 0.0
    %4944 = vmatprep.subr.mxu0 0.0
    %4945 = vmatpush1.msra.mxu0 0.0
    %4946 = vmatprep.subr.mxu0 0.0
    %4947 = vmatpush1.msra.mxu0 0.0
    %4948 = vmatprep.subr.mxu0 0.0
    %4949 = vmatpush1.msra.mxu0 0.0
    %4950 = vmatprep.subr.mxu0 0.0
    %4951 = vmatpush1.msra.mxu0 0.0
    %4952 = vmatprep.subr.mxu0 0.0
    %4953 = vmatpush1.msra.mxu0 0.0
    %4954 = vmatprep.mubr.f32.mxu0 0.0
    %4955 = vmatmul.mubr.f32.gmra.mrb[0].mxu0 %v4392
    %v4956 = vpop.f32.mrb[0].mxu0
    %v4957 = vadd.f32 %v4858, %v4956
    %v4958 = vpop.f32.mrb[0].mxu0
    %4959 = vmatprep.mubr.f32.mxu0 0.0
    %4960 = vmatmul.mubr.f32.gmra.mrb[0].mxu0 %v4878
    %v4961 = vpop.f32.mrb[0].mxu0
    %v4962 = vadd.f32 %v4858, %v4961
    %v4963 = vpop.f32.mrb[0].mxu0
    %4964 = vmatprep.mubr.f32.mxu0 0.0
    %4965 = vmatmul.mubr.f32.gmra.mrb[0].mxu0 %v4880
    %v4966 = vpop.f32.mrb[0].mxu0
    %v4967 = vadd.f32 %v4858, %v4966
    %v4968 = vpop.f32.mrb[0].mxu0
    %4969 = vmatprep.mubr.f32.mxu0 0.0
    %4970 = vmatmul.mubr.f32.gmra.mrb[0].mxu0 %v4882
    %v4971 = vpop.f32.mrb[0].mxu0
    %v4972 = vadd.f32 %v4858, %v4971
    %v4973 = vpop.f32.mrb[0].mxu0
    %4974 = vmatprep.mubr.f32.mxu0 0.0
    %4975 = vmatmul.mubr.f32.gmra.mrb[0].mxu0 %v4394
    %v4976 = vpop.f32.mrb[0].mxu0
    %v4977 = vadd.f32 %v4858, %v4976
    %v4978 = vpop.f32.mrb[0].mxu0
    %4979 = vmatprep.mubr.f32.mxu0 0.0
    %4980 = vmatmul.mubr.f32.gmra.mrb[0].mxu0 %v4884
    %v4981 = vpop.f32.mrb[0].mxu0
    %v4982 = vadd.f32 %v4858, %v4981
    %v4983 = vpop.f32.mrb[0].mxu0
    %4984 = vmatprep.mubr.f32.mxu0 0.0
    %4985 = vmatmul.mubr.f32.gmra.mrb[0].mxu0 %v4886
    %v4986 = vpop.f32.mrb[0].mxu0
    %v4987 = vadd.f32 %v4858, %v4986
    %v4988 = vpop.f32.mrb[0].mxu0
    %4989 = vmatprep.mubr.f32.mxu0 0.0
    %4990 = vmatmul.mubr.f32.gmra.mrb[0].mxu0 %v4888
    %v4991 = vpop.f32.mrb[0].mxu0
    %v4992 = vadd.f32 %v4858, %v4991
    %v4993 = vpop.f32.mrb[0].mxu0
    %4994 = vdwg.mxu0
    %4996 = vset.pattern.permute.xlu0 0
    %4997 = vperm.xlu0 %4996, %v4384
    %v4998 = vpop.permute.xlu0 %4997
    %5001 = vset.pattern.permute.xlu0 0
    %5002 = vperm.xlu0 %5001, %v4539
    %v5003 = vpop.permute.xlu0 %5002
    %5006 = vset.pattern.permute.xlu0 0
    %5007 = vperm.xlu0 %5006, %v4694
    %v5008 = vpop.permute.xlu0 %5007
    %5011 = vset.pattern.permute.xlu0 0
    %5012 = vperm.xlu0 %5011, %v4849
    %v5013 = vpop.permute.xlu0 %5012
    %5016 = vset.pattern.permute.xlu0 0
    %5017 = vperm.xlu0 %5016, %v4385
    %v5018 = vpop.permute.xlu0 %5017
    %5021 = vset.pattern.permute.xlu0 0
    %5022 = vperm.xlu0 %5021, %v4540
    %v5023 = vpop.permute.xlu0 %5022
    %5026 = vset.pattern.permute.xlu0 0
    %5027 = vperm.xlu0 %5026, %v4695
    %v5028 = vpop.permute.xlu0 %5027
    %5031 = vset.pattern.permute.xlu0 0
    %5032 = vperm.xlu0 %5031, %v4850
    %v5033 = vpop.permute.xlu0 %5032
    %v5035 = vmul.f32 %v4957, %v4998
    %v5036 = vmul.f32 %v4962, %v5003
    %v5037 = vmul.f32 %v4967, %v5008
    %v5038 = vmul.f32 %v4972, %v5013
    %v5039 = vmul.f32 %v4977, %v5018
    %v5040 = vmul.f32 %v4982, %v5023
    %v5041 = vmul.f32 %v4987, %v5028
    %v5042 = vmul.f32 %v4992, %v5033
    %vm5043 = vcmask 15360
    %v5044 = vsel %vm5043, %v5035, -inf
    %5045 = vmax.xlane.f32.xlu0 %v5044
    %v5046 = vpop.xlane.xlu0 %5045
    %v5047 = vsel %vm5043, %v5039, -inf
    %5048 = vmax.xlane.f32.xlu0 %v5047
    %v5049 = vpop.xlane.xlu0 %5048
    %v5050 = vsub.f32 %v5035, %v5046
    %v5051 = vsub.f32 %v5039, %v5049
    %v5052 = vmul.f32 %v5050, 1.442695
    %v5053 = vpow.pop %v5052
    %v5054 = vmul.f32 %v5051, 1.442695
    %v5055 = vpow.pop %v5054
    %v5056 = vsel %vm5043, %v5053, 0.0
    %5057 = vadd.xlane.f32.xlu0 %v5056
    %v5058 = vpop.xlane.xlu0 %5057
    %v5059 = vsel %vm5043, %v5055, 0.0
    %5060 = vadd.xlane.f32.xlu0 %v5059
    %v5061 = vpop.xlane.xlu0 %5060
    %v5062 = vrcp.pop %v5058
    %v5063 = vmul.f32 %v5053, %v5062
    %v5064 = vrcp.pop %v5061
    %v5065 = vmul.f32 %v5055, %v5064
    %v5066 = vlaneseq
    %v5067 = vshrl.u32 %v5066, 7
    %v5068 = vsub.s32 0, %v5067
    %v5069 = vrot.slane %v866, %v5068
    %5071 = vbcast.lane.b32.xlu0 %v5069, 256
    %v5072 = vpop.permute.xlu0 %5071
    %v5073 = vlaneseq
    %v5074 = vshrl.u32 %v5073, 7
    %v5075 = vsub.s32 1, %v5074
    %v5076 = vrot.slane %v866, %v5075
    %5078 = vbcast.lane.b32.xlu0 %v5076, 256
    %v5079 = vpop.permute.xlu0 %5078
    %v5082 = vmul.f32 %v5063, %v5072
    %v5083 = vmul.f32 %v5065, %v5079
    %5086 = vset.pattern.permute.xlu0 1
    %5087 = vperm.xlu0 %5086, %v5082
    %v5088 = vpop.permute.xlu0 %5087
    %5089 = vset.pattern.permute.xlu0 1
    %5090 = vperm.xlu0 %5089, %v5083
    %v5091 = vpop.permute.xlu0 %5090
    %v5092 = vlaneseq
    %v5093 = vshrl.u32 %v5092, 7
    %v5094 = vsub.s32 %v857, %v5093
    %v5095 = vrot.slane %v5088, %v5094
    %v5096 = vlaneseq
    %v5097 = vshrl.u32 %v5096, 7
    %v5098 = vsub.s32 %v857, %v5097
    %v5099 = vrot.slane %v5091, %v5098
    %v5100 = vsel %vm1071, %v5099, %v5095
    %vm5102 = vcmask 58368
    %v5103 = vsel %vm5102, %v5100, 0.0
    %5104 = vadd.xlane.f32.xlu0 %v5103
    %v5105 = vpop.xlane.xlu0 %5104
    %v5108 = vmul.f32 %v5088, %v4055
    %v5109 = vmul.f32 %v5091, %v4056
    %v5110 = vsel %vm943, %v5108, 0.0
    %v5111 = vrot.slane %v5110, 4
    %v5112 = vadd.f32 %v5110, %v5111
    %v5113 = vrot.slane %v5112, 2
    %v5114 = vadd.f32 %v5112, %v5113
    %v5115 = vrot.slane %v5114, 1
    %v5116 = vadd.f32 %v5114, %v5115
    %v5117 = vsel %vm943, %v5109, 0.0
    %v5118 = vrot.slane %v5117, 4
    %v5119 = vadd.f32 %v5117, %v5118
    %v5120 = vrot.slane %v5119, 2
    %v5121 = vadd.f32 %v5119, %v5120
    %v5122 = vrot.slane %v5121, 1
    %v5123 = vadd.f32 %v5121, %v5122
    %v5125 = vrot.slane %v5105, 1
    %v5128 = vrcp.pop %v5105
    %v5129 = vmul.f32 %v5116, %v5128
    %v5130 = vrcp.pop %v5125
    %v5131 = vmul.f32 %v5123, %v5130
    %v5132 = vld [vmem:[%s21] sm:$0xff]
    %v5133 = vld [vmem:[%s21 + $0x8] sm:$0xff]
    %v5134 = vld [vmem:[%s21 + $0x10] sm:$0xff]
    %v5135 = vld [vmem:[%s21 + $0x18] sm:$0xff]
    %v5136 = vld [vmem:[%s22] sm:$0x1]
    %v5138 = vlaneseq
    %v5139 = vshrl.u32 %v5138, 7
    %v5140 = vsub.s32 0, %v5139
    %v5141 = vrot.slane %v5136, %v5140
    %v5145 = vrot.slane %v5131, 7
    %v5146 = vsel %vm1071, %v5145, %v5129
    %v5147 = vsel %vm943, %v5146, 0
    %5149 = vmatprep.subr.mxu0 0.0
    %5150 = vmatpush1.msra.mxu0 %v5132
    %5151 = vmatprep.subr.mxu0 0.0
    %5152 = vmatpush1.msra.mxu0 %v5133
    %5153 = vmatprep.subr.mxu0 0.0
    %5154 = vmatpush1.msra.mxu0 %v5134
    %5155 = vmatprep.subr.mxu0 0.0
    %5156 = vmatpush1.msra.mxu0 %v5135
    %5157 = vmatprep.subr.mxu0 0.0
    %5158 = vmatpush1.msra.mxu0 0.0
    %5159 = vmatprep.subr.mxu0 0.0
    %5160 = vmatpush1.msra.mxu0 0.0
    %5161 = vmatprep.subr.mxu0 0.0
    %5162 = vmatpush1.msra.mxu0 0.0
    %5163 = vmatprep.subr.mxu0 0.0
    %5164 = vmatpush1.msra.mxu0 0.0
    %5165 = vmatprep.subr.mxu0 0.0
    %5166 = vmatpush1.msra.mxu0 0.0
    %5167 = vmatprep.subr.mxu0 0.0
    %5168 = vmatpush1.msra.mxu0 0.0
    %5169 = vmatprep.subr.mxu0 0.0
    %5170 = vmatpush1.msra.mxu0 0.0
    %5171 = vmatprep.subr.mxu0 0.0
    %5172 = vmatpush1.msra.mxu0 0.0
    %5173 = vmatprep.subr.mxu0 0.0
    %5174 = vmatpush1.msra.mxu0 0.0
    %5175 = vmatprep.subr.mxu0 0.0
    %5176 = vmatpush1.msra.mxu0 0.0
    %5177 = vmatprep.subr.mxu0 0.0
    %5178 = vmatpush1.msra.mxu0 0.0
    %5179 = vmatprep.subr.mxu0 0.0
    %5180 = vmatpush1.msra.mxu0 0.0
    %5181 = vmatprep.subr.mxu0 0.0
    %5182 = vmatpush1.msra.mxu0 0.0
    %5183 = vmatprep.subr.mxu0 0.0
    %5184 = vmatpush1.msra.mxu0 0.0
    %5185 = vmatprep.subr.mxu0 0.0
    %5186 = vmatpush1.msra.mxu0 0.0
    %5187 = vmatprep.subr.mxu0 0.0
    %5188 = vmatpush1.msra.mxu0 0.0
    %5189 = vmatprep.subr.mxu0 0.0
    %5190 = vmatpush1.msra.mxu0 0.0
    %5191 = vmatprep.subr.mxu0 0.0
    %5192 = vmatpush1.msra.mxu0 0.0
    %5193 = vmatprep.subr.mxu0 0.0
    %5194 = vmatpush1.msra.mxu0 0.0
    %5195 = vmatprep.subr.mxu0 0.0
    %5196 = vmatpush1.msra.mxu0 0.0
    %5197 = vmatprep.subr.mxu0 0.0
    %5198 = vmatpush1.msra.mxu0 0.0
    %5199 = vmatprep.subr.mxu0 0.0
    %5200 = vmatpush1.msra.mxu0 0.0
    %5201 = vmatprep.subr.mxu0 0.0
    %5202 = vmatpush1.msra.mxu0 0.0
    %5203 = vmatprep.subr.mxu0 0.0
    %5204 = vmatpush1.msra.mxu0 0.0
    %5205 = vmatprep.subr.mxu0 0.0
    %5206 = vmatpush1.msra.mxu0 0.0
    %5207 = vmatprep.subr.mxu0 0.0
    %5208 = vmatpush1.msra.mxu0 0.0
    %5209 = vmatprep.subr.mxu0 0.0
    %5210 = vmatpush1.msra.mxu0 0.0
    %5211 = vmatprep.subr.mxu0 0.0
    %5212 = vmatpush1.msra.mxu0 0.0
    %5213 = vmatprep.mubr.f32.mxu0 0.0
    %5214 = vmatmul.mubr.f32.gmra.mrb[0].mxu0 %v5147
    %v5215 = vpop.f32.mrb[0].mxu0
    %v5216 = vadd.f32 %v5141, %v5215
    %v5217 = vpop.f32.mrb[0].mxu0
    %5218 = vdwg.mxu0
    %vm5219 = vcmask 17408
    %v5220 = vsel %vm5219, %v5216, -inf
    %5221 = vmax.xlane.f32.xlu0 %v5220
    %v5222 = vpop.xlane.xlu0 %5221
    %v5223 = vsub.f32 %v5216, %v5222
    %v5224 = vmul.f32 %v5223, 1.442695
    %v5225 = vpow.pop %v5224
    %v5226 = vsel %vm5219, %v5225, 0.0
    %5227 = vadd.xlane.f32.xlu0 %v5226
    %v5228 = vpop.xlane.xlu0 %5227
    %v5229 = vlog2.pop %v5228
    %v5230 = vmul.f32 %v5229, 0.6931472
    %v5231 = vsub.f32 %v5223, %v5230
    %v5232 = vld [vmem:[%s2] sm:$0x3]
    %5233 = vset.pattern.permute.xlu0 0
    %5234 = vperm.xlu0 %5233, %v5232
    %v5235 = vpop.permute.xlu0 %5234
    %vm5236 = vcmp.eq.s32.totalorder %v857, %v5235
    %v5237 = vsel %vm5236, 1, 0
    %v5238 = vcvt.s32.f32 %v5237
    %v5239 = vmul.f32 %v5231, %v5238
    %v5240 = vsel %vm5219, %v5239, 0.0
    %5241 = vadd.xlane.f32.xlu0 %v5240
    %v5242 = vpop.xlane.xlu0 %5241
    %v5243 = vsel %vm1081, %v5242, 0.0
    %v5244 = vrot.slane %v5243, 4
    %v5245 = vadd.f32 %v5243, %v5244
    %v5246 = vrot.slane %v5245, 2
    %v5247 = vadd.f32 %v5245, %v5246
    %v5248 = vrot.slane %v5247, 1
    %v5249 = vadd.f32 %v5247, %v5248
    %v5250 = vsub.f32 0.0, %v5249
    %v5251 = vrcp.pop 2.0
    %v5252 = vmul.f32 %v5250, %v5251
    %v5253 = vld [vmem:[%s23] sm:$0x3]
    %v5255 = vrot.slane %v5253, 7
    %v5257 = vsub.f32 %v5253, %v5255
    %v5258 = vmax.f32 %v5257, 0.0
    %v5259 = vrot.slane %v5253, 1
    %v5261 = vsub.f32 %v5253, %v5259
    %v5262 = vmax.f32 %v5261, 0.0
    %v5264 = vrot.slane %v5262, 7
    %5265 = vrot.lane.b32.xlu0 %v5264, 127
    %v5266 = vpop.permute.xlu0 %5265
    %v5268 = vadd.f32 %v5258, %v5266
    %v5269 = vand.u32 2147483647, %v5082
    %v5270 = vand.u32 2147483647, %v5083
    %5273 = vset.pattern.permute.xlu0 1
    %5274 = vperm.xlu0 %5273, %v5269
    %v5275 = vpop.permute.xlu0 %5274
    %5276 = vset.pattern.permute.xlu0 1
    %5277 = vperm.xlu0 %5276, %v5270
    %v5278 = vpop.permute.xlu0 %5277
    %v5279 = vlaneseq
    %v5280 = vshrl.u32 %v5279, 7
    %v5281 = vsub.s32 %v857, %v5280
    %v5282 = vrot.slane %v5275, %v5281
    %v5283 = vlaneseq
    %v5284 = vshrl.u32 %v5283, 7
    %v5285 = vsub.s32 %v857, %v5284
    %v5286 = vrot.slane %v5278, %v5285
    %v5287 = vsel %vm1071, %v5286, %v5282
    %v5289 = vsel %vm5102, %v5287, 0.0
    %5290 = vadd.xlane.f32.xlu0 %v5289
    %v5291 = vpop.xlane.xlu0 %5290
    %v5292 = vsel %vm1081, %v5291, 0.0
    %v5293 = vrot.slane %v5292, 4
    %v5294 = vadd.f32 %v5292, %v5293
    %v5295 = vrot.slane %v5294, 2
    %v5296 = vadd.f32 %v5294, %v5295
    %v5297 = vrot.slane %v5296, 1
    %v5298 = vadd.f32 %v5296, %v5297
    %v5299 = vmul.f32 %v5298, %v5251
    %v5300 = vadd.f32 %v5268, %v5299
    %v5302 = vrot.slane %v5300, 1
    %5303 = vrot.lane.b32.xlu0 %v5302, 1
    %v5304 = vpop.permute.xlu0 %5303
    %vm5306 = vcmask 7168
    %v5307 = vsel %vm5306, %v5252, %v5304
    %vm5308 = vcmask 8192
    %5309 = vst.msk [vmem:[%s24] sm:$0x1] %vm5308, %v5307
    %5310 = vst.msk [vmem:[%s24 + $0x1] sm:$0x3] %vm5219, %v5231
    %5311 = vst.msk [vmem:[%s24 + $0x3] sm:$0x3] %vm5102, %v5100
    %v5312 = vcombine.high %v5035, 0.0
    %v5314 = vunpack.c.l.s4 1983009808
    %v5315 = vunpack.c.0.s8 %v5314
    %v5316 = vlaneseq
    %v5317 = vshrl.u32 %v5316, 7
    %v5318 = vsub.s32 %v5315, %v5317
    %v5319 = vrot.slane %v5035, %v5318
    %v5321 = vunpack.c.l.s4 1983009808
    %v5322 = vunpack.c.0.s8 %v5321
    %v5323 = vlaneseq
    %v5324 = vshrl.u32 %v5323, 7
    %v5325 = vsub.s32 %v5322, %v5324
    %v5326 = vrot.slane %v5312, %v5325
    %v5327 = vcombine.high %v5039, 0.0
    %v5329 = vunpack.c.l.s4 1983009808
    %v5330 = vunpack.c.0.s8 %v5329
    %v5331 = vlaneseq
    %v5332 = vshrl.u32 %v5331, 7
    %v5333 = vsub.s32 %v5330, %v5332
    %v5334 = vrot.slane %v5039, %v5333
    %v5336 = vunpack.c.l.s4 1983009808
    %v5337 = vunpack.c.0.s8 %v5336
    %v5338 = vlaneseq
    %v5339 = vshrl.u32 %v5338, 7
    %v5340 = vsub.s32 %v5337, %v5339
    %v5341 = vrot.slane %v5327, %v5340
    %v5342 = vcombine.low %v5319, %v5334
    %v5343 = vcombine.high %v5319, %v5334
    %v5345 = vunpack.c.l.s4 1934713408
    %v5346 = vunpack.c.0.s8 %v5345
    %v5347 = vlaneseq
    %v5348 = vshrl.u32 %v5347, 7
    %v5349 = vsub.s32 %v5346, %v5348
    %v5350 = vrot.slane %v5342, %v5349
    %v5352 = vunpack.c.l.s4 1934713408
    %v5353 = vunpack.c.0.s8 %v5352
    %v5354 = vlaneseq
    %v5355 = vshrl.u32 %v5354, 7
    %v5356 = vsub.s32 %v5353, %v5355
    %v5357 = vrot.slane %v5343, %v5356
    %v5358 = vcombine.low %v5326, %v5341
    %v5359 = vcombine.high %v5326, %v5341
    %v5361 = vunpack.c.l.s4 1934713408
    %v5362 = vunpack.c.0.s8 %v5361
    %v5363 = vlaneseq
    %v5364 = vshrl.u32 %v5363, 7
    %v5365 = vsub.s32 %v5362, %v5364
    %v5366 = vrot.slane %v5358, %v5365
    %v5368 = vunpack.c.l.s4 1934713408
    %v5369 = vunpack.c.0.s8 %v5368
    %v5370 = vlaneseq
    %v5371 = vshrl.u32 %v5370, 7
    %v5372 = vsub.s32 %v5369, %v5371
    %v5373 = vrot.slane %v5359, %v5372
    %v5374 = vcombine.high %v5350, 0.0
    %v5375 = vcombine.high %v5357, 0.0
    %v5376 = vcombine.high %v5366, 0.0
    %v5377 = vcombine.high %v5373, 0.0
    %v5378 = vcombine.high %v5036, 0.0
    %v5380 = vunpack.c.l.s4 1983009808
    %v5381 = vunpack.c.0.s8 %v5380
    %v5382 = vlaneseq
    %v5383 = vshrl.u32 %v5382, 7
    %v5384 = vsub.s32 %v5381, %v5383
    %v5385 = vrot.slane %v5036, %v5384
    %v5387 = vunpack.c.l.s4 1983009808
    %v5388 = vunpack.c.0.s8 %v5387
    %v5389 = vlaneseq
    %v5390 = vshrl.u32 %v5389, 7
    %v5391 = vsub.s32 %v5388, %v5390
    %v5392 = vrot.slane %v5378, %v5391
    %v5393 = vcombine.high %v5040, 0.0
    %v5395 = vunpack.c.l.s4 1983009808
    %v5396 = vunpack.c.0.s8 %v5395
    %v5397 = vlaneseq
    %v5398 = vshrl.u32 %v5397, 7
    %v5399 = vsub.s32 %v5396, %v5398
    %v5400 = vrot.slane %v5040, %v5399
    %v5402 = vunpack.c.l.s4 1983009808
    %v5403 = vunpack.c.0.s8 %v5402
    %v5404 = vlaneseq
    %v5405 = vshrl.u32 %v5404, 7
    %v5406 = vsub.s32 %v5403, %v5405
    %v5407 = vrot.slane %v5393, %v5406
    %v5408 = vcombine.low %v5385, %v5400
    %v5409 = vcombine.high %v5385, %v5400
    %v5411 = vunpack.c.l.s4 1934713408
    %v5412 = vunpack.c.0.s8 %v5411
    %v5413 = vlaneseq
    %v5414 = vshrl.u32 %v5413, 7
    %v5415 = vsub.s32 %v5412, %v5414
    %v5416 = vrot.slane %v5408, %v5415
    %v5418 = vunpack.c.l.s4 1934713408
    %v5419 = vunpack.c.0.s8 %v5418
    %v5420 = vlaneseq
    %v5421 = vshrl.u32 %v5420, 7
    %v5422 = vsub.s32 %v5419, %v5421
    %v5423 = vrot.slane %v5409, %v5422
    %v5424 = vcombine.low %v5392, %v5407
    %v5425 = vcombine.high %v5392, %v5407
    %v5427 = vunpack.c.l.s4 1934713408
    %v5428 = vunpack.c.0.s8 %v5427
    %v5429 = vlaneseq
    %v5430 = vshrl.u32 %v5429, 7
    %v5431 = vsub.s32 %v5428, %v5430
    %v5432 = vrot.slane %v5424, %v5431
    %v5434 = vunpack.c.l.s4 1934713408
    %v5435 = vunpack.c.0.s8 %v5434
    %v5436 = vlaneseq
    %v5437 = vshrl.u32 %v5436, 7
    %v5438 = vsub.s32 %v5435, %v5437
    %v5439 = vrot.slane %v5425, %v5438
    %v5440 = vcombine.high %v5416, 0.0
    %v5441 = vcombine.high %v5423, 0.0
    %v5442 = vcombine.high %v5432, 0.0
    %v5443 = vcombine.high %v5439, 0.0
    %v5444 = vcombine.high %v5037, 0.0
    %v5446 = vunpack.c.l.s4 1983009808
    %v5447 = vunpack.c.0.s8 %v5446
    %v5448 = vlaneseq
    %v5449 = vshrl.u32 %v5448, 7
    %v5450 = vsub.s32 %v5447, %v5449
    %v5451 = vrot.slane %v5037, %v5450
    %v5453 = vunpack.c.l.s4 1983009808
    %v5454 = vunpack.c.0.s8 %v5453
    %v5455 = vlaneseq
    %v5456 = vshrl.u32 %v5455, 7
    %v5457 = vsub.s32 %v5454, %v5456
    %v5458 = vrot.slane %v5444, %v5457
    %v5459 = vcombine.high %v5041, 0.0
    %v5461 = vunpack.c.l.s4 1983009808
    %v5462 = vunpack.c.0.s8 %v5461
    %v5463 = vlaneseq
    %v5464 = vshrl.u32 %v5463, 7
    %v5465 = vsub.s32 %v5462, %v5464
    %v5466 = vrot.slane %v5041, %v5465
    %v5468 = vunpack.c.l.s4 1983009808
    %v5469 = vunpack.c.0.s8 %v5468
    %v5470 = vlaneseq
    %v5471 = vshrl.u32 %v5470, 7
    %v5472 = vsub.s32 %v5469, %v5471
    %v5473 = vrot.slane %v5459, %v5472
    %v5474 = vcombine.low %v5451, %v5466
    %v5475 = vcombine.high %v5451, %v5466
    %v5477 = vunpack.c.l.s4 1934713408
    %v5478 = vunpack.c.0.s8 %v5477
    %v5479 = vlaneseq
    %v5480 = vshrl.u32 %v5479, 7
    %v5481 = vsub.s32 %v5478, %v5480
    %v5482 = vrot.slane %v5474, %v5481
    %v5484 = vunpack.c.l.s4 1934713408
    %v5485 = vunpack.c.0.s8 %v5484
    %v5486 = vlaneseq
    %v5487 = vshrl.u32 %v5486, 7
    %v5488 = vsub.s32 %v5485, %v5487
    %v5489 = vrot.slane %v5475, %v5488
    %v5490 = vcombine.low %v5458, %v5473
    %v5491 = vcombine.high %v5458, %v5473
    %v5493 = vunpack.c.l.s4 1934713408
    %v5494 = vunpack.c.0.s8 %v5493
    %v5495 = vlaneseq
    %v5496 = vshrl.u32 %v5495, 7
    %v5497 = vsub.s32 %v5494, %v5496
    %v5498 = vrot.slane %v5490, %v5497
    %v5500 = vunpack.c.l.s4 1934713408
    %v5501 = vunpack.c.0.s8 %v5500
    %v5502 = vlaneseq
    %v5503 = vshrl.u32 %v5502, 7
    %v5504 = vsub.s32 %v5501, %v5503
    %v5505 = vrot.slane %v5491, %v5504
    %v5506 = vcombine.high %v5482, 0.0
    %v5507 = vcombine.high %v5489, 0.0
    %v5508 = vcombine.high %v5498, 0.0
    %v5509 = vcombine.high %v5505, 0.0
    %v5510 = vcombine.high %v5038, 0.0
    %v5512 = vunpack.c.l.s4 1983009808
    %v5513 = vunpack.c.0.s8 %v5512
    %v5514 = vlaneseq
    %v5515 = vshrl.u32 %v5514, 7
    %v5516 = vsub.s32 %v5513, %v5515
    %v5517 = vrot.slane %v5038, %v5516
    %v5519 = vunpack.c.l.s4 1983009808
    %v5520 = vunpack.c.0.s8 %v5519
    %v5521 = vlaneseq
    %v5522 = vshrl.u32 %v5521, 7
    %v5523 = vsub.s32 %v5520, %v5522
    %v5524 = vrot.slane %v5510, %v5523
    %v5525 = vcombine.high %v5042, 0.0
    %v5527 = vunpack.c.l.s4 1983009808
    %v5528 = vunpack.c.0.s8 %v5527
    %v5529 = vlaneseq
    %v5530 = vshrl.u32 %v5529, 7
    %v5531 = vsub.s32 %v5528, %v5530
    %v5532 = vrot.slane %v5042, %v5531
    %v5534 = vunpack.c.l.s4 1983009808
    %v5535 = vunpack.c.0.s8 %v5534
    %v5536 = vlaneseq
    %v5537 = vshrl.u32 %v5536, 7
    %v5538 = vsub.s32 %v5535, %v5537
    %v5539 = vrot.slane %v5525, %v5538
    %v5540 = vcombine.low %v5517, %v5532
    %v5541 = vcombine.high %v5517, %v5532
    %v5543 = vunpack.c.l.s4 1934713408
    %v5544 = vunpack.c.0.s8 %v5543
    %v5545 = vlaneseq
    %v5546 = vshrl.u32 %v5545, 7
    %v5547 = vsub.s32 %v5544, %v5546
    %v5548 = vrot.slane %v5540, %v5547
    %v5550 = vunpack.c.l.s4 1934713408
    %v5551 = vunpack.c.0.s8 %v5550
    %v5552 = vlaneseq
    %v5553 = vshrl.u32 %v5552, 7
    %v5554 = vsub.s32 %v5551, %v5553
    %v5555 = vrot.slane %v5541, %v5554
    %v5556 = vcombine.low %v5524, %v5539
    %v5557 = vcombine.high %v5524, %v5539
    %v5559 = vunpack.c.l.s4 1934713408
    %v5560 = vunpack.c.0.s8 %v5559
    %v5561 = vlaneseq
    %v5562 = vshrl.u32 %v5561, 7
    %v5563 = vsub.s32 %v5560, %v5562
    %v5564 = vrot.slane %v5556, %v5563
    %v5566 = vunpack.c.l.s4 1934713408
    %v5567 = vunpack.c.0.s8 %v5566
    %v5568 = vlaneseq
    %v5569 = vshrl.u32 %v5568, 7
    %v5570 = vsub.s32 %v5567, %v5569
    %v5571 = vrot.slane %v5557, %v5570
    %v5572 = vcombine.high %v5548, 0.0
    %v5573 = vcombine.high %v5555, 0.0
    %v5574 = vcombine.high %v5564, 0.0
    %v5575 = vcombine.high %v5571, 0.0
    %5577 = vrot.lane.b32.xlu0 %v5374, 2
    %v5578 = vpop.permute.xlu0 %5577
    %5581 = vrot.lane.b32.xlu0 %v5357, 4
    %v5582 = vpop.permute.xlu0 %5581
    %5585 = vrot.lane.b32.xlu0 %v5375, 6
    %v5586 = vpop.permute.xlu0 %5585
    %5589 = vrot.lane.b32.xlu0 %v5366, 8
    %v5590 = vpop.permute.xlu0 %5589
    %5593 = vrot.lane.b32.xlu0 %v5376, 10
    %v5594 = vpop.permute.xlu0 %5593
    %5597 = vrot.lane.b32.xlu0 %v5373, 12
    %v5598 = vpop.permute.xlu0 %5597
    %5601 = vrot.lane.b32.xlu0 %v5377, 14
    %v5602 = vpop.permute.xlu0 %5601
    %5605 = vrot.lane.b32.xlu0 %v5416, 16
    %v5606 = vpop.permute.xlu0 %5605
    %5609 = vrot.lane.b32.xlu0 %v5440, 18
    %v5610 = vpop.permute.xlu0 %5609
    %5613 = vrot.lane.b32.xlu0 %v5423, 20
    %v5614 = vpop.permute.xlu0 %5613
    %5617 = vrot.lane.b32.xlu0 %v5441, 22
    %v5618 = vpop.permute.xlu0 %5617
    %5621 = vrot.lane.b32.xlu0 %v5432, 24
    %v5622 = vpop.permute.xlu0 %5621
    %5625 = vrot.lane.b32.xlu0 %v5442, 26
    %v5626 = vpop.permute.xlu0 %5625
    %5629 = vrot.lane.b32.xlu0 %v5439, 28
    %v5630 = vpop.permute.xlu0 %5629
    %5633 = vrot.lane.b32.xlu0 %v5443, 30
    %v5634 = vpop.permute.xlu0 %5633
    %5637 = vrot.lane.b32.xlu0 %v5482, 32
    %v5638 = vpop.permute.xlu0 %5637
    %5641 = vrot.lane.b32.xlu0 %v5506, 34
    %v5642 = vpop.permute.xlu0 %5641
    %5645 = vrot.lane.b32.xlu0 %v5489, 36
    %v5646 = vpop.permute.xlu0 %5645
    %5649 = vrot.lane.b32.xlu0 %v5507, 38
    %v5650 = vpop.permute.xlu0 %5649
    %5653 = vrot.lane.b32.xlu0 %v5498, 40
    %v5654 = vpop.permute.xlu0 %5653
    %5657 = vrot.lane.b32.xlu0 %v5508, 42
    %v5658 = vpop.permute.xlu0 %5657
    %5661 = vrot.lane.b32.xlu0 %v5505, 44
    %v5662 = vpop.permute.xlu0 %5661
    %5665 = vrot.lane.b32.xlu0 %v5509, 46
    %v5666 = vpop.permute.xlu0 %5665
    %5669 = vrot.lane.b32.xlu0 %v5548, 48
    %v5670 = vpop.permute.xlu0 %5669
    %5673 = vrot.lane.b32.xlu0 %v5572, 50
    %v5674 = vpop.permute.xlu0 %5673
    %5677 = vrot.lane.b32.xlu0 %v5555, 52
    %v5678 = vpop.permute.xlu0 %5677
    %5681 = vrot.lane.b32.xlu0 %v5573, 54
    %v5682 = vpop.permute.xlu0 %5681
    %5685 = vrot.lane.b32.xlu0 %v5564, 56
    %v5686 = vpop.permute.xlu0 %5685
    %5689 = vrot.lane.b32.xlu0 %v5574, 58
    %v5690 = vpop.permute.xlu0 %5689
    %5693 = vrot.lane.b32.xlu0 %v5571, 60
    %v5694 = vpop.permute.xlu0 %5693
    %5697 = vrot.lane.b32.xlu0 %v5575, 62
    %v5698 = vpop.permute.xlu0 %5697
    %v5700 = vsel %vm5043, %v5350, %v5578
    %vm5701 = vcmask 31744
    %v5702 = vsel %vm5701, %v5700, %v5582
    %vm5703 = vcmask 48128
    %v5704 = vsel %vm5703, %v5702, %v5586
    %vm5705 = vcmask 64512
    %v5706 = vsel %vm5705, %v5704, %v5590
    %vm5707 = vcmask 80896
    %v5708 = vsel %vm5707, %v5706, %v5594
    %vm5709 = vcmask 97280
    %v5710 = vsel %vm5709, %v5708, %v5598
    %vm5711 = vcmask 113664
    %v5712 = vsel %vm5711, %v5710, %v5602
    %v5713 = vsel %vm1091, %v5712, %v5606
    %vm5714 = vcmask 146432
    %v5715 = vsel %vm5714, %v5713, %v5610
    %vm5716 = vcmask 162816
    %v5717 = vsel %vm5716, %v5715, %v5614
    %vm5718 = vcmask 179200
    %v5719 = vsel %vm5718, %v5717, %v5618
    %vm5720 = vcmask 195584
    %v5721 = vsel %vm5720, %v5719, %v5622
    %vm5722 = vcmask 211968
    %v5723 = vsel %vm5722, %v5721, %v5626
    %vm5724 = vcmask 228352
    %v5725 = vsel %vm5724, %v5723, %v5630
    %vm5726 = vcmask 244736
    %v5727 = vsel %vm5726, %v5725, %v5634
    %v5728 = vsel %vm943, %v5727, %v5638
    %vm5729 = vcmask 277504
    %v5730 = vsel %vm5729, %v5728, %v5642
    %vm5731 = vcmask 293888
    %v5732 = vsel %vm5731, %v5730, %v5646
    %vm5733 = vcmask 310272
    %v5734 = vsel %vm5733, %v5732, %v5650
    %vm5735 = vcmask 326656
    %v5736 = vsel %vm5735, %v5734, %v5654
    %vm5737 = vcmask 343040
    %v5738 = vsel %vm5737, %v5736, %v5658
    %vm5739 = vcmask 359424
    %v5740 = vsel %vm5739, %v5738, %v5662
    %vm5741 = vcmask 375808
    %v5742 = vsel %vm5741, %v5740, %v5666
    %v5743 = vsel %vm969, %v5742, %v5670
    %vm5744 = vcmask 408576
    %v5745 = vsel %vm5744, %v5743, %v5674
    %vm5746 = vcmask 424960
    %v5747 = vsel %vm5746, %v5745, %v5678
    %vm5748 = vcmask 441344
    %v5749 = vsel %vm5748, %v5747, %v5682
    %vm5750 = vcmask 457728
    %v5751 = vsel %vm5750, %v5749, %v5686
    %vm5752 = vcmask 474112
    %v5753 = vsel %vm5752, %v5751, %v5690
    %vm5754 = vcmask 490496
    %v5755 = vsel %vm5754, %v5753, %v5694
    %vm5756 = vcmask 506880
    %v5757 = vsel %vm5756, %v5755, %v5698
    %vm5758 = vcmask 517120
    %5759 = vst.msk [vmem:[%s24 + $0x5] sm:$0x3] %vm5758, %v5757
    // Predicated region
    $region578: #{forward.1} parent=1 // pred_check
      _
    $region579: #{forward.1} parent=1 // pred_check_branch
      %5761 = sbr.rel (0) target = $region581
    $region580: #{forward.1} parent=1 // pred_region
      _
    $region581: #{forward.1} parent=1 // pred_fallthru
      _
    // Predicated region
    $region582: #{forward.1} parent=1 // pred_check
      _
    $region583: #{forward.1} parent=1 // pred_check_branch
      %5763 = sbr.rel (0) target = $region585
    $region584: #{forward.1} parent=1 // pred_region
      _
    $region585: #{forward.1} parent=1 // pred_fallthru
      _
    %5764 = vsyncpa [#allocation7], 1
  %5765 = vsyncmov [#allocation3]
  %s5766 = vpop.sfrf %5765
  %p5767 = scmp.eq.s32.totalorder %s5766, 0
  %p5768 = pneg %p5767
  %5770 = shalt.err (%p5768)
  %s5771 = scalar_lea.sflag [#allocation3], 1
  %5772 = vsyncmov %s5771
  %s5773 = vpop.sfrf %5772
  %p5774 = scmp.eq.s32.totalorder %s5773, 0
  %p5775 = pneg %p5774
  %5777 = shalt.err (%p5775)
  %s5778 = scalar_lea.sflag [#allocation3], 2
  %5779 = vsyncmov %s5778
  %s5780 = vpop.sfrf %5779
  %p5781 = scmp.eq.s32.totalorder %s5780, 0
  %p5782 = pneg %p5781
  %5784 = shalt.err (%p5782)
  %s5785 = scalar_lea.sflag [#allocation3], 3
  %5786 = vsyncmov %s5785
  %s5787 = vpop.sfrf %5786
  %p5788 = scmp.eq.s32.totalorder %s5787, 0
  %p5789 = pneg %p5788
  %5791 = shalt.err (%p5789)
  %s5792 = scalar_lea.sflag [#allocation3], 4
  %5793 = vsyncmov %s5792
  %s5794 = vpop.sfrf %5793
  %p5795 = scmp.eq.s32.totalorder %s5794, 0
  %p5796 = pneg %p5795
  %5798 = shalt.err (%p5796)
  %s5799 = scalar_lea.sflag [#allocation3], 5
  %5800 = vsyncmov %s5799
  %s5801 = vpop.sfrf %5800
  %p5802 = scmp.eq.s32.totalorder %s5801, 0
  %p5803 = pneg %p5802
  %5805 = shalt.err (%p5803)
  %s5806 = scalar_lea.sflag [#allocation3], 6
  %5807 = vsyncmov %s5806
  %s5808 = vpop.sfrf %5807
  %p5809 = scmp.eq.s32.totalorder %s5808, 0
  %p5810 = pneg %p5809
  %5812 = shalt.err (%p5810)
  %s5813 = scalar_lea.sflag [#allocation3], 7
  %5814 = vsyncmov %s5813
  %s5815 = vpop.sfrf %5814
  %p5816 = scmp.eq.s32.totalorder %s5815, 0
  %p5817 = pneg %p5816
  %5819 = shalt.err (%p5817)
  %s5820 = scalar_lea.sflag [#allocation3], 8
  %5821 = vsyncmov %s5820
  %s5822 = vpop.sfrf %5821
  %p5823 = scmp.eq.s32.totalorder %s5822, 0
  %p5824 = pneg %p5823
  %5826 = shalt.err (%p5824)
  %s5827 = scalar_lea.sflag [#allocation3], 9
  %5828 = vsyncmov %s5827
  %s5829 = vpop.sfrf %5828
  %p5830 = scmp.eq.s32.totalorder %s5829, 0
  %p5831 = pneg %p5830
  %5833 = shalt.err (%p5831)
  %s5834 = scalar_lea.sflag [#allocation3], 10
  %5835 = vsyncmov %s5834
  %s5836 = vpop.sfrf %5835
  %p5837 = scmp.eq.s32.totalorder %s5836, 0
  %p5838 = pneg %p5837
  %5840 = shalt.err (%p5838)
  %s5841 = scalar_lea.sflag [#allocation3], 11
  %5842 = vsyncmov %s5841
  %s5843 = vpop.sfrf %5842
  %p5844 = scmp.eq.s32.totalorder %s5843, 0
  %p5845 = pneg %p5844
  %5847 = shalt.err (%p5845)
  %s5848 = scalar_lea.sflag [#allocation3], 12
  %5849 = vsyncmov %s5848
  %s5850 = vpop.sfrf %5849
  %p5851 = scmp.eq.s32.totalorder %s5850, 0
  %p5852 = pneg %p5851
  %5854 = shalt.err (%p5852)
  %s5855 = scalar_lea.sflag [#allocation3], 13
  %5856 = vsyncmov %s5855
  %s5857 = vpop.sfrf %5856
  %p5858 = scmp.eq.s32.totalorder %s5857, 0
  %p5859 = pneg %p5858
  %5861 = shalt.err (%p5859)
  %s5862 = scalar_lea.sflag [#allocation3], 14
  %5863 = vsyncmov %s5862
  %s5864 = vpop.sfrf %5863
  %p5865 = scmp.eq.s32.totalorder %s5864, 0
  %p5866 = pneg %p5865
  %5868 = shalt.err (%p5866)
  %s5869 = scalar_lea.sflag [#allocation3], 15
  %5870 = vsyncmov %s5869
  %s5871 = vpop.sfrf %5870
  %p5872 = scmp.eq.s32.totalorder %s5871, 0
  %p5873 = pneg %p5872
  %5875 = shalt.err (%p5873)

</llo_original>
